<compile_context>
chip_gen: v6e
topology: v6e:2x2x1
jax: 0.10.0
libtpu: 0.0.40
codegen_flags: <defaults>
</compile_context>

<pallas_src>
import functools

import jax
import jax.numpy as jnp
from jax import lax
from jax.experimental import pallas as pl
from jax.experimental.pallas import tpu as pltpu

TB = 8       # images per grid step (tunable; keep the grid length even for v7x)
NPOS = 128   # conv2 output positions, padded 121 -> 128
KP = 32      # conv1 im2col K (3*3*3=27), padded 27 -> 32


# ---------------------------------------------------------------------------
# Fused kernel: conv1 -> tanh -> conv2 -> tanh -> flatten -> fc1 -> relu -> fc2
# for TB images per grid step. Everything stays in VMEM / vregs.
# ---------------------------------------------------------------------------
def _cnn_fused_kernel(p_ref,    # (1, 9, 32, TB*128) bf16  conv1 patches per conv2 offset
                      w1_ref,   # (16, 32)           bf16  conv1 weight (oc, kh*kw*ic pad)
                      b1_ref,   # (16, 1)            f32
                      w2_ref,   # (9, 32, 16)        bf16  conv2 weight (kh*kw, oc, ic)
                      b2_ref,   # (32, 1)            f32
                      w3_ref,   # (32, 128, 256)     bf16  fc1 weight (c, pos pad, n)
                      b3_ref,   # (1, 256)           f32
                      w4_ref,   # (256, 6)           bf16  fc2 weight (in, out)
                      b4_ref,   # (1, 6)             f32
                      o_ref,    # (TB, 6)            f32
                      fc_in_ref,  # scratch (TB*32, 128) f32
                      *, tb):
    tbl = tb * NPOS
    w1 = w1_ref[...]          # (16, 32) bf16
    b1 = b1_ref[...]          # (16, 1)  f32

    # conv1 + conv2, accumulated over the 9 conv2 kernel offsets (i, j).
    # Channel-major layout: rows = channels, lanes = (image, position).
    a2 = jnp.zeros((32, tbl), jnp.float32)
    for ij in range(9):                                   # static unroll
        p = p_ref[0, ij]                                  # (32, tbl) bf16
        a1 = jnp.tanh(
            jnp.dot(w1, p, preferred_element_type=jnp.float32) + b1)   # (16, tbl) f32
        a2 = a2 + jnp.dot(w2_ref[ij], a1.astype(jnp.bfloat16),
                          preferred_element_type=jnp.float32)          # (32, tbl) f32
    a2 = jnp.tanh(a2 + b2_ref[...])                       # conv2 output, f32

    # Stage per-image (32 channels, 128 positions) slabs into the scratch,
    # rows = b*32 + c. Lane-aligned slices + contiguous stores only.
    for b in range(tb):                                   # static unroll
        fc_in_ref[b * 32:(b + 1) * 32, :] = a2[:, b * NPOS:(b + 1) * NPOS]

    # fc1: K-chunked (TB, 4096) @ (4096, 256). Chunk c gathers rows {b*32 + c}
    # (one 128-wide position block per image) via a sublane-strided read.
    h = jnp.zeros((tb, 256), jnp.float32)
    for c in range(32):                                   # static unroll
        lhs = fc_in_ref[pl.ds(c, tb, stride=32), :].astype(jnp.bfloat16)  # (TB,128)
        h = h + jnp.dot(lhs, w3_ref[c], preferred_element_type=jnp.float32)
    h = jnp.maximum(h + b3_ref[...], 0.0)                 # relu, f32 epilogue

    out = jnp.dot(h.astype(jnp.bfloat16), w4_ref[...],
                  preferred_element_type=jnp.float32) + b4_ref[...]
    o_ref[...] = out.astype(o_ref.dtype)


# ---------------------------------------------------------------------------
# Host-side glue: stride-2 im2col for conv1, grouped by conv2 kernel offset,
# sliced straight from NCHW, emitted in bf16, padded & packed TB images / step.
# ---------------------------------------------------------------------------
def build_conv_patches(x_nchw, tb):
    """x: (B, 3, 47, 47) -> (B//tb, 9, 32, tb*128) bf16 where

       out[g, i*3+j, di*9+dj*3+ci, b*128 + (r2*11+c2)]
           = x[g*tb + b, ci, 4*r2 + 2*i + di, 4*c2 + 2*j + dj]

    i.e. for each conv2 kernel offset (i, j) the (kh*kw*ic) x (positions)
    im2col matrix of the conv1 patches feeding conv2 output position (r2, c2),
    with K padded 27->32, positions padded 121->128 (zeros), and tb images
    packed along the lane axis.
    """
    B = x_nchw.shape[0]
    assert B % tb == 0
    g = B // tb
    x = x_nchw.astype(jnp.bfloat16)
    groups = []
    for i in range(3):
        for j in range(3):
            feats = []
            for di in range(3):
                for dj in range(3):
                    r0 = 2 * i + di
                    c0 = 2 * j + dj
                    feats.append(x[:, :, r0:r0 + 41:4, c0:c0 + 41:4])  # (B,3,11,11)
            f = jnp.stack(feats, axis=1)            # (B, 9, 3, 11, 11)
            groups.append(f.reshape(B, 27, 121))    # rows (di,dj,ci); cols (r2,c2)
    p = jnp.stack(groups, axis=1)                   # (B, 9, 27, 121)
    p = jnp.pad(p, ((0, 0), (0, 0), (0, KP - 27), (0, NPOS - 121)))
    p = p.reshape(g, tb, 9, KP, NPOS)
    p = jnp.transpose(p, (0, 2, 3, 1, 4)).reshape(g, 9, KP, tb * NPOS)
    return p


# ---------------------------------------------------------------------------
# Parameters: PyTorch layouts at init, one-time re-layout for the kernel.
# ---------------------------------------------------------------------------
def init_params(key):
    ks = jax.random.split(key, 8)

    def u(k, shape, fan_in):
        bound = 1.0 / jnp.sqrt(fan_in)
        return jax.random.uniform(k, shape, jnp.float32, -bound, bound)

    return {
        "conv1_w": u(ks[0], (16, 3, 3, 3), 3 * 3 * 3),
        "conv1_b": u(ks[1], (16,), 3 * 3 * 3),
        "conv2_w": u(ks[2], (32, 16, 3, 3), 16 * 3 * 3),
        "conv2_b": u(ks[3], (32,), 16 * 3 * 3),
        "fc1_w": u(ks[4], (256, 11 * 11 * 32), 11 * 11 * 32),  # PyTorch (out, in)
        "fc1_b": u(ks[5], (256,), 11 * 11 * 32),
        "fc2_w": u(ks[6], (6, 256), 256),
        "fc2_b": u(ks[7], (6,), 256),
    }


def prepare_kernel_params(p):
    """One-time weight re-layout + bf16 cast (no per-forward transposes)."""
    w1 = jnp.transpose(p["conv1_w"], (0, 2, 3, 1)).reshape(16, 27)      # (oc, kh*kw*ic)
    w1 = jnp.pad(w1, ((0, 0), (0, KP - 27))).astype(jnp.bfloat16)       # (16, 32)
    w2 = jnp.transpose(p["conv2_w"], (2, 3, 0, 1)).reshape(9, 32, 16)   # (kh*kw, oc, ic)
    # fc1: PyTorch (256, 32*11*11), flatten order (c, h, w) -> (c, pos, n);
    # pad positions 121->128 with ZERO rows so conv padding is inert.
    w3 = jnp.transpose(p["fc1_w"].reshape(256, 32, 121), (1, 2, 0))     # (32,121,256)
    w3 = jnp.pad(w3, ((0, 0), (0, NPOS - 121), (0, 0))).astype(jnp.bfloat16)
    return {
        "w1": w1,
        "b1": p["conv1_b"].reshape(16, 1).astype(jnp.float32),
        "w2": w2.astype(jnp.bfloat16),
        "b2": p["conv2_b"].reshape(32, 1).astype(jnp.float32),
        "w3": w3,                                                        # (32,128,256)
        "b3": p["fc1_b"].reshape(1, 256).astype(jnp.float32),
        "w4": jnp.transpose(p["fc2_w"], (1, 0)).astype(jnp.bfloat16),    # (256, 6)
        "b4": p["fc2_b"].reshape(1, 6).astype(jnp.float32),
    }


# ---------------------------------------------------------------------------
# Forward pass
# ---------------------------------------------------------------------------
def cnn_forward(kp, x_nchw, tb=TB):
    """x_nchw: (B, 3, 47, 47) f32 -> (B, 6) f32."""
    B = x_nchw.shape[0]
    bp = ((B + tb - 1) // tb) * tb
    if bp != B:
        x_nchw = jnp.pad(x_nchw, ((0, bp - B), (0, 0), (0, 0), (0, 0)))
    g = bp // tb
    patches = build_conv_patches(x_nchw, tb)            # (g, 9, 32, tb*128) bf16
    tbl = tb * NPOS

    # NOTE: weight specs could additionally use pipeline_mode=pl.Buffered(1) to
    # single-buffer the resident weights; skipped since total VMEM use (~6 MB)
    # is far below even v7x's 64 MiB.
    out = pl.pallas_call(
        functools.partial(_cnn_fused_kernel, tb=tb),
        out_shape=jax.ShapeDtypeStruct((bp, 6), jnp.float32),
        grid=(g,),
        in_specs=[
            pl.BlockSpec((1, 9, KP, tbl), lambda i: (i, 0, 0, 0)),
            pl.BlockSpec((16, KP), lambda i: (0, 0)),
            pl.BlockSpec((16, 1), lambda i: (0, 0)),
            pl.BlockSpec((9, 32, 16), lambda i: (0, 0, 0)),
            pl.BlockSpec((32, 1), lambda i: (0, 0)),
            pl.BlockSpec((32, NPOS, 256), lambda i: (0, 0, 0)),
            pl.BlockSpec((1, 256), lambda i: (0, 0)),
            pl.BlockSpec((256, 6), lambda i: (0, 0)),
            pl.BlockSpec((1, 6), lambda i: (0, 0)),
        ],
        out_specs=pl.BlockSpec((tb, 6), lambda i: (i, 0)),
        scratch_shapes=[pltpu.VMEM((tb * 32, NPOS), jnp.float32)],
        compiler_params=pltpu.CompilerParams(
            dimension_semantics=("parallel",),
            vmem_limit_bytes=32 * 1024 * 1024,
        ),
    )(patches, kp["w1"], kp["b1"], kp["w2"], kp["b2"],
      kp["w3"], kp["b3"], kp["w4"], kp["b4"])
    return out[:B]


# ---------------------------------------------------------------------------
# Pure-JAX reference with the kernel's bf16 operand rounding mirrored
# (f32 accumulation everywhere, HIGHEST precision so no hidden down-casting).
# ---------------------------------------------------------------------------
def cnn_reference(raw, x_nchw):
    f32 = jnp.float32
    bf = lambda a: a.astype(jnp.bfloat16).astype(f32)
    hi = lax.Precision.HIGHEST
    dn = ("NCHW", "OIHW", "NCHW")

    y = lax.conv_general_dilated(bf(x_nchw), bf(raw["conv1_w"]), (2, 2), "VALID",
                                 dimension_numbers=dn, precision=hi)
    y = jnp.tanh(y + raw["conv1_b"][None, :, None, None])
    y = lax.conv_general_dilated(bf(y), bf(raw["conv2_w"]), (2, 2), "VALID",
                                 dimension_numbers=dn, precision=hi)
    y = jnp.tanh(y + raw["conv2_b"][None, :, None, None])
    flat = y.reshape(y.shape[0], -1)                      # PyTorch view order
    h = jnp.maximum(jnp.dot(bf(flat), bf(raw["fc1_w"]).T, precision=hi)
                    + raw["fc1_b"], 0.0)
    return jnp.dot(bf(h), bf(raw["fc2_w"]).T, precision=hi) + raw["fc2_b"]


if __name__ == "__main__":
    key = jax.random.PRNGKey(0)
    pkey, xkey = jax.random.split(key)
    raw = init_params(pkey)
    kp = prepare_kernel_params(raw)          # one-time weight re-layout

    # Input spatial size 47x47 is dictated by fc1 = Linear(11*11*32, 256).
    # Batch 16 -> grid of 2 parallel steps of TB=8 images each.
    x = jax.random.normal(xkey, (16, 3, 47, 47), dtype=jnp.float32)

    fwd = jax.jit(cnn_forward)
    out = jax.block_until_ready(fwd(kp, x))
    assert out.shape == (16, 6), out.shape
    assert bool(jnp.all(jnp.isfinite(out)))

    # Correctness vs pure-JAX reference with matching bf16 operand rounding.
    ref = cnn_reference(raw, x)
    max_err = float(jnp.max(jnp.abs(out - ref)))
    assert max_err < 1e-2, max_err

    print("KERNEL_OK")
</pallas_src>

<mosaic_0001>
module attributes {stable_mosaic.version = 11 : i64} {
  func.func @_cnn_fused_kernel(%arg0: i32, %arg1: memref<1x9x32x1024xbf16, #tpu.memory_space<vmem>>, %arg2: memref<16x32xbf16, #tpu.memory_space<vmem>>, %arg3: memref<16x1xf32, #tpu.memory_space<vmem>>, %arg4: memref<9x32x16xbf16, #tpu.memory_space<vmem>>, %arg5: memref<32x1xf32, #tpu.memory_space<vmem>>, %arg6: memref<32x128x256xbf16, #tpu.memory_space<vmem>>, %arg7: memref<1x256xf32, #tpu.memory_space<vmem>>, %arg8: memref<256x6xbf16, #tpu.memory_space<vmem>>, %arg9: memref<1x6xf32, #tpu.memory_space<vmem>>, %arg10: memref<8x6xf32, #tpu.memory_space<vmem>>, %arg11: memref<256x128xf32, #tpu.memory_space<vmem>>) attributes {dimension_semantics = [#tpu.dimension_semantics<parallel>], iteration_bounds = array<i64: 2>, scalar_prefetch = 0 : i64, scratch_operands = 1 : i64, tpu.core_type = #tpu.core_type<tc>, window_params = [{transform_indices = @transform_0, window_bounds = array<i64: 1, 9, 32, 1024>}, {pipeline_mode = #tpu.pipeline_mode<synchronous>, transform_indices = @transform_1, window_bounds = array<i64: 16, 32>}, {pipeline_mode = #tpu.pipeline_mode<synchronous>, transform_indices = @transform_2, window_bounds = array<i64: 16, 1>}, {pipeline_mode = #tpu.pipeline_mode<synchronous>, transform_indices = @transform_3, window_bounds = array<i64: 9, 32, 16>}, {pipeline_mode = #tpu.pipeline_mode<synchronous>, transform_indices = @transform_4, window_bounds = array<i64: 32, 1>}, {pipeline_mode = #tpu.pipeline_mode<synchronous>, transform_indices = @transform_5, window_bounds = array<i64: 32, 128, 256>}, {pipeline_mode = #tpu.pipeline_mode<synchronous>, transform_indices = @transform_6, window_bounds = array<i64: 1, 256>}, {pipeline_mode = #tpu.pipeline_mode<synchronous>, transform_indices = @transform_7, window_bounds = array<i64: 256, 6>}, {pipeline_mode = #tpu.pipeline_mode<synchronous>, transform_indices = @transform_8, window_bounds = array<i64: 1, 6>}, {transform_indices = @transform_9, window_bounds = array<i64: 8, 6>}]} {
    %c0 = arith.constant 0 : index
    %c0_0 = arith.constant 0 : index
    %0 = vector.load %arg2[%c0, %c0_0] : memref<16x32xbf16, #tpu.memory_space<vmem>>, vector<16x32xbf16>
    %c0_1 = arith.constant 0 : index
    %c0_2 = arith.constant 0 : index
    %1 = vector.load %arg3[%c0_1, %c0_2] : memref<16x1xf32, #tpu.memory_space<vmem>>, vector<16x1xf32>
    %cst = arith.constant 0.000000e+00 : f32
    %2 = vector.broadcast %cst : f32 to vector<32x1024xf32>
    %c0_3 = arith.constant 0 : index
    %c0_4 = arith.constant 0 : index
    %c0_5 = arith.constant 0 : index
    %c0_6 = arith.constant 0 : index
    %3 = vector.load %arg1[%c0_3, %c0_4, %c0_5, %c0_6] : memref<1x9x32x1024xbf16, #tpu.memory_space<vmem>>, vector<1x1x32x1024xbf16>
    %4 = vector.shape_cast %3 : vector<1x1x32x1024xbf16> to vector<32x1024xbf16>
    %cst_7 = arith.constant dense<0.000000e+00> : vector<16x1024xf32>
    %5 = tpu.matmul %0, %4, %cst_7 {dimension_numbers = #tpu.dot_dimension_numbers<[1], [0], [0], [1], [0, 0, 1, 1], [], []>} : vector<16x32xbf16>, vector<32x1024xbf16>, vector<16x1024xf32> -> vector<16x1024xf32>
    %6 = vector.broadcast %1 : vector<16x1xf32> to vector<16x1024xf32>
    %7 = arith.addf %5, %6 : vector<16x1024xf32>
    %8 = math.tanh %7 : vector<16x1024xf32>
    %c0_8 = arith.constant 0 : index
    %c0_9 = arith.constant 0 : index
    %c0_10 = arith.constant 0 : index
    %9 = vector.load %arg4[%c0_8, %c0_9, %c0_10] : memref<9x32x16xbf16, #tpu.memory_space<vmem>>, vector<1x32x16xbf16>
    %10 = vector.shape_cast %9 : vector<1x32x16xbf16> to vector<32x16xbf16>
    %11 = arith.truncf %8 : vector<16x1024xf32> to vector<16x1024xbf16>
    %cst_11 = arith.constant dense<0.000000e+00> : vector<32x1024xf32>
    %12 = tpu.matmul %10, %11, %cst_11 {dimension_numbers = #tpu.dot_dimension_numbers<[1], [0], [0], [1], [0, 0, 1, 1], [], []>} : vector<32x16xbf16>, vector<16x1024xbf16>, vector<32x1024xf32> -> vector<32x1024xf32>
    %13 = arith.addf %2, %12 : vector<32x1024xf32>
    %c0_12 = arith.constant 0 : index
    %c1 = arith.constant 1 : index
    %c0_13 = arith.constant 0 : index
    %c0_14 = arith.constant 0 : index
    %14 = vector.load %arg1[%c0_12, %c1, %c0_13, %c0_14] : memref<1x9x32x1024xbf16, #tpu.memory_space<vmem>>, vector<1x1x32x1024xbf16>
    %15 = vector.shape_cast %14 : vector<1x1x32x1024xbf16> to vector<32x1024xbf16>
    %cst_15 = arith.constant dense<0.000000e+00> : vector<16x1024xf32>
    %16 = tpu.matmul %0, %15, %cst_15 {dimension_numbers = #tpu.dot_dimension_numbers<[1], [0], [0], [1], [0, 0, 1, 1], [], []>} : vector<16x32xbf16>, vector<32x1024xbf16>, vector<16x1024xf32> -> vector<16x1024xf32>
    %17 = vector.broadcast %1 : vector<16x1xf32> to vector<16x1024xf32>
    %18 = arith.addf %16, %17 : vector<16x1024xf32>
    %19 = math.tanh %18 : vector<16x1024xf32>
    %c1_16 = arith.constant 1 : index
    %c0_17 = arith.constant 0 : index
    %c0_18 = arith.constant 0 : index
    %20 = vector.load %arg4[%c1_16, %c0_17, %c0_18] : memref<9x32x16xbf16, #tpu.memory_space<vmem>>, vector<1x32x16xbf16>
    %21 = vector.shape_cast %20 : vector<1x32x16xbf16> to vector<32x16xbf16>
    %22 = arith.truncf %19 : vector<16x1024xf32> to vector<16x1024xbf16>
    %cst_19 = arith.constant dense<0.000000e+00> : vector<32x1024xf32>
    %23 = tpu.matmul %21, %22, %cst_19 {dimension_numbers = #tpu.dot_dimension_numbers<[1], [0], [0], [1], [0, 0, 1, 1], [], []>} : vector<32x16xbf16>, vector<16x1024xbf16>, vector<32x1024xf32> -> vector<32x1024xf32>
    %24 = arith.addf %13, %23 : vector<32x1024xf32>
    %c0_20 = arith.constant 0 : index
    %c2 = arith.constant 2 : index
    %c0_21 = arith.constant 0 : index
    %c0_22 = arith.constant 0 : index
    %25 = vector.load %arg1[%c0_20, %c2, %c0_21, %c0_22] : memref<1x9x32x1024xbf16, #tpu.memory_space<vmem>>, vector<1x1x32x1024xbf16>
    %26 = vector.shape_cast %25 : vector<1x1x32x1024xbf16> to vector<32x1024xbf16>
    %cst_23 = arith.constant dense<0.000000e+00> : vector<16x1024xf32>
    %27 = tpu.matmul %0, %26, %cst_23 {dimension_numbers = #tpu.dot_dimension_numbers<[1], [0], [0], [1], [0, 0, 1, 1], [], []>} : vector<16x32xbf16>, vector<32x1024xbf16>, vector<16x1024xf32> -> vector<16x1024xf32>
    %28 = vector.broadcast %1 : vector<16x1xf32> to vector<16x1024xf32>
    %29 = arith.addf %27, %28 : vector<16x1024xf32>
    %30 = math.tanh %29 : vector<16x1024xf32>
    %c2_24 = arith.constant 2 : index
    %c0_25 = arith.constant 0 : index
    %c0_26 = arith.constant 0 : index
    %31 = vector.load %arg4[%c2_24, %c0_25, %c0_26] : memref<9x32x16xbf16, #tpu.memory_space<vmem>>, vector<1x32x16xbf16>
    %32 = vector.shape_cast %31 : vector<1x32x16xbf16> to vector<32x16xbf16>
    %33 = arith.truncf %30 : vector<16x1024xf32> to vector<16x1024xbf16>
    %cst_27 = arith.constant dense<0.000000e+00> : vector<32x1024xf32>
    %34 = tpu.matmul %32, %33, %cst_27 {dimension_numbers = #tpu.dot_dimension_numbers<[1], [0], [0], [1], [0, 0, 1, 1], [], []>} : vector<32x16xbf16>, vector<16x1024xbf16>, vector<32x1024xf32> -> vector<32x1024xf32>
    %35 = arith.addf %24, %34 : vector<32x1024xf32>
    %c0_28 = arith.constant 0 : index
    %c3 = arith.constant 3 : index
    %c0_29 = arith.constant 0 : index
    %c0_30 = arith.constant 0 : index
    %36 = vector.load %arg1[%c0_28, %c3, %c0_29, %c0_30] : memref<1x9x32x1024xbf16, #tpu.memory_space<vmem>>, vector<1x1x32x1024xbf16>
    %37 = vector.shape_cast %36 : vector<1x1x32x1024xbf16> to vector<32x1024xbf16>
    %cst_31 = arith.constant dense<0.000000e+00> : vector<16x1024xf32>
    %38 = tpu.matmul %0, %37, %cst_31 {dimension_numbers = #tpu.dot_dimension_numbers<[1], [0], [0], [1], [0, 0, 1, 1], [], []>} : vector<16x32xbf16>, vector<32x1024xbf16>, vector<16x1024xf32> -> vector<16x1024xf32>
    %39 = vector.broadcast %1 : vector<16x1xf32> to vector<16x1024xf32>
    %40 = arith.addf %38, %39 : vector<16x1024xf32>
    %41 = math.tanh %40 : vector<16x1024xf32>
    %c3_32 = arith.constant 3 : index
    %c0_33 = arith.constant 0 : index
    %c0_34 = arith.constant 0 : index
    %42 = vector.load %arg4[%c3_32, %c0_33, %c0_34] : memref<9x32x16xbf16, #tpu.memory_space<vmem>>, vector<1x32x16xbf16>
    %43 = vector.shape_cast %42 : vector<1x32x16xbf16> to vector<32x16xbf16>
    %44 = arith.truncf %41 : vector<16x1024xf32> to vector<16x1024xbf16>
    %cst_35 = arith.constant dense<0.000000e+00> : vector<32x1024xf32>
    %45 = tpu.matmul %43, %44, %cst_35 {dimension_numbers = #tpu.dot_dimension_numbers<[1], [0], [0], [1], [0, 0, 1, 1], [], []>} : vector<32x16xbf16>, vector<16x1024xbf16>, vector<32x1024xf32> -> vector<32x1024xf32>
    %46 = arith.addf %35, %45 : vector<32x1024xf32>
    %c0_36 = arith.constant 0 : index
    %c4 = arith.constant 4 : index
    %c0_37 = arith.constant 0 : index
    %c0_38 = arith.constant 0 : index
    %47 = vector.load %arg1[%c0_36, %c4, %c0_37, %c0_38] : memref<1x9x32x1024xbf16, #tpu.memory_space<vmem>>, vector<1x1x32x1024xbf16>
    %48 = vector.shape_cast %47 : vector<1x1x32x1024xbf16> to vector<32x1024xbf16>
    %cst_39 = arith.constant dense<0.000000e+00> : vector<16x1024xf32>
    %49 = tpu.matmul %0, %48, %cst_39 {dimension_numbers = #tpu.dot_dimension_numbers<[1], [0], [0], [1], [0, 0, 1, 1], [], []>} : vector<16x32xbf16>, vector<32x1024xbf16>, vector<16x1024xf32> -> vector<16x1024xf32>
    %50 = vector.broadcast %1 : vector<16x1xf32> to vector<16x1024xf32>
    %51 = arith.addf %49, %50 : vector<16x1024xf32>
    %52 = math.tanh %51 : vector<16x1024xf32>
    %c4_40 = arith.constant 4 : index
    %c0_41 = arith.constant 0 : index
    %c0_42 = arith.constant 0 : index
    %53 = vector.load %arg4[%c4_40, %c0_41, %c0_42] : memref<9x32x16xbf16, #tpu.memory_space<vmem>>, vector<1x32x16xbf16>
    %54 = vector.shape_cast %53 : vector<1x32x16xbf16> to vector<32x16xbf16>
    %55 = arith.truncf %52 : vector<16x1024xf32> to vector<16x1024xbf16>
    %cst_43 = arith.constant dense<0.000000e+00> : vector<32x1024xf32>
    %56 = tpu.matmul %54, %55, %cst_43 {dimension_numbers = #tpu.dot_dimension_numbers<[1], [0], [0], [1], [0, 0, 1, 1], [], []>} : vector<32x16xbf16>, vector<16x1024xbf16>, vector<32x1024xf32> -> vector<32x1024xf32>
    %57 = arith.addf %46, %56 : vector<32x1024xf32>
    %c0_44 = arith.constant 0 : index
    %c5 = arith.constant 5 : index
    %c0_45 = arith.constant 0 : index
    %c0_46 = arith.constant 0 : index
    %58 = vector.load %arg1[%c0_44, %c5, %c0_45, %c0_46] : memref<1x9x32x1024xbf16, #tpu.memory_space<vmem>>, vector<1x1x32x1024xbf16>
    %59 = vector.shape_cast %58 : vector<1x1x32x1024xbf16> to vector<32x1024xbf16>
    %cst_47 = arith.constant dense<0.000000e+00> : vector<16x1024xf32>
    %60 = tpu.matmul %0, %59, %cst_47 {dimension_numbers = #tpu.dot_dimension_numbers<[1], [0], [0], [1], [0, 0, 1, 1], [], []>} : vector<16x32xbf16>, vector<32x1024xbf16>, vector<16x1024xf32> -> vector<16x1024xf32>
    %61 = vector.broadcast %1 : vector<16x1xf32> to vector<16x1024xf32>
    %62 = arith.addf %60, %61 : vector<16x1024xf32>
    %63 = math.tanh %62 : vector<16x1024xf32>
    %c5_48 = arith.constant 5 : index
    %c0_49 = arith.constant 0 : index
    %c0_50 = arith.constant 0 : index
    %64 = vector.load %arg4[%c5_48, %c0_49, %c0_50] : memref<9x32x16xbf16, #tpu.memory_space<vmem>>, vector<1x32x16xbf16>
    %65 = vector.shape_cast %64 : vector<1x32x16xbf16> to vector<32x16xbf16>
    %66 = arith.truncf %63 : vector<16x1024xf32> to vector<16x1024xbf16>
    %cst_51 = arith.constant dense<0.000000e+00> : vector<32x1024xf32>
    %67 = tpu.matmul %65, %66, %cst_51 {dimension_numbers = #tpu.dot_dimension_numbers<[1], [0], [0], [1], [0, 0, 1, 1], [], []>} : vector<32x16xbf16>, vector<16x1024xbf16>, vector<32x1024xf32> -> vector<32x1024xf32>
    %68 = arith.addf %57, %67 : vector<32x1024xf32>
    %c0_52 = arith.constant 0 : index
    %c6 = arith.constant 6 : index
    %c0_53 = arith.constant 0 : index
    %c0_54 = arith.constant 0 : index
    %69 = vector.load %arg1[%c0_52, %c6, %c0_53, %c0_54] : memref<1x9x32x1024xbf16, #tpu.memory_space<vmem>>, vector<1x1x32x1024xbf16>
    %70 = vector.shape_cast %69 : vector<1x1x32x1024xbf16> to vector<32x1024xbf16>
    %cst_55 = arith.constant dense<0.000000e+00> : vector<16x1024xf32>
    %71 = tpu.matmul %0, %70, %cst_55 {dimension_numbers = #tpu.dot_dimension_numbers<[1], [0], [0], [1], [0, 0, 1, 1], [], []>} : vector<16x32xbf16>, vector<32x1024xbf16>, vector<16x1024xf32> -> vector<16x1024xf32>
    %72 = vector.broadcast %1 : vector<16x1xf32> to vector<16x1024xf32>
    %73 = arith.addf %71, %72 : vector<16x1024xf32>
    %74 = math.tanh %73 : vector<16x1024xf32>
    %c6_56 = arith.constant 6 : index
    %c0_57 = arith.constant 0 : index
    %c0_58 = arith.constant 0 : index
    %75 = vector.load %arg4[%c6_56, %c0_57, %c0_58] : memref<9x32x16xbf16, #tpu.memory_space<vmem>>, vector<1x32x16xbf16>
    %76 = vector.shape_cast %75 : vector<1x32x16xbf16> to vector<32x16xbf16>
    %77 = arith.truncf %74 : vector<16x1024xf32> to vector<16x1024xbf16>
    %cst_59 = arith.constant dense<0.000000e+00> : vector<32x1024xf32>
    %78 = tpu.matmul %76, %77, %cst_59 {dimension_numbers = #tpu.dot_dimension_numbers<[1], [0], [0], [1], [0, 0, 1, 1], [], []>} : vector<32x16xbf16>, vector<16x1024xbf16>, vector<32x1024xf32> -> vector<32x1024xf32>
    %79 = arith.addf %68, %78 : vector<32x1024xf32>
    %c0_60 = arith.constant 0 : index
    %c7 = arith.constant 7 : index
    %c0_61 = arith.constant 0 : index
    %c0_62 = arith.constant 0 : index
    %80 = vector.load %arg1[%c0_60, %c7, %c0_61, %c0_62] : memref<1x9x32x1024xbf16, #tpu.memory_space<vmem>>, vector<1x1x32x1024xbf16>
    %81 = vector.shape_cast %80 : vector<1x1x32x1024xbf16> to vector<32x1024xbf16>
    %cst_63 = arith.constant dense<0.000000e+00> : vector<16x1024xf32>
    %82 = tpu.matmul %0, %81, %cst_63 {dimension_numbers = #tpu.dot_dimension_numbers<[1], [0], [0], [1], [0, 0, 1, 1], [], []>} : vector<16x32xbf16>, vector<32x1024xbf16>, vector<16x1024xf32> -> vector<16x1024xf32>
    %83 = vector.broadcast %1 : vector<16x1xf32> to vector<16x1024xf32>
    %84 = arith.addf %82, %83 : vector<16x1024xf32>
    %85 = math.tanh %84 : vector<16x1024xf32>
    %c7_64 = arith.constant 7 : index
    %c0_65 = arith.constant 0 : index
    %c0_66 = arith.constant 0 : index
    %86 = vector.load %arg4[%c7_64, %c0_65, %c0_66] : memref<9x32x16xbf16, #tpu.memory_space<vmem>>, vector<1x32x16xbf16>
    %87 = vector.shape_cast %86 : vector<1x32x16xbf16> to vector<32x16xbf16>
    %88 = arith.truncf %85 : vector<16x1024xf32> to vector<16x1024xbf16>
    %cst_67 = arith.constant dense<0.000000e+00> : vector<32x1024xf32>
    %89 = tpu.matmul %87, %88, %cst_67 {dimension_numbers = #tpu.dot_dimension_numbers<[1], [0], [0], [1], [0, 0, 1, 1], [], []>} : vector<32x16xbf16>, vector<16x1024xbf16>, vector<32x1024xf32> -> vector<32x1024xf32>
    %90 = arith.addf %79, %89 : vector<32x1024xf32>
    %c0_68 = arith.constant 0 : index
    %c8 = arith.constant 8 : index
    %c0_69 = arith.constant 0 : index
    %c0_70 = arith.constant 0 : index
    %91 = vector.load %arg1[%c0_68, %c8, %c0_69, %c0_70] : memref<1x9x32x1024xbf16, #tpu.memory_space<vmem>>, vector<1x1x32x1024xbf16>
    %92 = vector.shape_cast %91 : vector<1x1x32x1024xbf16> to vector<32x1024xbf16>
    %cst_71 = arith.constant dense<0.000000e+00> : vector<16x1024xf32>
    %93 = tpu.matmul %0, %92, %cst_71 {dimension_numbers = #tpu.dot_dimension_numbers<[1], [0], [0], [1], [0, 0, 1, 1], [], []>} : vector<16x32xbf16>, vector<32x1024xbf16>, vector<16x1024xf32> -> vector<16x1024xf32>
    %94 = vector.broadcast %1 : vector<16x1xf32> to vector<16x1024xf32>
    %95 = arith.addf %93, %94 : vector<16x1024xf32>
    %96 = math.tanh %95 : vector<16x1024xf32>
    %c8_72 = arith.constant 8 : index
    %c0_73 = arith.constant 0 : index
    %c0_74 = arith.constant 0 : index
    %97 = vector.load %arg4[%c8_72, %c0_73, %c0_74] : memref<9x32x16xbf16, #tpu.memory_space<vmem>>, vector<1x32x16xbf16>
    %98 = vector.shape_cast %97 : vector<1x32x16xbf16> to vector<32x16xbf16>
    %99 = arith.truncf %96 : vector<16x1024xf32> to vector<16x1024xbf16>
    %cst_75 = arith.constant dense<0.000000e+00> : vector<32x1024xf32>
    %100 = tpu.matmul %98, %99, %cst_75 {dimension_numbers = #tpu.dot_dimension_numbers<[1], [0], [0], [1], [0, 0, 1, 1], [], []>} : vector<32x16xbf16>, vector<16x1024xbf16>, vector<32x1024xf32> -> vector<32x1024xf32>
    %101 = arith.addf %90, %100 : vector<32x1024xf32>
    %c0_76 = arith.constant 0 : index
    %c0_77 = arith.constant 0 : index
    %102 = vector.load %arg5[%c0_76, %c0_77] : memref<32x1xf32, #tpu.memory_space<vmem>>, vector<32x1xf32>
    %103 = vector.broadcast %102 : vector<32x1xf32> to vector<32x1024xf32>
    %104 = arith.addf %101, %103 : vector<32x1024xf32>
    %105 = math.tanh %104 : vector<32x1024xf32>
    %106 = vector.extract_strided_slice %105 {offsets = [0, 0], sizes = [32, 128], strides = [1, 1]} : vector<32x1024xf32> to vector<32x128xf32>
    %c0_78 = arith.constant 0 : index
    %c0_79 = arith.constant 0 : index
    %107 = vector.load %arg11[%c0_78, %c0_79] : memref<256x128xf32, #tpu.memory_space<vmem>>, vector<32x128xf32>
    tpu.vector_store %arg11[%c0_78, %c0_79], %106 {strides = array<i32>} : memref<256x128xf32, #tpu.memory_space<vmem>>, vector<32x128xf32>,
    %108 = vector.extract_strided_slice %105 {offsets = [0, 128], sizes = [32, 128], strides = [1, 1]} : vector<32x1024xf32> to vector<32x128xf32>
    %c32 = arith.constant 32 : index
    %c0_80 = arith.constant 0 : index
    %109 = vector.load %arg11[%c32, %c0_80] : memref<256x128xf32, #tpu.memory_space<vmem>>, vector<32x128xf32>
    tpu.vector_store %arg11[%c32, %c0_80], %108 {strides = array<i32>} : memref<256x128xf32, #tpu.memory_space<vmem>>, vector<32x128xf32>,
    %110 = vector.extract_strided_slice %105 {offsets = [0, 256], sizes = [32, 128], strides = [1, 1]} : vector<32x1024xf32> to vector<32x128xf32>
    %c64 = arith.constant 64 : index
    %c0_81 = arith.constant 0 : index
    %111 = vector.load %arg11[%c64, %c0_81] : memref<256x128xf32, #tpu.memory_space<vmem>>, vector<32x128xf32>
    tpu.vector_store %arg11[%c64, %c0_81], %110 {strides = array<i32>} : memref<256x128xf32, #tpu.memory_space<vmem>>, vector<32x128xf32>,
    %112 = vector.extract_strided_slice %105 {offsets = [0, 384], sizes = [32, 128], strides = [1, 1]} : vector<32x1024xf32> to vector<32x128xf32>
    %c96 = arith.constant 96 : index
    %c0_82 = arith.constant 0 : index
    %113 = vector.load %arg11[%c96, %c0_82] : memref<256x128xf32, #tpu.memory_space<vmem>>, vector<32x128xf32>
    tpu.vector_store %arg11[%c96, %c0_82], %112 {strides = array<i32>} : memref<256x128xf32, #tpu.memory_space<vmem>>, vector<32x128xf32>,
    %114 = vector.extract_strided_slice %105 {offsets = [0, 512], sizes = [32, 128], strides = [1, 1]} : vector<32x1024xf32> to vector<32x128xf32>
    %c128 = arith.constant 128 : index
    %c0_83 = arith.constant 0 : index
    %115 = vector.load %arg11[%c128, %c0_83] : memref<256x128xf32, #tpu.memory_space<vmem>>, vector<32x128xf32>
    tpu.vector_store %arg11[%c128, %c0_83], %114 {strides = array<i32>} : memref<256x128xf32, #tpu.memory_space<vmem>>, vector<32x128xf32>,
    %116 = vector.extract_strided_slice %105 {offsets = [0, 640], sizes = [32, 128], strides = [1, 1]} : vector<32x1024xf32> to vector<32x128xf32>
    %c160 = arith.constant 160 : index
    %c0_84 = arith.constant 0 : index
    %117 = vector.load %arg11[%c160, %c0_84] : memref<256x128xf32, #tpu.memory_space<vmem>>, vector<32x128xf32>
    tpu.vector_store %arg11[%c160, %c0_84], %116 {strides = array<i32>} : memref<256x128xf32, #tpu.memory_space<vmem>>, vector<32x128xf32>,
    %118 = vector.extract_strided_slice %105 {offsets = [0, 768], sizes = [32, 128], strides = [1, 1]} : vector<32x1024xf32> to vector<32x128xf32>
    %c192 = arith.constant 192 : index
    %c0_85 = arith.constant 0 : index
    %119 = vector.load %arg11[%c192, %c0_85] : memref<256x128xf32, #tpu.memory_space<vmem>>, vector<32x128xf32>
    tpu.vector_store %arg11[%c192, %c0_85], %118 {strides = array<i32>} : memref<256x128xf32, #tpu.memory_space<vmem>>, vector<32x128xf32>,
    %120 = vector.extract_strided_slice %105 {offsets = [0, 896], sizes = [32, 128], strides = [1, 1]} : vector<32x1024xf32> to vector<32x128xf32>
    %c224 = arith.constant 224 : index
    %c0_86 = arith.constant 0 : index
    %121 = vector.load %arg11[%c224, %c0_86] : memref<256x128xf32, #tpu.memory_space<vmem>>, vector<32x128xf32>
    tpu.vector_store %arg11[%c224, %c0_86], %120 {strides = array<i32>} : memref<256x128xf32, #tpu.memory_space<vmem>>, vector<32x128xf32>,
    %cst_87 = arith.constant 0.000000e+00 : f32
    %122 = vector.broadcast %cst_87 : f32 to vector<8x256xf32>
    %c0_88 = arith.constant 0 : index
    %c0_89 = arith.constant 0 : index
    %123 = tpu.strided_load %arg11[%c0_88, %c0_89] {strides = array<i32: 32, 1>} : memref<256x128xf32, #tpu.memory_space<vmem>>, vector<8x128xf32>
    %124 = arith.truncf %123 : vector<8x128xf32> to vector<8x128xbf16>
    %c0_90 = arith.constant 0 : index
    %c0_91 = arith.constant 0 : index
    %c0_92 = arith.constant 0 : index
    %125 = vector.load %arg6[%c0_90, %c0_91, %c0_92] : memref<32x128x256xbf16, #tpu.memory_space<vmem>>, vector<1x128x256xbf16>
    %126 = vector.shape_cast %125 : vector<1x128x256xbf16> to vector<128x256xbf16>
    %cst_93 = arith.constant dense<0.000000e+00> : vector<8x256xf32>
    %127 = tpu.matmul %124, %126, %cst_93 {dimension_numbers = #tpu.dot_dimension_numbers<[1], [0], [0], [1], [0, 0, 1, 1], [], []>} : vector<8x128xbf16>, vector<128x256xbf16>, vector<8x256xf32> -> vector<8x256xf32>
    %128 = arith.addf %122, %127 : vector<8x256xf32>
    %c1_94 = arith.constant 1 : index
    %c0_95 = arith.constant 0 : index
    %129 = tpu.strided_load %arg11[%c1_94, %c0_95] {strides = array<i32: 32, 1>} : memref<256x128xf32, #tpu.memory_space<vmem>>, vector<8x128xf32>
    %130 = arith.truncf %129 : vector<8x128xf32> to vector<8x128xbf16>
    %c1_96 = arith.constant 1 : index
    %c0_97 = arith.constant 0 : index
    %c0_98 = arith.constant 0 : index
    %131 = vector.load %arg6[%c1_96, %c0_97, %c0_98] : memref<32x128x256xbf16, #tpu.memory_space<vmem>>, vector<1x128x256xbf16>
    %132 = vector.shape_cast %131 : vector<1x128x256xbf16> to vector<128x256xbf16>
    %cst_99 = arith.constant dense<0.000000e+00> : vector<8x256xf32>
    %133 = tpu.matmul %130, %132, %cst_99 {dimension_numbers = #tpu.dot_dimension_numbers<[1], [0], [0], [1], [0, 0, 1, 1], [], []>} : vector<8x128xbf16>, vector<128x256xbf16>, vector<8x256xf32> -> vector<8x256xf32>
    %134 = arith.addf %128, %133 : vector<8x256xf32>
    %c2_100 = arith.constant 2 : index
    %c0_101 = arith.constant 0 : index
    %135 = tpu.strided_load %arg11[%c2_100, %c0_101] {strides = array<i32: 32, 1>} : memref<256x128xf32, #tpu.memory_space<vmem>>, vector<8x128xf32>
    %136 = arith.truncf %135 : vector<8x128xf32> to vector<8x128xbf16>
    %c2_102 = arith.constant 2 : index
    %c0_103 = arith.constant 0 : index
    %c0_104 = arith.constant 0 : index
    %137 = vector.load %arg6[%c2_102, %c0_103, %c0_104] : memref<32x128x256xbf16, #tpu.memory_space<vmem>>, vector<1x128x256xbf16>
    %138 = vector.shape_cast %137 : vector<1x128x256xbf16> to vector<128x256xbf16>
    %cst_105 = arith.constant dense<0.000000e+00> : vector<8x256xf32>
    %139 = tpu.matmul %136, %138, %cst_105 {dimension_numbers = #tpu.dot_dimension_numbers<[1], [0], [0], [1], [0, 0, 1, 1], [], []>} : vector<8x128xbf16>, vector<128x256xbf16>, vector<8x256xf32> -> vector<8x256xf32>
    %140 = arith.addf %134, %139 : vector<8x256xf32>
    %c3_106 = arith.constant 3 : index
    %c0_107 = arith.constant 0 : index
    %141 = tpu.strided_load %arg11[%c3_106, %c0_107] {strides = array<i32: 32, 1>} : memref<256x128xf32, #tpu.memory_space<vmem>>, vector<8x128xf32>
    %142 = arith.truncf %141 : vector<8x128xf32> to vector<8x128xbf16>
    %c3_108 = arith.constant 3 : index
    %c0_109 = arith.constant 0 : index
    %c0_110 = arith.constant 0 : index
    %143 = vector.load %arg6[%c3_108, %c0_109, %c0_110] : memref<32x128x256xbf16, #tpu.memory_space<vmem>>, vector<1x128x256xbf16>
    %144 = vector.shape_cast %143 : vector<1x128x256xbf16> to vector<128x256xbf16>
    %cst_111 = arith.constant dense<0.000000e+00> : vector<8x256xf32>
    %145 = tpu.matmul %142, %144, %cst_111 {dimension_numbers = #tpu.dot_dimension_numbers<[1], [0], [0], [1], [0, 0, 1, 1], [], []>} : vector<8x128xbf16>, vector<128x256xbf16>, vector<8x256xf32> -> vector<8x256xf32>
    %146 = arith.addf %140, %145 : vector<8x256xf32>
    %c4_112 = arith.constant 4 : index
    %c0_113 = arith.constant 0 : index
    %147 = tpu.strided_load %arg11[%c4_112, %c0_113] {strides = array<i32: 32, 1>} : memref<256x128xf32, #tpu.memory_space<vmem>>, vector<8x128xf32>
    %148 = arith.truncf %147 : vector<8x128xf32> to vector<8x128xbf16>
    %c4_114 = arith.constant 4 : index
    %c0_115 = arith.constant 0 : index
    %c0_116 = arith.constant 0 : index
    %149 = vector.load %arg6[%c4_114, %c0_115, %c0_116] : memref<32x128x256xbf16, #tpu.memory_space<vmem>>, vector<1x128x256xbf16>
    %150 = vector.shape_cast %149 : vector<1x128x256xbf16> to vector<128x256xbf16>
    %cst_117 = arith.constant dense<0.000000e+00> : vector<8x256xf32>
    %151 = tpu.matmul %148, %150, %cst_117 {dimension_numbers = #tpu.dot_dimension_numbers<[1], [0], [0], [1], [0, 0, 1, 1], [], []>} : vector<8x128xbf16>, vector<128x256xbf16>, vector<8x256xf32> -> vector<8x256xf32>
    %152 = arith.addf %146, %151 : vector<8x256xf32>
    %c5_118 = arith.constant 5 : index
    %c0_119 = arith.constant 0 : index
    %153 = tpu.strided_load %arg11[%c5_118, %c0_119] {strides = array<i32: 32, 1>} : memref<256x128xf32, #tpu.memory_space<vmem>>, vector<8x128xf32>
    %154 = arith.truncf %153 : vector<8x128xf32> to vector<8x128xbf16>
    %c5_120 = arith.constant 5 : index
    %c0_121 = arith.constant 0 : index
    %c0_122 = arith.constant 0 : index
    %155 = vector.load %arg6[%c5_120, %c0_121, %c0_122] : memref<32x128x256xbf16, #tpu.memory_space<vmem>>, vector<1x128x256xbf16>
    %156 = vector.shape_cast %155 : vector<1x128x256xbf16> to vector<128x256xbf16>
    %cst_123 = arith.constant dense<0.000000e+00> : vector<8x256xf32>
    %157 = tpu.matmul %154, %156, %cst_123 {dimension_numbers = #tpu.dot_dimension_numbers<[1], [0], [0], [1], [0, 0, 1, 1], [], []>} : vector<8x128xbf16>, vector<128x256xbf16>, vector<8x256xf32> -> vector<8x256xf32>
    %158 = arith.addf %152, %157 : vector<8x256xf32>
    %c6_124 = arith.constant 6 : index
    %c0_125 = arith.constant 0 : index
    %159 = tpu.strided_load %arg11[%c6_124, %c0_125] {strides = array<i32: 32, 1>} : memref<256x128xf32, #tpu.memory_space<vmem>>, vector<8x128xf32>
    %160 = arith.truncf %159 : vector<8x128xf32> to vector<8x128xbf16>
    %c6_126 = arith.constant 6 : index
    %c0_127 = arith.constant 0 : index
    %c0_128 = arith.constant 0 : index
    %161 = vector.load %arg6[%c6_126, %c0_127, %c0_128] : memref<32x128x256xbf16, #tpu.memory_space<vmem>>, vector<1x128x256xbf16>
    %162 = vector.shape_cast %161 : vector<1x128x256xbf16> to vector<128x256xbf16>
    %cst_129 = arith.constant dense<0.000000e+00> : vector<8x256xf32>
    %163 = tpu.matmul %160, %162, %cst_129 {dimension_numbers = #tpu.dot_dimension_numbers<[1], [0], [0], [1], [0, 0, 1, 1], [], []>} : vector<8x128xbf16>, vector<128x256xbf16>, vector<8x256xf32> -> vector<8x256xf32>
    %164 = arith.addf %158, %163 : vector<8x256xf32>
    %c7_130 = arith.constant 7 : index
    %c0_131 = arith.constant 0 : index
    %165 = tpu.strided_load %arg11[%c7_130, %c0_131] {strides = array<i32: 32, 1>} : memref<256x128xf32, #tpu.memory_space<vmem>>, vector<8x128xf32>
    %166 = arith.truncf %165 : vector<8x128xf32> to vector<8x128xbf16>
    %c7_132 = arith.constant 7 : index
    %c0_133 = arith.constant 0 : index
    %c0_134 = arith.constant 0 : index
    %167 = vector.load %arg6[%c7_132, %c0_133, %c0_134] : memref<32x128x256xbf16, #tpu.memory_space<vmem>>, vector<1x128x256xbf16>
    %168 = vector.shape_cast %167 : vector<1x128x256xbf16> to vector<128x256xbf16>
    %cst_135 = arith.constant dense<0.000000e+00> : vector<8x256xf32>
    %169 = tpu.matmul %166, %168, %cst_135 {dimension_numbers = #tpu.dot_dimension_numbers<[1], [0], [0], [1], [0, 0, 1, 1], [], []>} : vector<8x128xbf16>, vector<128x256xbf16>, vector<8x256xf32> -> vector<8x256xf32>
    %170 = arith.addf %164, %169 : vector<8x256xf32>
    %c8_136 = arith.constant 8 : index
    %c0_137 = arith.constant 0 : index
    %171 = tpu.strided_load %arg11[%c8_136, %c0_137] {strides = array<i32: 32, 1>} : memref<256x128xf32, #tpu.memory_space<vmem>>, vector<8x128xf32>
    %172 = arith.truncf %171 : vector<8x128xf32> to vector<8x128xbf16>
    %c8_138 = arith.constant 8 : index
    %c0_139 = arith.constant 0 : index
    %c0_140 = arith.constant 0 : index
    %173 = vector.load %arg6[%c8_138, %c0_139, %c0_140] : memref<32x128x256xbf16, #tpu.memory_space<vmem>>, vector<1x128x256xbf16>
    %174 = vector.shape_cast %173 : vector<1x128x256xbf16> to vector<128x256xbf16>
    %cst_141 = arith.constant dense<0.000000e+00> : vector<8x256xf32>
    %175 = tpu.matmul %172, %174, %cst_141 {dimension_numbers = #tpu.dot_dimension_numbers<[1], [0], [0], [1], [0, 0, 1, 1], [], []>} : vector<8x128xbf16>, vector<128x256xbf16>, vector<8x256xf32> -> vector<8x256xf32>
    %176 = arith.addf %170, %175 : vector<8x256xf32>
    %c9 = arith.constant 9 : index
    %c0_142 = arith.constant 0 : index
    %177 = tpu.strided_load %arg11[%c9, %c0_142] {strides = array<i32: 32, 1>} : memref<256x128xf32, #tpu.memory_space<vmem>>, vector<8x128xf32>
    %178 = arith.truncf %177 : vector<8x128xf32> to vector<8x128xbf16>
    %c9_143 = arith.constant 9 : index
    %c0_144 = arith.constant 0 : index
    %c0_145 = arith.constant 0 : index
    %179 = vector.load %arg6[%c9_143, %c0_144, %c0_145] : memref<32x128x256xbf16, #tpu.memory_space<vmem>>, vector<1x128x256xbf16>
    %180 = vector.shape_cast %179 : vector<1x128x256xbf16> to vector<128x256xbf16>
    %cst_146 = arith.constant dense<0.000000e+00> : vector<8x256xf32>
    %181 = tpu.matmul %178, %180, %cst_146 {dimension_numbers = #tpu.dot_dimension_numbers<[1], [0], [0], [1], [0, 0, 1, 1], [], []>} : vector<8x128xbf16>, vector<128x256xbf16>, vector<8x256xf32> -> vector<8x256xf32>
    %182 = arith.addf %176, %181 : vector<8x256xf32>
    %c10 = arith.constant 10 : index
    %c0_147 = arith.constant 0 : index
    %183 = tpu.strided_load %arg11[%c10, %c0_147] {strides = array<i32: 32, 1>} : memref<256x128xf32, #tpu.memory_space<vmem>>, vector<8x128xf32>
    %184 = arith.truncf %183 : vector<8x128xf32> to vector<8x128xbf16>
    %c10_148 = arith.constant 10 : index
    %c0_149 = arith.constant 0 : index
    %c0_150 = arith.constant 0 : index
    %185 = vector.load %arg6[%c10_148, %c0_149, %c0_150] : memref<32x128x256xbf16, #tpu.memory_space<vmem>>, vector<1x128x256xbf16>
    %186 = vector.shape_cast %185 : vector<1x128x256xbf16> to vector<128x256xbf16>
    %cst_151 = arith.constant dense<0.000000e+00> : vector<8x256xf32>
    %187 = tpu.matmul %184, %186, %cst_151 {dimension_numbers = #tpu.dot_dimension_numbers<[1], [0], [0], [1], [0, 0, 1, 1], [], []>} : vector<8x128xbf16>, vector<128x256xbf16>, vector<8x256xf32> -> vector<8x256xf32>
    %188 = arith.addf %182, %187 : vector<8x256xf32>
    %c11 = arith.constant 11 : index
    %c0_152 = arith.constant 0 : index
    %189 = tpu.strided_load %arg11[%c11, %c0_152] {strides = array<i32: 32, 1>} : memref<256x128xf32, #tpu.memory_space<vmem>>, vector<8x128xf32>
    %190 = arith.truncf %189 : vector<8x128xf32> to vector<8x128xbf16>
    %c11_153 = arith.constant 11 : index
    %c0_154 = arith.constant 0 : index
    %c0_155 = arith.constant 0 : index
    %191 = vector.load %arg6[%c11_153, %c0_154, %c0_155] : memref<32x128x256xbf16, #tpu.memory_space<vmem>>, vector<1x128x256xbf16>
    %192 = vector.shape_cast %191 : vector<1x128x256xbf16> to vector<128x256xbf16>
    %cst_156 = arith.constant dense<0.000000e+00> : vector<8x256xf32>
    %193 = tpu.matmul %190, %192, %cst_156 {dimension_numbers = #tpu.dot_dimension_numbers<[1], [0], [0], [1], [0, 0, 1, 1], [], []>} : vector<8x128xbf16>, vector<128x256xbf16>, vector<8x256xf32> -> vector<8x256xf32>
    %194 = arith.addf %188, %193 : vector<8x256xf32>
    %c12 = arith.constant 12 : index
    %c0_157 = arith.constant 0 : index
    %195 = tpu.strided_load %arg11[%c12, %c0_157] {strides = array<i32: 32, 1>} : memref<256x128xf32, #tpu.memory_space<vmem>>, vector<8x128xf32>
    %196 = arith.truncf %195 : vector<8x128xf32> to vector<8x128xbf16>
    %c12_158 = arith.constant 12 : index
    %c0_159 = arith.constant 0 : index
    %c0_160 = arith.constant 0 : index
    %197 = vector.load %arg6[%c12_158, %c0_159, %c0_160] : memref<32x128x256xbf16, #tpu.memory_space<vmem>>, vector<1x128x256xbf16>
    %198 = vector.shape_cast %197 : vector<1x128x256xbf16> to vector<128x256xbf16>
    %cst_161 = arith.constant dense<0.000000e+00> : vector<8x256xf32>
    %199 = tpu.matmul %196, %198, %cst_161 {dimension_numbers = #tpu.dot_dimension_numbers<[1], [0], [0], [1], [0, 0, 1, 1], [], []>} : vector<8x128xbf16>, vector<128x256xbf16>, vector<8x256xf32> -> vector<8x256xf32>
    %200 = arith.addf %194, %199 : vector<8x256xf32>
    %c13 = arith.constant 13 : index
    %c0_162 = arith.constant 0 : index
    %201 = tpu.strided_load %arg11[%c13, %c0_162] {strides = array<i32: 32, 1>} : memref<256x128xf32, #tpu.memory_space<vmem>>, vector<8x128xf32>
    %202 = arith.truncf %201 : vector<8x128xf32> to vector<8x128xbf16>
    %c13_163 = arith.constant 13 : index
    %c0_164 = arith.constant 0 : index
    %c0_165 = arith.constant 0 : index
    %203 = vector.load %arg6[%c13_163, %c0_164, %c0_165] : memref<32x128x256xbf16, #tpu.memory_space<vmem>>, vector<1x128x256xbf16>
    %204 = vector.shape_cast %203 : vector<1x128x256xbf16> to vector<128x256xbf16>
    %cst_166 = arith.constant dense<0.000000e+00> : vector<8x256xf32>
    %205 = tpu.matmul %202, %204, %cst_166 {dimension_numbers = #tpu.dot_dimension_numbers<[1], [0], [0], [1], [0, 0, 1, 1], [], []>} : vector<8x128xbf16>, vector<128x256xbf16>, vector<8x256xf32> -> vector<8x256xf32>
    %206 = arith.addf %200, %205 : vector<8x256xf32>
    %c14 = arith.constant 14 : index
    %c0_167 = arith.constant 0 : index
    %207 = tpu.strided_load %arg11[%c14, %c0_167] {strides = array<i32: 32, 1>} : memref<256x128xf32, #tpu.memory_space<vmem>>, vector<8x128xf32>
    %208 = arith.truncf %207 : vector<8x128xf32> to vector<8x128xbf16>
    %c14_168 = arith.constant 14 : index
    %c0_169 = arith.constant 0 : index
    %c0_170 = arith.constant 0 : index
    %209 = vector.load %arg6[%c14_168, %c0_169, %c0_170] : memref<32x128x256xbf16, #tpu.memory_space<vmem>>, vector<1x128x256xbf16>
    %210 = vector.shape_cast %209 : vector<1x128x256xbf16> to vector<128x256xbf16>
    %cst_171 = arith.constant dense<0.000000e+00> : vector<8x256xf32>
    %211 = tpu.matmul %208, %210, %cst_171 {dimension_numbers = #tpu.dot_dimension_numbers<[1], [0], [0], [1], [0, 0, 1, 1], [], []>} : vector<8x128xbf16>, vector<128x256xbf16>, vector<8x256xf32> -> vector<8x256xf32>
    %212 = arith.addf %206, %211 : vector<8x256xf32>
    %c15 = arith.constant 15 : index
    %c0_172 = arith.constant 0 : index
    %213 = tpu.strided_load %arg11[%c15, %c0_172] {strides = array<i32: 32, 1>} : memref<256x128xf32, #tpu.memory_space<vmem>>, vector<8x128xf32>
    %214 = arith.truncf %213 : vector<8x128xf32> to vector<8x128xbf16>
    %c15_173 = arith.constant 15 : index
    %c0_174 = arith.constant 0 : index
    %c0_175 = arith.constant 0 : index
    %215 = vector.load %arg6[%c15_173, %c0_174, %c0_175] : memref<32x128x256xbf16, #tpu.memory_space<vmem>>, vector<1x128x256xbf16>
    %216 = vector.shape_cast %215 : vector<1x128x256xbf16> to vector<128x256xbf16>
    %cst_176 = arith.constant dense<0.000000e+00> : vector<8x256xf32>
    %217 = tpu.matmul %214, %216, %cst_176 {dimension_numbers = #tpu.dot_dimension_numbers<[1], [0], [0], [1], [0, 0, 1, 1], [], []>} : vector<8x128xbf16>, vector<128x256xbf16>, vector<8x256xf32> -> vector<8x256xf32>
    %218 = arith.addf %212, %217 : vector<8x256xf32>
    %c16 = arith.constant 16 : index
    %c0_177 = arith.constant 0 : index
    %219 = tpu.strided_load %arg11[%c16, %c0_177] {strides = array<i32: 32, 1>} : memref<256x128xf32, #tpu.memory_space<vmem>>, vector<8x128xf32>
    %220 = arith.truncf %219 : vector<8x128xf32> to vector<8x128xbf16>
    %c16_178 = arith.constant 16 : index
    %c0_179 = arith.constant 0 : index
    %c0_180 = arith.constant 0 : index
    %221 = vector.load %arg6[%c16_178, %c0_179, %c0_180] : memref<32x128x256xbf16, #tpu.memory_space<vmem>>, vector<1x128x256xbf16>
    %222 = vector.shape_cast %221 : vector<1x128x256xbf16> to vector<128x256xbf16>
    %cst_181 = arith.constant dense<0.000000e+00> : vector<8x256xf32>
    %223 = tpu.matmul %220, %222, %cst_181 {dimension_numbers = #tpu.dot_dimension_numbers<[1], [0], [0], [1], [0, 0, 1, 1], [], []>} : vector<8x128xbf16>, vector<128x256xbf16>, vector<8x256xf32> -> vector<8x256xf32>
    %224 = arith.addf %218, %223 : vector<8x256xf32>
    %c17 = arith.constant 17 : index
    %c0_182 = arith.constant 0 : index
    %225 = tpu.strided_load %arg11[%c17, %c0_182] {strides = array<i32: 32, 1>} : memref<256x128xf32, #tpu.memory_space<vmem>>, vector<8x128xf32>
    %226 = arith.truncf %225 : vector<8x128xf32> to vector<8x128xbf16>
    %c17_183 = arith.constant 17 : index
    %c0_184 = arith.constant 0 : index
    %c0_185 = arith.constant 0 : index
    %227 = vector.load %arg6[%c17_183, %c0_184, %c0_185] : memref<32x128x256xbf16, #tpu.memory_space<vmem>>, vector<1x128x256xbf16>
    %228 = vector.shape_cast %227 : vector<1x128x256xbf16> to vector<128x256xbf16>
    %cst_186 = arith.constant dense<0.000000e+00> : vector<8x256xf32>
    %229 = tpu.matmul %226, %228, %cst_186 {dimension_numbers = #tpu.dot_dimension_numbers<[1], [0], [0], [1], [0, 0, 1, 1], [], []>} : vector<8x128xbf16>, vector<128x256xbf16>, vector<8x256xf32> -> vector<8x256xf32>
    %230 = arith.addf %224, %229 : vector<8x256xf32>
    %c18 = arith.constant 18 : index
    %c0_187 = arith.constant 0 : index
    %231 = tpu.strided_load %arg11[%c18, %c0_187] {strides = array<i32: 32, 1>} : memref<256x128xf32, #tpu.memory_space<vmem>>, vector<8x128xf32>
    %232 = arith.truncf %231 : vector<8x128xf32> to vector<8x128xbf16>
    %c18_188 = arith.constant 18 : index
    %c0_189 = arith.constant 0 : index
    %c0_190 = arith.constant 0 : index
    %233 = vector.load %arg6[%c18_188, %c0_189, %c0_190] : memref<32x128x256xbf16, #tpu.memory_space<vmem>>, vector<1x128x256xbf16>
    %234 = vector.shape_cast %233 : vector<1x128x256xbf16> to vector<128x256xbf16>
    %cst_191 = arith.constant dense<0.000000e+00> : vector<8x256xf32>
    %235 = tpu.matmul %232, %234, %cst_191 {dimension_numbers = #tpu.dot_dimension_numbers<[1], [0], [0], [1], [0, 0, 1, 1], [], []>} : vector<8x128xbf16>, vector<128x256xbf16>, vector<8x256xf32> -> vector<8x256xf32>
    %236 = arith.addf %230, %235 : vector<8x256xf32>
    %c19 = arith.constant 19 : index
    %c0_192 = arith.constant 0 : index
    %237 = tpu.strided_load %arg11[%c19, %c0_192] {strides = array<i32: 32, 1>} : memref<256x128xf32, #tpu.memory_space<vmem>>, vector<8x128xf32>
    %238 = arith.truncf %237 : vector<8x128xf32> to vector<8x128xbf16>
    %c19_193 = arith.constant 19 : index
    %c0_194 = arith.constant 0 : index
    %c0_195 = arith.constant 0 : index
    %239 = vector.load %arg6[%c19_193, %c0_194, %c0_195] : memref<32x128x256xbf16, #tpu.memory_space<vmem>>, vector<1x128x256xbf16>
    %240 = vector.shape_cast %239 : vector<1x128x256xbf16> to vector<128x256xbf16>
    %cst_196 = arith.constant dense<0.000000e+00> : vector<8x256xf32>
    %241 = tpu.matmul %238, %240, %cst_196 {dimension_numbers = #tpu.dot_dimension_numbers<[1], [0], [0], [1], [0, 0, 1, 1], [], []>} : vector<8x128xbf16>, vector<128x256xbf16>, vector<8x256xf32> -> vector<8x256xf32>
    %242 = arith.addf %236, %241 : vector<8x256xf32>
    %c20 = arith.constant 20 : index
    %c0_197 = arith.constant 0 : index
    %243 = tpu.strided_load %arg11[%c20, %c0_197] {strides = array<i32: 32, 1>} : memref<256x128xf32, #tpu.memory_space<vmem>>, vector<8x128xf32>
    %244 = arith.truncf %243 : vector<8x128xf32> to vector<8x128xbf16>
    %c20_198 = arith.constant 20 : index
    %c0_199 = arith.constant 0 : index
    %c0_200 = arith.constant 0 : index
    %245 = vector.load %arg6[%c20_198, %c0_199, %c0_200] : memref<32x128x256xbf16, #tpu.memory_space<vmem>>, vector<1x128x256xbf16>
    %246 = vector.shape_cast %245 : vector<1x128x256xbf16> to vector<128x256xbf16>
    %cst_201 = arith.constant dense<0.000000e+00> : vector<8x256xf32>
    %247 = tpu.matmul %244, %246, %cst_201 {dimension_numbers = #tpu.dot_dimension_numbers<[1], [0], [0], [1], [0, 0, 1, 1], [], []>} : vector<8x128xbf16>, vector<128x256xbf16>, vector<8x256xf32> -> vector<8x256xf32>
    %248 = arith.addf %242, %247 : vector<8x256xf32>
    %c21 = arith.constant 21 : index
    %c0_202 = arith.constant 0 : index
    %249 = tpu.strided_load %arg11[%c21, %c0_202] {strides = array<i32: 32, 1>} : memref<256x128xf32, #tpu.memory_space<vmem>>, vector<8x128xf32>
    %250 = arith.truncf %249 : vector<8x128xf32> to vector<8x128xbf16>
    %c21_203 = arith.constant 21 : index
    %c0_204 = arith.constant 0 : index
    %c0_205 = arith.constant 0 : index
    %251 = vector.load %arg6[%c21_203, %c0_204, %c0_205] : memref<32x128x256xbf16, #tpu.memory_space<vmem>>, vector<1x128x256xbf16>
    %252 = vector.shape_cast %251 : vector<1x128x256xbf16> to vector<128x256xbf16>
    %cst_206 = arith.constant dense<0.000000e+00> : vector<8x256xf32>
    %253 = tpu.matmul %250, %252, %cst_206 {dimension_numbers = #tpu.dot_dimension_numbers<[1], [0], [0], [1], [0, 0, 1, 1], [], []>} : vector<8x128xbf16>, vector<128x256xbf16>, vector<8x256xf32> -> vector<8x256xf32>
    %254 = arith.addf %248, %253 : vector<8x256xf32>
    %c22 = arith.constant 22 : index
    %c0_207 = arith.constant 0 : index
    %255 = tpu.strided_load %arg11[%c22, %c0_207] {strides = array<i32: 32, 1>} : memref<256x128xf32, #tpu.memory_space<vmem>>, vector<8x128xf32>
    %256 = arith.truncf %255 : vector<8x128xf32> to vector<8x128xbf16>
    %c22_208 = arith.constant 22 : index
    %c0_209 = arith.constant 0 : index
    %c0_210 = arith.constant 0 : index
    %257 = vector.load %arg6[%c22_208, %c0_209, %c0_210] : memref<32x128x256xbf16, #tpu.memory_space<vmem>>, vector<1x128x256xbf16>
    %258 = vector.shape_cast %257 : vector<1x128x256xbf16> to vector<128x256xbf16>
    %cst_211 = arith.constant dense<0.000000e+00> : vector<8x256xf32>
    %259 = tpu.matmul %256, %258, %cst_211 {dimension_numbers = #tpu.dot_dimension_numbers<[1], [0], [0], [1], [0, 0, 1, 1], [], []>} : vector<8x128xbf16>, vector<128x256xbf16>, vector<8x256xf32> -> vector<8x256xf32>
    %260 = arith.addf %254, %259 : vector<8x256xf32>
    %c23 = arith.constant 23 : index
    %c0_212 = arith.constant 0 : index
    %261 = tpu.strided_load %arg11[%c23, %c0_212] {strides = array<i32: 32, 1>} : memref<256x128xf32, #tpu.memory_space<vmem>>, vector<8x128xf32>
    %262 = arith.truncf %261 : vector<8x128xf32> to vector<8x128xbf16>
    %c23_213 = arith.constant 23 : index
    %c0_214 = arith.constant 0 : index
    %c0_215 = arith.constant 0 : index
    %263 = vector.load %arg6[%c23_213, %c0_214, %c0_215] : memref<32x128x256xbf16, #tpu.memory_space<vmem>>, vector<1x128x256xbf16>
    %264 = vector.shape_cast %263 : vector<1x128x256xbf16> to vector<128x256xbf16>
    %cst_216 = arith.constant dense<0.000000e+00> : vector<8x256xf32>
    %265 = tpu.matmul %262, %264, %cst_216 {dimension_numbers = #tpu.dot_dimension_numbers<[1], [0], [0], [1], [0, 0, 1, 1], [], []>} : vector<8x128xbf16>, vector<128x256xbf16>, vector<8x256xf32> -> vector<8x256xf32>
    %266 = arith.addf %260, %265 : vector<8x256xf32>
    %c24 = arith.constant 24 : index
    %c0_217 = arith.constant 0 : index
    %267 = tpu.strided_load %arg11[%c24, %c0_217] {strides = array<i32: 32, 1>} : memref<256x128xf32, #tpu.memory_space<vmem>>, vector<8x128xf32>
    %268 = arith.truncf %267 : vector<8x128xf32> to vector<8x128xbf16>
    %c24_218 = arith.constant 24 : index
    %c0_219 = arith.constant 0 : index
    %c0_220 = arith.constant 0 : index
    %269 = vector.load %arg6[%c24_218, %c0_219, %c0_220] : memref<32x128x256xbf16, #tpu.memory_space<vmem>>, vector<1x128x256xbf16>
    %270 = vector.shape_cast %269 : vector<1x128x256xbf16> to vector<128x256xbf16>
    %cst_221 = arith.constant dense<0.000000e+00> : vector<8x256xf32>
    %271 = tpu.matmul %268, %270, %cst_221 {dimension_numbers = #tpu.dot_dimension_numbers<[1], [0], [0], [1], [0, 0, 1, 1], [], []>} : vector<8x128xbf16>, vector<128x256xbf16>, vector<8x256xf32> -> vector<8x256xf32>
    %272 = arith.addf %266, %271 : vector<8x256xf32>
    %c25 = arith.constant 25 : index
    %c0_222 = arith.constant 0 : index
    %273 = tpu.strided_load %arg11[%c25, %c0_222] {strides = array<i32: 32, 1>} : memref<256x128xf32, #tpu.memory_space<vmem>>, vector<8x128xf32>
    %274 = arith.truncf %273 : vector<8x128xf32> to vector<8x128xbf16>
    %c25_223 = arith.constant 25 : index
    %c0_224 = arith.constant 0 : index
    %c0_225 = arith.constant 0 : index
    %275 = vector.load %arg6[%c25_223, %c0_224, %c0_225] : memref<32x128x256xbf16, #tpu.memory_space<vmem>>, vector<1x128x256xbf16>
    %276 = vector.shape_cast %275 : vector<1x128x256xbf16> to vector<128x256xbf16>
    %cst_226 = arith.constant dense<0.000000e+00> : vector<8x256xf32>
    %277 = tpu.matmul %274, %276, %cst_226 {dimension_numbers = #tpu.dot_dimension_numbers<[1], [0], [0], [1], [0, 0, 1, 1], [], []>} : vector<8x128xbf16>, vector<128x256xbf16>, vector<8x256xf32> -> vector<8x256xf32>
    %278 = arith.addf %272, %277 : vector<8x256xf32>
    %c26 = arith.constant 26 : index
    %c0_227 = arith.constant 0 : index
    %279 = tpu.strided_load %arg11[%c26, %c0_227] {strides = array<i32: 32, 1>} : memref<256x128xf32, #tpu.memory_space<vmem>>, vector<8x128xf32>
    %280 = arith.truncf %279 : vector<8x128xf32> to vector<8x128xbf16>
    %c26_228 = arith.constant 26 : index
    %c0_229 = arith.constant 0 : index
    %c0_230 = arith.constant 0 : index
    %281 = vector.load %arg6[%c26_228, %c0_229, %c0_230] : memref<32x128x256xbf16, #tpu.memory_space<vmem>>, vector<1x128x256xbf16>
    %282 = vector.shape_cast %281 : vector<1x128x256xbf16> to vector<128x256xbf16>
    %cst_231 = arith.constant dense<0.000000e+00> : vector<8x256xf32>
    %283 = tpu.matmul %280, %282, %cst_231 {dimension_numbers = #tpu.dot_dimension_numbers<[1], [0], [0], [1], [0, 0, 1, 1], [], []>} : vector<8x128xbf16>, vector<128x256xbf16>, vector<8x256xf32> -> vector<8x256xf32>
    %284 = arith.addf %278, %283 : vector<8x256xf32>
    %c27 = arith.constant 27 : index
    %c0_232 = arith.constant 0 : index
    %285 = tpu.strided_load %arg11[%c27, %c0_232] {strides = array<i32: 32, 1>} : memref<256x128xf32, #tpu.memory_space<vmem>>, vector<8x128xf32>
    %286 = arith.truncf %285 : vector<8x128xf32> to vector<8x128xbf16>
    %c27_233 = arith.constant 27 : index
    %c0_234 = arith.constant 0 : index
    %c0_235 = arith.constant 0 : index
    %287 = vector.load %arg6[%c27_233, %c0_234, %c0_235] : memref<32x128x256xbf16, #tpu.memory_space<vmem>>, vector<1x128x256xbf16>
    %288 = vector.shape_cast %287 : vector<1x128x256xbf16> to vector<128x256xbf16>
    %cst_236 = arith.constant dense<0.000000e+00> : vector<8x256xf32>
    %289 = tpu.matmul %286, %288, %cst_236 {dimension_numbers = #tpu.dot_dimension_numbers<[1], [0], [0], [1], [0, 0, 1, 1], [], []>} : vector<8x128xbf16>, vector<128x256xbf16>, vector<8x256xf32> -> vector<8x256xf32>
    %290 = arith.addf %284, %289 : vector<8x256xf32>
    %c28 = arith.constant 28 : index
    %c0_237 = arith.constant 0 : index
    %291 = tpu.strided_load %arg11[%c28, %c0_237] {strides = array<i32: 32, 1>} : memref<256x128xf32, #tpu.memory_space<vmem>>, vector<8x128xf32>
    %292 = arith.truncf %291 : vector<8x128xf32> to vector<8x128xbf16>
    %c28_238 = arith.constant 28 : index
    %c0_239 = arith.constant 0 : index
    %c0_240 = arith.constant 0 : index
    %293 = vector.load %arg6[%c28_238, %c0_239, %c0_240] : memref<32x128x256xbf16, #tpu.memory_space<vmem>>, vector<1x128x256xbf16>
    %294 = vector.shape_cast %293 : vector<1x128x256xbf16> to vector<128x256xbf16>
    %cst_241 = arith.constant dense<0.000000e+00> : vector<8x256xf32>
    %295 = tpu.matmul %292, %294, %cst_241 {dimension_numbers = #tpu.dot_dimension_numbers<[1], [0], [0], [1], [0, 0, 1, 1], [], []>} : vector<8x128xbf16>, vector<128x256xbf16>, vector<8x256xf32> -> vector<8x256xf32>
    %296 = arith.addf %290, %295 : vector<8x256xf32>
    %c29 = arith.constant 29 : index
    %c0_242 = arith.constant 0 : index
    %297 = tpu.strided_load %arg11[%c29, %c0_242] {strides = array<i32: 32, 1>} : memref<256x128xf32, #tpu.memory_space<vmem>>, vector<8x128xf32>
    %298 = arith.truncf %297 : vector<8x128xf32> to vector<8x128xbf16>
    %c29_243 = arith.constant 29 : index
    %c0_244 = arith.constant 0 : index
    %c0_245 = arith.constant 0 : index
    %299 = vector.load %arg6[%c29_243, %c0_244, %c0_245] : memref<32x128x256xbf16, #tpu.memory_space<vmem>>, vector<1x128x256xbf16>
    %300 = vector.shape_cast %299 : vector<1x128x256xbf16> to vector<128x256xbf16>
    %cst_246 = arith.constant dense<0.000000e+00> : vector<8x256xf32>
    %301 = tpu.matmul %298, %300, %cst_246 {dimension_numbers = #tpu.dot_dimension_numbers<[1], [0], [0], [1], [0, 0, 1, 1], [], []>} : vector<8x128xbf16>, vector<128x256xbf16>, vector<8x256xf32> -> vector<8x256xf32>
    %302 = arith.addf %296, %301 : vector<8x256xf32>
    %c30 = arith.constant 30 : index
    %c0_247 = arith.constant 0 : index
    %303 = tpu.strided_load %arg11[%c30, %c0_247] {strides = array<i32: 32, 1>} : memref<256x128xf32, #tpu.memory_space<vmem>>, vector<8x128xf32>
    %304 = arith.truncf %303 : vector<8x128xf32> to vector<8x128xbf16>
    %c30_248 = arith.constant 30 : index
    %c0_249 = arith.constant 0 : index
    %c0_250 = arith.constant 0 : index
    %305 = vector.load %arg6[%c30_248, %c0_249, %c0_250] : memref<32x128x256xbf16, #tpu.memory_space<vmem>>, vector<1x128x256xbf16>
    %306 = vector.shape_cast %305 : vector<1x128x256xbf16> to vector<128x256xbf16>
    %cst_251 = arith.constant dense<0.000000e+00> : vector<8x256xf32>
    %307 = tpu.matmul %304, %306, %cst_251 {dimension_numbers = #tpu.dot_dimension_numbers<[1], [0], [0], [1], [0, 0, 1, 1], [], []>} : vector<8x128xbf16>, vector<128x256xbf16>, vector<8x256xf32> -> vector<8x256xf32>
    %308 = arith.addf %302, %307 : vector<8x256xf32>
    %c31 = arith.constant 31 : index
    %c0_252 = arith.constant 0 : index
    %309 = tpu.strided_load %arg11[%c31, %c0_252] {strides = array<i32: 32, 1>} : memref<256x128xf32, #tpu.memory_space<vmem>>, vector<8x128xf32>
    %310 = arith.truncf %309 : vector<8x128xf32> to vector<8x128xbf16>
    %c31_253 = arith.constant 31 : index
    %c0_254 = arith.constant 0 : index
    %c0_255 = arith.constant 0 : index
    %311 = vector.load %arg6[%c31_253, %c0_254, %c0_255] : memref<32x128x256xbf16, #tpu.memory_space<vmem>>, vector<1x128x256xbf16>
    %312 = vector.shape_cast %311 : vector<1x128x256xbf16> to vector<128x256xbf16>
    %cst_256 = arith.constant dense<0.000000e+00> : vector<8x256xf32>
    %313 = tpu.matmul %310, %312, %cst_256 {dimension_numbers = #tpu.dot_dimension_numbers<[1], [0], [0], [1], [0, 0, 1, 1], [], []>} : vector<8x128xbf16>, vector<128x256xbf16>, vector<8x256xf32> -> vector<8x256xf32>
    %314 = arith.addf %308, %313 : vector<8x256xf32>
    %c0_257 = arith.constant 0 : index
    %c0_258 = arith.constant 0 : index
    %315 = vector.load %arg7[%c0_257, %c0_258] : memref<1x256xf32, #tpu.memory_space<vmem>>, vector<1x256xf32>
    %316 = vector.broadcast %315 : vector<1x256xf32> to vector<8x256xf32>
    %317 = arith.addf %314, %316 : vector<8x256xf32>
    %cst_259 = arith.constant 0.000000e+00 : f32
    %318 = vector.broadcast %cst_259 : f32 to vector<8x256xf32>
    %319 = arith.maximumf %317, %318 : vector<8x256xf32>
    %320 = arith.truncf %319 : vector<8x256xf32> to vector<8x256xbf16>
    %c0_260 = arith.constant 0 : index
    %c0_261 = arith.constant 0 : index
    %321 = vector.load %arg8[%c0_260, %c0_261] : memref<256x6xbf16, #tpu.memory_space<vmem>>, vector<256x6xbf16>
    %cst_262 = arith.constant dense<0.000000e+00> : vector<8x6xf32>
    %322 = tpu.matmul %320, %321, %cst_262 {dimension_numbers = #tpu.dot_dimension_numbers<[1], [0], [0], [1], [0, 0, 1, 1], [], []>} : vector<8x256xbf16>, vector<256x6xbf16>, vector<8x6xf32> -> vector<8x6xf32>
    %c0_263 = arith.constant 0 : index
    %c0_264 = arith.constant 0 : index
    %323 = vector.load %arg9[%c0_263, %c0_264] : memref<1x6xf32, #tpu.memory_space<vmem>>, vector<1x6xf32>
    %324 = vector.broadcast %323 : vector<1x6xf32> to vector<8x6xf32>
    %325 = arith.addf %322, %324 : vector<8x6xf32>
    %c0_265 = arith.constant 0 : index
    %c0_266 = arith.constant 0 : index
    %326 = vector.load %arg10[%c0_265, %c0_266] : memref<8x6xf32, #tpu.memory_space<vmem>>, vector<8x6xf32>
    tpu.vector_store %arg10[%c0_265, %c0_266], %325 {strides = array<i32>} : memref<8x6xf32, #tpu.memory_space<vmem>>, vector<8x6xf32>,
    return
  }
  func.func @transform_0(%arg0: i32) -> (i32, i32, i32, i32) {
    %c0_i32 = arith.constant 0 : i32
    %c0_i32_0 = arith.constant 0 : i32
    %c0_i32_1 = arith.constant 0 : i32
    %c0_i32_2 = arith.constant 0 : i32
    return %arg0, %c0_i32, %c0_i32_0, %c0_i32_1 : i32, i32, i32, i32
  }
  func.func @transform_1(%arg0: i32) -> (i32, i32) {
    %c0_i32 = arith.constant 0 : i32
    %c0_i32_0 = arith.constant 0 : i32
    %c0_i32_1 = arith.constant 0 : i32
    return %c0_i32, %c0_i32_0 : i32, i32
  }
  func.func @transform_2(%arg0: i32) -> (i32, i32) {
    %c0_i32 = arith.constant 0 : i32
    %c0_i32_0 = arith.constant 0 : i32
    %c0_i32_1 = arith.constant 0 : i32
    return %c0_i32, %c0_i32_0 : i32, i32
  }
  func.func @transform_3(%arg0: i32) -> (i32, i32, i32) {
    %c0_i32 = arith.constant 0 : i32
    %c0_i32_0 = arith.constant 0 : i32
    %c0_i32_1 = arith.constant 0 : i32
    %c0_i32_2 = arith.constant 0 : i32
    return %c0_i32, %c0_i32_0, %c0_i32_1 : i32, i32, i32
  }
  func.func @transform_4(%arg0: i32) -> (i32, i32) {
    %c0_i32 = arith.constant 0 : i32
    %c0_i32_0 = arith.constant 0 : i32
    %c0_i32_1 = arith.constant 0 : i32
    return %c0_i32, %c0_i32_0 : i32, i32
  }
  func.func @transform_5(%arg0: i32) -> (i32, i32, i32) {
    %c0_i32 = arith.constant 0 : i32
    %c0_i32_0 = arith.constant 0 : i32
    %c0_i32_1 = arith.constant 0 : i32
    %c0_i32_2 = arith.constant 0 : i32
    return %c0_i32, %c0_i32_0, %c0_i32_1 : i32, i32, i32
  }
  func.func @transform_6(%arg0: i32) -> (i32, i32) {
    %c0_i32 = arith.constant 0 : i32
    %c0_i32_0 = arith.constant 0 : i32
    %c0_i32_1 = arith.constant 0 : i32
    return %c0_i32, %c0_i32_0 : i32, i32
  }
  func.func @transform_7(%arg0: i32) -> (i32, i32) {
    %c0_i32 = arith.constant 0 : i32
    %c0_i32_0 = arith.constant 0 : i32
    %c0_i32_1 = arith.constant 0 : i32
    return %c0_i32, %c0_i32_0 : i32, i32
  }
  func.func @transform_8(%arg0: i32) -> (i32, i32) {
    %c0_i32 = arith.constant 0 : i32
    %c0_i32_0 = arith.constant 0 : i32
    %c0_i32_1 = arith.constant 0 : i32
    return %c0_i32, %c0_i32_0 : i32, i32
  }
  func.func @transform_9(%arg0: i32) -> (i32, i32) {
    %c0_i32 = arith.constant 0 : i32
    %c0_i32_0 = arith.constant 0 : i32
    return %arg0, %c0_i32 : i32, i32
  }
}

</mosaic_0001>

<llo_original>
// kernel: cnn_forward.1
$region0: #{cnn_forward.1}
  #allocation0 [shape = 'u32[]', space=smem, size = 0x4, offset = 0x4, fixed_abs, tag = 'smem constant byte address 0x4 - core index']
  #allocation1 [shape = 'u32[144,128]{1,0:T(1,128)}', space=vmem, size = 0x12000, scoped, tag = 'internal scratch']
  #allocation2 [shape = 'f32[256,128]{1,0:T(8,128)}', space=vmem, size = 0x20000, scoped, tag = 'scratch operand']
  %s0 = inlined_call_operand.vmem [shape: bf16[2,9,32,1024], index: 0, kind: input, shape index: {}]
  %s1 = inlined_call_operand.vmem [shape: bf16[16,32], index: 1, kind: input, shape index: {}]
  %s2 = inlined_call_operand.vmem [shape: f32[16,1], index: 2, kind: input, shape index: {}]
  %s3 = inlined_call_operand.vmem [shape: bf16[9,32,16], index: 3, kind: input, shape index: {}]
  %s4 = inlined_call_operand.vmem [shape: f32[32,1], index: 4, kind: input, shape index: {}]
  %s5 = inlined_call_operand.vmem [shape: bf16[32,128,256], index: 5, kind: input, shape index: {}]
  %s6 = inlined_call_operand.vmem [shape: f32[1,256], index: 6, kind: input, shape index: {}]
  %s7 = inlined_call_operand.vmem [shape: bf16[256,6], index: 7, kind: input, shape index: {}]
  %s8 = inlined_call_operand.vmem [shape: f32[1,6], index: 8, kind: input, shape index: {}]
  %s9 = inlined_call_operand.vmem [shape: f32[16,6], index: 9, kind: output, shape index: {}]
  %s10 = sld [smem:[#allocation0]]
  $region69: #{cnn_forward.1} parent=0
    _
  %s12 = ssub.s32 1, %s10
  %s13 = scalar_select 0, %s12, %s10
  loop: start=0, step=1, limit=4
  $region2: #{cnn_forward.1} parent=0 // loop_pre_header
    _
  $region3: #{cnn_forward.1} parent=0 // loop_header
    %s15 = sphi 0, %s19
    %p16 = scmp.ge.s32.totalorder %s15, 4
    %s25 = sphi 0, %s27
    %s28 = sphi 0, %s25
    %s29 = sphi 0, %s28
    %s45 = sphi 0, %s29
    %s49 = sphi 0, %s49
    %s51 = sphi 0, %s49
    %s52 = sphi 0, %s51
    %s66 = sphi 0, %s52
    %s70 = sphi 0, %s70
    %s72 = sphi 0, %s70
    %s73 = sphi 0, %s72
    %s87 = sphi 0, %s73
    %s91 = sphi 0, %s91
    %s93 = sphi 0, %s91
    %s94 = sphi 0, %s93
    %s108 = sphi 0, %s94
    %s112 = sphi 0, %s112
    %s114 = sphi 0, %s112
    %s115 = sphi 0, %s114
    %s129 = sphi 0, %s115
    %s133 = sphi 0, %s133
    %s135 = sphi 0, %s133
    %s136 = sphi 0, %s135
    %s150 = sphi 0, %s136
    %s154 = sphi 0, %s154
    %s156 = sphi 0, %s154
    %s157 = sphi 0, %s156
    %s171 = sphi 0, %s157
    %s175 = sphi 0, %s175
    %s177 = sphi 0, %s175
    %s178 = sphi 0, %s177
    %s192 = sphi 0, %s178
    %s196 = sphi 0, %s196
    %s198 = sphi 0, %s196
    %s199 = sphi 0, %s198
    %s213 = sphi 0, %s199
    %s219 = sphi 0, %s221
    %s222 = sphi 0, %s219
    %s223 = sphi 0, %s222
    %s239 = sphi 0, %s223
  $region4: #{cnn_forward.1} parent=0 // loop_header_branch
    %18 = sbr.rel (%p16) target = $region8
  $region5: #{cnn_forward.1} parent=0 // loop_body
    %s20 = ssub.s32 %s15, 1
    %s21 = ssub.s32 %s15, 2
    %s22 = sadd.s32 %s15, 1
    %s23 = ssub.s32 %s15, %s22
    %p24 = scmp.eq.s32.totalorder %s23, 0
    %s26 = sadd.s32 %s25, 1
    %s27 = scalar_select %p24, %s25, %s26
    %p30 = pneg %p24
    %p31 = scmp.eq.s32.totalorder %s15, 1
    %p32 = por %p30, %p31
    %p33 = scmp.ne.s32.totalorder %s25, %s28
    %p34 = scmp.eq.s32.totalorder %s15, 0
    %p35 = por %p33, %p34
    %p36 = scmp.ne.s32.totalorder %s25, %s28
    %p37 = scmp.eq.s32.totalorder %s20, 1
    %p38 = por %p36, %p37
    %p39 = scmp.ne.s32.totalorder %s28, %s29
    %p40 = scmp.eq.s32.totalorder %s20, 0
    %p41 = por %p39, %p40
    %p42 = scmp.ne.s32.totalorder %s28, %s29
    %p43 = scmp.eq.s32.totalorder %s21, 1
    %p44 = por %p42, %p43
    %p46 = scmp.ne.s32.totalorder %s29, %s45
    %p47 = scmp.eq.s32.totalorder %s21, 0
    %p48 = por %p46, %p47
    %s50 = sadd.s32 %s49, 1
    %p53 = scmp.eq.s32.totalorder %s15, 1
    %p54 = scmp.ne.s32.totalorder %s49, %s51
    %p55 = scmp.eq.s32.totalorder %s15, 0
    %p56 = por %p54, %p55
    %p57 = scmp.ne.s32.totalorder %s49, %s51
    %p58 = scmp.eq.s32.totalorder %s20, 1
    %p59 = por %p57, %p58
    %p60 = scmp.ne.s32.totalorder %s51, %s52
    %p61 = scmp.eq.s32.totalorder %s20, 0
    %p62 = por %p60, %p61
    %p63 = scmp.ne.s32.totalorder %s51, %s52
    %p64 = scmp.eq.s32.totalorder %s21, 1
    %p65 = por %p63, %p64
    %p67 = scmp.ne.s32.totalorder %s52, %s66
    %p68 = scmp.eq.s32.totalorder %s21, 0
    %p69 = por %p67, %p68
    %s71 = sadd.s32 %s70, 1
    %p74 = scmp.eq.s32.totalorder %s15, 1
    %p75 = scmp.ne.s32.totalorder %s70, %s72
    %p76 = scmp.eq.s32.totalorder %s15, 0
    %p77 = por %p75, %p76
    %p78 = scmp.ne.s32.totalorder %s70, %s72
    %p79 = scmp.eq.s32.totalorder %s20, 1
    %p80 = por %p78, %p79
    %p81 = scmp.ne.s32.totalorder %s72, %s73
    %p82 = scmp.eq.s32.totalorder %s20, 0
    %p83 = por %p81, %p82
    %p84 = scmp.ne.s32.totalorder %s72, %s73
    %p85 = scmp.eq.s32.totalorder %s21, 1
    %p86 = por %p84, %p85
    %p88 = scmp.ne.s32.totalorder %s73, %s87
    %p89 = scmp.eq.s32.totalorder %s21, 0
    %p90 = por %p88, %p89
    %s92 = sadd.s32 %s91, 1
    %p95 = scmp.eq.s32.totalorder %s15, 1
    %p96 = scmp.ne.s32.totalorder %s91, %s93
    %p97 = scmp.eq.s32.totalorder %s15, 0
    %p98 = por %p96, %p97
    %p99 = scmp.ne.s32.totalorder %s91, %s93
    %p100 = scmp.eq.s32.totalorder %s20, 1
    %p101 = por %p99, %p100
    %p102 = scmp.ne.s32.totalorder %s93, %s94
    %p103 = scmp.eq.s32.totalorder %s20, 0
    %p104 = por %p102, %p103
    %p105 = scmp.ne.s32.totalorder %s93, %s94
    %p106 = scmp.eq.s32.totalorder %s21, 1
    %p107 = por %p105, %p106
    %p109 = scmp.ne.s32.totalorder %s94, %s108
    %p110 = scmp.eq.s32.totalorder %s21, 0
    %p111 = por %p109, %p110
    %s113 = sadd.s32 %s112, 1
    %p116 = scmp.eq.s32.totalorder %s15, 1
    %p117 = scmp.ne.s32.totalorder %s112, %s114
    %p118 = scmp.eq.s32.totalorder %s15, 0
    %p119 = por %p117, %p118
    %p120 = scmp.ne.s32.totalorder %s112, %s114
    %p121 = scmp.eq.s32.totalorder %s20, 1
    %p122 = por %p120, %p121
    %p123 = scmp.ne.s32.totalorder %s114, %s115
    %p124 = scmp.eq.s32.totalorder %s20, 0
    %p125 = por %p123, %p124
    %p126 = scmp.ne.s32.totalorder %s114, %s115
    %p127 = scmp.eq.s32.totalorder %s21, 1
    %p128 = por %p126, %p127
    %p130 = scmp.ne.s32.totalorder %s115, %s129
    %p131 = scmp.eq.s32.totalorder %s21, 0
    %p132 = por %p130, %p131
    %s134 = sadd.s32 %s133, 1
    %p137 = scmp.eq.s32.totalorder %s15, 1
    %p138 = scmp.ne.s32.totalorder %s133, %s135
    %p139 = scmp.eq.s32.totalorder %s15, 0
    %p140 = por %p138, %p139
    %p141 = scmp.ne.s32.totalorder %s133, %s135
    %p142 = scmp.eq.s32.totalorder %s20, 1
    %p143 = por %p141, %p142
    %p144 = scmp.ne.s32.totalorder %s135, %s136
    %p145 = scmp.eq.s32.totalorder %s20, 0
    %p146 = por %p144, %p145
    %p147 = scmp.ne.s32.totalorder %s135, %s136
    %p148 = scmp.eq.s32.totalorder %s21, 1
    %p149 = por %p147, %p148
    %p151 = scmp.ne.s32.totalorder %s136, %s150
    %p152 = scmp.eq.s32.totalorder %s21, 0
    %p153 = por %p151, %p152
    %s155 = sadd.s32 %s154, 1
    %p158 = scmp.eq.s32.totalorder %s15, 1
    %p159 = scmp.ne.s32.totalorder %s154, %s156
    %p160 = scmp.eq.s32.totalorder %s15, 0
    %p161 = por %p159, %p160
    %p162 = scmp.ne.s32.totalorder %s154, %s156
    %p163 = scmp.eq.s32.totalorder %s20, 1
    %p164 = por %p162, %p163
    %p165 = scmp.ne.s32.totalorder %s156, %s157
    %p166 = scmp.eq.s32.totalorder %s20, 0
    %p167 = por %p165, %p166
    %p168 = scmp.ne.s32.totalorder %s156, %s157
    %p169 = scmp.eq.s32.totalorder %s21, 1
    %p170 = por %p168, %p169
    %p172 = scmp.ne.s32.totalorder %s157, %s171
    %p173 = scmp.eq.s32.totalorder %s21, 0
    %p174 = por %p172, %p173
    %s176 = sadd.s32 %s175, 1
    %p179 = scmp.eq.s32.totalorder %s15, 1
    %p180 = scmp.ne.s32.totalorder %s175, %s177
    %p181 = scmp.eq.s32.totalorder %s15, 0
    %p182 = por %p180, %p181
    %p183 = scmp.ne.s32.totalorder %s175, %s177
    %p184 = scmp.eq.s32.totalorder %s20, 1
    %p185 = por %p183, %p184
    %p186 = scmp.ne.s32.totalorder %s177, %s178
    %p187 = scmp.eq.s32.totalorder %s20, 0
    %p188 = por %p186, %p187
    %p189 = scmp.ne.s32.totalorder %s177, %s178
    %p190 = scmp.eq.s32.totalorder %s21, 1
    %p191 = por %p189, %p190
    %p193 = scmp.ne.s32.totalorder %s178, %s192
    %p194 = scmp.eq.s32.totalorder %s21, 0
    %p195 = por %p193, %p194
    %s197 = sadd.s32 %s196, 1
    %p200 = scmp.eq.s32.totalorder %s15, 1
    %p201 = scmp.ne.s32.totalorder %s196, %s198
    %p202 = scmp.eq.s32.totalorder %s15, 0
    %p203 = por %p201, %p202
    %p204 = scmp.ne.s32.totalorder %s196, %s198
    %p205 = scmp.eq.s32.totalorder %s20, 1
    %p206 = por %p204, %p205
    %p207 = scmp.ne.s32.totalorder %s198, %s199
    %p208 = scmp.eq.s32.totalorder %s20, 0
    %p209 = por %p207, %p208
    %p210 = scmp.ne.s32.totalorder %s198, %s199
    %p211 = scmp.eq.s32.totalorder %s21, 1
    %p212 = por %p210, %p211
    %p214 = scmp.ne.s32.totalorder %s199, %s213
    %p215 = scmp.eq.s32.totalorder %s21, 0
    %p216 = por %p214, %p215
    %s217 = ssub.s32 %s15, %s22
    %p218 = scmp.eq.s32.totalorder %s217, 0
    %s220 = sadd.s32 %s219, 1
    %s221 = scalar_select %p218, %s219, %s220
    %p224 = pneg %p218
    %p225 = scmp.eq.s32.totalorder %s15, 1
    %p226 = por %p224, %p225
    %p227 = scmp.ne.s32.totalorder %s219, %s222
    %p228 = scmp.eq.s32.totalorder %s15, 0
    %p229 = por %p227, %p228
    %p230 = scmp.ne.s32.totalorder %s219, %s222
    %p231 = scmp.eq.s32.totalorder %s20, 1
    %p232 = por %p230, %p231
    %p233 = scmp.ne.s32.totalorder %s222, %s223
    %p234 = scmp.eq.s32.totalorder %s20, 0
    %p235 = por %p233, %p234
    %p236 = scmp.ne.s32.totalorder %s222, %s223
    %p237 = scmp.eq.s32.totalorder %s21, 1
    %p238 = por %p236, %p237
    %p240 = scmp.ne.s32.totalorder %s223, %s239
    %p241 = scmp.eq.s32.totalorder %s21, 0
    %p242 = por %p240, %p241
    %p243 = scmp.le.s32.totalorder 1, %s15
    %p244 = scmp.lt.s32.totalorder %s15, 3
    %p245 = pnand %p243, %p244
    %p246 = pneg %p245
    // Predicated region
    $region9: #{cnn_forward.1} parent=5 // pred_check
      _
    $region10: #{cnn_forward.1} parent=5 // pred_check_branch
      %248 = sbr.rel (%p245) target = $region12
    $region11: #{cnn_forward.1} parent=5 // pred_region
      %s249 = ssub.s32 %s15, 1
      // Predicated region
      $region13: #{cnn_forward.1} parent=11 // pred_check
        %p250 = pneg %p62
      $region14: #{cnn_forward.1} parent=11 // pred_check_branch
        %252 = sbr.rel (%p250) target = $region16
      $region15: #{cnn_forward.1} parent=11 // pred_region
        _
      $region16: #{cnn_forward.1} parent=11 // pred_fallthru
        _
      // Predicated region
      $region17: #{cnn_forward.1} parent=11 // pred_check
        %p253 = pneg %p83
      $region18: #{cnn_forward.1} parent=11 // pred_check_branch
        %255 = sbr.rel (%p253) target = $region20
      $region19: #{cnn_forward.1} parent=11 // pred_region
        _
      $region20: #{cnn_forward.1} parent=11 // pred_fallthru
        _
      // Predicated region
      $region21: #{cnn_forward.1} parent=11 // pred_check
        %p256 = pneg %p104
      $region22: #{cnn_forward.1} parent=11 // pred_check_branch
        %258 = sbr.rel (%p256) target = $region24
      $region23: #{cnn_forward.1} parent=11 // pred_region
        _
      $region24: #{cnn_forward.1} parent=11 // pred_fallthru
        _
      // Predicated region
      $region25: #{cnn_forward.1} parent=11 // pred_check
        %p259 = pneg %p125
      $region26: #{cnn_forward.1} parent=11 // pred_check_branch
        %261 = sbr.rel (%p259) target = $region28
      $region27: #{cnn_forward.1} parent=11 // pred_region
        _
      $region28: #{cnn_forward.1} parent=11 // pred_fallthru
        _
      // Predicated region
      $region29: #{cnn_forward.1} parent=11 // pred_check
        %p262 = pneg %p146
      $region30: #{cnn_forward.1} parent=11 // pred_check_branch
        %264 = sbr.rel (%p262) target = $region32
      $region31: #{cnn_forward.1} parent=11 // pred_region
        _
      $region32: #{cnn_forward.1} parent=11 // pred_fallthru
        _
      // Predicated region
      $region33: #{cnn_forward.1} parent=11 // pred_check
        %p265 = pneg %p167
      $region34: #{cnn_forward.1} parent=11 // pred_check_branch
        %267 = sbr.rel (%p265) target = $region36
      $region35: #{cnn_forward.1} parent=11 // pred_region
        _
      $region36: #{cnn_forward.1} parent=11 // pred_fallthru
        _
      // Predicated region
      $region37: #{cnn_forward.1} parent=11 // pred_check
        %p268 = pneg %p188
      $region38: #{cnn_forward.1} parent=11 // pred_check_branch
        %270 = sbr.rel (%p268) target = $region40
      $region39: #{cnn_forward.1} parent=11 // pred_region
        _
      $region40: #{cnn_forward.1} parent=11 // pred_fallthru
        _
      // Predicated region
      $region41: #{cnn_forward.1} parent=11 // pred_check
        %p271 = pneg %p209
      $region42: #{cnn_forward.1} parent=11 // pred_check_branch
        %273 = sbr.rel (%p271) target = $region44
      $region43: #{cnn_forward.1} parent=11 // pred_region
        _
      $region44: #{cnn_forward.1} parent=11 // pred_fallthru
        _
    $region12: #{cnn_forward.1} parent=5 // pred_fallthru
      _
    %p274 = scmp.lt.s32.totalorder %s15, 2
    // Predicated region
    $region45: #{cnn_forward.1} parent=5 // pred_check
      %p275 = pneg %p274
    $region46: #{cnn_forward.1} parent=5 // pred_check_branch
      %277 = sbr.rel (%p275) target = $region48
    $region47: #{cnn_forward.1} parent=5 // pred_region
      // Predicated region
      $region49: #{cnn_forward.1} parent=47 // pred_check
        %p278 = pneg %p35
      $region50: #{cnn_forward.1} parent=47 // pred_check_branch
        %280 = sbr.rel (%p278) target = $region52
      $region51: #{cnn_forward.1} parent=47 // pred_region
        %p281 = scmp.lt.s32.totalorder %s15, 1
        %s282 = scalar_select %p281, %s15, 1
        %s283 = smul.addr %s282, 288
        %s284 = smul.addr %s283, 4
        %s285 = scalar_lea.vmem %s0, %s284
      $region52: #{cnn_forward.1} parent=47 // pred_fallthru
        _
    $region48: #{cnn_forward.1} parent=5 // pred_fallthru
      _
    %p286 = scmp.le.s32.totalorder 1, %s15
    %p287 = scmp.lt.s32.totalorder %s15, 3
    %p288 = pnand %p286, %p287
    %p289 = pneg %p288
    // Predicated region
    $region53: #{cnn_forward.1} parent=5 // pred_check
      _
    $region54: #{cnn_forward.1} parent=5 // pred_check_branch
      %291 = sbr.rel (%p288) target = $region56
    $region55: #{cnn_forward.1} parent=5 // pred_region
      %s292 = ssub.s32 %s15, 1
      %p293 = scmp.lt.s32.totalorder %s20, 1
      %s294 = scalar_select %p293, %s20, 1
      %s295 = smul.addr %s294, 288
      %s296 = smul.addr %s295, 4
      %s297 = scalar_lea.vmem %s0, %s296
      %p298 = pneg %p41
      %p299 = pneg %p38
      %p300 = pneg %p62
      %p301 = pneg %p59
      %p302 = pneg %p83
      %p303 = pneg %p80
      %p304 = pneg %p104
      %p305 = pneg %p101
      %p306 = pneg %p125
      %p307 = pneg %p122
      %p308 = pneg %p146
      %p309 = pneg %p143
      %p310 = pneg %p167
      %p311 = pneg %p164
      %p312 = pneg %p188
      %p313 = pneg %p185
      %p314 = pneg %p209
      %p315 = pneg %p206
      %p316 = pneg %p235
      %p317 = pneg %p232
      %p318 = scmp.lt.s32.totalorder %s20, 1
      %s319 = scalar_select %p318, %s20, 1
      %s320 = smul.addr %s319, 8
      %s321 = scalar_lea.vmem %s9, %s320
      %p322 = scmp.lt.s32.totalorder %s20, 1
      %s323 = scalar_select %p322, %s20, 1
      %s324 = smul.addr %s323, 288
      %s325 = smul.addr %s324, 4
      %s326 = scalar_lea.vmem %s0, %s325
      %p327 = scmp.lt.s32.totalorder %s20, 1
      %s328 = scalar_select %p327, %s20, 1
      %s329 = smul.addr %s328, 8
      %s330 = scalar_lea.vmem %s9, %s329
      %v332 = vld [vmem:[%s1] sm:$0xf]
      %v333 = vld [vmem:[%s1 + $0x4] sm:$0xf]
      %v334 = vld [vmem:[%s2] sm:$0xff]
      %v335 = vld [vmem:[%s2 + $0x8] sm:$0xff]
      %v336 = vld [vmem:[%s326] sm:$0xff]
      %v337 = vld [vmem:[%s326 + $0x8] sm:$0xff]
      %v338 = vld [vmem:[%s326 + $0x10] sm:$0xff]
      %v339 = vld [vmem:[%s326 + $0x18] sm:$0xff]
      %v340 = vld [vmem:[%s326 + $0x20] sm:$0xff]
      %v341 = vld [vmem:[%s326 + $0x28] sm:$0xff]
      %v342 = vld [vmem:[%s326 + $0x30] sm:$0xff]
      %v343 = vld [vmem:[%s326 + $0x38] sm:$0xff]
      %v344 = vld [vmem:[%s326 + $0x40] sm:$0xff]
      %v345 = vld [vmem:[%s326 + $0x48] sm:$0xff]
      %v346 = vld [vmem:[%s326 + $0x50] sm:$0xff]
      %v347 = vld [vmem:[%s326 + $0x58] sm:$0xff]
      %v348 = vld [vmem:[%s326 + $0x60] sm:$0xff]
      %v349 = vld [vmem:[%s326 + $0x68] sm:$0xff]
      %v350 = vld [vmem:[%s326 + $0x70] sm:$0xff]
      %v351 = vld [vmem:[%s326 + $0x78] sm:$0xff]
      %353 = vset.pattern.permute.xlu0 0
      %354 = vperm.xlu0 %353, %v334
      %v355 = vpop.permute.xlu0 %354
      %358 = vset.pattern.permute.xlu0 0
      %359 = vperm.xlu0 %358, %v335
      %v360 = vpop.permute.xlu0 %359
      %v364 = vunpack.c.l.b16 %v332
      %v365 = vunpack.c.l.b16 %v333
      %v366 = vpack.c.b16 %v365, %v364
      %v383 = vunpack.c.l.b16 %v336
      %v384 = vunpack.c.h.b16 %v336
      %v385 = vunpack.c.l.b16 %v337
      %v386 = vunpack.c.h.b16 %v337
      %v387 = vunpack.c.l.b16 %v338
      %v388 = vunpack.c.h.b16 %v338
      %v389 = vunpack.c.l.b16 %v339
      %v390 = vunpack.c.h.b16 %v339
      %v391 = vunpack.c.l.b16 %v340
      %v392 = vunpack.c.h.b16 %v340
      %v393 = vunpack.c.l.b16 %v341
      %v394 = vunpack.c.h.b16 %v341
      %v395 = vunpack.c.l.b16 %v342
      %v396 = vunpack.c.h.b16 %v342
      %v397 = vunpack.c.l.b16 %v343
      %v398 = vunpack.c.h.b16 %v343
      %v399 = vunpack.c.l.b16 %v344
      %v400 = vunpack.c.h.b16 %v344
      %v401 = vunpack.c.l.b16 %v345
      %v402 = vunpack.c.h.b16 %v345
      %v403 = vunpack.c.l.b16 %v346
      %v404 = vunpack.c.h.b16 %v346
      %v405 = vunpack.c.l.b16 %v347
      %v406 = vunpack.c.h.b16 %v347
      %v407 = vunpack.c.l.b16 %v348
      %v408 = vunpack.c.h.b16 %v348
      %v409 = vunpack.c.l.b16 %v349
      %v410 = vunpack.c.h.b16 %v349
      %v411 = vunpack.c.l.b16 %v350
      %v412 = vunpack.c.h.b16 %v350
      %v413 = vunpack.c.l.b16 %v351
      %v414 = vunpack.c.h.b16 %v351
      %v415 = vpack.c.b16 %v391, %v383
      %v416 = vpack.c.b16 %v392, %v384
      %v417 = vpack.c.b16 %v393, %v385
      %v418 = vpack.c.b16 %v394, %v386
      %v419 = vpack.c.b16 %v395, %v387
      %v420 = vpack.c.b16 %v396, %v388
      %v421 = vpack.c.b16 %v397, %v389
      %v422 = vpack.c.b16 %v398, %v390
      %v423 = vpack.c.b16 %v407, %v399
      %v424 = vpack.c.b16 %v408, %v400
      %v425 = vpack.c.b16 %v409, %v401
      %v426 = vpack.c.b16 %v410, %v402
      %v427 = vpack.c.b16 %v411, %v403
      %v428 = vpack.c.b16 %v412, %v404
      %v429 = vpack.c.b16 %v413, %v405
      %v430 = vpack.c.b16 %v414, %v406
      %vm447 = vcmask 261120
      %v449 = vsel %vm447, %v366, 0
      %451 = vmatprep.subr.bf16.mxu0 0
      %452 = vmatpush1.bf16.msra.mxu0 0
      %453 = vmatprep.subr.bf16.mxu0 0
      %454 = vmatpush1.bf16.msra.mxu0 0
      %455 = vmatprep.subr.bf16.mxu0 0
      %456 = vmatpush1.bf16.msra.mxu0 0
      %457 = vmatprep.subr.bf16.mxu0 0
      %458 = vmatpush1.bf16.msra.mxu0 0
      %459 = vmatprep.subr.bf16.mxu0 0
      %460 = vmatpush1.bf16.msra.mxu0 0
      %461 = vmatprep.subr.bf16.mxu0 0
      %462 = vmatpush1.bf16.msra.mxu0 0
      %463 = vmatprep.subr.bf16.mxu0 %v424
      %464 = vmatpush1.bf16.msra.mxu0 %v423
      %465 = vmatprep.subr.bf16.mxu0 %v416
      %466 = vmatpush1.bf16.msra.mxu0 %v415
      %467 = vmatprep.subr.bf16.mxu0 0
      %468 = vmatpush2.bf16.msra.mxu0 0
      %469 = vmatprep.subr.bf16.mxu0 0
      %470 = vmatpush2.bf16.msra.mxu0 0
      %471 = vmatprep.subr.bf16.mxu0 0
      %472 = vmatpush2.bf16.msra.mxu0 0
      %473 = vmatprep.subr.bf16.mxu0 0
      %474 = vmatpush2.bf16.msra.mxu0 0
      %475 = vmatprep.subr.bf16.mxu0 0
      %476 = vmatpush2.bf16.msra.mxu0 0
      %477 = vmatprep.subr.bf16.mxu0 0
      %478 = vmatpush2.bf16.msra.mxu0 0
      %479 = vmatprep.subr.bf16.mxu0 0
      %480 = vmatpush2.bf16.msra.mxu0 0
      %481 = vmatprep.subr.bf16.mxu0 0
      %482 = vmatpush2.bf16.msra.mxu0 0
      %483 = vmatprep.mubr.bf16.mxu0 0
      %484 = vmatmul.mubr.bf16.gmra.mxu0 %v449
      %v485 = vpop.f32.mrf.mxu0
      %v486 = vadd.f32 %v355, %v485
      %v487 = vpop.f32.mrf.mxu0
      %v488 = vadd.f32 %v355, %v487
      %v489 = vpop.f32.mrf.mxu0
      %v490 = vadd.f32 %v360, %v489
      %v491 = vpop.f32.mrf.mxu0
      %v492 = vadd.f32 %v360, %v491
      %493 = vdwg.mxu0
      %494 = vmatprep.subr.bf16.mxu0 0
      %495 = vmatpush1.bf16.msra.mxu0 0
      %496 = vmatprep.subr.bf16.mxu0 0
      %497 = vmatpush1.bf16.msra.mxu0 0
      %498 = vmatprep.subr.bf16.mxu0 0
      %499 = vmatpush1.bf16.msra.mxu0 0
      %500 = vmatprep.subr.bf16.mxu0 0
      %501 = vmatpush1.bf16.msra.mxu0 0
      %502 = vmatprep.subr.bf16.mxu0 0
      %503 = vmatpush1.bf16.msra.mxu0 0
      %504 = vmatprep.subr.bf16.mxu0 0
      %505 = vmatpush1.bf16.msra.mxu0 0
      %506 = vmatprep.subr.bf16.mxu0 %v426
      %507 = vmatpush1.bf16.msra.mxu0 %v425
      %508 = vmatprep.subr.bf16.mxu0 %v418
      %509 = vmatpush1.bf16.msra.mxu0 %v417
      %510 = vmatprep.subr.bf16.mxu0 0
      %511 = vmatpush2.bf16.msra.mxu0 0
      %512 = vmatprep.subr.bf16.mxu0 0
      %513 = vmatpush2.bf16.msra.mxu0 0
      %514 = vmatprep.subr.bf16.mxu0 0
      %515 = vmatpush2.bf16.msra.mxu0 0
      %516 = vmatprep.subr.bf16.mxu0 0
      %517 = vmatpush2.bf16.msra.mxu0 0
      %518 = vmatprep.subr.bf16.mxu0 0
      %519 = vmatpush2.bf16.msra.mxu0 0
      %520 = vmatprep.subr.bf16.mxu0 0
      %521 = vmatpush2.bf16.msra.mxu0 0
      %522 = vmatprep.subr.bf16.mxu0 0
      %523 = vmatpush2.bf16.msra.mxu0 0
      %524 = vmatprep.subr.bf16.mxu0 0
      %525 = vmatpush2.bf16.msra.mxu0 0
      %526 = vmatprep.mubr.bf16.mxu0 0
      %527 = vmatmul.mubr.bf16.gmra.mxu0 %v449
      %v528 = vpop.f32.mrf.mxu0
      %v529 = vadd.f32 %v355, %v528
      %v530 = vpop.f32.mrf.mxu0
      %v531 = vadd.f32 %v355, %v530
      %v532 = vpop.f32.mrf.mxu0
      %v533 = vadd.f32 %v360, %v532
      %v534 = vpop.f32.mrf.mxu0
      %v535 = vadd.f32 %v360, %v534
      %536 = vdwg.mxu0
      %537 = vmatprep.subr.bf16.mxu0 0
      %538 = vmatpush1.bf16.msra.mxu0 0
      %539 = vmatprep.subr.bf16.mxu0 0
      %540 = vmatpush1.bf16.msra.mxu0 0
      %541 = vmatprep.subr.bf16.mxu0 0
      %542 = vmatpush1.bf16.msra.mxu0 0
      %543 = vmatprep.subr.bf16.mxu0 0
      %544 = vmatpush1.bf16.msra.mxu0 0
      %545 = vmatprep.subr.bf16.mxu0 0
      %546 = vmatpush1.bf16.msra.mxu0 0
      %547 = vmatprep.subr.bf16.mxu0 0
      %548 = vmatpush1.bf16.msra.mxu0 0
      %549 = vmatprep.subr.bf16.mxu0 %v428
      %550 = vmatpush1.bf16.msra.mxu0 %v427
      %551 = vmatprep.subr.bf16.mxu0 %v420
      %552 = vmatpush1.bf16.msra.mxu0 %v419
      %553 = vmatprep.subr.bf16.mxu0 0
      %554 = vmatpush2.bf16.msra.mxu0 0
      %555 = vmatprep.subr.bf16.mxu0 0
      %556 = vmatpush2.bf16.msra.mxu0 0
      %557 = vmatprep.subr.bf16.mxu0 0
      %558 = vmatpush2.bf16.msra.mxu0 0
      %559 = vmatprep.subr.bf16.mxu0 0
      %560 = vmatpush2.bf16.msra.mxu0 0
      %561 = vmatprep.subr.bf16.mxu0 0
      %562 = vmatpush2.bf16.msra.mxu0 0
      %563 = vmatprep.subr.bf16.mxu0 0
      %564 = vmatpush2.bf16.msra.mxu0 0
      %565 = vmatprep.subr.bf16.mxu0 0
      %566 = vmatpush2.bf16.msra.mxu0 0
      %567 = vmatprep.subr.bf16.mxu0 0
      %568 = vmatpush2.bf16.msra.mxu0 0
      %569 = vmatprep.mubr.bf16.mxu0 0
      %570 = vmatmul.mubr.bf16.gmra.mxu0 %v449
      %v571 = vpop.f32.mrf.mxu0
      %v572 = vadd.f32 %v355, %v571
      %v573 = vpop.f32.mrf.mxu0
      %v574 = vadd.f32 %v355, %v573
      %v575 = vpop.f32.mrf.mxu0
      %v576 = vadd.f32 %v360, %v575
      %v577 = vpop.f32.mrf.mxu0
      %v578 = vadd.f32 %v360, %v577
      %579 = vdwg.mxu0
      %580 = vmatprep.subr.bf16.mxu0 0
      %581 = vmatpush1.bf16.msra.mxu0 0
      %582 = vmatprep.subr.bf16.mxu0 0
      %583 = vmatpush1.bf16.msra.mxu0 0
      %584 = vmatprep.subr.bf16.mxu0 0
      %585 = vmatpush1.bf16.msra.mxu0 0
      %586 = vmatprep.subr.bf16.mxu0 0
      %587 = vmatpush1.bf16.msra.mxu0 0
      %588 = vmatprep.subr.bf16.mxu0 0
      %589 = vmatpush1.bf16.msra.mxu0 0
      %590 = vmatprep.subr.bf16.mxu0 0
      %591 = vmatpush1.bf16.msra.mxu0 0
      %592 = vmatprep.subr.bf16.mxu0 %v430
      %593 = vmatpush1.bf16.msra.mxu0 %v429
      %594 = vmatprep.subr.bf16.mxu0 %v422
      %595 = vmatpush1.bf16.msra.mxu0 %v421
      %596 = vmatprep.subr.bf16.mxu0 0
      %597 = vmatpush2.bf16.msra.mxu0 0
      %598 = vmatprep.subr.bf16.mxu0 0
      %599 = vmatpush2.bf16.msra.mxu0 0
      %600 = vmatprep.subr.bf16.mxu0 0
      %601 = vmatpush2.bf16.msra.mxu0 0
      %602 = vmatprep.subr.bf16.mxu0 0
      %603 = vmatpush2.bf16.msra.mxu0 0
      %604 = vmatprep.subr.bf16.mxu0 0
      %605 = vmatpush2.bf16.msra.mxu0 0
      %606 = vmatprep.subr.bf16.mxu0 0
      %607 = vmatpush2.bf16.msra.mxu0 0
      %608 = vmatprep.subr.bf16.mxu0 0
      %609 = vmatpush2.bf16.msra.mxu0 0
      %610 = vmatprep.subr.bf16.mxu0 0
      %611 = vmatpush2.bf16.msra.mxu0 0
      %612 = vmatprep.mubr.bf16.mxu0 0
      %613 = vmatmul.mubr.bf16.gmra.mxu0 %v449
      %v614 = vpop.f32.mrf.mxu0
      %v615 = vadd.f32 %v355, %v614
      %v616 = vpop.f32.mrf.mxu0
      %v617 = vadd.f32 %v355, %v616
      %v618 = vpop.f32.mrf.mxu0
      %v619 = vadd.f32 %v360, %v618
      %v620 = vpop.f32.mrf.mxu0
      %v621 = vadd.f32 %v360, %v620
      %622 = vdwg.mxu0
      %v623 = vtanh.pop %v486
      %v624 = vtanh.pop %v488
      %v625 = vtanh.pop %v529
      %v626 = vtanh.pop %v531
      %v627 = vtanh.pop %v572
      %v628 = vtanh.pop %v574
      %v629 = vtanh.pop %v615
      %v630 = vtanh.pop %v617
      %v631 = vtanh.pop %v490
      %v632 = vtanh.pop %v492
      %v633 = vtanh.pop %v533
      %v634 = vtanh.pop %v535
      %v635 = vtanh.pop %v576
      %v636 = vtanh.pop %v578
      %v637 = vtanh.pop %v619
      %v638 = vtanh.pop %v621
      %v639 = vld [vmem:[%s3] sm:$0xf]
      %v640 = vld [vmem:[%s3 + $0x4] sm:$0xf]
      %v641 = vld [vmem:[%s3 + $0x8] sm:$0xf]
      %v642 = vld [vmem:[%s3 + $0xc] sm:$0xf]
      %v643 = vpack.c.bf16 %v631, %v623
      %v644 = vpack.c.bf16 %v632, %v624
      %v645 = vpack.c.bf16 %v633, %v625
      %v646 = vpack.c.bf16 %v634, %v626
      %v647 = vpack.c.bf16 %v635, %v627
      %v648 = vpack.c.bf16 %v636, %v628
      %v649 = vpack.c.bf16 %v637, %v629
      %v650 = vpack.c.bf16 %v638, %v630
      %s651 = scalar_lea.vmem %s326, 128
      %v652 = vld [vmem:[%s651] sm:$0xff]
      %v653 = vld [vmem:[%s651 + $0x8] sm:$0xff]
      %v654 = vld [vmem:[%s651 + $0x10] sm:$0xff]
      %v655 = vld [vmem:[%s651 + $0x18] sm:$0xff]
      %v656 = vld [vmem:[%s651 + $0x20] sm:$0xff]
      %v657 = vld [vmem:[%s651 + $0x28] sm:$0xff]
      %v658 = vld [vmem:[%s651 + $0x30] sm:$0xff]
      %v659 = vld [vmem:[%s651 + $0x38] sm:$0xff]
      %v660 = vld [vmem:[%s651 + $0x40] sm:$0xff]
      %v661 = vld [vmem:[%s651 + $0x48] sm:$0xff]
      %v662 = vld [vmem:[%s651 + $0x50] sm:$0xff]
      %v663 = vld [vmem:[%s651 + $0x58] sm:$0xff]
      %v664 = vld [vmem:[%s651 + $0x60] sm:$0xff]
      %v665 = vld [vmem:[%s651 + $0x68] sm:$0xff]
      %v666 = vld [vmem:[%s651 + $0x70] sm:$0xff]
      %v667 = vld [vmem:[%s651 + $0x78] sm:$0xff]
      %v684 = vunpack.c.l.b16 %v652
      %v685 = vunpack.c.h.b16 %v652
      %v686 = vunpack.c.l.b16 %v653
      %v687 = vunpack.c.h.b16 %v653
      %v688 = vunpack.c.l.b16 %v654
      %v689 = vunpack.c.h.b16 %v654
      %v690 = vunpack.c.l.b16 %v655
      %v691 = vunpack.c.h.b16 %v655
      %v692 = vunpack.c.l.b16 %v656
      %v693 = vunpack.c.h.b16 %v656
      %v694 = vunpack.c.l.b16 %v657
      %v695 = vunpack.c.h.b16 %v657
      %v696 = vunpack.c.l.b16 %v658
      %v697 = vunpack.c.h.b16 %v658
      %v698 = vunpack.c.l.b16 %v659
      %v699 = vunpack.c.h.b16 %v659
      %v700 = vunpack.c.l.b16 %v660
      %v701 = vunpack.c.h.b16 %v660
      %v702 = vunpack.c.l.b16 %v661
      %v703 = vunpack.c.h.b16 %v661
      %v704 = vunpack.c.l.b16 %v662
      %v705 = vunpack.c.h.b16 %v662
      %v706 = vunpack.c.l.b16 %v663
      %v707 = vunpack.c.h.b16 %v663
      %v708 = vunpack.c.l.b16 %v664
      %v709 = vunpack.c.h.b16 %v664
      %v710 = vunpack.c.l.b16 %v665
      %v711 = vunpack.c.h.b16 %v665
      %v712 = vunpack.c.l.b16 %v666
      %v713 = vunpack.c.h.b16 %v666
      %v714 = vunpack.c.l.b16 %v667
      %v715 = vunpack.c.h.b16 %v667
      %v716 = vpack.c.b16 %v692, %v684
      %v717 = vpack.c.b16 %v693, %v685
      %v718 = vpack.c.b16 %v694, %v686
      %v719 = vpack.c.b16 %v695, %v687
      %v720 = vpack.c.b16 %v696, %v688
      %v721 = vpack.c.b16 %v697, %v689
      %v722 = vpack.c.b16 %v698, %v690
      %v723 = vpack.c.b16 %v699, %v691
      %v724 = vpack.c.b16 %v708, %v700
      %v725 = vpack.c.b16 %v709, %v701
      %v726 = vpack.c.b16 %v710, %v702
      %v727 = vpack.c.b16 %v711, %v703
      %v728 = vpack.c.b16 %v712, %v704
      %v729 = vpack.c.b16 %v713, %v705
      %v730 = vpack.c.b16 %v714, %v706
      %v731 = vpack.c.b16 %v715, %v707
      %748 = vmatprep.subr.bf16.mxu0 0
      %749 = vmatpush1.bf16.msra.mxu0 0
      %750 = vmatprep.subr.bf16.mxu0 0
      %751 = vmatpush1.bf16.msra.mxu0 0
      %752 = vmatprep.subr.bf16.mxu0 0
      %753 = vmatpush1.bf16.msra.mxu0 0
      %754 = vmatprep.subr.bf16.mxu0 0
      %755 = vmatpush1.bf16.msra.mxu0 0
      %756 = vmatprep.subr.bf16.mxu0 0
      %757 = vmatpush1.bf16.msra.mxu0 0
      %758 = vmatprep.subr.bf16.mxu0 0
      %759 = vmatpush1.bf16.msra.mxu0 0
      %760 = vmatprep.subr.bf16.mxu0 %v725
      %761 = vmatpush1.bf16.msra.mxu0 %v724
      %762 = vmatprep.subr.bf16.mxu0 %v717
      %763 = vmatpush1.bf16.msra.mxu0 %v716
      %764 = vmatprep.subr.bf16.mxu0 0
      %765 = vmatpush2.bf16.msra.mxu0 0
      %766 = vmatprep.subr.bf16.mxu0 0
      %767 = vmatpush2.bf16.msra.mxu0 0
      %768 = vmatprep.subr.bf16.mxu0 0
      %769 = vmatpush2.bf16.msra.mxu0 0
      %770 = vmatprep.subr.bf16.mxu0 0
      %771 = vmatpush2.bf16.msra.mxu0 0
      %772 = vmatprep.subr.bf16.mxu0 0
      %773 = vmatpush2.bf16.msra.mxu0 0
      %774 = vmatprep.subr.bf16.mxu0 0
      %775 = vmatpush2.bf16.msra.mxu0 0
      %776 = vmatprep.subr.bf16.mxu0 0
      %777 = vmatpush2.bf16.msra.mxu0 0
      %778 = vmatprep.subr.bf16.mxu0 0
      %779 = vmatpush2.bf16.msra.mxu0 0
      %780 = vmatprep.mubr.bf16.mxu0 0
      %781 = vmatmul.mubr.bf16.gmra.mxu0 %v449
      %v782 = vpop.f32.mrf.mxu0
      %v783 = vadd.f32 %v355, %v782
      %v784 = vpop.f32.mrf.mxu0
      %v785 = vadd.f32 %v355, %v784
      %v786 = vpop.f32.mrf.mxu0
      %v787 = vadd.f32 %v360, %v786
      %v788 = vpop.f32.mrf.mxu0
      %v789 = vadd.f32 %v360, %v788
      %790 = vdwg.mxu0
      %791 = vmatprep.subr.bf16.mxu0 0
      %792 = vmatpush1.bf16.msra.mxu0 0
      %793 = vmatprep.subr.bf16.mxu0 0
      %794 = vmatpush1.bf16.msra.mxu0 0
      %795 = vmatprep.subr.bf16.mxu0 0
      %796 = vmatpush1.bf16.msra.mxu0 0
      %797 = vmatprep.subr.bf16.mxu0 0
      %798 = vmatpush1.bf16.msra.mxu0 0
      %799 = vmatprep.subr.bf16.mxu0 0
      %800 = vmatpush1.bf16.msra.mxu0 0
      %801 = vmatprep.subr.bf16.mxu0 0
      %802 = vmatpush1.bf16.msra.mxu0 0
      %803 = vmatprep.subr.bf16.mxu0 %v727
      %804 = vmatpush1.bf16.msra.mxu0 %v726
      %805 = vmatprep.subr.bf16.mxu0 %v719
      %806 = vmatpush1.bf16.msra.mxu0 %v718
      %807 = vmatprep.subr.bf16.mxu0 0
      %808 = vmatpush2.bf16.msra.mxu0 0
      %809 = vmatprep.subr.bf16.mxu0 0
      %810 = vmatpush2.bf16.msra.mxu0 0
      %811 = vmatprep.subr.bf16.mxu0 0
      %812 = vmatpush2.bf16.msra.mxu0 0
      %813 = vmatprep.subr.bf16.mxu0 0
      %814 = vmatpush2.bf16.msra.mxu0 0
      %815 = vmatprep.subr.bf16.mxu0 0
      %816 = vmatpush2.bf16.msra.mxu0 0
      %817 = vmatprep.subr.bf16.mxu0 0
      %818 = vmatpush2.bf16.msra.mxu0 0
      %819 = vmatprep.subr.bf16.mxu0 0
      %820 = vmatpush2.bf16.msra.mxu0 0
      %821 = vmatprep.subr.bf16.mxu0 0
      %822 = vmatpush2.bf16.msra.mxu0 0
      %823 = vmatprep.mubr.bf16.mxu0 0
      %824 = vmatmul.mubr.bf16.gmra.mxu0 %v449
      %v825 = vpop.f32.mrf.mxu0
      %v826 = vadd.f32 %v355, %v825
      %v827 = vpop.f32.mrf.mxu0
      %v828 = vadd.f32 %v355, %v827
      %v829 = vpop.f32.mrf.mxu0
      %v830 = vadd.f32 %v360, %v829
      %v831 = vpop.f32.mrf.mxu0
      %v832 = vadd.f32 %v360, %v831
      %833 = vdwg.mxu0
      %834 = vmatprep.subr.bf16.mxu0 0
      %835 = vmatpush1.bf16.msra.mxu0 0
      %836 = vmatprep.subr.bf16.mxu0 0
      %837 = vmatpush1.bf16.msra.mxu0 0
      %838 = vmatprep.subr.bf16.mxu0 0
      %839 = vmatpush1.bf16.msra.mxu0 0
      %840 = vmatprep.subr.bf16.mxu0 0
      %841 = vmatpush1.bf16.msra.mxu0 0
      %842 = vmatprep.subr.bf16.mxu0 0
      %843 = vmatpush1.bf16.msra.mxu0 0
      %844 = vmatprep.subr.bf16.mxu0 0
      %845 = vmatpush1.bf16.msra.mxu0 0
      %846 = vmatprep.subr.bf16.mxu0 %v729
      %847 = vmatpush1.bf16.msra.mxu0 %v728
      %848 = vmatprep.subr.bf16.mxu0 %v721
      %849 = vmatpush1.bf16.msra.mxu0 %v720
      %850 = vmatprep.subr.bf16.mxu0 0
      %851 = vmatpush2.bf16.msra.mxu0 0
      %852 = vmatprep.subr.bf16.mxu0 0
      %853 = vmatpush2.bf16.msra.mxu0 0
      %854 = vmatprep.subr.bf16.mxu0 0
      %855 = vmatpush2.bf16.msra.mxu0 0
      %856 = vmatprep.subr.bf16.mxu0 0
      %857 = vmatpush2.bf16.msra.mxu0 0
      %858 = vmatprep.subr.bf16.mxu0 0
      %859 = vmatpush2.bf16.msra.mxu0 0
      %860 = vmatprep.subr.bf16.mxu0 0
      %861 = vmatpush2.bf16.msra.mxu0 0
      %862 = vmatprep.subr.bf16.mxu0 0
      %863 = vmatpush2.bf16.msra.mxu0 0
      %864 = vmatprep.subr.bf16.mxu0 0
      %865 = vmatpush2.bf16.msra.mxu0 0
      %866 = vmatprep.mubr.bf16.mxu0 0
      %867 = vmatmul.mubr.bf16.gmra.mxu0 %v449
      %v868 = vpop.f32.mrf.mxu0
      %v869 = vadd.f32 %v355, %v868
      %v870 = vpop.f32.mrf.mxu0
      %v871 = vadd.f32 %v355, %v870
      %v872 = vpop.f32.mrf.mxu0
      %v873 = vadd.f32 %v360, %v872
      %v874 = vpop.f32.mrf.mxu0
      %v875 = vadd.f32 %v360, %v874
      %876 = vdwg.mxu0
      %877 = vmatprep.subr.bf16.mxu0 0
      %878 = vmatpush1.bf16.msra.mxu0 0
      %879 = vmatprep.subr.bf16.mxu0 0
      %880 = vmatpush1.bf16.msra.mxu0 0
      %881 = vmatprep.subr.bf16.mxu0 0
      %882 = vmatpush1.bf16.msra.mxu0 0
      %883 = vmatprep.subr.bf16.mxu0 0
      %884 = vmatpush1.bf16.msra.mxu0 0
      %885 = vmatprep.subr.bf16.mxu0 0
      %886 = vmatpush1.bf16.msra.mxu0 0
      %887 = vmatprep.subr.bf16.mxu0 0
      %888 = vmatpush1.bf16.msra.mxu0 0
      %889 = vmatprep.subr.bf16.mxu0 %v731
      %890 = vmatpush1.bf16.msra.mxu0 %v730
      %891 = vmatprep.subr.bf16.mxu0 %v723
      %892 = vmatpush1.bf16.msra.mxu0 %v722
      %893 = vmatprep.subr.bf16.mxu0 0
      %894 = vmatpush2.bf16.msra.mxu0 0
      %895 = vmatprep.subr.bf16.mxu0 0
      %896 = vmatpush2.bf16.msra.mxu0 0
      %897 = vmatprep.subr.bf16.mxu0 0
      %898 = vmatpush2.bf16.msra.mxu0 0
      %899 = vmatprep.subr.bf16.mxu0 0
      %900 = vmatpush2.bf16.msra.mxu0 0
      %901 = vmatprep.subr.bf16.mxu0 0
      %902 = vmatpush2.bf16.msra.mxu0 0
      %903 = vmatprep.subr.bf16.mxu0 0
      %904 = vmatpush2.bf16.msra.mxu0 0
      %905 = vmatprep.subr.bf16.mxu0 0
      %906 = vmatpush2.bf16.msra.mxu0 0
      %907 = vmatprep.subr.bf16.mxu0 0
      %908 = vmatpush2.bf16.msra.mxu0 0
      %909 = vmatprep.mubr.bf16.mxu0 0
      %910 = vmatmul.mubr.bf16.gmra.mxu0 %v449
      %v911 = vpop.f32.mrf.mxu0
      %v912 = vadd.f32 %v355, %v911
      %v913 = vpop.f32.mrf.mxu0
      %v914 = vadd.f32 %v355, %v913
      %v915 = vpop.f32.mrf.mxu0
      %v916 = vadd.f32 %v360, %v915
      %v917 = vpop.f32.mrf.mxu0
      %v918 = vadd.f32 %v360, %v917
      %919 = vdwg.mxu0
      %v920 = vtanh.pop %v783
      %v921 = vtanh.pop %v785
      %v922 = vtanh.pop %v826
      %v923 = vtanh.pop %v828
      %v924 = vtanh.pop %v869
      %v925 = vtanh.pop %v871
      %v926 = vtanh.pop %v912
      %v927 = vtanh.pop %v914
      %v928 = vtanh.pop %v787
      %v929 = vtanh.pop %v789
      %v930 = vtanh.pop %v830
      %v931 = vtanh.pop %v832
      %v932 = vtanh.pop %v873
      %v933 = vtanh.pop %v875
      %v934 = vtanh.pop %v916
      %v935 = vtanh.pop %v918
      %s936 = scalar_lea.vmem %s3, 16
      %v937 = vld [vmem:[%s936] sm:$0xf]
      %v938 = vld [vmem:[%s936 + $0x4] sm:$0xf]
      %v939 = vld [vmem:[%s936 + $0x8] sm:$0xf]
      %v940 = vld [vmem:[%s936 + $0xc] sm:$0xf]
      %v941 = vpack.c.bf16 %v928, %v920
      %v942 = vpack.c.bf16 %v929, %v921
      %v943 = vpack.c.bf16 %v930, %v922
      %v944 = vpack.c.bf16 %v931, %v923
      %v945 = vpack.c.bf16 %v932, %v924
      %v946 = vpack.c.bf16 %v933, %v925
      %v947 = vpack.c.bf16 %v934, %v926
      %v948 = vpack.c.bf16 %v935, %v927
      %v953 = vunpack.c.l.b16 %v937
      %v954 = vunpack.c.l.b16 %v938
      %v955 = vunpack.c.l.b16 %v939
      %v956 = vunpack.c.l.b16 %v940
      %v957 = vpack.c.b16 %v954, %v953
      %v958 = vpack.c.b16 %v956, %v955
      %vm959 = vcmask 130048
      %v961 = vsel %vm959, %v957, 0
      %v964 = vsel %vm959, %v958, 0
      %966 = vmatprep.subr.bf16.mxu0 0
      %967 = vmatpush1.bf16.msra.mxu0 0
      %968 = vmatprep.subr.bf16.mxu0 0
      %969 = vmatpush1.bf16.msra.mxu0 0
      %970 = vmatprep.subr.bf16.mxu0 0
      %971 = vmatpush1.bf16.msra.mxu0 0
      %972 = vmatprep.subr.bf16.mxu0 0
      %973 = vmatpush1.bf16.msra.mxu0 0
      %974 = vmatprep.subr.bf16.mxu0 0
      %975 = vmatpush1.bf16.msra.mxu0 0
      %976 = vmatprep.subr.bf16.mxu0 0
      %977 = vmatpush1.bf16.msra.mxu0 0
      %978 = vmatprep.subr.bf16.mxu0 0
      %979 = vmatpush1.bf16.msra.mxu0 0
      %980 = vmatprep.subr.bf16.mxu0 %v942
      %981 = vmatpush1.bf16.msra.mxu0 %v941
      %982 = vmatprep.subr.bf16.mxu0 0
      %983 = vmatpush2.bf16.msra.mxu0 0
      %984 = vmatprep.subr.bf16.mxu0 0
      %985 = vmatpush2.bf16.msra.mxu0 0
      %986 = vmatprep.subr.bf16.mxu0 0
      %987 = vmatpush2.bf16.msra.mxu0 0
      %988 = vmatprep.subr.bf16.mxu0 0
      %989 = vmatpush2.bf16.msra.mxu0 0
      %990 = vmatprep.subr.bf16.mxu0 0
      %991 = vmatpush2.bf16.msra.mxu0 0
      %992 = vmatprep.subr.bf16.mxu0 0
      %993 = vmatpush2.bf16.msra.mxu0 0
      %994 = vmatprep.subr.bf16.mxu0 0
      %995 = vmatpush2.bf16.msra.mxu0 0
      %996 = vmatprep.subr.bf16.mxu0 0
      %997 = vmatpush2.bf16.msra.mxu0 0
      %998 = vmatprep.mubr.bf16.mxu0 0
      %999 = vmatmul.mubr.bf16.gmra.mxu0 %v961
      %v1000 = vpop.f32.mrf.mxu0
      %v1001 = vadd.f32 0.0, %v1000
      %v1002 = vpop.f32.mrf.mxu0
      %v1003 = vadd.f32 0.0, %v1002
      %v1004 = vpop.f32.mrf.mxu0
      %v1005 = vadd.f32 0.0, %v1004
      %v1006 = vpop.f32.mrf.mxu0
      %v1007 = vadd.f32 0.0, %v1006
      %1008 = vmatprep.mubr.bf16.mxu0 0
      %1009 = vmatmul.mubr.bf16.gmra.mxu0 %v964
      %v1010 = vpop.f32.mrf.mxu0
      %v1011 = vadd.f32 0.0, %v1010
      %v1012 = vpop.f32.mrf.mxu0
      %v1013 = vadd.f32 0.0, %v1012
      %v1014 = vpop.f32.mrf.mxu0
      %v1015 = vadd.f32 0.0, %v1014
      %v1016 = vpop.f32.mrf.mxu0
      %v1017 = vadd.f32 0.0, %v1016
      %1018 = vdwg.mxu0
      %1019 = vmatprep.subr.bf16.mxu0 0
      %1020 = vmatpush1.bf16.msra.mxu0 0
      %1021 = vmatprep.subr.bf16.mxu0 0
      %1022 = vmatpush1.bf16.msra.mxu0 0
      %1023 = vmatprep.subr.bf16.mxu0 0
      %1024 = vmatpush1.bf16.msra.mxu0 0
      %1025 = vmatprep.subr.bf16.mxu0 0
      %1026 = vmatpush1.bf16.msra.mxu0 0
      %1027 = vmatprep.subr.bf16.mxu0 0
      %1028 = vmatpush1.bf16.msra.mxu0 0
      %1029 = vmatprep.subr.bf16.mxu0 0
      %1030 = vmatpush1.bf16.msra.mxu0 0
      %1031 = vmatprep.subr.bf16.mxu0 0
      %1032 = vmatpush1.bf16.msra.mxu0 0
      %1033 = vmatprep.subr.bf16.mxu0 %v944
      %1034 = vmatpush1.bf16.msra.mxu0 %v943
      %1035 = vmatprep.subr.bf16.mxu0 0
      %1036 = vmatpush2.bf16.msra.mxu0 0
      %1037 = vmatprep.subr.bf16.mxu0 0
      %1038 = vmatpush2.bf16.msra.mxu0 0
      %1039 = vmatprep.subr.bf16.mxu0 0
      %1040 = vmatpush2.bf16.msra.mxu0 0
      %1041 = vmatprep.subr.bf16.mxu0 0
      %1042 = vmatpush2.bf16.msra.mxu0 0
      %1043 = vmatprep.subr.bf16.mxu0 0
      %1044 = vmatpush2.bf16.msra.mxu0 0
      %1045 = vmatprep.subr.bf16.mxu0 0
      %1046 = vmatpush2.bf16.msra.mxu0 0
      %1047 = vmatprep.subr.bf16.mxu0 0
      %1048 = vmatpush2.bf16.msra.mxu0 0
      %1049 = vmatprep.subr.bf16.mxu0 0
      %1050 = vmatpush2.bf16.msra.mxu0 0
      %1051 = vmatprep.mubr.bf16.mxu0 0
      %1052 = vmatmul.mubr.bf16.gmra.mxu0 %v961
      %v1053 = vpop.f32.mrf.mxu0
      %v1054 = vadd.f32 0.0, %v1053
      %v1055 = vpop.f32.mrf.mxu0
      %v1056 = vadd.f32 0.0, %v1055
      %v1057 = vpop.f32.mrf.mxu0
      %v1058 = vadd.f32 0.0, %v1057
      %v1059 = vpop.f32.mrf.mxu0
      %v1060 = vadd.f32 0.0, %v1059
      %1061 = vmatprep.mubr.bf16.mxu0 0
      %1062 = vmatmul.mubr.bf16.gmra.mxu0 %v964
      %v1063 = vpop.f32.mrf.mxu0
      %v1064 = vadd.f32 0.0, %v1063
      %v1065 = vpop.f32.mrf.mxu0
      %v1066 = vadd.f32 0.0, %v1065
      %v1067 = vpop.f32.mrf.mxu0
      %v1068 = vadd.f32 0.0, %v1067
      %v1069 = vpop.f32.mrf.mxu0
      %v1070 = vadd.f32 0.0, %v1069
      %1071 = vdwg.mxu0
      %1072 = vmatprep.subr.bf16.mxu0 0
      %1073 = vmatpush1.bf16.msra.mxu0 0
      %1074 = vmatprep.subr.bf16.mxu0 0
      %1075 = vmatpush1.bf16.msra.mxu0 0
      %1076 = vmatprep.subr.bf16.mxu0 0
      %1077 = vmatpush1.bf16.msra.mxu0 0
      %1078 = vmatprep.subr.bf16.mxu0 0
      %1079 = vmatpush1.bf16.msra.mxu0 0
      %1080 = vmatprep.subr.bf16.mxu0 0
      %1081 = vmatpush1.bf16.msra.mxu0 0
      %1082 = vmatprep.subr.bf16.mxu0 0
      %1083 = vmatpush1.bf16.msra.mxu0 0
      %1084 = vmatprep.subr.bf16.mxu0 0
      %1085 = vmatpush1.bf16.msra.mxu0 0
      %1086 = vmatprep.subr.bf16.mxu0 %v946
      %1087 = vmatpush1.bf16.msra.mxu0 %v945
      %1088 = vmatprep.subr.bf16.mxu0 0
      %1089 = vmatpush2.bf16.msra.mxu0 0
      %1090 = vmatprep.subr.bf16.mxu0 0
      %1091 = vmatpush2.bf16.msra.mxu0 0
      %1092 = vmatprep.subr.bf16.mxu0 0
      %1093 = vmatpush2.bf16.msra.mxu0 0
      %1094 = vmatprep.subr.bf16.mxu0 0
      %1095 = vmatpush2.bf16.msra.mxu0 0
      %1096 = vmatprep.subr.bf16.mxu0 0
      %1097 = vmatpush2.bf16.msra.mxu0 0
      %1098 = vmatprep.subr.bf16.mxu0 0
      %1099 = vmatpush2.bf16.msra.mxu0 0
      %1100 = vmatprep.subr.bf16.mxu0 0
      %1101 = vmatpush2.bf16.msra.mxu0 0
      %1102 = vmatprep.subr.bf16.mxu0 0
      %1103 = vmatpush2.bf16.msra.mxu0 0
      %1104 = vmatprep.mubr.bf16.mxu0 0
      %1105 = vmatmul.mubr.bf16.gmra.mxu0 %v961
      %v1106 = vpop.f32.mrf.mxu0
      %v1107 = vadd.f32 0.0, %v1106
      %v1108 = vpop.f32.mrf.mxu0
      %v1109 = vadd.f32 0.0, %v1108
      %v1110 = vpop.f32.mrf.mxu0
      %v1111 = vadd.f32 0.0, %v1110
      %v1112 = vpop.f32.mrf.mxu0
      %v1113 = vadd.f32 0.0, %v1112
      %1114 = vmatprep.mubr.bf16.mxu0 0
      %1115 = vmatmul.mubr.bf16.gmra.mxu0 %v964
      %v1116 = vpop.f32.mrf.mxu0
      %v1117 = vadd.f32 0.0, %v1116
      %v1118 = vpop.f32.mrf.mxu0
      %v1119 = vadd.f32 0.0, %v1118
      %v1120 = vpop.f32.mrf.mxu0
      %v1121 = vadd.f32 0.0, %v1120
      %v1122 = vpop.f32.mrf.mxu0
      %v1123 = vadd.f32 0.0, %v1122
      %1124 = vdwg.mxu0
      %1125 = vmatprep.subr.bf16.mxu0 0
      %1126 = vmatpush1.bf16.msra.mxu0 0
      %1127 = vmatprep.subr.bf16.mxu0 0
      %1128 = vmatpush1.bf16.msra.mxu0 0
      %1129 = vmatprep.subr.bf16.mxu0 0
      %1130 = vmatpush1.bf16.msra.mxu0 0
      %1131 = vmatprep.subr.bf16.mxu0 0
      %1132 = vmatpush1.bf16.msra.mxu0 0
      %1133 = vmatprep.subr.bf16.mxu0 0
      %1134 = vmatpush1.bf16.msra.mxu0 0
      %1135 = vmatprep.subr.bf16.mxu0 0
      %1136 = vmatpush1.bf16.msra.mxu0 0
      %1137 = vmatprep.subr.bf16.mxu0 0
      %1138 = vmatpush1.bf16.msra.mxu0 0
      %1139 = vmatprep.subr.bf16.mxu0 %v948
      %1140 = vmatpush1.bf16.msra.mxu0 %v947
      %1141 = vmatprep.subr.bf16.mxu0 0
      %1142 = vmatpush2.bf16.msra.mxu0 0
      %1143 = vmatprep.subr.bf16.mxu0 0
      %1144 = vmatpush2.bf16.msra.mxu0 0
      %1145 = vmatprep.subr.bf16.mxu0 0
      %1146 = vmatpush2.bf16.msra.mxu0 0
      %1147 = vmatprep.subr.bf16.mxu0 0
      %1148 = vmatpush2.bf16.msra.mxu0 0
      %1149 = vmatprep.subr.bf16.mxu0 0
      %1150 = vmatpush2.bf16.msra.mxu0 0
      %1151 = vmatprep.subr.bf16.mxu0 0
      %1152 = vmatpush2.bf16.msra.mxu0 0
      %1153 = vmatprep.subr.bf16.mxu0 0
      %1154 = vmatpush2.bf16.msra.mxu0 0
      %1155 = vmatprep.subr.bf16.mxu0 0
      %1156 = vmatpush2.bf16.msra.mxu0 0
      %1157 = vmatprep.mubr.bf16.mxu0 0
      %1158 = vmatmul.mubr.bf16.gmra.mxu0 %v961
      %v1159 = vpop.f32.mrf.mxu0
      %v1160 = vadd.f32 0.0, %v1159
      %v1161 = vpop.f32.mrf.mxu0
      %v1162 = vadd.f32 0.0, %v1161
      %v1163 = vpop.f32.mrf.mxu0
      %v1164 = vadd.f32 0.0, %v1163
      %v1165 = vpop.f32.mrf.mxu0
      %v1166 = vadd.f32 0.0, %v1165
      %1167 = vmatprep.mubr.bf16.mxu0 0
      %1168 = vmatmul.mubr.bf16.gmra.mxu0 %v964
      %v1169 = vpop.f32.mrf.mxu0
      %v1170 = vadd.f32 0.0, %v1169
      %v1171 = vpop.f32.mrf.mxu0
      %v1172 = vadd.f32 0.0, %v1171
      %v1173 = vpop.f32.mrf.mxu0
      %v1174 = vadd.f32 0.0, %v1173
      %v1175 = vpop.f32.mrf.mxu0
      %v1176 = vadd.f32 0.0, %v1175
      %1177 = vdwg.mxu0
      %v1182 = vunpack.c.l.b16 %v639
      %v1183 = vunpack.c.l.b16 %v640
      %v1184 = vunpack.c.l.b16 %v641
      %v1185 = vunpack.c.l.b16 %v642
      %v1186 = vpack.c.b16 %v1183, %v1182
      %v1187 = vpack.c.b16 %v1185, %v1184
      %v1189 = vsel %vm959, %v1186, 0
      %v1192 = vsel %vm959, %v1187, 0
      %1194 = vmatprep.subr.bf16.mxu0 0
      %1195 = vmatpush1.bf16.msra.mxu0 0
      %1196 = vmatprep.subr.bf16.mxu0 0
      %1197 = vmatpush1.bf16.msra.mxu0 0
      %1198 = vmatprep.subr.bf16.mxu0 0
      %1199 = vmatpush1.bf16.msra.mxu0 0
      %1200 = vmatprep.subr.bf16.mxu0 0
      %1201 = vmatpush1.bf16.msra.mxu0 0
      %1202 = vmatprep.subr.bf16.mxu0 0
      %1203 = vmatpush1.bf16.msra.mxu0 0
      %1204 = vmatprep.subr.bf16.mxu0 0
      %1205 = vmatpush1.bf16.msra.mxu0 0
      %1206 = vmatprep.subr.bf16.mxu0 0
      %1207 = vmatpush1.bf16.msra.mxu0 0
      %1208 = vmatprep.subr.bf16.mxu0 %v644
      %1209 = vmatpush1.bf16.msra.mxu0 %v643
      %1210 = vmatprep.subr.bf16.mxu0 0
      %1211 = vmatpush2.bf16.msra.mxu0 0
      %1212 = vmatprep.subr.bf16.mxu0 0
      %1213 = vmatpush2.bf16.msra.mxu0 0
      %1214 = vmatprep.subr.bf16.mxu0 0
      %1215 = vmatpush2.bf16.msra.mxu0 0
      %1216 = vmatprep.subr.bf16.mxu0 0
      %1217 = vmatpush2.bf16.msra.mxu0 0
      %1218 = vmatprep.subr.bf16.mxu0 0
      %1219 = vmatpush2.bf16.msra.mxu0 0
      %1220 = vmatprep.subr.bf16.mxu0 0
      %1221 = vmatpush2.bf16.msra.mxu0 0
      %1222 = vmatprep.subr.bf16.mxu0 0
      %1223 = vmatpush2.bf16.msra.mxu0 0
      %1224 = vmatprep.subr.bf16.mxu0 0
      %1225 = vmatpush2.bf16.msra.mxu0 0
      %1226 = vmatprep.mubr.bf16.mxu0 0
      %1227 = vmatmul.mubr.bf16.gmra.mxu0 %v1189
      %v1228 = vpop.f32.mrf.mxu0
      %v1229 = vadd.f32 %v1001, %v1228
      %v1230 = vpop.f32.mrf.mxu0
      %v1231 = vadd.f32 %v1003, %v1230
      %v1232 = vpop.f32.mrf.mxu0
      %v1233 = vadd.f32 %v1005, %v1232
      %v1234 = vpop.f32.mrf.mxu0
      %v1235 = vadd.f32 %v1007, %v1234
      %1236 = vmatprep.mubr.bf16.mxu0 0
      %1237 = vmatmul.mubr.bf16.gmra.mxu0 %v1192
      %v1238 = vpop.f32.mrf.mxu0
      %v1239 = vadd.f32 %v1011, %v1238
      %v1240 = vpop.f32.mrf.mxu0
      %v1241 = vadd.f32 %v1013, %v1240
      %v1242 = vpop.f32.mrf.mxu0
      %v1243 = vadd.f32 %v1015, %v1242
      %v1244 = vpop.f32.mrf.mxu0
      %v1245 = vadd.f32 %v1017, %v1244
      %1246 = vdwg.mxu0
      %1247 = vmatprep.subr.bf16.mxu0 0
      %1248 = vmatpush1.bf16.msra.mxu0 0
      %1249 = vmatprep.subr.bf16.mxu0 0
      %1250 = vmatpush1.bf16.msra.mxu0 0
      %1251 = vmatprep.subr.bf16.mxu0 0
      %1252 = vmatpush1.bf16.msra.mxu0 0
      %1253 = vmatprep.subr.bf16.mxu0 0
      %1254 = vmatpush1.bf16.msra.mxu0 0
      %1255 = vmatprep.subr.bf16.mxu0 0
      %1256 = vmatpush1.bf16.msra.mxu0 0
      %1257 = vmatprep.subr.bf16.mxu0 0
      %1258 = vmatpush1.bf16.msra.mxu0 0
      %1259 = vmatprep.subr.bf16.mxu0 0
      %1260 = vmatpush1.bf16.msra.mxu0 0
      %1261 = vmatprep.subr.bf16.mxu0 %v646
      %1262 = vmatpush1.bf16.msra.mxu0 %v645
      %1263 = vmatprep.subr.bf16.mxu0 0
      %1264 = vmatpush2.bf16.msra.mxu0 0
      %1265 = vmatprep.subr.bf16.mxu0 0
      %1266 = vmatpush2.bf16.msra.mxu0 0
      %1267 = vmatprep.subr.bf16.mxu0 0
      %1268 = vmatpush2.bf16.msra.mxu0 0
      %1269 = vmatprep.subr.bf16.mxu0 0
      %1270 = vmatpush2.bf16.msra.mxu0 0
      %1271 = vmatprep.subr.bf16.mxu0 0
      %1272 = vmatpush2.bf16.msra.mxu0 0
      %1273 = vmatprep.subr.bf16.mxu0 0
      %1274 = vmatpush2.bf16.msra.mxu0 0
      %1275 = vmatprep.subr.bf16.mxu0 0
      %1276 = vmatpush2.bf16.msra.mxu0 0
      %1277 = vmatprep.subr.bf16.mxu0 0
      %1278 = vmatpush2.bf16.msra.mxu0 0
      %1279 = vmatprep.mubr.bf16.mxu0 0
      %1280 = vmatmul.mubr.bf16.gmra.mxu0 %v1189
      %v1281 = vpop.f32.mrf.mxu0
      %v1282 = vadd.f32 %v1054, %v1281
      %v1283 = vpop.f32.mrf.mxu0
      %v1284 = vadd.f32 %v1056, %v1283
      %v1285 = vpop.f32.mrf.mxu0
      %v1286 = vadd.f32 %v1058, %v1285
      %v1287 = vpop.f32.mrf.mxu0
      %v1288 = vadd.f32 %v1060, %v1287
      %1289 = vmatprep.mubr.bf16.mxu0 0
      %1290 = vmatmul.mubr.bf16.gmra.mxu0 %v1192
      %v1291 = vpop.f32.mrf.mxu0
      %v1292 = vadd.f32 %v1064, %v1291
      %v1293 = vpop.f32.mrf.mxu0
      %v1294 = vadd.f32 %v1066, %v1293
      %v1295 = vpop.f32.mrf.mxu0
      %v1296 = vadd.f32 %v1068, %v1295
      %v1297 = vpop.f32.mrf.mxu0
      %v1298 = vadd.f32 %v1070, %v1297
      %1299 = vdwg.mxu0
      %1300 = vmatprep.subr.bf16.mxu0 0
      %1301 = vmatpush1.bf16.msra.mxu0 0
      %1302 = vmatprep.subr.bf16.mxu0 0
      %1303 = vmatpush1.bf16.msra.mxu0 0
      %1304 = vmatprep.subr.bf16.mxu0 0
      %1305 = vmatpush1.bf16.msra.mxu0 0
      %1306 = vmatprep.subr.bf16.mxu0 0
      %1307 = vmatpush1.bf16.msra.mxu0 0
      %1308 = vmatprep.subr.bf16.mxu0 0
      %1309 = vmatpush1.bf16.msra.mxu0 0
      %1310 = vmatprep.subr.bf16.mxu0 0
      %1311 = vmatpush1.bf16.msra.mxu0 0
      %1312 = vmatprep.subr.bf16.mxu0 0
      %1313 = vmatpush1.bf16.msra.mxu0 0
      %1314 = vmatprep.subr.bf16.mxu0 %v648
      %1315 = vmatpush1.bf16.msra.mxu0 %v647
      %1316 = vmatprep.subr.bf16.mxu0 0
      %1317 = vmatpush2.bf16.msra.mxu0 0
      %1318 = vmatprep.subr.bf16.mxu0 0
      %1319 = vmatpush2.bf16.msra.mxu0 0
      %1320 = vmatprep.subr.bf16.mxu0 0
      %1321 = vmatpush2.bf16.msra.mxu0 0
      %1322 = vmatprep.subr.bf16.mxu0 0
      %1323 = vmatpush2.bf16.msra.mxu0 0
      %1324 = vmatprep.subr.bf16.mxu0 0
      %1325 = vmatpush2.bf16.msra.mxu0 0
      %1326 = vmatprep.subr.bf16.mxu0 0
      %1327 = vmatpush2.bf16.msra.mxu0 0
      %1328 = vmatprep.subr.bf16.mxu0 0
      %1329 = vmatpush2.bf16.msra.mxu0 0
      %1330 = vmatprep.subr.bf16.mxu0 0
      %1331 = vmatpush2.bf16.msra.mxu0 0
      %1332 = vmatprep.mubr.bf16.mxu0 0
      %1333 = vmatmul.mubr.bf16.gmra.mxu0 %v1189
      %v1334 = vpop.f32.mrf.mxu0
      %v1335 = vadd.f32 %v1107, %v1334
      %v1336 = vpop.f32.mrf.mxu0
      %v1337 = vadd.f32 %v1109, %v1336
      %v1338 = vpop.f32.mrf.mxu0
      %v1339 = vadd.f32 %v1111, %v1338
      %v1340 = vpop.f32.mrf.mxu0
      %v1341 = vadd.f32 %v1113, %v1340
      %1342 = vmatprep.mubr.bf16.mxu0 0
      %1343 = vmatmul.mubr.bf16.gmra.mxu0 %v1192
      %v1344 = vpop.f32.mrf.mxu0
      %v1345 = vadd.f32 %v1117, %v1344
      %v1346 = vpop.f32.mrf.mxu0
      %v1347 = vadd.f32 %v1119, %v1346
      %v1348 = vpop.f32.mrf.mxu0
      %v1349 = vadd.f32 %v1121, %v1348
      %v1350 = vpop.f32.mrf.mxu0
      %v1351 = vadd.f32 %v1123, %v1350
      %1352 = vdwg.mxu0
      %1353 = vmatprep.subr.bf16.mxu0 0
      %1354 = vmatpush1.bf16.msra.mxu0 0
      %1355 = vmatprep.subr.bf16.mxu0 0
      %1356 = vmatpush1.bf16.msra.mxu0 0
      %1357 = vmatprep.subr.bf16.mxu0 0
      %1358 = vmatpush1.bf16.msra.mxu0 0
      %1359 = vmatprep.subr.bf16.mxu0 0
      %1360 = vmatpush1.bf16.msra.mxu0 0
      %1361 = vmatprep.subr.bf16.mxu0 0
      %1362 = vmatpush1.bf16.msra.mxu0 0
      %1363 = vmatprep.subr.bf16.mxu0 0
      %1364 = vmatpush1.bf16.msra.mxu0 0
      %1365 = vmatprep.subr.bf16.mxu0 0
      %1366 = vmatpush1.bf16.msra.mxu0 0
      %1367 = vmatprep.subr.bf16.mxu0 %v650
      %1368 = vmatpush1.bf16.msra.mxu0 %v649
      %1369 = vmatprep.subr.bf16.mxu0 0
      %1370 = vmatpush2.bf16.msra.mxu0 0
      %1371 = vmatprep.subr.bf16.mxu0 0
      %1372 = vmatpush2.bf16.msra.mxu0 0
      %1373 = vmatprep.subr.bf16.mxu0 0
      %1374 = vmatpush2.bf16.msra.mxu0 0
      %1375 = vmatprep.subr.bf16.mxu0 0
      %1376 = vmatpush2.bf16.msra.mxu0 0
      %1377 = vmatprep.subr.bf16.mxu0 0
      %1378 = vmatpush2.bf16.msra.mxu0 0
      %1379 = vmatprep.subr.bf16.mxu0 0
      %1380 = vmatpush2.bf16.msra.mxu0 0
      %1381 = vmatprep.subr.bf16.mxu0 0
      %1382 = vmatpush2.bf16.msra.mxu0 0
      %1383 = vmatprep.subr.bf16.mxu0 0
      %1384 = vmatpush2.bf16.msra.mxu0 0
      %1385 = vmatprep.mubr.bf16.mxu0 0
      %1386 = vmatmul.mubr.bf16.gmra.mxu0 %v1189
      %v1387 = vpop.f32.mrf.mxu0
      %v1388 = vadd.f32 %v1160, %v1387
      %v1389 = vpop.f32.mrf.mxu0
      %v1390 = vadd.f32 %v1162, %v1389
      %v1391 = vpop.f32.mrf.mxu0
      %v1392 = vadd.f32 %v1164, %v1391
      %v1393 = vpop.f32.mrf.mxu0
      %v1394 = vadd.f32 %v1166, %v1393
      %1395 = vmatprep.mubr.bf16.mxu0 0
      %1396 = vmatmul.mubr.bf16.gmra.mxu0 %v1192
      %v1397 = vpop.f32.mrf.mxu0
      %v1398 = vadd.f32 %v1170, %v1397
      %v1399 = vpop.f32.mrf.mxu0
      %v1400 = vadd.f32 %v1172, %v1399
      %v1401 = vpop.f32.mrf.mxu0
      %v1402 = vadd.f32 %v1174, %v1401
      %v1403 = vpop.f32.mrf.mxu0
      %v1404 = vadd.f32 %v1176, %v1403
      %1405 = vdwg.mxu0
      %s1406 = scalar_lea.vmem %s326, 256
      %v1407 = vld [vmem:[%s1406] sm:$0xff]
      %v1408 = vld [vmem:[%s1406 + $0x8] sm:$0xff]
      %v1409 = vld [vmem:[%s1406 + $0x10] sm:$0xff]
      %v1410 = vld [vmem:[%s1406 + $0x18] sm:$0xff]
      %v1411 = vld [vmem:[%s1406 + $0x20] sm:$0xff]
      %v1412 = vld [vmem:[%s1406 + $0x28] sm:$0xff]
      %v1413 = vld [vmem:[%s1406 + $0x30] sm:$0xff]
      %v1414 = vld [vmem:[%s1406 + $0x38] sm:$0xff]
      %v1415 = vld [vmem:[%s1406 + $0x40] sm:$0xff]
      %v1416 = vld [vmem:[%s1406 + $0x48] sm:$0xff]
      %v1417 = vld [vmem:[%s1406 + $0x50] sm:$0xff]
      %v1418 = vld [vmem:[%s1406 + $0x58] sm:$0xff]
      %v1419 = vld [vmem:[%s1406 + $0x60] sm:$0xff]
      %v1420 = vld [vmem:[%s1406 + $0x68] sm:$0xff]
      %v1421 = vld [vmem:[%s1406 + $0x70] sm:$0xff]
      %v1422 = vld [vmem:[%s1406 + $0x78] sm:$0xff]
      %v1439 = vunpack.c.l.b16 %v1407
      %v1440 = vunpack.c.h.b16 %v1407
      %v1441 = vunpack.c.l.b16 %v1408
      %v1442 = vunpack.c.h.b16 %v1408
      %v1443 = vunpack.c.l.b16 %v1409
      %v1444 = vunpack.c.h.b16 %v1409
      %v1445 = vunpack.c.l.b16 %v1410
      %v1446 = vunpack.c.h.b16 %v1410
      %v1447 = vunpack.c.l.b16 %v1411
      %v1448 = vunpack.c.h.b16 %v1411
      %v1449 = vunpack.c.l.b16 %v1412
      %v1450 = vunpack.c.h.b16 %v1412
      %v1451 = vunpack.c.l.b16 %v1413
      %v1452 = vunpack.c.h.b16 %v1413
      %v1453 = vunpack.c.l.b16 %v1414
      %v1454 = vunpack.c.h.b16 %v1414
      %v1455 = vunpack.c.l.b16 %v1415
      %v1456 = vunpack.c.h.b16 %v1415
      %v1457 = vunpack.c.l.b16 %v1416
      %v1458 = vunpack.c.h.b16 %v1416
      %v1459 = vunpack.c.l.b16 %v1417
      %v1460 = vunpack.c.h.b16 %v1417
      %v1461 = vunpack.c.l.b16 %v1418
      %v1462 = vunpack.c.h.b16 %v1418
      %v1463 = vunpack.c.l.b16 %v1419
      %v1464 = vunpack.c.h.b16 %v1419
      %v1465 = vunpack.c.l.b16 %v1420
      %v1466 = vunpack.c.h.b16 %v1420
      %v1467 = vunpack.c.l.b16 %v1421
      %v1468 = vunpack.c.h.b16 %v1421
      %v1469 = vunpack.c.l.b16 %v1422
      %v1470 = vunpack.c.h.b16 %v1422
      %v1471 = vpack.c.b16 %v1447, %v1439
      %v1472 = vpack.c.b16 %v1448, %v1440
      %v1473 = vpack.c.b16 %v1449, %v1441
      %v1474 = vpack.c.b16 %v1450, %v1442
      %v1475 = vpack.c.b16 %v1451, %v1443
      %v1476 = vpack.c.b16 %v1452, %v1444
      %v1477 = vpack.c.b16 %v1453, %v1445
      %v1478 = vpack.c.b16 %v1454, %v1446
      %v1479 = vpack.c.b16 %v1463, %v1455
      %v1480 = vpack.c.b16 %v1464, %v1456
      %v1481 = vpack.c.b16 %v1465, %v1457
      %v1482 = vpack.c.b16 %v1466, %v1458
      %v1483 = vpack.c.b16 %v1467, %v1459
      %v1484 = vpack.c.b16 %v1468, %v1460
      %v1485 = vpack.c.b16 %v1469, %v1461
      %v1486 = vpack.c.b16 %v1470, %v1462
      %1503 = vmatprep.subr.bf16.mxu0 0
      %1504 = vmatpush1.bf16.msra.mxu0 0
      %1505 = vmatprep.subr.bf16.mxu0 0
      %1506 = vmatpush1.bf16.msra.mxu0 0
      %1507 = vmatprep.subr.bf16.mxu0 0
      %1508 = vmatpush1.bf16.msra.mxu0 0
      %1509 = vmatprep.subr.bf16.mxu0 0
      %1510 = vmatpush1.bf16.msra.mxu0 0
      %1511 = vmatprep.subr.bf16.mxu0 0
      %1512 = vmatpush1.bf16.msra.mxu0 0
      %1513 = vmatprep.subr.bf16.mxu0 0
      %1514 = vmatpush1.bf16.msra.mxu0 0
      %1515 = vmatprep.subr.bf16.mxu0 %v1480
      %1516 = vmatpush1.bf16.msra.mxu0 %v1479
      %1517 = vmatprep.subr.bf16.mxu0 %v1472
      %1518 = vmatpush1.bf16.msra.mxu0 %v1471
      %1519 = vmatprep.subr.bf16.mxu0 0
      %1520 = vmatpush2.bf16.msra.mxu0 0
      %1521 = vmatprep.subr.bf16.mxu0 0
      %1522 = vmatpush2.bf16.msra.mxu0 0
      %1523 = vmatprep.subr.bf16.mxu0 0
      %1524 = vmatpush2.bf16.msra.mxu0 0
      %1525 = vmatprep.subr.bf16.mxu0 0
      %1526 = vmatpush2.bf16.msra.mxu0 0
      %1527 = vmatprep.subr.bf16.mxu0 0
      %1528 = vmatpush2.bf16.msra.mxu0 0
      %1529 = vmatprep.subr.bf16.mxu0 0
      %1530 = vmatpush2.bf16.msra.mxu0 0
      %1531 = vmatprep.subr.bf16.mxu0 0
      %1532 = vmatpush2.bf16.msra.mxu0 0
      %1533 = vmatprep.subr.bf16.mxu0 0
      %1534 = vmatpush2.bf16.msra.mxu0 0
      %1535 = vmatprep.mubr.bf16.mxu0 0
      %1536 = vmatmul.mubr.bf16.gmra.mxu0 %v449
      %v1537 = vpop.f32.mrf.mxu0
      %v1538 = vadd.f32 %v355, %v1537
      %v1539 = vpop.f32.mrf.mxu0
      %v1540 = vadd.f32 %v355, %v1539
      %v1541 = vpop.f32.mrf.mxu0
      %v1542 = vadd.f32 %v360, %v1541
      %v1543 = vpop.f32.mrf.mxu0
      %v1544 = vadd.f32 %v360, %v1543
      %1545 = vdwg.mxu0
      %1546 = vmatprep.subr.bf16.mxu0 0
      %1547 = vmatpush1.bf16.msra.mxu0 0
      %1548 = vmatprep.subr.bf16.mxu0 0
      %1549 = vmatpush1.bf16.msra.mxu0 0
      %1550 = vmatprep.subr.bf16.mxu0 0
      %1551 = vmatpush1.bf16.msra.mxu0 0
      %1552 = vmatprep.subr.bf16.mxu0 0
      %1553 = vmatpush1.bf16.msra.mxu0 0
      %1554 = vmatprep.subr.bf16.mxu0 0
      %1555 = vmatpush1.bf16.msra.mxu0 0
      %1556 = vmatprep.subr.bf16.mxu0 0
      %1557 = vmatpush1.bf16.msra.mxu0 0
      %1558 = vmatprep.subr.bf16.mxu0 %v1482
      %1559 = vmatpush1.bf16.msra.mxu0 %v1481
      %1560 = vmatprep.subr.bf16.mxu0 %v1474
      %1561 = vmatpush1.bf16.msra.mxu0 %v1473
      %1562 = vmatprep.subr.bf16.mxu0 0
      %1563 = vmatpush2.bf16.msra.mxu0 0
      %1564 = vmatprep.subr.bf16.mxu0 0
      %1565 = vmatpush2.bf16.msra.mxu0 0
      %1566 = vmatprep.subr.bf16.mxu0 0
      %1567 = vmatpush2.bf16.msra.mxu0 0
      %1568 = vmatprep.subr.bf16.mxu0 0
      %1569 = vmatpush2.bf16.msra.mxu0 0
      %1570 = vmatprep.subr.bf16.mxu0 0
      %1571 = vmatpush2.bf16.msra.mxu0 0
      %1572 = vmatprep.subr.bf16.mxu0 0
      %1573 = vmatpush2.bf16.msra.mxu0 0
      %1574 = vmatprep.subr.bf16.mxu0 0
      %1575 = vmatpush2.bf16.msra.mxu0 0
      %1576 = vmatprep.subr.bf16.mxu0 0
      %1577 = vmatpush2.bf16.msra.mxu0 0
      %1578 = vmatprep.mubr.bf16.mxu0 0
      %1579 = vmatmul.mubr.bf16.gmra.mxu0 %v449
      %v1580 = vpop.f32.mrf.mxu0
      %v1581 = vadd.f32 %v355, %v1580
      %v1582 = vpop.f32.mrf.mxu0
      %v1583 = vadd.f32 %v355, %v1582
      %v1584 = vpop.f32.mrf.mxu0
      %v1585 = vadd.f32 %v360, %v1584
      %v1586 = vpop.f32.mrf.mxu0
      %v1587 = vadd.f32 %v360, %v1586
      %1588 = vdwg.mxu0
      %1589 = vmatprep.subr.bf16.mxu0 0
      %1590 = vmatpush1.bf16.msra.mxu0 0
      %1591 = vmatprep.subr.bf16.mxu0 0
      %1592 = vmatpush1.bf16.msra.mxu0 0
      %1593 = vmatprep.subr.bf16.mxu0 0
      %1594 = vmatpush1.bf16.msra.mxu0 0
      %1595 = vmatprep.subr.bf16.mxu0 0
      %1596 = vmatpush1.bf16.msra.mxu0 0
      %1597 = vmatprep.subr.bf16.mxu0 0
      %1598 = vmatpush1.bf16.msra.mxu0 0
      %1599 = vmatprep.subr.bf16.mxu0 0
      %1600 = vmatpush1.bf16.msra.mxu0 0
      %1601 = vmatprep.subr.bf16.mxu0 %v1484
      %1602 = vmatpush1.bf16.msra.mxu0 %v1483
      %1603 = vmatprep.subr.bf16.mxu0 %v1476
      %1604 = vmatpush1.bf16.msra.mxu0 %v1475
      %1605 = vmatprep.subr.bf16.mxu0 0
      %1606 = vmatpush2.bf16.msra.mxu0 0
      %1607 = vmatprep.subr.bf16.mxu0 0
      %1608 = vmatpush2.bf16.msra.mxu0 0
      %1609 = vmatprep.subr.bf16.mxu0 0
      %1610 = vmatpush2.bf16.msra.mxu0 0
      %1611 = vmatprep.subr.bf16.mxu0 0
      %1612 = vmatpush2.bf16.msra.mxu0 0
      %1613 = vmatprep.subr.bf16.mxu0 0
      %1614 = vmatpush2.bf16.msra.mxu0 0
      %1615 = vmatprep.subr.bf16.mxu0 0
      %1616 = vmatpush2.bf16.msra.mxu0 0
      %1617 = vmatprep.subr.bf16.mxu0 0
      %1618 = vmatpush2.bf16.msra.mxu0 0
      %1619 = vmatprep.subr.bf16.mxu0 0
      %1620 = vmatpush2.bf16.msra.mxu0 0
      %1621 = vmatprep.mubr.bf16.mxu0 0
      %1622 = vmatmul.mubr.bf16.gmra.mxu0 %v449
      %v1623 = vpop.f32.mrf.mxu0
      %v1624 = vadd.f32 %v355, %v1623
      %v1625 = vpop.f32.mrf.mxu0
      %v1626 = vadd.f32 %v355, %v1625
      %v1627 = vpop.f32.mrf.mxu0
      %v1628 = vadd.f32 %v360, %v1627
      %v1629 = vpop.f32.mrf.mxu0
      %v1630 = vadd.f32 %v360, %v1629
      %1631 = vdwg.mxu0
      %1632 = vmatprep.subr.bf16.mxu0 0
      %1633 = vmatpush1.bf16.msra.mxu0 0
      %1634 = vmatprep.subr.bf16.mxu0 0
      %1635 = vmatpush1.bf16.msra.mxu0 0
      %1636 = vmatprep.subr.bf16.mxu0 0
      %1637 = vmatpush1.bf16.msra.mxu0 0
      %1638 = vmatprep.subr.bf16.mxu0 0
      %1639 = vmatpush1.bf16.msra.mxu0 0
      %1640 = vmatprep.subr.bf16.mxu0 0
      %1641 = vmatpush1.bf16.msra.mxu0 0
      %1642 = vmatprep.subr.bf16.mxu0 0
      %1643 = vmatpush1.bf16.msra.mxu0 0
      %1644 = vmatprep.subr.bf16.mxu0 %v1486
      %1645 = vmatpush1.bf16.msra.mxu0 %v1485
      %1646 = vmatprep.subr.bf16.mxu0 %v1478
      %1647 = vmatpush1.bf16.msra.mxu0 %v1477
      %1648 = vmatprep.subr.bf16.mxu0 0
      %1649 = vmatpush2.bf16.msra.mxu0 0
      %1650 = vmatprep.subr.bf16.mxu0 0
      %1651 = vmatpush2.bf16.msra.mxu0 0
      %1652 = vmatprep.subr.bf16.mxu0 0
      %1653 = vmatpush2.bf16.msra.mxu0 0
      %1654 = vmatprep.subr.bf16.mxu0 0
      %1655 = vmatpush2.bf16.msra.mxu0 0
      %1656 = vmatprep.subr.bf16.mxu0 0
      %1657 = vmatpush2.bf16.msra.mxu0 0
      %1658 = vmatprep.subr.bf16.mxu0 0
      %1659 = vmatpush2.bf16.msra.mxu0 0
      %1660 = vmatprep.subr.bf16.mxu0 0
      %1661 = vmatpush2.bf16.msra.mxu0 0
      %1662 = vmatprep.subr.bf16.mxu0 0
      %1663 = vmatpush2.bf16.msra.mxu0 0
      %1664 = vmatprep.mubr.bf16.mxu0 0
      %1665 = vmatmul.mubr.bf16.gmra.mxu0 %v449
      %v1666 = vpop.f32.mrf.mxu0
      %v1667 = vadd.f32 %v355, %v1666
      %v1668 = vpop.f32.mrf.mxu0
      %v1669 = vadd.f32 %v355, %v1668
      %v1670 = vpop.f32.mrf.mxu0
      %v1671 = vadd.f32 %v360, %v1670
      %v1672 = vpop.f32.mrf.mxu0
      %v1673 = vadd.f32 %v360, %v1672
      %1674 = vdwg.mxu0
      %v1675 = vtanh.pop %v1538
      %v1676 = vtanh.pop %v1540
      %v1677 = vtanh.pop %v1581
      %v1678 = vtanh.pop %v1583
      %v1679 = vtanh.pop %v1624
      %v1680 = vtanh.pop %v1626
      %v1681 = vtanh.pop %v1667
      %v1682 = vtanh.pop %v1669
      %v1683 = vtanh.pop %v1542
      %v1684 = vtanh.pop %v1544
      %v1685 = vtanh.pop %v1585
      %v1686 = vtanh.pop %v1587
      %v1687 = vtanh.pop %v1628
      %v1688 = vtanh.pop %v1630
      %v1689 = vtanh.pop %v1671
      %v1690 = vtanh.pop %v1673
      %s1691 = scalar_lea.vmem %s3, 32
      %v1692 = vld [vmem:[%s1691] sm:$0xf]
      %v1693 = vld [vmem:[%s1691 + $0x4] sm:$0xf]
      %v1694 = vld [vmem:[%s1691 + $0x8] sm:$0xf]
      %v1695 = vld [vmem:[%s1691 + $0xc] sm:$0xf]
      %v1696 = vpack.c.bf16 %v1683, %v1675
      %v1697 = vpack.c.bf16 %v1684, %v1676
      %v1698 = vpack.c.bf16 %v1685, %v1677
      %v1699 = vpack.c.bf16 %v1686, %v1678
      %v1700 = vpack.c.bf16 %v1687, %v1679
      %v1701 = vpack.c.bf16 %v1688, %v1680
      %v1702 = vpack.c.bf16 %v1689, %v1681
      %v1703 = vpack.c.bf16 %v1690, %v1682
      %v1708 = vunpack.c.l.b16 %v1692
      %v1709 = vunpack.c.l.b16 %v1693
      %v1710 = vunpack.c.l.b16 %v1694
      %v1711 = vunpack.c.l.b16 %v1695
      %v1712 = vpack.c.b16 %v1709, %v1708
      %v1713 = vpack.c.b16 %v1711, %v1710
      %v1715 = vsel %vm959, %v1712, 0
      %v1718 = vsel %vm959, %v1713, 0
      %1720 = vmatprep.subr.bf16.mxu0 0
      %1721 = vmatpush1.bf16.msra.mxu0 0
      %1722 = vmatprep.subr.bf16.mxu0 0
      %1723 = vmatpush1.bf16.msra.mxu0 0
      %1724 = vmatprep.subr.bf16.mxu0 0
      %1725 = vmatpush1.bf16.msra.mxu0 0
      %1726 = vmatprep.subr.bf16.mxu0 0
      %1727 = vmatpush1.bf16.msra.mxu0 0
      %1728 = vmatprep.subr.bf16.mxu0 0
      %1729 = vmatpush1.bf16.msra.mxu0 0
      %1730 = vmatprep.subr.bf16.mxu0 0
      %1731 = vmatpush1.bf16.msra.mxu0 0
      %1732 = vmatprep.subr.bf16.mxu0 0
      %1733 = vmatpush1.bf16.msra.mxu0 0
      %1734 = vmatprep.subr.bf16.mxu0 %v1697
      %1735 = vmatpush1.bf16.msra.mxu0 %v1696
      %1736 = vmatprep.subr.bf16.mxu0 0
      %1737 = vmatpush2.bf16.msra.mxu0 0
      %1738 = vmatprep.subr.bf16.mxu0 0
      %1739 = vmatpush2.bf16.msra.mxu0 0
      %1740 = vmatprep.subr.bf16.mxu0 0
      %1741 = vmatpush2.bf16.msra.mxu0 0
      %1742 = vmatprep.subr.bf16.mxu0 0
      %1743 = vmatpush2.bf16.msra.mxu0 0
      %1744 = vmatprep.subr.bf16.mxu0 0
      %1745 = vmatpush2.bf16.msra.mxu0 0
      %1746 = vmatprep.subr.bf16.mxu0 0
      %1747 = vmatpush2.bf16.msra.mxu0 0
      %1748 = vmatprep.subr.bf16.mxu0 0
      %1749 = vmatpush2.bf16.msra.mxu0 0
      %1750 = vmatprep.subr.bf16.mxu0 0
      %1751 = vmatpush2.bf16.msra.mxu0 0
      %1752 = vmatprep.mubr.bf16.mxu0 0
      %1753 = vmatmul.mubr.bf16.gmra.mxu0 %v1715
      %v1754 = vpop.f32.mrf.mxu0
      %v1755 = vadd.f32 0.0, %v1754
      %v1756 = vpop.f32.mrf.mxu0
      %v1757 = vadd.f32 0.0, %v1756
      %v1758 = vpop.f32.mrf.mxu0
      %v1759 = vadd.f32 0.0, %v1758
      %v1760 = vpop.f32.mrf.mxu0
      %v1761 = vadd.f32 0.0, %v1760
      %1762 = vmatprep.mubr.bf16.mxu0 0
      %1763 = vmatmul.mubr.bf16.gmra.mxu0 %v1718
      %v1764 = vpop.f32.mrf.mxu0
      %v1765 = vadd.f32 0.0, %v1764
      %v1766 = vpop.f32.mrf.mxu0
      %v1767 = vadd.f32 0.0, %v1766
      %v1768 = vpop.f32.mrf.mxu0
      %v1769 = vadd.f32 0.0, %v1768
      %v1770 = vpop.f32.mrf.mxu0
      %v1771 = vadd.f32 0.0, %v1770
      %1772 = vdwg.mxu0
      %1773 = vmatprep.subr.bf16.mxu0 0
      %1774 = vmatpush1.bf16.msra.mxu0 0
      %1775 = vmatprep.subr.bf16.mxu0 0
      %1776 = vmatpush1.bf16.msra.mxu0 0
      %1777 = vmatprep.subr.bf16.mxu0 0
      %1778 = vmatpush1.bf16.msra.mxu0 0
      %1779 = vmatprep.subr.bf16.mxu0 0
      %1780 = vmatpush1.bf16.msra.mxu0 0
      %1781 = vmatprep.subr.bf16.mxu0 0
      %1782 = vmatpush1.bf16.msra.mxu0 0
      %1783 = vmatprep.subr.bf16.mxu0 0
      %1784 = vmatpush1.bf16.msra.mxu0 0
      %1785 = vmatprep.subr.bf16.mxu0 0
      %1786 = vmatpush1.bf16.msra.mxu0 0
      %1787 = vmatprep.subr.bf16.mxu0 %v1699
      %1788 = vmatpush1.bf16.msra.mxu0 %v1698
      %1789 = vmatprep.subr.bf16.mxu0 0
      %1790 = vmatpush2.bf16.msra.mxu0 0
      %1791 = vmatprep.subr.bf16.mxu0 0
      %1792 = vmatpush2.bf16.msra.mxu0 0
      %1793 = vmatprep.subr.bf16.mxu0 0
      %1794 = vmatpush2.bf16.msra.mxu0 0
      %1795 = vmatprep.subr.bf16.mxu0 0
      %1796 = vmatpush2.bf16.msra.mxu0 0
      %1797 = vmatprep.subr.bf16.mxu0 0
      %1798 = vmatpush2.bf16.msra.mxu0 0
      %1799 = vmatprep.subr.bf16.mxu0 0
      %1800 = vmatpush2.bf16.msra.mxu0 0
      %1801 = vmatprep.subr.bf16.mxu0 0
      %1802 = vmatpush2.bf16.msra.mxu0 0
      %1803 = vmatprep.subr.bf16.mxu0 0
      %1804 = vmatpush2.bf16.msra.mxu0 0
      %1805 = vmatprep.mubr.bf16.mxu0 0
      %1806 = vmatmul.mubr.bf16.gmra.mxu0 %v1715
      %v1807 = vpop.f32.mrf.mxu0
      %v1808 = vadd.f32 0.0, %v1807
      %v1809 = vpop.f32.mrf.mxu0
      %v1810 = vadd.f32 0.0, %v1809
      %v1811 = vpop.f32.mrf.mxu0
      %v1812 = vadd.f32 0.0, %v1811
      %v1813 = vpop.f32.mrf.mxu0
      %v1814 = vadd.f32 0.0, %v1813
      %1815 = vmatprep.mubr.bf16.mxu0 0
      %1816 = vmatmul.mubr.bf16.gmra.mxu0 %v1718
      %v1817 = vpop.f32.mrf.mxu0
      %v1818 = vadd.f32 0.0, %v1817
      %v1819 = vpop.f32.mrf.mxu0
      %v1820 = vadd.f32 0.0, %v1819
      %v1821 = vpop.f32.mrf.mxu0
      %v1822 = vadd.f32 0.0, %v1821
      %v1823 = vpop.f32.mrf.mxu0
      %v1824 = vadd.f32 0.0, %v1823
      %1825 = vdwg.mxu0
      %1826 = vmatprep.subr.bf16.mxu0 0
      %1827 = vmatpush1.bf16.msra.mxu0 0
      %1828 = vmatprep.subr.bf16.mxu0 0
      %1829 = vmatpush1.bf16.msra.mxu0 0
      %1830 = vmatprep.subr.bf16.mxu0 0
      %1831 = vmatpush1.bf16.msra.mxu0 0
      %1832 = vmatprep.subr.bf16.mxu0 0
      %1833 = vmatpush1.bf16.msra.mxu0 0
      %1834 = vmatprep.subr.bf16.mxu0 0
      %1835 = vmatpush1.bf16.msra.mxu0 0
      %1836 = vmatprep.subr.bf16.mxu0 0
      %1837 = vmatpush1.bf16.msra.mxu0 0
      %1838 = vmatprep.subr.bf16.mxu0 0
      %1839 = vmatpush1.bf16.msra.mxu0 0
      %1840 = vmatprep.subr.bf16.mxu0 %v1701
      %1841 = vmatpush1.bf16.msra.mxu0 %v1700
      %1842 = vmatprep.subr.bf16.mxu0 0
      %1843 = vmatpush2.bf16.msra.mxu0 0
      %1844 = vmatprep.subr.bf16.mxu0 0
      %1845 = vmatpush2.bf16.msra.mxu0 0
      %1846 = vmatprep.subr.bf16.mxu0 0
      %1847 = vmatpush2.bf16.msra.mxu0 0
      %1848 = vmatprep.subr.bf16.mxu0 0
      %1849 = vmatpush2.bf16.msra.mxu0 0
      %1850 = vmatprep.subr.bf16.mxu0 0
      %1851 = vmatpush2.bf16.msra.mxu0 0
      %1852 = vmatprep.subr.bf16.mxu0 0
      %1853 = vmatpush2.bf16.msra.mxu0 0
      %1854 = vmatprep.subr.bf16.mxu0 0
      %1855 = vmatpush2.bf16.msra.mxu0 0
      %1856 = vmatprep.subr.bf16.mxu0 0
      %1857 = vmatpush2.bf16.msra.mxu0 0
      %1858 = vmatprep.mubr.bf16.mxu0 0
      %1859 = vmatmul.mubr.bf16.gmra.mxu0 %v1715
      %v1860 = vpop.f32.mrf.mxu0
      %v1861 = vadd.f32 0.0, %v1860
      %v1862 = vpop.f32.mrf.mxu0
      %v1863 = vadd.f32 0.0, %v1862
      %v1864 = vpop.f32.mrf.mxu0
      %v1865 = vadd.f32 0.0, %v1864
      %v1866 = vpop.f32.mrf.mxu0
      %v1867 = vadd.f32 0.0, %v1866
      %1868 = vmatprep.mubr.bf16.mxu0 0
      %1869 = vmatmul.mubr.bf16.gmra.mxu0 %v1718
      %v1870 = vpop.f32.mrf.mxu0
      %v1871 = vadd.f32 0.0, %v1870
      %v1872 = vpop.f32.mrf.mxu0
      %v1873 = vadd.f32 0.0, %v1872
      %v1874 = vpop.f32.mrf.mxu0
      %v1875 = vadd.f32 0.0, %v1874
      %v1876 = vpop.f32.mrf.mxu0
      %v1877 = vadd.f32 0.0, %v1876
      %1878 = vdwg.mxu0
      %1879 = vmatprep.subr.bf16.mxu0 0
      %1880 = vmatpush1.bf16.msra.mxu0 0
      %1881 = vmatprep.subr.bf16.mxu0 0
      %1882 = vmatpush1.bf16.msra.mxu0 0
      %1883 = vmatprep.subr.bf16.mxu0 0
      %1884 = vmatpush1.bf16.msra.mxu0 0
      %1885 = vmatprep.subr.bf16.mxu0 0
      %1886 = vmatpush1.bf16.msra.mxu0 0
      %1887 = vmatprep.subr.bf16.mxu0 0
      %1888 = vmatpush1.bf16.msra.mxu0 0
      %1889 = vmatprep.subr.bf16.mxu0 0
      %1890 = vmatpush1.bf16.msra.mxu0 0
      %1891 = vmatprep.subr.bf16.mxu0 0
      %1892 = vmatpush1.bf16.msra.mxu0 0
      %1893 = vmatprep.subr.bf16.mxu0 %v1703
      %1894 = vmatpush1.bf16.msra.mxu0 %v1702
      %1895 = vmatprep.subr.bf16.mxu0 0
      %1896 = vmatpush2.bf16.msra.mxu0 0
      %1897 = vmatprep.subr.bf16.mxu0 0
      %1898 = vmatpush2.bf16.msra.mxu0 0
      %1899 = vmatprep.subr.bf16.mxu0 0
      %1900 = vmatpush2.bf16.msra.mxu0 0
      %1901 = vmatprep.subr.bf16.mxu0 0
      %1902 = vmatpush2.bf16.msra.mxu0 0
      %1903 = vmatprep.subr.bf16.mxu0 0
      %1904 = vmatpush2.bf16.msra.mxu0 0
      %1905 = vmatprep.subr.bf16.mxu0 0
      %1906 = vmatpush2.bf16.msra.mxu0 0
      %1907 = vmatprep.subr.bf16.mxu0 0
      %1908 = vmatpush2.bf16.msra.mxu0 0
      %1909 = vmatprep.subr.bf16.mxu0 0
      %1910 = vmatpush2.bf16.msra.mxu0 0
      %1911 = vmatprep.mubr.bf16.mxu0 0
      %1912 = vmatmul.mubr.bf16.gmra.mxu0 %v1715
      %v1913 = vpop.f32.mrf.mxu0
      %v1914 = vadd.f32 0.0, %v1913
      %v1915 = vpop.f32.mrf.mxu0
      %v1916 = vadd.f32 0.0, %v1915
      %v1917 = vpop.f32.mrf.mxu0
      %v1918 = vadd.f32 0.0, %v1917
      %v1919 = vpop.f32.mrf.mxu0
      %v1920 = vadd.f32 0.0, %v1919
      %1921 = vmatprep.mubr.bf16.mxu0 0
      %1922 = vmatmul.mubr.bf16.gmra.mxu0 %v1718
      %v1923 = vpop.f32.mrf.mxu0
      %v1924 = vadd.f32 0.0, %v1923
      %v1925 = vpop.f32.mrf.mxu0
      %v1926 = vadd.f32 0.0, %v1925
      %v1927 = vpop.f32.mrf.mxu0
      %v1928 = vadd.f32 0.0, %v1927
      %v1929 = vpop.f32.mrf.mxu0
      %v1930 = vadd.f32 0.0, %v1929
      %1931 = vdwg.mxu0
      %v1932 = vadd.f32 %v1229, %v1755
      %v1933 = vadd.f32 %v1231, %v1757
      %v1934 = vadd.f32 %v1282, %v1808
      %v1935 = vadd.f32 %v1284, %v1810
      %v1936 = vadd.f32 %v1335, %v1861
      %v1937 = vadd.f32 %v1337, %v1863
      %v1938 = vadd.f32 %v1388, %v1914
      %v1939 = vadd.f32 %v1390, %v1916
      %v1940 = vadd.f32 %v1233, %v1759
      %v1941 = vadd.f32 %v1235, %v1761
      %v1942 = vadd.f32 %v1286, %v1812
      %v1943 = vadd.f32 %v1288, %v1814
      %v1944 = vadd.f32 %v1339, %v1865
      %v1945 = vadd.f32 %v1341, %v1867
      %v1946 = vadd.f32 %v1392, %v1918
      %v1947 = vadd.f32 %v1394, %v1920
      %v1948 = vadd.f32 %v1239, %v1765
      %v1949 = vadd.f32 %v1241, %v1767
      %v1950 = vadd.f32 %v1292, %v1818
      %v1951 = vadd.f32 %v1294, %v1820
      %v1952 = vadd.f32 %v1345, %v1871
      %v1953 = vadd.f32 %v1347, %v1873
      %v1954 = vadd.f32 %v1398, %v1924
      %v1955 = vadd.f32 %v1400, %v1926
      %v1956 = vadd.f32 %v1243, %v1769
      %v1957 = vadd.f32 %v1245, %v1771
      %v1958 = vadd.f32 %v1296, %v1822
      %v1959 = vadd.f32 %v1298, %v1824
      %v1960 = vadd.f32 %v1349, %v1875
      %v1961 = vadd.f32 %v1351, %v1877
      %v1962 = vadd.f32 %v1402, %v1928
      %v1963 = vadd.f32 %v1404, %v1930
      %s1964 = scalar_lea.vmem %s326, 384
      %v1965 = vld [vmem:[%s1964] sm:$0xff]
      %v1966 = vld [vmem:[%s1964 + $0x8] sm:$0xff]
      %v1967 = vld [vmem:[%s1964 + $0x10] sm:$0xff]
      %v1968 = vld [vmem:[%s1964 + $0x18] sm:$0xff]
      %v1969 = vld [vmem:[%s1964 + $0x20] sm:$0xff]
      %v1970 = vld [vmem:[%s1964 + $0x28] sm:$0xff]
      %v1971 = vld [vmem:[%s1964 + $0x30] sm:$0xff]
      %v1972 = vld [vmem:[%s1964 + $0x38] sm:$0xff]
      %v1973 = vld [vmem:[%s1964 + $0x40] sm:$0xff]
      %v1974 = vld [vmem:[%s1964 + $0x48] sm:$0xff]
      %v1975 = vld [vmem:[%s1964 + $0x50] sm:$0xff]
      %v1976 = vld [vmem:[%s1964 + $0x58] sm:$0xff]
      %v1977 = vld [vmem:[%s1964 + $0x60] sm:$0xff]
      %v1978 = vld [vmem:[%s1964 + $0x68] sm:$0xff]
      %v1979 = vld [vmem:[%s1964 + $0x70] sm:$0xff]
      %v1980 = vld [vmem:[%s1964 + $0x78] sm:$0xff]
      %v1997 = vunpack.c.l.b16 %v1965
      %v1998 = vunpack.c.h.b16 %v1965
      %v1999 = vunpack.c.l.b16 %v1966
      %v2000 = vunpack.c.h.b16 %v1966
      %v2001 = vunpack.c.l.b16 %v1967
      %v2002 = vunpack.c.h.b16 %v1967
      %v2003 = vunpack.c.l.b16 %v1968
      %v2004 = vunpack.c.h.b16 %v1968
      %v2005 = vunpack.c.l.b16 %v1969
      %v2006 = vunpack.c.h.b16 %v1969
      %v2007 = vunpack.c.l.b16 %v1970
      %v2008 = vunpack.c.h.b16 %v1970
      %v2009 = vunpack.c.l.b16 %v1971
      %v2010 = vunpack.c.h.b16 %v1971
      %v2011 = vunpack.c.l.b16 %v1972
      %v2012 = vunpack.c.h.b16 %v1972
      %v2013 = vunpack.c.l.b16 %v1973
      %v2014 = vunpack.c.h.b16 %v1973
      %v2015 = vunpack.c.l.b16 %v1974
      %v2016 = vunpack.c.h.b16 %v1974
      %v2017 = vunpack.c.l.b16 %v1975
      %v2018 = vunpack.c.h.b16 %v1975
      %v2019 = vunpack.c.l.b16 %v1976
      %v2020 = vunpack.c.h.b16 %v1976
      %v2021 = vunpack.c.l.b16 %v1977
      %v2022 = vunpack.c.h.b16 %v1977
      %v2023 = vunpack.c.l.b16 %v1978
      %v2024 = vunpack.c.h.b16 %v1978
      %v2025 = vunpack.c.l.b16 %v1979
      %v2026 = vunpack.c.h.b16 %v1979
      %v2027 = vunpack.c.l.b16 %v1980
      %v2028 = vunpack.c.h.b16 %v1980
      %v2029 = vpack.c.b16 %v2005, %v1997
      %v2030 = vpack.c.b16 %v2006, %v1998
      %v2031 = vpack.c.b16 %v2007, %v1999
      %v2032 = vpack.c.b16 %v2008, %v2000
      %v2033 = vpack.c.b16 %v2009, %v2001
      %v2034 = vpack.c.b16 %v2010, %v2002
      %v2035 = vpack.c.b16 %v2011, %v2003
      %v2036 = vpack.c.b16 %v2012, %v2004
      %v2037 = vpack.c.b16 %v2021, %v2013
      %v2038 = vpack.c.b16 %v2022, %v2014
      %v2039 = vpack.c.b16 %v2023, %v2015
      %v2040 = vpack.c.b16 %v2024, %v2016
      %v2041 = vpack.c.b16 %v2025, %v2017
      %v2042 = vpack.c.b16 %v2026, %v2018
      %v2043 = vpack.c.b16 %v2027, %v2019
      %v2044 = vpack.c.b16 %v2028, %v2020
      %2061 = vmatprep.subr.bf16.mxu0 0
      %2062 = vmatpush1.bf16.msra.mxu0 0
      %2063 = vmatprep.subr.bf16.mxu0 0
      %2064 = vmatpush1.bf16.msra.mxu0 0
      %2065 = vmatprep.subr.bf16.mxu0 0
      %2066 = vmatpush1.bf16.msra.mxu0 0
      %2067 = vmatprep.subr.bf16.mxu0 0
      %2068 = vmatpush1.bf16.msra.mxu0 0
      %2069 = vmatprep.subr.bf16.mxu0 0
      %2070 = vmatpush1.bf16.msra.mxu0 0
      %2071 = vmatprep.subr.bf16.mxu0 0
      %2072 = vmatpush1.bf16.msra.mxu0 0
      %2073 = vmatprep.subr.bf16.mxu0 %v2038
      %2074 = vmatpush1.bf16.msra.mxu0 %v2037
      %2075 = vmatprep.subr.bf16.mxu0 %v2030
      %2076 = vmatpush1.bf16.msra.mxu0 %v2029
      %2077 = vmatprep.subr.bf16.mxu0 0
      %2078 = vmatpush2.bf16.msra.mxu0 0
      %2079 = vmatprep.subr.bf16.mxu0 0
      %2080 = vmatpush2.bf16.msra.mxu0 0
      %2081 = vmatprep.subr.bf16.mxu0 0
      %2082 = vmatpush2.bf16.msra.mxu0 0
      %2083 = vmatprep.subr.bf16.mxu0 0
      %2084 = vmatpush2.bf16.msra.mxu0 0
      %2085 = vmatprep.subr.bf16.mxu0 0
      %2086 = vmatpush2.bf16.msra.mxu0 0
      %2087 = vmatprep.subr.bf16.mxu0 0
      %2088 = vmatpush2.bf16.msra.mxu0 0
      %2089 = vmatprep.subr.bf16.mxu0 0
      %2090 = vmatpush2.bf16.msra.mxu0 0
      %2091 = vmatprep.subr.bf16.mxu0 0
      %2092 = vmatpush2.bf16.msra.mxu0 0
      %2093 = vmatprep.mubr.bf16.mxu0 0
      %2094 = vmatmul.mubr.bf16.gmra.mxu0 %v449
      %v2095 = vpop.f32.mrf.mxu0
      %v2096 = vadd.f32 %v355, %v2095
      %v2097 = vpop.f32.mrf.mxu0
      %v2098 = vadd.f32 %v355, %v2097
      %v2099 = vpop.f32.mrf.mxu0
      %v2100 = vadd.f32 %v360, %v2099
      %v2101 = vpop.f32.mrf.mxu0
      %v2102 = vadd.f32 %v360, %v2101
      %2103 = vdwg.mxu0
      %2104 = vmatprep.subr.bf16.mxu0 0
      %2105 = vmatpush1.bf16.msra.mxu0 0
      %2106 = vmatprep.subr.bf16.mxu0 0
      %2107 = vmatpush1.bf16.msra.mxu0 0
      %2108 = vmatprep.subr.bf16.mxu0 0
      %2109 = vmatpush1.bf16.msra.mxu0 0
      %2110 = vmatprep.subr.bf16.mxu0 0
      %2111 = vmatpush1.bf16.msra.mxu0 0
      %2112 = vmatprep.subr.bf16.mxu0 0
      %2113 = vmatpush1.bf16.msra.mxu0 0
      %2114 = vmatprep.subr.bf16.mxu0 0
      %2115 = vmatpush1.bf16.msra.mxu0 0
      %2116 = vmatprep.subr.bf16.mxu0 %v2040
      %2117 = vmatpush1.bf16.msra.mxu0 %v2039
      %2118 = vmatprep.subr.bf16.mxu0 %v2032
      %2119 = vmatpush1.bf16.msra.mxu0 %v2031
      %2120 = vmatprep.subr.bf16.mxu0 0
      %2121 = vmatpush2.bf16.msra.mxu0 0
      %2122 = vmatprep.subr.bf16.mxu0 0
      %2123 = vmatpush2.bf16.msra.mxu0 0
      %2124 = vmatprep.subr.bf16.mxu0 0
      %2125 = vmatpush2.bf16.msra.mxu0 0
      %2126 = vmatprep.subr.bf16.mxu0 0
      %2127 = vmatpush2.bf16.msra.mxu0 0
      %2128 = vmatprep.subr.bf16.mxu0 0
      %2129 = vmatpush2.bf16.msra.mxu0 0
      %2130 = vmatprep.subr.bf16.mxu0 0
      %2131 = vmatpush2.bf16.msra.mxu0 0
      %2132 = vmatprep.subr.bf16.mxu0 0
      %2133 = vmatpush2.bf16.msra.mxu0 0
      %2134 = vmatprep.subr.bf16.mxu0 0
      %2135 = vmatpush2.bf16.msra.mxu0 0
      %2136 = vmatprep.mubr.bf16.mxu0 0
      %2137 = vmatmul.mubr.bf16.gmra.mxu0 %v449
      %v2138 = vpop.f32.mrf.mxu0
      %v2139 = vadd.f32 %v355, %v2138
      %v2140 = vpop.f32.mrf.mxu0
      %v2141 = vadd.f32 %v355, %v2140
      %v2142 = vpop.f32.mrf.mxu0
      %v2143 = vadd.f32 %v360, %v2142
      %v2144 = vpop.f32.mrf.mxu0
      %v2145 = vadd.f32 %v360, %v2144
      %2146 = vdwg.mxu0
      %2147 = vmatprep.subr.bf16.mxu0 0
      %2148 = vmatpush1.bf16.msra.mxu0 0
      %2149 = vmatprep.subr.bf16.mxu0 0
      %2150 = vmatpush1.bf16.msra.mxu0 0
      %2151 = vmatprep.subr.bf16.mxu0 0
      %2152 = vmatpush1.bf16.msra.mxu0 0
      %2153 = vmatprep.subr.bf16.mxu0 0
      %2154 = vmatpush1.bf16.msra.mxu0 0
      %2155 = vmatprep.subr.bf16.mxu0 0
      %2156 = vmatpush1.bf16.msra.mxu0 0
      %2157 = vmatprep.subr.bf16.mxu0 0
      %2158 = vmatpush1.bf16.msra.mxu0 0
      %2159 = vmatprep.subr.bf16.mxu0 %v2042
      %2160 = vmatpush1.bf16.msra.mxu0 %v2041
      %2161 = vmatprep.subr.bf16.mxu0 %v2034
      %2162 = vmatpush1.bf16.msra.mxu0 %v2033
      %2163 = vmatprep.subr.bf16.mxu0 0
      %2164 = vmatpush2.bf16.msra.mxu0 0
      %2165 = vmatprep.subr.bf16.mxu0 0
      %2166 = vmatpush2.bf16.msra.mxu0 0
      %2167 = vmatprep.subr.bf16.mxu0 0
      %2168 = vmatpush2.bf16.msra.mxu0 0
      %2169 = vmatprep.subr.bf16.mxu0 0
      %2170 = vmatpush2.bf16.msra.mxu0 0
      %2171 = vmatprep.subr.bf16.mxu0 0
      %2172 = vmatpush2.bf16.msra.mxu0 0
      %2173 = vmatprep.subr.bf16.mxu0 0
      %2174 = vmatpush2.bf16.msra.mxu0 0
      %2175 = vmatprep.subr.bf16.mxu0 0
      %2176 = vmatpush2.bf16.msra.mxu0 0
      %2177 = vmatprep.subr.bf16.mxu0 0
      %2178 = vmatpush2.bf16.msra.mxu0 0
      %2179 = vmatprep.mubr.bf16.mxu0 0
      %2180 = vmatmul.mubr.bf16.gmra.mxu0 %v449
      %v2181 = vpop.f32.mrf.mxu0
      %v2182 = vadd.f32 %v355, %v2181
      %v2183 = vpop.f32.mrf.mxu0
      %v2184 = vadd.f32 %v355, %v2183
      %v2185 = vpop.f32.mrf.mxu0
      %v2186 = vadd.f32 %v360, %v2185
      %v2187 = vpop.f32.mrf.mxu0
      %v2188 = vadd.f32 %v360, %v2187
      %2189 = vdwg.mxu0
      %2190 = vmatprep.subr.bf16.mxu0 0
      %2191 = vmatpush1.bf16.msra.mxu0 0
      %2192 = vmatprep.subr.bf16.mxu0 0
      %2193 = vmatpush1.bf16.msra.mxu0 0
      %2194 = vmatprep.subr.bf16.mxu0 0
      %2195 = vmatpush1.bf16.msra.mxu0 0
      %2196 = vmatprep.subr.bf16.mxu0 0
      %2197 = vmatpush1.bf16.msra.mxu0 0
      %2198 = vmatprep.subr.bf16.mxu0 0
      %2199 = vmatpush1.bf16.msra.mxu0 0
      %2200 = vmatprep.subr.bf16.mxu0 0
      %2201 = vmatpush1.bf16.msra.mxu0 0
      %2202 = vmatprep.subr.bf16.mxu0 %v2044
      %2203 = vmatpush1.bf16.msra.mxu0 %v2043
      %2204 = vmatprep.subr.bf16.mxu0 %v2036
      %2205 = vmatpush1.bf16.msra.mxu0 %v2035
      %2206 = vmatprep.subr.bf16.mxu0 0
      %2207 = vmatpush2.bf16.msra.mxu0 0
      %2208 = vmatprep.subr.bf16.mxu0 0
      %2209 = vmatpush2.bf16.msra.mxu0 0
      %2210 = vmatprep.subr.bf16.mxu0 0
      %2211 = vmatpush2.bf16.msra.mxu0 0
      %2212 = vmatprep.subr.bf16.mxu0 0
      %2213 = vmatpush2.bf16.msra.mxu0 0
      %2214 = vmatprep.subr.bf16.mxu0 0
      %2215 = vmatpush2.bf16.msra.mxu0 0
      %2216 = vmatprep.subr.bf16.mxu0 0
      %2217 = vmatpush2.bf16.msra.mxu0 0
      %2218 = vmatprep.subr.bf16.mxu0 0
      %2219 = vmatpush2.bf16.msra.mxu0 0
      %2220 = vmatprep.subr.bf16.mxu0 0
      %2221 = vmatpush2.bf16.msra.mxu0 0
      %2222 = vmatprep.mubr.bf16.mxu0 0
      %2223 = vmatmul.mubr.bf16.gmra.mxu0 %v449
      %v2224 = vpop.f32.mrf.mxu0
      %v2225 = vadd.f32 %v355, %v2224
      %v2226 = vpop.f32.mrf.mxu0
      %v2227 = vadd.f32 %v355, %v2226
      %v2228 = vpop.f32.mrf.mxu0
      %v2229 = vadd.f32 %v360, %v2228
      %v2230 = vpop.f32.mrf.mxu0
      %v2231 = vadd.f32 %v360, %v2230
      %2232 = vdwg.mxu0
      %v2233 = vtanh.pop %v2096
      %v2234 = vtanh.pop %v2098
      %v2235 = vtanh.pop %v2139
      %v2236 = vtanh.pop %v2141
      %v2237 = vtanh.pop %v2182
      %v2238 = vtanh.pop %v2184
      %v2239 = vtanh.pop %v2225
      %v2240 = vtanh.pop %v2227
      %v2241 = vtanh.pop %v2100
      %v2242 = vtanh.pop %v2102
      %v2243 = vtanh.pop %v2143
      %v2244 = vtanh.pop %v2145
      %v2245 = vtanh.pop %v2186
      %v2246 = vtanh.pop %v2188
      %v2247 = vtanh.pop %v2229
      %v2248 = vtanh.pop %v2231
      %s2249 = scalar_lea.vmem %s3, 48
      %v2250 = vld [vmem:[%s2249] sm:$0xf]
      %v2251 = vld [vmem:[%s2249 + $0x4] sm:$0xf]
      %v2252 = vld [vmem:[%s2249 + $0x8] sm:$0xf]
      %v2253 = vld [vmem:[%s2249 + $0xc] sm:$0xf]
      %v2254 = vpack.c.bf16 %v2241, %v2233
      %v2255 = vpack.c.bf16 %v2242, %v2234
      %v2256 = vpack.c.bf16 %v2243, %v2235
      %v2257 = vpack.c.bf16 %v2244, %v2236
      %v2258 = vpack.c.bf16 %v2245, %v2237
      %v2259 = vpack.c.bf16 %v2246, %v2238
      %v2260 = vpack.c.bf16 %v2247, %v2239
      %v2261 = vpack.c.bf16 %v2248, %v2240
      %v2266 = vunpack.c.l.b16 %v2250
      %v2267 = vunpack.c.l.b16 %v2251
      %v2268 = vunpack.c.l.b16 %v2252
      %v2269 = vunpack.c.l.b16 %v2253
      %v2270 = vpack.c.b16 %v2267, %v2266
      %v2271 = vpack.c.b16 %v2269, %v2268
      %v2273 = vsel %vm959, %v2270, 0
      %v2276 = vsel %vm959, %v2271, 0
      %2278 = vmatprep.subr.bf16.mxu0 0
      %2279 = vmatpush1.bf16.msra.mxu0 0
      %2280 = vmatprep.subr.bf16.mxu0 0
      %2281 = vmatpush1.bf16.msra.mxu0 0
      %2282 = vmatprep.subr.bf16.mxu0 0
      %2283 = vmatpush1.bf16.msra.mxu0 0
      %2284 = vmatprep.subr.bf16.mxu0 0
      %2285 = vmatpush1.bf16.msra.mxu0 0
      %2286 = vmatprep.subr.bf16.mxu0 0
      %2287 = vmatpush1.bf16.msra.mxu0 0
      %2288 = vmatprep.subr.bf16.mxu0 0
      %2289 = vmatpush1.bf16.msra.mxu0 0
      %2290 = vmatprep.subr.bf16.mxu0 0
      %2291 = vmatpush1.bf16.msra.mxu0 0
      %2292 = vmatprep.subr.bf16.mxu0 %v2255
      %2293 = vmatpush1.bf16.msra.mxu0 %v2254
      %2294 = vmatprep.subr.bf16.mxu0 0
      %2295 = vmatpush2.bf16.msra.mxu0 0
      %2296 = vmatprep.subr.bf16.mxu0 0
      %2297 = vmatpush2.bf16.msra.mxu0 0
      %2298 = vmatprep.subr.bf16.mxu0 0
      %2299 = vmatpush2.bf16.msra.mxu0 0
      %2300 = vmatprep.subr.bf16.mxu0 0
      %2301 = vmatpush2.bf16.msra.mxu0 0
      %2302 = vmatprep.subr.bf16.mxu0 0
      %2303 = vmatpush2.bf16.msra.mxu0 0
      %2304 = vmatprep.subr.bf16.mxu0 0
      %2305 = vmatpush2.bf16.msra.mxu0 0
      %2306 = vmatprep.subr.bf16.mxu0 0
      %2307 = vmatpush2.bf16.msra.mxu0 0
      %2308 = vmatprep.subr.bf16.mxu0 0
      %2309 = vmatpush2.bf16.msra.mxu0 0
      %2310 = vmatprep.mubr.bf16.mxu0 0
      %2311 = vmatmul.mubr.bf16.gmra.mxu0 %v2273
      %v2312 = vpop.f32.mrf.mxu0
      %v2313 = vadd.f32 0.0, %v2312
      %v2314 = vpop.f32.mrf.mxu0
      %v2315 = vadd.f32 0.0, %v2314
      %v2316 = vpop.f32.mrf.mxu0
      %v2317 = vadd.f32 0.0, %v2316
      %v2318 = vpop.f32.mrf.mxu0
      %v2319 = vadd.f32 0.0, %v2318
      %2320 = vmatprep.mubr.bf16.mxu0 0
      %2321 = vmatmul.mubr.bf16.gmra.mxu0 %v2276
      %v2322 = vpop.f32.mrf.mxu0
      %v2323 = vadd.f32 0.0, %v2322
      %v2324 = vpop.f32.mrf.mxu0
      %v2325 = vadd.f32 0.0, %v2324
      %v2326 = vpop.f32.mrf.mxu0
      %v2327 = vadd.f32 0.0, %v2326
      %v2328 = vpop.f32.mrf.mxu0
      %v2329 = vadd.f32 0.0, %v2328
      %2330 = vdwg.mxu0
      %2331 = vmatprep.subr.bf16.mxu0 0
      %2332 = vmatpush1.bf16.msra.mxu0 0
      %2333 = vmatprep.subr.bf16.mxu0 0
      %2334 = vmatpush1.bf16.msra.mxu0 0
      %2335 = vmatprep.subr.bf16.mxu0 0
      %2336 = vmatpush1.bf16.msra.mxu0 0
      %2337 = vmatprep.subr.bf16.mxu0 0
      %2338 = vmatpush1.bf16.msra.mxu0 0
      %2339 = vmatprep.subr.bf16.mxu0 0
      %2340 = vmatpush1.bf16.msra.mxu0 0
      %2341 = vmatprep.subr.bf16.mxu0 0
      %2342 = vmatpush1.bf16.msra.mxu0 0
      %2343 = vmatprep.subr.bf16.mxu0 0
      %2344 = vmatpush1.bf16.msra.mxu0 0
      %2345 = vmatprep.subr.bf16.mxu0 %v2257
      %2346 = vmatpush1.bf16.msra.mxu0 %v2256
      %2347 = vmatprep.subr.bf16.mxu0 0
      %2348 = vmatpush2.bf16.msra.mxu0 0
      %2349 = vmatprep.subr.bf16.mxu0 0
      %2350 = vmatpush2.bf16.msra.mxu0 0
      %2351 = vmatprep.subr.bf16.mxu0 0
      %2352 = vmatpush2.bf16.msra.mxu0 0
      %2353 = vmatprep.subr.bf16.mxu0 0
      %2354 = vmatpush2.bf16.msra.mxu0 0
      %2355 = vmatprep.subr.bf16.mxu0 0
      %2356 = vmatpush2.bf16.msra.mxu0 0
      %2357 = vmatprep.subr.bf16.mxu0 0
      %2358 = vmatpush2.bf16.msra.mxu0 0
      %2359 = vmatprep.subr.bf16.mxu0 0
      %2360 = vmatpush2.bf16.msra.mxu0 0
      %2361 = vmatprep.subr.bf16.mxu0 0
      %2362 = vmatpush2.bf16.msra.mxu0 0
      %2363 = vmatprep.mubr.bf16.mxu0 0
      %2364 = vmatmul.mubr.bf16.gmra.mxu0 %v2273
      %v2365 = vpop.f32.mrf.mxu0
      %v2366 = vadd.f32 0.0, %v2365
      %v2367 = vpop.f32.mrf.mxu0
      %v2368 = vadd.f32 0.0, %v2367
      %v2369 = vpop.f32.mrf.mxu0
      %v2370 = vadd.f32 0.0, %v2369
      %v2371 = vpop.f32.mrf.mxu0
      %v2372 = vadd.f32 0.0, %v2371
      %2373 = vmatprep.mubr.bf16.mxu0 0
      %2374 = vmatmul.mubr.bf16.gmra.mxu0 %v2276
      %v2375 = vpop.f32.mrf.mxu0
      %v2376 = vadd.f32 0.0, %v2375
      %v2377 = vpop.f32.mrf.mxu0
      %v2378 = vadd.f32 0.0, %v2377
      %v2379 = vpop.f32.mrf.mxu0
      %v2380 = vadd.f32 0.0, %v2379
      %v2381 = vpop.f32.mrf.mxu0
      %v2382 = vadd.f32 0.0, %v2381
      %2383 = vdwg.mxu0
      %2384 = vmatprep.subr.bf16.mxu0 0
      %2385 = vmatpush1.bf16.msra.mxu0 0
      %2386 = vmatprep.subr.bf16.mxu0 0
      %2387 = vmatpush1.bf16.msra.mxu0 0
      %2388 = vmatprep.subr.bf16.mxu0 0
      %2389 = vmatpush1.bf16.msra.mxu0 0
      %2390 = vmatprep.subr.bf16.mxu0 0
      %2391 = vmatpush1.bf16.msra.mxu0 0
      %2392 = vmatprep.subr.bf16.mxu0 0
      %2393 = vmatpush1.bf16.msra.mxu0 0
      %2394 = vmatprep.subr.bf16.mxu0 0
      %2395 = vmatpush1.bf16.msra.mxu0 0
      %2396 = vmatprep.subr.bf16.mxu0 0
      %2397 = vmatpush1.bf16.msra.mxu0 0
      %2398 = vmatprep.subr.bf16.mxu0 %v2259
      %2399 = vmatpush1.bf16.msra.mxu0 %v2258
      %2400 = vmatprep.subr.bf16.mxu0 0
      %2401 = vmatpush2.bf16.msra.mxu0 0
      %2402 = vmatprep.subr.bf16.mxu0 0
      %2403 = vmatpush2.bf16.msra.mxu0 0
      %2404 = vmatprep.subr.bf16.mxu0 0
      %2405 = vmatpush2.bf16.msra.mxu0 0
      %2406 = vmatprep.subr.bf16.mxu0 0
      %2407 = vmatpush2.bf16.msra.mxu0 0
      %2408 = vmatprep.subr.bf16.mxu0 0
      %2409 = vmatpush2.bf16.msra.mxu0 0
      %2410 = vmatprep.subr.bf16.mxu0 0
      %2411 = vmatpush2.bf16.msra.mxu0 0
      %2412 = vmatprep.subr.bf16.mxu0 0
      %2413 = vmatpush2.bf16.msra.mxu0 0
      %2414 = vmatprep.subr.bf16.mxu0 0
      %2415 = vmatpush2.bf16.msra.mxu0 0
      %2416 = vmatprep.mubr.bf16.mxu0 0
      %2417 = vmatmul.mubr.bf16.gmra.mxu0 %v2273
      %v2418 = vpop.f32.mrf.mxu0
      %v2419 = vadd.f32 0.0, %v2418
      %v2420 = vpop.f32.mrf.mxu0
      %v2421 = vadd.f32 0.0, %v2420
      %v2422 = vpop.f32.mrf.mxu0
      %v2423 = vadd.f32 0.0, %v2422
      %v2424 = vpop.f32.mrf.mxu0
      %v2425 = vadd.f32 0.0, %v2424
      %2426 = vmatprep.mubr.bf16.mxu0 0
      %2427 = vmatmul.mubr.bf16.gmra.mxu0 %v2276
      %v2428 = vpop.f32.mrf.mxu0
      %v2429 = vadd.f32 0.0, %v2428
      %v2430 = vpop.f32.mrf.mxu0
      %v2431 = vadd.f32 0.0, %v2430
      %v2432 = vpop.f32.mrf.mxu0
      %v2433 = vadd.f32 0.0, %v2432
      %v2434 = vpop.f32.mrf.mxu0
      %v2435 = vadd.f32 0.0, %v2434
      %2436 = vdwg.mxu0
      %2437 = vmatprep.subr.bf16.mxu0 0
      %2438 = vmatpush1.bf16.msra.mxu0 0
      %2439 = vmatprep.subr.bf16.mxu0 0
      %2440 = vmatpush1.bf16.msra.mxu0 0
      %2441 = vmatprep.subr.bf16.mxu0 0
      %2442 = vmatpush1.bf16.msra.mxu0 0
      %2443 = vmatprep.subr.bf16.mxu0 0
      %2444 = vmatpush1.bf16.msra.mxu0 0
      %2445 = vmatprep.subr.bf16.mxu0 0
      %2446 = vmatpush1.bf16.msra.mxu0 0
      %2447 = vmatprep.subr.bf16.mxu0 0
      %2448 = vmatpush1.bf16.msra.mxu0 0
      %2449 = vmatprep.subr.bf16.mxu0 0
      %2450 = vmatpush1.bf16.msra.mxu0 0
      %2451 = vmatprep.subr.bf16.mxu0 %v2261
      %2452 = vmatpush1.bf16.msra.mxu0 %v2260
      %2453 = vmatprep.subr.bf16.mxu0 0
      %2454 = vmatpush2.bf16.msra.mxu0 0
      %2455 = vmatprep.subr.bf16.mxu0 0
      %2456 = vmatpush2.bf16.msra.mxu0 0
      %2457 = vmatprep.subr.bf16.mxu0 0
      %2458 = vmatpush2.bf16.msra.mxu0 0
      %2459 = vmatprep.subr.bf16.mxu0 0
      %2460 = vmatpush2.bf16.msra.mxu0 0
      %2461 = vmatprep.subr.bf16.mxu0 0
      %2462 = vmatpush2.bf16.msra.mxu0 0
      %2463 = vmatprep.subr.bf16.mxu0 0
      %2464 = vmatpush2.bf16.msra.mxu0 0
      %2465 = vmatprep.subr.bf16.mxu0 0
      %2466 = vmatpush2.bf16.msra.mxu0 0
      %2467 = vmatprep.subr.bf16.mxu0 0
      %2468 = vmatpush2.bf16.msra.mxu0 0
      %2469 = vmatprep.mubr.bf16.mxu0 0
      %2470 = vmatmul.mubr.bf16.gmra.mxu0 %v2273
      %v2471 = vpop.f32.mrf.mxu0
      %v2472 = vadd.f32 0.0, %v2471
      %v2473 = vpop.f32.mrf.mxu0
      %v2474 = vadd.f32 0.0, %v2473
      %v2475 = vpop.f32.mrf.mxu0
      %v2476 = vadd.f32 0.0, %v2475
      %v2477 = vpop.f32.mrf.mxu0
      %v2478 = vadd.f32 0.0, %v2477
      %2479 = vmatprep.mubr.bf16.mxu0 0
      %2480 = vmatmul.mubr.bf16.gmra.mxu0 %v2276
      %v2481 = vpop.f32.mrf.mxu0
      %v2482 = vadd.f32 0.0, %v2481
      %v2483 = vpop.f32.mrf.mxu0
      %v2484 = vadd.f32 0.0, %v2483
      %v2485 = vpop.f32.mrf.mxu0
      %v2486 = vadd.f32 0.0, %v2485
      %v2487 = vpop.f32.mrf.mxu0
      %v2488 = vadd.f32 0.0, %v2487
      %2489 = vdwg.mxu0
      %v2490 = vadd.f32 %v1932, %v2313
      %v2491 = vadd.f32 %v1933, %v2315
      %v2492 = vadd.f32 %v1934, %v2366
      %v2493 = vadd.f32 %v1935, %v2368
      %v2494 = vadd.f32 %v1936, %v2419
      %v2495 = vadd.f32 %v1937, %v2421
      %v2496 = vadd.f32 %v1938, %v2472
      %v2497 = vadd.f32 %v1939, %v2474
      %v2498 = vadd.f32 %v1940, %v2317
      %v2499 = vadd.f32 %v1941, %v2319
      %v2500 = vadd.f32 %v1942, %v2370
      %v2501 = vadd.f32 %v1943, %v2372
      %v2502 = vadd.f32 %v1944, %v2423
      %v2503 = vadd.f32 %v1945, %v2425
      %v2504 = vadd.f32 %v1946, %v2476
      %v2505 = vadd.f32 %v1947, %v2478
      %v2506 = vadd.f32 %v1948, %v2323
      %v2507 = vadd.f32 %v1949, %v2325
      %v2508 = vadd.f32 %v1950, %v2376
      %v2509 = vadd.f32 %v1951, %v2378
      %v2510 = vadd.f32 %v1952, %v2429
      %v2511 = vadd.f32 %v1953, %v2431
      %v2512 = vadd.f32 %v1954, %v2482
      %v2513 = vadd.f32 %v1955, %v2484
      %v2514 = vadd.f32 %v1956, %v2327
      %v2515 = vadd.f32 %v1957, %v2329
      %v2516 = vadd.f32 %v1958, %v2380
      %v2517 = vadd.f32 %v1959, %v2382
      %v2518 = vadd.f32 %v1960, %v2433
      %v2519 = vadd.f32 %v1961, %v2435
      %v2520 = vadd.f32 %v1962, %v2486
      %v2521 = vadd.f32 %v1963, %v2488
      %s2522 = scalar_lea.vmem %s326, 512
      %v2523 = vld [vmem:[%s2522] sm:$0xff]
      %v2524 = vld [vmem:[%s2522 + $0x8] sm:$0xff]
      %v2525 = vld [vmem:[%s2522 + $0x10] sm:$0xff]
      %v2526 = vld [vmem:[%s2522 + $0x18] sm:$0xff]
      %v2527 = vld [vmem:[%s2522 + $0x20] sm:$0xff]
      %v2528 = vld [vmem:[%s2522 + $0x28] sm:$0xff]
      %v2529 = vld [vmem:[%s2522 + $0x30] sm:$0xff]
      %v2530 = vld [vmem:[%s2522 + $0x38] sm:$0xff]
      %v2531 = vld [vmem:[%s2522 + $0x40] sm:$0xff]
      %v2532 = vld [vmem:[%s2522 + $0x48] sm:$0xff]
      %v2533 = vld [vmem:[%s2522 + $0x50] sm:$0xff]
      %v2534 = vld [vmem:[%s2522 + $0x58] sm:$0xff]
      %v2535 = vld [vmem:[%s2522 + $0x60] sm:$0xff]
      %v2536 = vld [vmem:[%s2522 + $0x68] sm:$0xff]
      %v2537 = vld [vmem:[%s2522 + $0x70] sm:$0xff]
      %v2538 = vld [vmem:[%s2522 + $0x78] sm:$0xff]
      %v2555 = vunpack.c.l.b16 %v2523
      %v2556 = vunpack.c.h.b16 %v2523
      %v2557 = vunpack.c.l.b16 %v2524
      %v2558 = vunpack.c.h.b16 %v2524
      %v2559 = vunpack.c.l.b16 %v2525
      %v2560 = vunpack.c.h.b16 %v2525
      %v2561 = vunpack.c.l.b16 %v2526
      %v2562 = vunpack.c.h.b16 %v2526
      %v2563 = vunpack.c.l.b16 %v2527
      %v2564 = vunpack.c.h.b16 %v2527
      %v2565 = vunpack.c.l.b16 %v2528
      %v2566 = vunpack.c.h.b16 %v2528
      %v2567 = vunpack.c.l.b16 %v2529
      %v2568 = vunpack.c.h.b16 %v2529
      %v2569 = vunpack.c.l.b16 %v2530
      %v2570 = vunpack.c.h.b16 %v2530
      %v2571 = vunpack.c.l.b16 %v2531
      %v2572 = vunpack.c.h.b16 %v2531
      %v2573 = vunpack.c.l.b16 %v2532
      %v2574 = vunpack.c.h.b16 %v2532
      %v2575 = vunpack.c.l.b16 %v2533
      %v2576 = vunpack.c.h.b16 %v2533
      %v2577 = vunpack.c.l.b16 %v2534
      %v2578 = vunpack.c.h.b16 %v2534
      %v2579 = vunpack.c.l.b16 %v2535
      %v2580 = vunpack.c.h.b16 %v2535
      %v2581 = vunpack.c.l.b16 %v2536
      %v2582 = vunpack.c.h.b16 %v2536
      %v2583 = vunpack.c.l.b16 %v2537
      %v2584 = vunpack.c.h.b16 %v2537
      %v2585 = vunpack.c.l.b16 %v2538
      %v2586 = vunpack.c.h.b16 %v2538
      %v2587 = vpack.c.b16 %v2563, %v2555
      %v2588 = vpack.c.b16 %v2564, %v2556
      %v2589 = vpack.c.b16 %v2565, %v2557
      %v2590 = vpack.c.b16 %v2566, %v2558
      %v2591 = vpack.c.b16 %v2567, %v2559
      %v2592 = vpack.c.b16 %v2568, %v2560
      %v2593 = vpack.c.b16 %v2569, %v2561
      %v2594 = vpack.c.b16 %v2570, %v2562
      %v2595 = vpack.c.b16 %v2579, %v2571
      %v2596 = vpack.c.b16 %v2580, %v2572
      %v2597 = vpack.c.b16 %v2581, %v2573
      %v2598 = vpack.c.b16 %v2582, %v2574
      %v2599 = vpack.c.b16 %v2583, %v2575
      %v2600 = vpack.c.b16 %v2584, %v2576
      %v2601 = vpack.c.b16 %v2585, %v2577
      %v2602 = vpack.c.b16 %v2586, %v2578
      %2619 = vmatprep.subr.bf16.mxu0 0
      %2620 = vmatpush1.bf16.msra.mxu0 0
      %2621 = vmatprep.subr.bf16.mxu0 0
      %2622 = vmatpush1.bf16.msra.mxu0 0
      %2623 = vmatprep.subr.bf16.mxu0 0
      %2624 = vmatpush1.bf16.msra.mxu0 0
      %2625 = vmatprep.subr.bf16.mxu0 0
      %2626 = vmatpush1.bf16.msra.mxu0 0
      %2627 = vmatprep.subr.bf16.mxu0 0
      %2628 = vmatpush1.bf16.msra.mxu0 0
      %2629 = vmatprep.subr.bf16.mxu0 0
      %2630 = vmatpush1.bf16.msra.mxu0 0
      %2631 = vmatprep.subr.bf16.mxu0 %v2596
      %2632 = vmatpush1.bf16.msra.mxu0 %v2595
      %2633 = vmatprep.subr.bf16.mxu0 %v2588
      %2634 = vmatpush1.bf16.msra.mxu0 %v2587
      %2635 = vmatprep.subr.bf16.mxu0 0
      %2636 = vmatpush2.bf16.msra.mxu0 0
      %2637 = vmatprep.subr.bf16.mxu0 0
      %2638 = vmatpush2.bf16.msra.mxu0 0
      %2639 = vmatprep.subr.bf16.mxu0 0
      %2640 = vmatpush2.bf16.msra.mxu0 0
      %2641 = vmatprep.subr.bf16.mxu0 0
      %2642 = vmatpush2.bf16.msra.mxu0 0
      %2643 = vmatprep.subr.bf16.mxu0 0
      %2644 = vmatpush2.bf16.msra.mxu0 0
      %2645 = vmatprep.subr.bf16.mxu0 0
      %2646 = vmatpush2.bf16.msra.mxu0 0
      %2647 = vmatprep.subr.bf16.mxu0 0
      %2648 = vmatpush2.bf16.msra.mxu0 0
      %2649 = vmatprep.subr.bf16.mxu0 0
      %2650 = vmatpush2.bf16.msra.mxu0 0
      %2651 = vmatprep.mubr.bf16.mxu0 0
      %2652 = vmatmul.mubr.bf16.gmra.mxu0 %v449
      %v2653 = vpop.f32.mrf.mxu0
      %v2654 = vadd.f32 %v355, %v2653
      %v2655 = vpop.f32.mrf.mxu0
      %v2656 = vadd.f32 %v355, %v2655
      %v2657 = vpop.f32.mrf.mxu0
      %v2658 = vadd.f32 %v360, %v2657
      %v2659 = vpop.f32.mrf.mxu0
      %v2660 = vadd.f32 %v360, %v2659
      %2661 = vdwg.mxu0
      %2662 = vmatprep.subr.bf16.mxu0 0
      %2663 = vmatpush1.bf16.msra.mxu0 0
      %2664 = vmatprep.subr.bf16.mxu0 0
      %2665 = vmatpush1.bf16.msra.mxu0 0
      %2666 = vmatprep.subr.bf16.mxu0 0
      %2667 = vmatpush1.bf16.msra.mxu0 0
      %2668 = vmatprep.subr.bf16.mxu0 0
      %2669 = vmatpush1.bf16.msra.mxu0 0
      %2670 = vmatprep.subr.bf16.mxu0 0
      %2671 = vmatpush1.bf16.msra.mxu0 0
      %2672 = vmatprep.subr.bf16.mxu0 0
      %2673 = vmatpush1.bf16.msra.mxu0 0
      %2674 = vmatprep.subr.bf16.mxu0 %v2598
      %2675 = vmatpush1.bf16.msra.mxu0 %v2597
      %2676 = vmatprep.subr.bf16.mxu0 %v2590
      %2677 = vmatpush1.bf16.msra.mxu0 %v2589
      %2678 = vmatprep.subr.bf16.mxu0 0
      %2679 = vmatpush2.bf16.msra.mxu0 0
      %2680 = vmatprep.subr.bf16.mxu0 0
      %2681 = vmatpush2.bf16.msra.mxu0 0
      %2682 = vmatprep.subr.bf16.mxu0 0
      %2683 = vmatpush2.bf16.msra.mxu0 0
      %2684 = vmatprep.subr.bf16.mxu0 0
      %2685 = vmatpush2.bf16.msra.mxu0 0
      %2686 = vmatprep.subr.bf16.mxu0 0
      %2687 = vmatpush2.bf16.msra.mxu0 0
      %2688 = vmatprep.subr.bf16.mxu0 0
      %2689 = vmatpush2.bf16.msra.mxu0 0
      %2690 = vmatprep.subr.bf16.mxu0 0
      %2691 = vmatpush2.bf16.msra.mxu0 0
      %2692 = vmatprep.subr.bf16.mxu0 0
      %2693 = vmatpush2.bf16.msra.mxu0 0
      %2694 = vmatprep.mubr.bf16.mxu0 0
      %2695 = vmatmul.mubr.bf16.gmra.mxu0 %v449
      %v2696 = vpop.f32.mrf.mxu0
      %v2697 = vadd.f32 %v355, %v2696
      %v2698 = vpop.f32.mrf.mxu0
      %v2699 = vadd.f32 %v355, %v2698
      %v2700 = vpop.f32.mrf.mxu0
      %v2701 = vadd.f32 %v360, %v2700
      %v2702 = vpop.f32.mrf.mxu0
      %v2703 = vadd.f32 %v360, %v2702
      %2704 = vdwg.mxu0
      %2705 = vmatprep.subr.bf16.mxu0 0
      %2706 = vmatpush1.bf16.msra.mxu0 0
      %2707 = vmatprep.subr.bf16.mxu0 0
      %2708 = vmatpush1.bf16.msra.mxu0 0
      %2709 = vmatprep.subr.bf16.mxu0 0
      %2710 = vmatpush1.bf16.msra.mxu0 0
      %2711 = vmatprep.subr.bf16.mxu0 0
      %2712 = vmatpush1.bf16.msra.mxu0 0
      %2713 = vmatprep.subr.bf16.mxu0 0
      %2714 = vmatpush1.bf16.msra.mxu0 0
      %2715 = vmatprep.subr.bf16.mxu0 0
      %2716 = vmatpush1.bf16.msra.mxu0 0
      %2717 = vmatprep.subr.bf16.mxu0 %v2600
      %2718 = vmatpush1.bf16.msra.mxu0 %v2599
      %2719 = vmatprep.subr.bf16.mxu0 %v2592
      %2720 = vmatpush1.bf16.msra.mxu0 %v2591
      %2721 = vmatprep.subr.bf16.mxu0 0
      %2722 = vmatpush2.bf16.msra.mxu0 0
      %2723 = vmatprep.subr.bf16.mxu0 0
      %2724 = vmatpush2.bf16.msra.mxu0 0
      %2725 = vmatprep.subr.bf16.mxu0 0
      %2726 = vmatpush2.bf16.msra.mxu0 0
      %2727 = vmatprep.subr.bf16.mxu0 0
      %2728 = vmatpush2.bf16.msra.mxu0 0
      %2729 = vmatprep.subr.bf16.mxu0 0
      %2730 = vmatpush2.bf16.msra.mxu0 0
      %2731 = vmatprep.subr.bf16.mxu0 0
      %2732 = vmatpush2.bf16.msra.mxu0 0
      %2733 = vmatprep.subr.bf16.mxu0 0
      %2734 = vmatpush2.bf16.msra.mxu0 0
      %2735 = vmatprep.subr.bf16.mxu0 0
      %2736 = vmatpush2.bf16.msra.mxu0 0
      %2737 = vmatprep.mubr.bf16.mxu0 0
      %2738 = vmatmul.mubr.bf16.gmra.mxu0 %v449
      %v2739 = vpop.f32.mrf.mxu0
      %v2740 = vadd.f32 %v355, %v2739
      %v2741 = vpop.f32.mrf.mxu0
      %v2742 = vadd.f32 %v355, %v2741
      %v2743 = vpop.f32.mrf.mxu0
      %v2744 = vadd.f32 %v360, %v2743
      %v2745 = vpop.f32.mrf.mxu0
      %v2746 = vadd.f32 %v360, %v2745
      %2747 = vdwg.mxu0
      %2748 = vmatprep.subr.bf16.mxu0 0
      %2749 = vmatpush1.bf16.msra.mxu0 0
      %2750 = vmatprep.subr.bf16.mxu0 0
      %2751 = vmatpush1.bf16.msra.mxu0 0
      %2752 = vmatprep.subr.bf16.mxu0 0
      %2753 = vmatpush1.bf16.msra.mxu0 0
      %2754 = vmatprep.subr.bf16.mxu0 0
      %2755 = vmatpush1.bf16.msra.mxu0 0
      %2756 = vmatprep.subr.bf16.mxu0 0
      %2757 = vmatpush1.bf16.msra.mxu0 0
      %2758 = vmatprep.subr.bf16.mxu0 0
      %2759 = vmatpush1.bf16.msra.mxu0 0
      %2760 = vmatprep.subr.bf16.mxu0 %v2602
      %2761 = vmatpush1.bf16.msra.mxu0 %v2601
      %2762 = vmatprep.subr.bf16.mxu0 %v2594
      %2763 = vmatpush1.bf16.msra.mxu0 %v2593
      %2764 = vmatprep.subr.bf16.mxu0 0
      %2765 = vmatpush2.bf16.msra.mxu0 0
      %2766 = vmatprep.subr.bf16.mxu0 0
      %2767 = vmatpush2.bf16.msra.mxu0 0
      %2768 = vmatprep.subr.bf16.mxu0 0
      %2769 = vmatpush2.bf16.msra.mxu0 0
      %2770 = vmatprep.subr.bf16.mxu0 0
      %2771 = vmatpush2.bf16.msra.mxu0 0
      %2772 = vmatprep.subr.bf16.mxu0 0
      %2773 = vmatpush2.bf16.msra.mxu0 0
      %2774 = vmatprep.subr.bf16.mxu0 0
      %2775 = vmatpush2.bf16.msra.mxu0 0
      %2776 = vmatprep.subr.bf16.mxu0 0
      %2777 = vmatpush2.bf16.msra.mxu0 0
      %2778 = vmatprep.subr.bf16.mxu0 0
      %2779 = vmatpush2.bf16.msra.mxu0 0
      %2780 = vmatprep.mubr.bf16.mxu0 0
      %2781 = vmatmul.mubr.bf16.gmra.mxu0 %v449
      %v2782 = vpop.f32.mrf.mxu0
      %v2783 = vadd.f32 %v355, %v2782
      %v2784 = vpop.f32.mrf.mxu0
      %v2785 = vadd.f32 %v355, %v2784
      %v2786 = vpop.f32.mrf.mxu0
      %v2787 = vadd.f32 %v360, %v2786
      %v2788 = vpop.f32.mrf.mxu0
      %v2789 = vadd.f32 %v360, %v2788
      %2790 = vdwg.mxu0
      %v2791 = vtanh.pop %v2654
      %v2792 = vtanh.pop %v2656
      %v2793 = vtanh.pop %v2697
      %v2794 = vtanh.pop %v2699
      %v2795 = vtanh.pop %v2740
      %v2796 = vtanh.pop %v2742
      %v2797 = vtanh.pop %v2783
      %v2798 = vtanh.pop %v2785
      %v2799 = vtanh.pop %v2658
      %v2800 = vtanh.pop %v2660
      %v2801 = vtanh.pop %v2701
      %v2802 = vtanh.pop %v2703
      %v2803 = vtanh.pop %v2744
      %v2804 = vtanh.pop %v2746
      %v2805 = vtanh.pop %v2787
      %v2806 = vtanh.pop %v2789
      %s2807 = scalar_lea.vmem %s3, 64
      %v2808 = vld [vmem:[%s2807] sm:$0xf]
      %v2809 = vld [vmem:[%s2807 + $0x4] sm:$0xf]
      %v2810 = vld [vmem:[%s2807 + $0x8] sm:$0xf]
      %v2811 = vld [vmem:[%s2807 + $0xc] sm:$0xf]
      %v2812 = vpack.c.bf16 %v2799, %v2791
      %v2813 = vpack.c.bf16 %v2800, %v2792
      %v2814 = vpack.c.bf16 %v2801, %v2793
      %v2815 = vpack.c.bf16 %v2802, %v2794
      %v2816 = vpack.c.bf16 %v2803, %v2795
      %v2817 = vpack.c.bf16 %v2804, %v2796
      %v2818 = vpack.c.bf16 %v2805, %v2797
      %v2819 = vpack.c.bf16 %v2806, %v2798
      %v2824 = vunpack.c.l.b16 %v2808
      %v2825 = vunpack.c.l.b16 %v2809
      %v2826 = vunpack.c.l.b16 %v2810
      %v2827 = vunpack.c.l.b16 %v2811
      %v2828 = vpack.c.b16 %v2825, %v2824
      %v2829 = vpack.c.b16 %v2827, %v2826
      %v2831 = vsel %vm959, %v2828, 0
      %v2834 = vsel %vm959, %v2829, 0
      %2836 = vmatprep.subr.bf16.mxu0 0
      %2837 = vmatpush1.bf16.msra.mxu0 0
      %2838 = vmatprep.subr.bf16.mxu0 0
      %2839 = vmatpush1.bf16.msra.mxu0 0
      %2840 = vmatprep.subr.bf16.mxu0 0
      %2841 = vmatpush1.bf16.msra.mxu0 0
      %2842 = vmatprep.subr.bf16.mxu0 0
      %2843 = vmatpush1.bf16.msra.mxu0 0
      %2844 = vmatprep.subr.bf16.mxu0 0
      %2845 = vmatpush1.bf16.msra.mxu0 0
      %2846 = vmatprep.subr.bf16.mxu0 0
      %2847 = vmatpush1.bf16.msra.mxu0 0
      %2848 = vmatprep.subr.bf16.mxu0 0
      %2849 = vmatpush1.bf16.msra.mxu0 0
      %2850 = vmatprep.subr.bf16.mxu0 %v2813
      %2851 = vmatpush1.bf16.msra.mxu0 %v2812
      %2852 = vmatprep.subr.bf16.mxu0 0
      %2853 = vmatpush2.bf16.msra.mxu0 0
      %2854 = vmatprep.subr.bf16.mxu0 0
      %2855 = vmatpush2.bf16.msra.mxu0 0
      %2856 = vmatprep.subr.bf16.mxu0 0
      %2857 = vmatpush2.bf16.msra.mxu0 0
      %2858 = vmatprep.subr.bf16.mxu0 0
      %2859 = vmatpush2.bf16.msra.mxu0 0
      %2860 = vmatprep.subr.bf16.mxu0 0
      %2861 = vmatpush2.bf16.msra.mxu0 0
      %2862 = vmatprep.subr.bf16.mxu0 0
      %2863 = vmatpush2.bf16.msra.mxu0 0
      %2864 = vmatprep.subr.bf16.mxu0 0
      %2865 = vmatpush2.bf16.msra.mxu0 0
      %2866 = vmatprep.subr.bf16.mxu0 0
      %2867 = vmatpush2.bf16.msra.mxu0 0
      %2868 = vmatprep.mubr.bf16.mxu0 0
      %2869 = vmatmul.mubr.bf16.gmra.mxu0 %v2831
      %v2870 = vpop.f32.mrf.mxu0
      %v2871 = vadd.f32 0.0, %v2870
      %v2872 = vpop.f32.mrf.mxu0
      %v2873 = vadd.f32 0.0, %v2872
      %v2874 = vpop.f32.mrf.mxu0
      %v2875 = vadd.f32 0.0, %v2874
      %v2876 = vpop.f32.mrf.mxu0
      %v2877 = vadd.f32 0.0, %v2876
      %2878 = vmatprep.mubr.bf16.mxu0 0
      %2879 = vmatmul.mubr.bf16.gmra.mxu0 %v2834
      %v2880 = vpop.f32.mrf.mxu0
      %v2881 = vadd.f32 0.0, %v2880
      %v2882 = vpop.f32.mrf.mxu0
      %v2883 = vadd.f32 0.0, %v2882
      %v2884 = vpop.f32.mrf.mxu0
      %v2885 = vadd.f32 0.0, %v2884
      %v2886 = vpop.f32.mrf.mxu0
      %v2887 = vadd.f32 0.0, %v2886
      %2888 = vdwg.mxu0
      %2889 = vmatprep.subr.bf16.mxu0 0
      %2890 = vmatpush1.bf16.msra.mxu0 0
      %2891 = vmatprep.subr.bf16.mxu0 0
      %2892 = vmatpush1.bf16.msra.mxu0 0
      %2893 = vmatprep.subr.bf16.mxu0 0
      %2894 = vmatpush1.bf16.msra.mxu0 0
      %2895 = vmatprep.subr.bf16.mxu0 0
      %2896 = vmatpush1.bf16.msra.mxu0 0
      %2897 = vmatprep.subr.bf16.mxu0 0
      %2898 = vmatpush1.bf16.msra.mxu0 0
      %2899 = vmatprep.subr.bf16.mxu0 0
      %2900 = vmatpush1.bf16.msra.mxu0 0
      %2901 = vmatprep.subr.bf16.mxu0 0
      %2902 = vmatpush1.bf16.msra.mxu0 0
      %2903 = vmatprep.subr.bf16.mxu0 %v2815
      %2904 = vmatpush1.bf16.msra.mxu0 %v2814
      %2905 = vmatprep.subr.bf16.mxu0 0
      %2906 = vmatpush2.bf16.msra.mxu0 0
      %2907 = vmatprep.subr.bf16.mxu0 0
      %2908 = vmatpush2.bf16.msra.mxu0 0
      %2909 = vmatprep.subr.bf16.mxu0 0
      %2910 = vmatpush2.bf16.msra.mxu0 0
      %2911 = vmatprep.subr.bf16.mxu0 0
      %2912 = vmatpush2.bf16.msra.mxu0 0
      %2913 = vmatprep.subr.bf16.mxu0 0
      %2914 = vmatpush2.bf16.msra.mxu0 0
      %2915 = vmatprep.subr.bf16.mxu0 0
      %2916 = vmatpush2.bf16.msra.mxu0 0
      %2917 = vmatprep.subr.bf16.mxu0 0
      %2918 = vmatpush2.bf16.msra.mxu0 0
      %2919 = vmatprep.subr.bf16.mxu0 0
      %2920 = vmatpush2.bf16.msra.mxu0 0
      %2921 = vmatprep.mubr.bf16.mxu0 0
      %2922 = vmatmul.mubr.bf16.gmra.mxu0 %v2831
      %v2923 = vpop.f32.mrf.mxu0
      %v2924 = vadd.f32 0.0, %v2923
      %v2925 = vpop.f32.mrf.mxu0
      %v2926 = vadd.f32 0.0, %v2925
      %v2927 = vpop.f32.mrf.mxu0
      %v2928 = vadd.f32 0.0, %v2927
      %v2929 = vpop.f32.mrf.mxu0
      %v2930 = vadd.f32 0.0, %v2929
      %2931 = vmatprep.mubr.bf16.mxu0 0
      %2932 = vmatmul.mubr.bf16.gmra.mxu0 %v2834
      %v2933 = vpop.f32.mrf.mxu0
      %v2934 = vadd.f32 0.0, %v2933
      %v2935 = vpop.f32.mrf.mxu0
      %v2936 = vadd.f32 0.0, %v2935
      %v2937 = vpop.f32.mrf.mxu0
      %v2938 = vadd.f32 0.0, %v2937
      %v2939 = vpop.f32.mrf.mxu0
      %v2940 = vadd.f32 0.0, %v2939
      %2941 = vdwg.mxu0
      %2942 = vmatprep.subr.bf16.mxu0 0
      %2943 = vmatpush1.bf16.msra.mxu0 0
      %2944 = vmatprep.subr.bf16.mxu0 0
      %2945 = vmatpush1.bf16.msra.mxu0 0
      %2946 = vmatprep.subr.bf16.mxu0 0
      %2947 = vmatpush1.bf16.msra.mxu0 0
      %2948 = vmatprep.subr.bf16.mxu0 0
      %2949 = vmatpush1.bf16.msra.mxu0 0
      %2950 = vmatprep.subr.bf16.mxu0 0
      %2951 = vmatpush1.bf16.msra.mxu0 0
      %2952 = vmatprep.subr.bf16.mxu0 0
      %2953 = vmatpush1.bf16.msra.mxu0 0
      %2954 = vmatprep.subr.bf16.mxu0 0
      %2955 = vmatpush1.bf16.msra.mxu0 0
      %2956 = vmatprep.subr.bf16.mxu0 %v2817
      %2957 = vmatpush1.bf16.msra.mxu0 %v2816
      %2958 = vmatprep.subr.bf16.mxu0 0
      %2959 = vmatpush2.bf16.msra.mxu0 0
      %2960 = vmatprep.subr.bf16.mxu0 0
      %2961 = vmatpush2.bf16.msra.mxu0 0
      %2962 = vmatprep.subr.bf16.mxu0 0
      %2963 = vmatpush2.bf16.msra.mxu0 0
      %2964 = vmatprep.subr.bf16.mxu0 0
      %2965 = vmatpush2.bf16.msra.mxu0 0
      %2966 = vmatprep.subr.bf16.mxu0 0
      %2967 = vmatpush2.bf16.msra.mxu0 0
      %2968 = vmatprep.subr.bf16.mxu0 0
      %2969 = vmatpush2.bf16.msra.mxu0 0
      %2970 = vmatprep.subr.bf16.mxu0 0
      %2971 = vmatpush2.bf16.msra.mxu0 0
      %2972 = vmatprep.subr.bf16.mxu0 0
      %2973 = vmatpush2.bf16.msra.mxu0 0
      %2974 = vmatprep.mubr.bf16.mxu0 0
      %2975 = vmatmul.mubr.bf16.gmra.mxu0 %v2831
      %v2976 = vpop.f32.mrf.mxu0
      %v2977 = vadd.f32 0.0, %v2976
      %v2978 = vpop.f32.mrf.mxu0
      %v2979 = vadd.f32 0.0, %v2978
      %v2980 = vpop.f32.mrf.mxu0
      %v2981 = vadd.f32 0.0, %v2980
      %v2982 = vpop.f32.mrf.mxu0
      %v2983 = vadd.f32 0.0, %v2982
      %2984 = vmatprep.mubr.bf16.mxu0 0
      %2985 = vmatmul.mubr.bf16.gmra.mxu0 %v2834
      %v2986 = vpop.f32.mrf.mxu0
      %v2987 = vadd.f32 0.0, %v2986
      %v2988 = vpop.f32.mrf.mxu0
      %v2989 = vadd.f32 0.0, %v2988
      %v2990 = vpop.f32.mrf.mxu0
      %v2991 = vadd.f32 0.0, %v2990
      %v2992 = vpop.f32.mrf.mxu0
      %v2993 = vadd.f32 0.0, %v2992
      %2994 = vdwg.mxu0
      %2995 = vmatprep.subr.bf16.mxu0 0
      %2996 = vmatpush1.bf16.msra.mxu0 0
      %2997 = vmatprep.subr.bf16.mxu0 0
      %2998 = vmatpush1.bf16.msra.mxu0 0
      %2999 = vmatprep.subr.bf16.mxu0 0
      %3000 = vmatpush1.bf16.msra.mxu0 0
      %3001 = vmatprep.subr.bf16.mxu0 0
      %3002 = vmatpush1.bf16.msra.mxu0 0
      %3003 = vmatprep.subr.bf16.mxu0 0
      %3004 = vmatpush1.bf16.msra.mxu0 0
      %3005 = vmatprep.subr.bf16.mxu0 0
      %3006 = vmatpush1.bf16.msra.mxu0 0
      %3007 = vmatprep.subr.bf16.mxu0 0
      %3008 = vmatpush1.bf16.msra.mxu0 0
      %3009 = vmatprep.subr.bf16.mxu0 %v2819
      %3010 = vmatpush1.bf16.msra.mxu0 %v2818
      %3011 = vmatprep.subr.bf16.mxu0 0
      %3012 = vmatpush2.bf16.msra.mxu0 0
      %3013 = vmatprep.subr.bf16.mxu0 0
      %3014 = vmatpush2.bf16.msra.mxu0 0
      %3015 = vmatprep.subr.bf16.mxu0 0
      %3016 = vmatpush2.bf16.msra.mxu0 0
      %3017 = vmatprep.subr.bf16.mxu0 0
      %3018 = vmatpush2.bf16.msra.mxu0 0
      %3019 = vmatprep.subr.bf16.mxu0 0
      %3020 = vmatpush2.bf16.msra.mxu0 0
      %3021 = vmatprep.subr.bf16.mxu0 0
      %3022 = vmatpush2.bf16.msra.mxu0 0
      %3023 = vmatprep.subr.bf16.mxu0 0
      %3024 = vmatpush2.bf16.msra.mxu0 0
      %3025 = vmatprep.subr.bf16.mxu0 0
      %3026 = vmatpush2.bf16.msra.mxu0 0
      %3027 = vmatprep.mubr.bf16.mxu0 0
      %3028 = vmatmul.mubr.bf16.gmra.mxu0 %v2831
      %v3029 = vpop.f32.mrf.mxu0
      %v3030 = vadd.f32 0.0, %v3029
      %v3031 = vpop.f32.mrf.mxu0
      %v3032 = vadd.f32 0.0, %v3031
      %v3033 = vpop.f32.mrf.mxu0
      %v3034 = vadd.f32 0.0, %v3033
      %v3035 = vpop.f32.mrf.mxu0
      %v3036 = vadd.f32 0.0, %v3035
      %3037 = vmatprep.mubr.bf16.mxu0 0
      %3038 = vmatmul.mubr.bf16.gmra.mxu0 %v2834
      %v3039 = vpop.f32.mrf.mxu0
      %v3040 = vadd.f32 0.0, %v3039
      %v3041 = vpop.f32.mrf.mxu0
      %v3042 = vadd.f32 0.0, %v3041
      %v3043 = vpop.f32.mrf.mxu0
      %v3044 = vadd.f32 0.0, %v3043
      %v3045 = vpop.f32.mrf.mxu0
      %v3046 = vadd.f32 0.0, %v3045
      %3047 = vdwg.mxu0
      %v3048 = vadd.f32 %v2490, %v2871
      %v3049 = vadd.f32 %v2491, %v2873
      %v3050 = vadd.f32 %v2492, %v2924
      %v3051 = vadd.f32 %v2493, %v2926
      %v3052 = vadd.f32 %v2494, %v2977
      %v3053 = vadd.f32 %v2495, %v2979
      %v3054 = vadd.f32 %v2496, %v3030
      %v3055 = vadd.f32 %v2497, %v3032
      %v3056 = vadd.f32 %v2498, %v2875
      %v3057 = vadd.f32 %v2499, %v2877
      %v3058 = vadd.f32 %v2500, %v2928
      %v3059 = vadd.f32 %v2501, %v2930
      %v3060 = vadd.f32 %v2502, %v2981
      %v3061 = vadd.f32 %v2503, %v2983
      %v3062 = vadd.f32 %v2504, %v3034
      %v3063 = vadd.f32 %v2505, %v3036
      %v3064 = vadd.f32 %v2506, %v2881
      %v3065 = vadd.f32 %v2507, %v2883
      %v3066 = vadd.f32 %v2508, %v2934
      %v3067 = vadd.f32 %v2509, %v2936
      %v3068 = vadd.f32 %v2510, %v2987
      %v3069 = vadd.f32 %v2511, %v2989
      %v3070 = vadd.f32 %v2512, %v3040
      %v3071 = vadd.f32 %v2513, %v3042
      %v3072 = vadd.f32 %v2514, %v2885
      %v3073 = vadd.f32 %v2515, %v2887
      %v3074 = vadd.f32 %v2516, %v2938
      %v3075 = vadd.f32 %v2517, %v2940
      %v3076 = vadd.f32 %v2518, %v2991
      %v3077 = vadd.f32 %v2519, %v2993
      %v3078 = vadd.f32 %v2520, %v3044
      %v3079 = vadd.f32 %v2521, %v3046
      %s3080 = scalar_lea.vmem %s326, 640
      %v3081 = vld [vmem:[%s3080] sm:$0xff]
      %v3082 = vld [vmem:[%s3080 + $0x8] sm:$0xff]
      %v3083 = vld [vmem:[%s3080 + $0x10] sm:$0xff]
      %v3084 = vld [vmem:[%s3080 + $0x18] sm:$0xff]
      %v3085 = vld [vmem:[%s3080 + $0x20] sm:$0xff]
      %v3086 = vld [vmem:[%s3080 + $0x28] sm:$0xff]
      %v3087 = vld [vmem:[%s3080 + $0x30] sm:$0xff]
      %v3088 = vld [vmem:[%s3080 + $0x38] sm:$0xff]
      %v3089 = vld [vmem:[%s3080 + $0x40] sm:$0xff]
      %v3090 = vld [vmem:[%s3080 + $0x48] sm:$0xff]
      %v3091 = vld [vmem:[%s3080 + $0x50] sm:$0xff]
      %v3092 = vld [vmem:[%s3080 + $0x58] sm:$0xff]
      %v3093 = vld [vmem:[%s3080 + $0x60] sm:$0xff]
      %v3094 = vld [vmem:[%s3080 + $0x68] sm:$0xff]
      %v3095 = vld [vmem:[%s3080 + $0x70] sm:$0xff]
      %v3096 = vld [vmem:[%s3080 + $0x78] sm:$0xff]
      %v3113 = vunpack.c.l.b16 %v3081
      %v3114 = vunpack.c.h.b16 %v3081
      %v3115 = vunpack.c.l.b16 %v3082
      %v3116 = vunpack.c.h.b16 %v3082
      %v3117 = vunpack.c.l.b16 %v3083
      %v3118 = vunpack.c.h.b16 %v3083
      %v3119 = vunpack.c.l.b16 %v3084
      %v3120 = vunpack.c.h.b16 %v3084
      %v3121 = vunpack.c.l.b16 %v3085
      %v3122 = vunpack.c.h.b16 %v3085
      %v3123 = vunpack.c.l.b16 %v3086
      %v3124 = vunpack.c.h.b16 %v3086
      %v3125 = vunpack.c.l.b16 %v3087
      %v3126 = vunpack.c.h.b16 %v3087
      %v3127 = vunpack.c.l.b16 %v3088
      %v3128 = vunpack.c.h.b16 %v3088
      %v3129 = vunpack.c.l.b16 %v3089
      %v3130 = vunpack.c.h.b16 %v3089
      %v3131 = vunpack.c.l.b16 %v3090
      %v3132 = vunpack.c.h.b16 %v3090
      %v3133 = vunpack.c.l.b16 %v3091
      %v3134 = vunpack.c.h.b16 %v3091
      %v3135 = vunpack.c.l.b16 %v3092
      %v3136 = vunpack.c.h.b16 %v3092
      %v3137 = vunpack.c.l.b16 %v3093
      %v3138 = vunpack.c.h.b16 %v3093
      %v3139 = vunpack.c.l.b16 %v3094
      %v3140 = vunpack.c.h.b16 %v3094
      %v3141 = vunpack.c.l.b16 %v3095
      %v3142 = vunpack.c.h.b16 %v3095
      %v3143 = vunpack.c.l.b16 %v3096
      %v3144 = vunpack.c.h.b16 %v3096
      %v3145 = vpack.c.b16 %v3121, %v3113
      %v3146 = vpack.c.b16 %v3122, %v3114
      %v3147 = vpack.c.b16 %v3123, %v3115
      %v3148 = vpack.c.b16 %v3124, %v3116
      %v3149 = vpack.c.b16 %v3125, %v3117
      %v3150 = vpack.c.b16 %v3126, %v3118
      %v3151 = vpack.c.b16 %v3127, %v3119
      %v3152 = vpack.c.b16 %v3128, %v3120
      %v3153 = vpack.c.b16 %v3137, %v3129
      %v3154 = vpack.c.b16 %v3138, %v3130
      %v3155 = vpack.c.b16 %v3139, %v3131
      %v3156 = vpack.c.b16 %v3140, %v3132
      %v3157 = vpack.c.b16 %v3141, %v3133
      %v3158 = vpack.c.b16 %v3142, %v3134
      %v3159 = vpack.c.b16 %v3143, %v3135
      %v3160 = vpack.c.b16 %v3144, %v3136
      %3177 = vmatprep.subr.bf16.mxu0 0
      %3178 = vmatpush1.bf16.msra.mxu0 0
      %3179 = vmatprep.subr.bf16.mxu0 0
      %3180 = vmatpush1.bf16.msra.mxu0 0
      %3181 = vmatprep.subr.bf16.mxu0 0
      %3182 = vmatpush1.bf16.msra.mxu0 0
      %3183 = vmatprep.subr.bf16.mxu0 0
      %3184 = vmatpush1.bf16.msra.mxu0 0
      %3185 = vmatprep.subr.bf16.mxu0 0
      %3186 = vmatpush1.bf16.msra.mxu0 0
      %3187 = vmatprep.subr.bf16.mxu0 0
      %3188 = vmatpush1.bf16.msra.mxu0 0
      %3189 = vmatprep.subr.bf16.mxu0 %v3154
      %3190 = vmatpush1.bf16.msra.mxu0 %v3153
      %3191 = vmatprep.subr.bf16.mxu0 %v3146
      %3192 = vmatpush1.bf16.msra.mxu0 %v3145
      %3193 = vmatprep.subr.bf16.mxu0 0
      %3194 = vmatpush2.bf16.msra.mxu0 0
      %3195 = vmatprep.subr.bf16.mxu0 0
      %3196 = vmatpush2.bf16.msra.mxu0 0
      %3197 = vmatprep.subr.bf16.mxu0 0
      %3198 = vmatpush2.bf16.msra.mxu0 0
      %3199 = vmatprep.subr.bf16.mxu0 0
      %3200 = vmatpush2.bf16.msra.mxu0 0
      %3201 = vmatprep.subr.bf16.mxu0 0
      %3202 = vmatpush2.bf16.msra.mxu0 0
      %3203 = vmatprep.subr.bf16.mxu0 0
      %3204 = vmatpush2.bf16.msra.mxu0 0
      %3205 = vmatprep.subr.bf16.mxu0 0
      %3206 = vmatpush2.bf16.msra.mxu0 0
      %3207 = vmatprep.subr.bf16.mxu0 0
      %3208 = vmatpush2.bf16.msra.mxu0 0
      %3209 = vmatprep.mubr.bf16.mxu0 0
      %3210 = vmatmul.mubr.bf16.gmra.mxu0 %v449
      %v3211 = vpop.f32.mrf.mxu0
      %v3212 = vadd.f32 %v355, %v3211
      %v3213 = vpop.f32.mrf.mxu0
      %v3214 = vadd.f32 %v355, %v3213
      %v3215 = vpop.f32.mrf.mxu0
      %v3216 = vadd.f32 %v360, %v3215
      %v3217 = vpop.f32.mrf.mxu0
      %v3218 = vadd.f32 %v360, %v3217
      %3219 = vdwg.mxu0
      %3220 = vmatprep.subr.bf16.mxu0 0
      %3221 = vmatpush1.bf16.msra.mxu0 0
      %3222 = vmatprep.subr.bf16.mxu0 0
      %3223 = vmatpush1.bf16.msra.mxu0 0
      %3224 = vmatprep.subr.bf16.mxu0 0
      %3225 = vmatpush1.bf16.msra.mxu0 0
      %3226 = vmatprep.subr.bf16.mxu0 0
      %3227 = vmatpush1.bf16.msra.mxu0 0
      %3228 = vmatprep.subr.bf16.mxu0 0
      %3229 = vmatpush1.bf16.msra.mxu0 0
      %3230 = vmatprep.subr.bf16.mxu0 0
      %3231 = vmatpush1.bf16.msra.mxu0 0
      %3232 = vmatprep.subr.bf16.mxu0 %v3156
      %3233 = vmatpush1.bf16.msra.mxu0 %v3155
      %3234 = vmatprep.subr.bf16.mxu0 %v3148
      %3235 = vmatpush1.bf16.msra.mxu0 %v3147
      %3236 = vmatprep.subr.bf16.mxu0 0
      %3237 = vmatpush2.bf16.msra.mxu0 0
      %3238 = vmatprep.subr.bf16.mxu0 0
      %3239 = vmatpush2.bf16.msra.mxu0 0
      %3240 = vmatprep.subr.bf16.mxu0 0
      %3241 = vmatpush2.bf16.msra.mxu0 0
      %3242 = vmatprep.subr.bf16.mxu0 0
      %3243 = vmatpush2.bf16.msra.mxu0 0
      %3244 = vmatprep.subr.bf16.mxu0 0
      %3245 = vmatpush2.bf16.msra.mxu0 0
      %3246 = vmatprep.subr.bf16.mxu0 0
      %3247 = vmatpush2.bf16.msra.mxu0 0
      %3248 = vmatprep.subr.bf16.mxu0 0
      %3249 = vmatpush2.bf16.msra.mxu0 0
      %3250 = vmatprep.subr.bf16.mxu0 0
      %3251 = vmatpush2.bf16.msra.mxu0 0
      %3252 = vmatprep.mubr.bf16.mxu0 0
      %3253 = vmatmul.mubr.bf16.gmra.mxu0 %v449
      %v3254 = vpop.f32.mrf.mxu0
      %v3255 = vadd.f32 %v355, %v3254
      %v3256 = vpop.f32.mrf.mxu0
      %v3257 = vadd.f32 %v355, %v3256
      %v3258 = vpop.f32.mrf.mxu0
      %v3259 = vadd.f32 %v360, %v3258
      %v3260 = vpop.f32.mrf.mxu0
      %v3261 = vadd.f32 %v360, %v3260
      %3262 = vdwg.mxu0
      %3263 = vmatprep.subr.bf16.mxu0 0
      %3264 = vmatpush1.bf16.msra.mxu0 0
      %3265 = vmatprep.subr.bf16.mxu0 0
      %3266 = vmatpush1.bf16.msra.mxu0 0
      %3267 = vmatprep.subr.bf16.mxu0 0
      %3268 = vmatpush1.bf16.msra.mxu0 0
      %3269 = vmatprep.subr.bf16.mxu0 0
      %3270 = vmatpush1.bf16.msra.mxu0 0
      %3271 = vmatprep.subr.bf16.mxu0 0
      %3272 = vmatpush1.bf16.msra.mxu0 0
      %3273 = vmatprep.subr.bf16.mxu0 0
      %3274 = vmatpush1.bf16.msra.mxu0 0
      %3275 = vmatprep.subr.bf16.mxu0 %v3158
      %3276 = vmatpush1.bf16.msra.mxu0 %v3157
      %3277 = vmatprep.subr.bf16.mxu0 %v3150
      %3278 = vmatpush1.bf16.msra.mxu0 %v3149
      %3279 = vmatprep.subr.bf16.mxu0 0
      %3280 = vmatpush2.bf16.msra.mxu0 0
      %3281 = vmatprep.subr.bf16.mxu0 0
      %3282 = vmatpush2.bf16.msra.mxu0 0
      %3283 = vmatprep.subr.bf16.mxu0 0
      %3284 = vmatpush2.bf16.msra.mxu0 0
      %3285 = vmatprep.subr.bf16.mxu0 0
      %3286 = vmatpush2.bf16.msra.mxu0 0
      %3287 = vmatprep.subr.bf16.mxu0 0
      %3288 = vmatpush2.bf16.msra.mxu0 0
      %3289 = vmatprep.subr.bf16.mxu0 0
      %3290 = vmatpush2.bf16.msra.mxu0 0
      %3291 = vmatprep.subr.bf16.mxu0 0
      %3292 = vmatpush2.bf16.msra.mxu0 0
      %3293 = vmatprep.subr.bf16.mxu0 0
      %3294 = vmatpush2.bf16.msra.mxu0 0
      %3295 = vmatprep.mubr.bf16.mxu0 0
      %3296 = vmatmul.mubr.bf16.gmra.mxu0 %v449
      %v3297 = vpop.f32.mrf.mxu0
      %v3298 = vadd.f32 %v355, %v3297
      %v3299 = vpop.f32.mrf.mxu0
      %v3300 = vadd.f32 %v355, %v3299
      %v3301 = vpop.f32.mrf.mxu0
      %v3302 = vadd.f32 %v360, %v3301
      %v3303 = vpop.f32.mrf.mxu0
      %v3304 = vadd.f32 %v360, %v3303
      %3305 = vdwg.mxu0
      %3306 = vmatprep.subr.bf16.mxu0 0
      %3307 = vmatpush1.bf16.msra.mxu0 0
      %3308 = vmatprep.subr.bf16.mxu0 0
      %3309 = vmatpush1.bf16.msra.mxu0 0
      %3310 = vmatprep.subr.bf16.mxu0 0
      %3311 = vmatpush1.bf16.msra.mxu0 0
      %3312 = vmatprep.subr.bf16.mxu0 0
      %3313 = vmatpush1.bf16.msra.mxu0 0
      %3314 = vmatprep.subr.bf16.mxu0 0
      %3315 = vmatpush1.bf16.msra.mxu0 0
      %3316 = vmatprep.subr.bf16.mxu0 0
      %3317 = vmatpush1.bf16.msra.mxu0 0
      %3318 = vmatprep.subr.bf16.mxu0 %v3160
      %3319 = vmatpush1.bf16.msra.mxu0 %v3159
      %3320 = vmatprep.subr.bf16.mxu0 %v3152
      %3321 = vmatpush1.bf16.msra.mxu0 %v3151
      %3322 = vmatprep.subr.bf16.mxu0 0
      %3323 = vmatpush2.bf16.msra.mxu0 0
      %3324 = vmatprep.subr.bf16.mxu0 0
      %3325 = vmatpush2.bf16.msra.mxu0 0
      %3326 = vmatprep.subr.bf16.mxu0 0
      %3327 = vmatpush2.bf16.msra.mxu0 0
      %3328 = vmatprep.subr.bf16.mxu0 0
      %3329 = vmatpush2.bf16.msra.mxu0 0
      %3330 = vmatprep.subr.bf16.mxu0 0
      %3331 = vmatpush2.bf16.msra.mxu0 0
      %3332 = vmatprep.subr.bf16.mxu0 0
      %3333 = vmatpush2.bf16.msra.mxu0 0
      %3334 = vmatprep.subr.bf16.mxu0 0
      %3335 = vmatpush2.bf16.msra.mxu0 0
      %3336 = vmatprep.subr.bf16.mxu0 0
      %3337 = vmatpush2.bf16.msra.mxu0 0
      %3338 = vmatprep.mubr.bf16.mxu0 0
      %3339 = vmatmul.mubr.bf16.gmra.mxu0 %v449
      %v3340 = vpop.f32.mrf.mxu0
      %v3341 = vadd.f32 %v355, %v3340
      %v3342 = vpop.f32.mrf.mxu0
      %v3343 = vadd.f32 %v355, %v3342
      %v3344 = vpop.f32.mrf.mxu0
      %v3345 = vadd.f32 %v360, %v3344
      %v3346 = vpop.f32.mrf.mxu0
      %v3347 = vadd.f32 %v360, %v3346
      %3348 = vdwg.mxu0
      %v3349 = vtanh.pop %v3212
      %v3350 = vtanh.pop %v3214
      %v3351 = vtanh.pop %v3255
      %v3352 = vtanh.pop %v3257
      %v3353 = vtanh.pop %v3298
      %v3354 = vtanh.pop %v3300
      %v3355 = vtanh.pop %v3341
      %v3356 = vtanh.pop %v3343
      %v3357 = vtanh.pop %v3216
      %v3358 = vtanh.pop %v3218
      %v3359 = vtanh.pop %v3259
      %v3360 = vtanh.pop %v3261
      %v3361 = vtanh.pop %v3302
      %v3362 = vtanh.pop %v3304
      %v3363 = vtanh.pop %v3345
      %v3364 = vtanh.pop %v3347
      %s3365 = scalar_lea.vmem %s3, 80
      %v3366 = vld [vmem:[%s3365] sm:$0xf]
      %v3367 = vld [vmem:[%s3365 + $0x4] sm:$0xf]
      %v3368 = vld [vmem:[%s3365 + $0x8] sm:$0xf]
      %v3369 = vld [vmem:[%s3365 + $0xc] sm:$0xf]
      %v3370 = vpack.c.bf16 %v3357, %v3349
      %v3371 = vpack.c.bf16 %v3358, %v3350
      %v3372 = vpack.c.bf16 %v3359, %v3351
      %v3373 = vpack.c.bf16 %v3360, %v3352
      %v3374 = vpack.c.bf16 %v3361, %v3353
      %v3375 = vpack.c.bf16 %v3362, %v3354
      %v3376 = vpack.c.bf16 %v3363, %v3355
      %v3377 = vpack.c.bf16 %v3364, %v3356
      %v3382 = vunpack.c.l.b16 %v3366
      %v3383 = vunpack.c.l.b16 %v3367
      %v3384 = vunpack.c.l.b16 %v3368
      %v3385 = vunpack.c.l.b16 %v3369
      %v3386 = vpack.c.b16 %v3383, %v3382
      %v3387 = vpack.c.b16 %v3385, %v3384
      %v3389 = vsel %vm959, %v3386, 0
      %v3392 = vsel %vm959, %v3387, 0
      %3394 = vmatprep.subr.bf16.mxu0 0
      %3395 = vmatpush1.bf16.msra.mxu0 0
      %3396 = vmatprep.subr.bf16.mxu0 0
      %3397 = vmatpush1.bf16.msra.mxu0 0
      %3398 = vmatprep.subr.bf16.mxu0 0
      %3399 = vmatpush1.bf16.msra.mxu0 0
      %3400 = vmatprep.subr.bf16.mxu0 0
      %3401 = vmatpush1.bf16.msra.mxu0 0
      %3402 = vmatprep.subr.bf16.mxu0 0
      %3403 = vmatpush1.bf16.msra.mxu0 0
      %3404 = vmatprep.subr.bf16.mxu0 0
      %3405 = vmatpush1.bf16.msra.mxu0 0
      %3406 = vmatprep.subr.bf16.mxu0 0
      %3407 = vmatpush1.bf16.msra.mxu0 0
      %3408 = vmatprep.subr.bf16.mxu0 %v3371
      %3409 = vmatpush1.bf16.msra.mxu0 %v3370
      %3410 = vmatprep.subr.bf16.mxu0 0
      %3411 = vmatpush2.bf16.msra.mxu0 0
      %3412 = vmatprep.subr.bf16.mxu0 0
      %3413 = vmatpush2.bf16.msra.mxu0 0
      %3414 = vmatprep.subr.bf16.mxu0 0
      %3415 = vmatpush2.bf16.msra.mxu0 0
      %3416 = vmatprep.subr.bf16.mxu0 0
      %3417 = vmatpush2.bf16.msra.mxu0 0
      %3418 = vmatprep.subr.bf16.mxu0 0
      %3419 = vmatpush2.bf16.msra.mxu0 0
      %3420 = vmatprep.subr.bf16.mxu0 0
      %3421 = vmatpush2.bf16.msra.mxu0 0
      %3422 = vmatprep.subr.bf16.mxu0 0
      %3423 = vmatpush2.bf16.msra.mxu0 0
      %3424 = vmatprep.subr.bf16.mxu0 0
      %3425 = vmatpush2.bf16.msra.mxu0 0
      %3426 = vmatprep.mubr.bf16.mxu0 0
      %3427 = vmatmul.mubr.bf16.gmra.mxu0 %v3389
      %v3428 = vpop.f32.mrf.mxu0
      %v3429 = vadd.f32 0.0, %v3428
      %v3430 = vpop.f32.mrf.mxu0
      %v3431 = vadd.f32 0.0, %v3430
      %v3432 = vpop.f32.mrf.mxu0
      %v3433 = vadd.f32 0.0, %v3432
      %v3434 = vpop.f32.mrf.mxu0
      %v3435 = vadd.f32 0.0, %v3434
      %3436 = vmatprep.mubr.bf16.mxu0 0
      %3437 = vmatmul.mubr.bf16.gmra.mxu0 %v3392
      %v3438 = vpop.f32.mrf.mxu0
      %v3439 = vadd.f32 0.0, %v3438
      %v3440 = vpop.f32.mrf.mxu0
      %v3441 = vadd.f32 0.0, %v3440
      %v3442 = vpop.f32.mrf.mxu0
      %v3443 = vadd.f32 0.0, %v3442
      %v3444 = vpop.f32.mrf.mxu0
      %v3445 = vadd.f32 0.0, %v3444
      %3446 = vdwg.mxu0
      %3447 = vmatprep.subr.bf16.mxu0 0
      %3448 = vmatpush1.bf16.msra.mxu0 0
      %3449 = vmatprep.subr.bf16.mxu0 0
      %3450 = vmatpush1.bf16.msra.mxu0 0
      %3451 = vmatprep.subr.bf16.mxu0 0
      %3452 = vmatpush1.bf16.msra.mxu0 0
      %3453 = vmatprep.subr.bf16.mxu0 0
      %3454 = vmatpush1.bf16.msra.mxu0 0
      %3455 = vmatprep.subr.bf16.mxu0 0
      %3456 = vmatpush1.bf16.msra.mxu0 0
      %3457 = vmatprep.subr.bf16.mxu0 0
      %3458 = vmatpush1.bf16.msra.mxu0 0
      %3459 = vmatprep.subr.bf16.mxu0 0
      %3460 = vmatpush1.bf16.msra.mxu0 0
      %3461 = vmatprep.subr.bf16.mxu0 %v3373
      %3462 = vmatpush1.bf16.msra.mxu0 %v3372
      %3463 = vmatprep.subr.bf16.mxu0 0
      %3464 = vmatpush2.bf16.msra.mxu0 0
      %3465 = vmatprep.subr.bf16.mxu0 0
      %3466 = vmatpush2.bf16.msra.mxu0 0
      %3467 = vmatprep.subr.bf16.mxu0 0
      %3468 = vmatpush2.bf16.msra.mxu0 0
      %3469 = vmatprep.subr.bf16.mxu0 0
      %3470 = vmatpush2.bf16.msra.mxu0 0
      %3471 = vmatprep.subr.bf16.mxu0 0
      %3472 = vmatpush2.bf16.msra.mxu0 0
      %3473 = vmatprep.subr.bf16.mxu0 0
      %3474 = vmatpush2.bf16.msra.mxu0 0
      %3475 = vmatprep.subr.bf16.mxu0 0
      %3476 = vmatpush2.bf16.msra.mxu0 0
      %3477 = vmatprep.subr.bf16.mxu0 0
      %3478 = vmatpush2.bf16.msra.mxu0 0
      %3479 = vmatprep.mubr.bf16.mxu0 0
      %3480 = vmatmul.mubr.bf16.gmra.mxu0 %v3389
      %v3481 = vpop.f32.mrf.mxu0
      %v3482 = vadd.f32 0.0, %v3481
      %v3483 = vpop.f32.mrf.mxu0
      %v3484 = vadd.f32 0.0, %v3483
      %v3485 = vpop.f32.mrf.mxu0
      %v3486 = vadd.f32 0.0, %v3485
      %v3487 = vpop.f32.mrf.mxu0
      %v3488 = vadd.f32 0.0, %v3487
      %3489 = vmatprep.mubr.bf16.mxu0 0
      %3490 = vmatmul.mubr.bf16.gmra.mxu0 %v3392
      %v3491 = vpop.f32.mrf.mxu0
      %v3492 = vadd.f32 0.0, %v3491
      %v3493 = vpop.f32.mrf.mxu0
      %v3494 = vadd.f32 0.0, %v3493
      %v3495 = vpop.f32.mrf.mxu0
      %v3496 = vadd.f32 0.0, %v3495
      %v3497 = vpop.f32.mrf.mxu0
      %v3498 = vadd.f32 0.0, %v3497
      %3499 = vdwg.mxu0
      %3500 = vmatprep.subr.bf16.mxu0 0
      %3501 = vmatpush1.bf16.msra.mxu0 0
      %3502 = vmatprep.subr.bf16.mxu0 0
      %3503 = vmatpush1.bf16.msra.mxu0 0
      %3504 = vmatprep.subr.bf16.mxu0 0
      %3505 = vmatpush1.bf16.msra.mxu0 0
      %3506 = vmatprep.subr.bf16.mxu0 0
      %3507 = vmatpush1.bf16.msra.mxu0 0
      %3508 = vmatprep.subr.bf16.mxu0 0
      %3509 = vmatpush1.bf16.msra.mxu0 0
      %3510 = vmatprep.subr.bf16.mxu0 0
      %3511 = vmatpush1.bf16.msra.mxu0 0
      %3512 = vmatprep.subr.bf16.mxu0 0
      %3513 = vmatpush1.bf16.msra.mxu0 0
      %3514 = vmatprep.subr.bf16.mxu0 %v3375
      %3515 = vmatpush1.bf16.msra.mxu0 %v3374
      %3516 = vmatprep.subr.bf16.mxu0 0
      %3517 = vmatpush2.bf16.msra.mxu0 0
      %3518 = vmatprep.subr.bf16.mxu0 0
      %3519 = vmatpush2.bf16.msra.mxu0 0
      %3520 = vmatprep.subr.bf16.mxu0 0
      %3521 = vmatpush2.bf16.msra.mxu0 0
      %3522 = vmatprep.subr.bf16.mxu0 0
      %3523 = vmatpush2.bf16.msra.mxu0 0
      %3524 = vmatprep.subr.bf16.mxu0 0
      %3525 = vmatpush2.bf16.msra.mxu0 0
      %3526 = vmatprep.subr.bf16.mxu0 0
      %3527 = vmatpush2.bf16.msra.mxu0 0
      %3528 = vmatprep.subr.bf16.mxu0 0
      %3529 = vmatpush2.bf16.msra.mxu0 0
      %3530 = vmatprep.subr.bf16.mxu0 0
      %3531 = vmatpush2.bf16.msra.mxu0 0
      %3532 = vmatprep.mubr.bf16.mxu0 0
      %3533 = vmatmul.mubr.bf16.gmra.mxu0 %v3389
      %v3534 = vpop.f32.mrf.mxu0
      %v3535 = vadd.f32 0.0, %v3534
      %v3536 = vpop.f32.mrf.mxu0
      %v3537 = vadd.f32 0.0, %v3536
      %v3538 = vpop.f32.mrf.mxu0
      %v3539 = vadd.f32 0.0, %v3538
      %v3540 = vpop.f32.mrf.mxu0
      %v3541 = vadd.f32 0.0, %v3540
      %3542 = vmatprep.mubr.bf16.mxu0 0
      %3543 = vmatmul.mubr.bf16.gmra.mxu0 %v3392
      %v3544 = vpop.f32.mrf.mxu0
      %v3545 = vadd.f32 0.0, %v3544
      %v3546 = vpop.f32.mrf.mxu0
      %v3547 = vadd.f32 0.0, %v3546
      %v3548 = vpop.f32.mrf.mxu0
      %v3549 = vadd.f32 0.0, %v3548
      %v3550 = vpop.f32.mrf.mxu0
      %v3551 = vadd.f32 0.0, %v3550
      %3552 = vdwg.mxu0
      %3553 = vmatprep.subr.bf16.mxu0 0
      %3554 = vmatpush1.bf16.msra.mxu0 0
      %3555 = vmatprep.subr.bf16.mxu0 0
      %3556 = vmatpush1.bf16.msra.mxu0 0
      %3557 = vmatprep.subr.bf16.mxu0 0
      %3558 = vmatpush1.bf16.msra.mxu0 0
      %3559 = vmatprep.subr.bf16.mxu0 0
      %3560 = vmatpush1.bf16.msra.mxu0 0
      %3561 = vmatprep.subr.bf16.mxu0 0
      %3562 = vmatpush1.bf16.msra.mxu0 0
      %3563 = vmatprep.subr.bf16.mxu0 0
      %3564 = vmatpush1.bf16.msra.mxu0 0
      %3565 = vmatprep.subr.bf16.mxu0 0
      %3566 = vmatpush1.bf16.msra.mxu0 0
      %3567 = vmatprep.subr.bf16.mxu0 %v3377
      %3568 = vmatpush1.bf16.msra.mxu0 %v3376
      %3569 = vmatprep.subr.bf16.mxu0 0
      %3570 = vmatpush2.bf16.msra.mxu0 0
      %3571 = vmatprep.subr.bf16.mxu0 0
      %3572 = vmatpush2.bf16.msra.mxu0 0
      %3573 = vmatprep.subr.bf16.mxu0 0
      %3574 = vmatpush2.bf16.msra.mxu0 0
      %3575 = vmatprep.subr.bf16.mxu0 0
      %3576 = vmatpush2.bf16.msra.mxu0 0
      %3577 = vmatprep.subr.bf16.mxu0 0
      %3578 = vmatpush2.bf16.msra.mxu0 0
      %3579 = vmatprep.subr.bf16.mxu0 0
      %3580 = vmatpush2.bf16.msra.mxu0 0
      %3581 = vmatprep.subr.bf16.mxu0 0
      %3582 = vmatpush2.bf16.msra.mxu0 0
      %3583 = vmatprep.subr.bf16.mxu0 0
      %3584 = vmatpush2.bf16.msra.mxu0 0
      %3585 = vmatprep.mubr.bf16.mxu0 0
      %3586 = vmatmul.mubr.bf16.gmra.mxu0 %v3389
      %v3587 = vpop.f32.mrf.mxu0
      %v3588 = vadd.f32 0.0, %v3587
      %v3589 = vpop.f32.mrf.mxu0
      %v3590 = vadd.f32 0.0, %v3589
      %v3591 = vpop.f32.mrf.mxu0
      %v3592 = vadd.f32 0.0, %v3591
      %v3593 = vpop.f32.mrf.mxu0
      %v3594 = vadd.f32 0.0, %v3593
      %3595 = vmatprep.mubr.bf16.mxu0 0
      %3596 = vmatmul.mubr.bf16.gmra.mxu0 %v3392
      %v3597 = vpop.f32.mrf.mxu0
      %v3598 = vadd.f32 0.0, %v3597
      %v3599 = vpop.f32.mrf.mxu0
      %v3600 = vadd.f32 0.0, %v3599
      %v3601 = vpop.f32.mrf.mxu0
      %v3602 = vadd.f32 0.0, %v3601
      %v3603 = vpop.f32.mrf.mxu0
      %v3604 = vadd.f32 0.0, %v3603
      %3605 = vdwg.mxu0
      %v3606 = vadd.f32 %v3048, %v3429
      %v3607 = vadd.f32 %v3049, %v3431
      %v3608 = vadd.f32 %v3050, %v3482
      %v3609 = vadd.f32 %v3051, %v3484
      %v3610 = vadd.f32 %v3052, %v3535
      %v3611 = vadd.f32 %v3053, %v3537
      %v3612 = vadd.f32 %v3054, %v3588
      %v3613 = vadd.f32 %v3055, %v3590
      %v3614 = vadd.f32 %v3056, %v3433
      %v3615 = vadd.f32 %v3057, %v3435
      %v3616 = vadd.f32 %v3058, %v3486
      %v3617 = vadd.f32 %v3059, %v3488
      %v3618 = vadd.f32 %v3060, %v3539
      %v3619 = vadd.f32 %v3061, %v3541
      %v3620 = vadd.f32 %v3062, %v3592
      %v3621 = vadd.f32 %v3063, %v3594
      %v3622 = vadd.f32 %v3064, %v3439
      %v3623 = vadd.f32 %v3065, %v3441
      %v3624 = vadd.f32 %v3066, %v3492
      %v3625 = vadd.f32 %v3067, %v3494
      %v3626 = vadd.f32 %v3068, %v3545
      %v3627 = vadd.f32 %v3069, %v3547
      %v3628 = vadd.f32 %v3070, %v3598
      %v3629 = vadd.f32 %v3071, %v3600
      %v3630 = vadd.f32 %v3072, %v3443
      %v3631 = vadd.f32 %v3073, %v3445
      %v3632 = vadd.f32 %v3074, %v3496
      %v3633 = vadd.f32 %v3075, %v3498
      %v3634 = vadd.f32 %v3076, %v3549
      %v3635 = vadd.f32 %v3077, %v3551
      %v3636 = vadd.f32 %v3078, %v3602
      %v3637 = vadd.f32 %v3079, %v3604
      %s3638 = scalar_lea.vmem %s326, 768
      %v3639 = vld [vmem:[%s3638] sm:$0xff]
      %v3640 = vld [vmem:[%s3638 + $0x8] sm:$0xff]
      %v3641 = vld [vmem:[%s3638 + $0x10] sm:$0xff]
      %v3642 = vld [vmem:[%s3638 + $0x18] sm:$0xff]
      %v3643 = vld [vmem:[%s3638 + $0x20] sm:$0xff]
      %v3644 = vld [vmem:[%s3638 + $0x28] sm:$0xff]
      %v3645 = vld [vmem:[%s3638 + $0x30] sm:$0xff]
      %v3646 = vld [vmem:[%s3638 + $0x38] sm:$0xff]
      %v3647 = vld [vmem:[%s3638 + $0x40] sm:$0xff]
      %v3648 = vld [vmem:[%s3638 + $0x48] sm:$0xff]
      %v3649 = vld [vmem:[%s3638 + $0x50] sm:$0xff]
      %v3650 = vld [vmem:[%s3638 + $0x58] sm:$0xff]
      %v3651 = vld [vmem:[%s3638 + $0x60] sm:$0xff]
      %v3652 = vld [vmem:[%s3638 + $0x68] sm:$0xff]
      %v3653 = vld [vmem:[%s3638 + $0x70] sm:$0xff]
      %v3654 = vld [vmem:[%s3638 + $0x78] sm:$0xff]
      %v3671 = vunpack.c.l.b16 %v3639
      %v3672 = vunpack.c.h.b16 %v3639
      %v3673 = vunpack.c.l.b16 %v3640
      %v3674 = vunpack.c.h.b16 %v3640
      %v3675 = vunpack.c.l.b16 %v3641
      %v3676 = vunpack.c.h.b16 %v3641
      %v3677 = vunpack.c.l.b16 %v3642
      %v3678 = vunpack.c.h.b16 %v3642
      %v3679 = vunpack.c.l.b16 %v3643
      %v3680 = vunpack.c.h.b16 %v3643
      %v3681 = vunpack.c.l.b16 %v3644
      %v3682 = vunpack.c.h.b16 %v3644
      %v3683 = vunpack.c.l.b16 %v3645
      %v3684 = vunpack.c.h.b16 %v3645
      %v3685 = vunpack.c.l.b16 %v3646
      %v3686 = vunpack.c.h.b16 %v3646
      %v3687 = vunpack.c.l.b16 %v3647
      %v3688 = vunpack.c.h.b16 %v3647
      %v3689 = vunpack.c.l.b16 %v3648
      %v3690 = vunpack.c.h.b16 %v3648
      %v3691 = vunpack.c.l.b16 %v3649
      %v3692 = vunpack.c.h.b16 %v3649
      %v3693 = vunpack.c.l.b16 %v3650
      %v3694 = vunpack.c.h.b16 %v3650
      %v3695 = vunpack.c.l.b16 %v3651
      %v3696 = vunpack.c.h.b16 %v3651
      %v3697 = vunpack.c.l.b16 %v3652
      %v3698 = vunpack.c.h.b16 %v3652
      %v3699 = vunpack.c.l.b16 %v3653
      %v3700 = vunpack.c.h.b16 %v3653
      %v3701 = vunpack.c.l.b16 %v3654
      %v3702 = vunpack.c.h.b16 %v3654
      %v3703 = vpack.c.b16 %v3679, %v3671
      %v3704 = vpack.c.b16 %v3680, %v3672
      %v3705 = vpack.c.b16 %v3681, %v3673
      %v3706 = vpack.c.b16 %v3682, %v3674
      %v3707 = vpack.c.b16 %v3683, %v3675
      %v3708 = vpack.c.b16 %v3684, %v3676
      %v3709 = vpack.c.b16 %v3685, %v3677
      %v3710 = vpack.c.b16 %v3686, %v3678
      %v3711 = vpack.c.b16 %v3695, %v3687
      %v3712 = vpack.c.b16 %v3696, %v3688
      %v3713 = vpack.c.b16 %v3697, %v3689
      %v3714 = vpack.c.b16 %v3698, %v3690
      %v3715 = vpack.c.b16 %v3699, %v3691
      %v3716 = vpack.c.b16 %v3700, %v3692
      %v3717 = vpack.c.b16 %v3701, %v3693
      %v3718 = vpack.c.b16 %v3702, %v3694
      %3735 = vmatprep.subr.bf16.mxu0 0
      %3736 = vmatpush1.bf16.msra.mxu0 0
      %3737 = vmatprep.subr.bf16.mxu0 0
      %3738 = vmatpush1.bf16.msra.mxu0 0
      %3739 = vmatprep.subr.bf16.mxu0 0
      %3740 = vmatpush1.bf16.msra.mxu0 0
      %3741 = vmatprep.subr.bf16.mxu0 0
      %3742 = vmatpush1.bf16.msra.mxu0 0
      %3743 = vmatprep.subr.bf16.mxu0 0
      %3744 = vmatpush1.bf16.msra.mxu0 0
      %3745 = vmatprep.subr.bf16.mxu0 0
      %3746 = vmatpush1.bf16.msra.mxu0 0
      %3747 = vmatprep.subr.bf16.mxu0 %v3712
      %3748 = vmatpush1.bf16.msra.mxu0 %v3711
      %3749 = vmatprep.subr.bf16.mxu0 %v3704
      %3750 = vmatpush1.bf16.msra.mxu0 %v3703
      %3751 = vmatprep.subr.bf16.mxu0 0
      %3752 = vmatpush2.bf16.msra.mxu0 0
      %3753 = vmatprep.subr.bf16.mxu0 0
      %3754 = vmatpush2.bf16.msra.mxu0 0
      %3755 = vmatprep.subr.bf16.mxu0 0
      %3756 = vmatpush2.bf16.msra.mxu0 0
      %3757 = vmatprep.subr.bf16.mxu0 0
      %3758 = vmatpush2.bf16.msra.mxu0 0
      %3759 = vmatprep.subr.bf16.mxu0 0
      %3760 = vmatpush2.bf16.msra.mxu0 0
      %3761 = vmatprep.subr.bf16.mxu0 0
      %3762 = vmatpush2.bf16.msra.mxu0 0
      %3763 = vmatprep.subr.bf16.mxu0 0
      %3764 = vmatpush2.bf16.msra.mxu0 0
      %3765 = vmatprep.subr.bf16.mxu0 0
      %3766 = vmatpush2.bf16.msra.mxu0 0
      %3767 = vmatprep.mubr.bf16.mxu0 0
      %3768 = vmatmul.mubr.bf16.gmra.mxu0 %v449
      %v3769 = vpop.f32.mrf.mxu0
      %v3770 = vadd.f32 %v355, %v3769
      %v3771 = vpop.f32.mrf.mxu0
      %v3772 = vadd.f32 %v355, %v3771
      %v3773 = vpop.f32.mrf.mxu0
      %v3774 = vadd.f32 %v360, %v3773
      %v3775 = vpop.f32.mrf.mxu0
      %v3776 = vadd.f32 %v360, %v3775
      %3777 = vdwg.mxu0
      %3778 = vmatprep.subr.bf16.mxu0 0
      %3779 = vmatpush1.bf16.msra.mxu0 0
      %3780 = vmatprep.subr.bf16.mxu0 0
      %3781 = vmatpush1.bf16.msra.mxu0 0
      %3782 = vmatprep.subr.bf16.mxu0 0
      %3783 = vmatpush1.bf16.msra.mxu0 0
      %3784 = vmatprep.subr.bf16.mxu0 0
      %3785 = vmatpush1.bf16.msra.mxu0 0
      %3786 = vmatprep.subr.bf16.mxu0 0
      %3787 = vmatpush1.bf16.msra.mxu0 0
      %3788 = vmatprep.subr.bf16.mxu0 0
      %3789 = vmatpush1.bf16.msra.mxu0 0
      %3790 = vmatprep.subr.bf16.mxu0 %v3714
      %3791 = vmatpush1.bf16.msra.mxu0 %v3713
      %3792 = vmatprep.subr.bf16.mxu0 %v3706
      %3793 = vmatpush1.bf16.msra.mxu0 %v3705
      %3794 = vmatprep.subr.bf16.mxu0 0
      %3795 = vmatpush2.bf16.msra.mxu0 0
      %3796 = vmatprep.subr.bf16.mxu0 0
      %3797 = vmatpush2.bf16.msra.mxu0 0
      %3798 = vmatprep.subr.bf16.mxu0 0
      %3799 = vmatpush2.bf16.msra.mxu0 0
      %3800 = vmatprep.subr.bf16.mxu0 0
      %3801 = vmatpush2.bf16.msra.mxu0 0
      %3802 = vmatprep.subr.bf16.mxu0 0
      %3803 = vmatpush2.bf16.msra.mxu0 0
      %3804 = vmatprep.subr.bf16.mxu0 0
      %3805 = vmatpush2.bf16.msra.mxu0 0
      %3806 = vmatprep.subr.bf16.mxu0 0
      %3807 = vmatpush2.bf16.msra.mxu0 0
      %3808 = vmatprep.subr.bf16.mxu0 0
      %3809 = vmatpush2.bf16.msra.mxu0 0
      %3810 = vmatprep.mubr.bf16.mxu0 0
      %3811 = vmatmul.mubr.bf16.gmra.mxu0 %v449
      %v3812 = vpop.f32.mrf.mxu0
      %v3813 = vadd.f32 %v355, %v3812
      %v3814 = vpop.f32.mrf.mxu0
      %v3815 = vadd.f32 %v355, %v3814
      %v3816 = vpop.f32.mrf.mxu0
      %v3817 = vadd.f32 %v360, %v3816
      %v3818 = vpop.f32.mrf.mxu0
      %v3819 = vadd.f32 %v360, %v3818
      %3820 = vdwg.mxu0
      %3821 = vmatprep.subr.bf16.mxu0 0
      %3822 = vmatpush1.bf16.msra.mxu0 0
      %3823 = vmatprep.subr.bf16.mxu0 0
      %3824 = vmatpush1.bf16.msra.mxu0 0
      %3825 = vmatprep.subr.bf16.mxu0 0
      %3826 = vmatpush1.bf16.msra.mxu0 0
      %3827 = vmatprep.subr.bf16.mxu0 0
      %3828 = vmatpush1.bf16.msra.mxu0 0
      %3829 = vmatprep.subr.bf16.mxu0 0
      %3830 = vmatpush1.bf16.msra.mxu0 0
      %3831 = vmatprep.subr.bf16.mxu0 0
      %3832 = vmatpush1.bf16.msra.mxu0 0
      %3833 = vmatprep.subr.bf16.mxu0 %v3716
      %3834 = vmatpush1.bf16.msra.mxu0 %v3715
      %3835 = vmatprep.subr.bf16.mxu0 %v3708
      %3836 = vmatpush1.bf16.msra.mxu0 %v3707
      %3837 = vmatprep.subr.bf16.mxu0 0
      %3838 = vmatpush2.bf16.msra.mxu0 0
      %3839 = vmatprep.subr.bf16.mxu0 0
      %3840 = vmatpush2.bf16.msra.mxu0 0
      %3841 = vmatprep.subr.bf16.mxu0 0
      %3842 = vmatpush2.bf16.msra.mxu0 0
      %3843 = vmatprep.subr.bf16.mxu0 0
      %3844 = vmatpush2.bf16.msra.mxu0 0
      %3845 = vmatprep.subr.bf16.mxu0 0
      %3846 = vmatpush2.bf16.msra.mxu0 0
      %3847 = vmatprep.subr.bf16.mxu0 0
      %3848 = vmatpush2.bf16.msra.mxu0 0
      %3849 = vmatprep.subr.bf16.mxu0 0
      %3850 = vmatpush2.bf16.msra.mxu0 0
      %3851 = vmatprep.subr.bf16.mxu0 0
      %3852 = vmatpush2.bf16.msra.mxu0 0
      %3853 = vmatprep.mubr.bf16.mxu0 0
      %3854 = vmatmul.mubr.bf16.gmra.mxu0 %v449
      %v3855 = vpop.f32.mrf.mxu0
      %v3856 = vadd.f32 %v355, %v3855
      %v3857 = vpop.f32.mrf.mxu0
      %v3858 = vadd.f32 %v355, %v3857
      %v3859 = vpop.f32.mrf.mxu0
      %v3860 = vadd.f32 %v360, %v3859
      %v3861 = vpop.f32.mrf.mxu0
      %v3862 = vadd.f32 %v360, %v3861
      %3863 = vdwg.mxu0
      %3864 = vmatprep.subr.bf16.mxu0 0
      %3865 = vmatpush1.bf16.msra.mxu0 0
      %3866 = vmatprep.subr.bf16.mxu0 0
      %3867 = vmatpush1.bf16.msra.mxu0 0
      %3868 = vmatprep.subr.bf16.mxu0 0
      %3869 = vmatpush1.bf16.msra.mxu0 0
      %3870 = vmatprep.subr.bf16.mxu0 0
      %3871 = vmatpush1.bf16.msra.mxu0 0
      %3872 = vmatprep.subr.bf16.mxu0 0
      %3873 = vmatpush1.bf16.msra.mxu0 0
      %3874 = vmatprep.subr.bf16.mxu0 0
      %3875 = vmatpush1.bf16.msra.mxu0 0
      %3876 = vmatprep.subr.bf16.mxu0 %v3718
      %3877 = vmatpush1.bf16.msra.mxu0 %v3717
      %3878 = vmatprep.subr.bf16.mxu0 %v3710
      %3879 = vmatpush1.bf16.msra.mxu0 %v3709
      %3880 = vmatprep.subr.bf16.mxu0 0
      %3881 = vmatpush2.bf16.msra.mxu0 0
      %3882 = vmatprep.subr.bf16.mxu0 0
      %3883 = vmatpush2.bf16.msra.mxu0 0
      %3884 = vmatprep.subr.bf16.mxu0 0
      %3885 = vmatpush2.bf16.msra.mxu0 0
      %3886 = vmatprep.subr.bf16.mxu0 0
      %3887 = vmatpush2.bf16.msra.mxu0 0
      %3888 = vmatprep.subr.bf16.mxu0 0
      %3889 = vmatpush2.bf16.msra.mxu0 0
      %3890 = vmatprep.subr.bf16.mxu0 0
      %3891 = vmatpush2.bf16.msra.mxu0 0
      %3892 = vmatprep.subr.bf16.mxu0 0
      %3893 = vmatpush2.bf16.msra.mxu0 0
      %3894 = vmatprep.subr.bf16.mxu0 0
      %3895 = vmatpush2.bf16.msra.mxu0 0
      %3896 = vmatprep.mubr.bf16.mxu0 0
      %3897 = vmatmul.mubr.bf16.gmra.mxu0 %v449
      %v3898 = vpop.f32.mrf.mxu0
      %v3899 = vadd.f32 %v355, %v3898
      %v3900 = vpop.f32.mrf.mxu0
      %v3901 = vadd.f32 %v355, %v3900
      %v3902 = vpop.f32.mrf.mxu0
      %v3903 = vadd.f32 %v360, %v3902
      %v3904 = vpop.f32.mrf.mxu0
      %v3905 = vadd.f32 %v360, %v3904
      %3906 = vdwg.mxu0
      %v3907 = vtanh.pop %v3770
      %v3908 = vtanh.pop %v3772
      %v3909 = vtanh.pop %v3813
      %v3910 = vtanh.pop %v3815
      %v3911 = vtanh.pop %v3856
      %v3912 = vtanh.pop %v3858
      %v3913 = vtanh.pop %v3899
      %v3914 = vtanh.pop %v3901
      %v3915 = vtanh.pop %v3774
      %v3916 = vtanh.pop %v3776
      %v3917 = vtanh.pop %v3817
      %v3918 = vtanh.pop %v3819
      %v3919 = vtanh.pop %v3860
      %v3920 = vtanh.pop %v3862
      %v3921 = vtanh.pop %v3903
      %v3922 = vtanh.pop %v3905
      %s3923 = scalar_lea.vmem %s3, 96
      %v3924 = vld [vmem:[%s3923] sm:$0xf]
      %v3925 = vld [vmem:[%s3923 + $0x4] sm:$0xf]
      %v3926 = vld [vmem:[%s3923 + $0x8] sm:$0xf]
      %v3927 = vld [vmem:[%s3923 + $0xc] sm:$0xf]
      %v3928 = vpack.c.bf16 %v3915, %v3907
      %v3929 = vpack.c.bf16 %v3916, %v3908
      %v3930 = vpack.c.bf16 %v3917, %v3909
      %v3931 = vpack.c.bf16 %v3918, %v3910
      %v3932 = vpack.c.bf16 %v3919, %v3911
      %v3933 = vpack.c.bf16 %v3920, %v3912
      %v3934 = vpack.c.bf16 %v3921, %v3913
      %v3935 = vpack.c.bf16 %v3922, %v3914
      %v3940 = vunpack.c.l.b16 %v3924
      %v3941 = vunpack.c.l.b16 %v3925
      %v3942 = vunpack.c.l.b16 %v3926
      %v3943 = vunpack.c.l.b16 %v3927
      %v3944 = vpack.c.b16 %v3941, %v3940
      %v3945 = vpack.c.b16 %v3943, %v3942
      %v3947 = vsel %vm959, %v3944, 0
      %v3950 = vsel %vm959, %v3945, 0
      %3952 = vmatprep.subr.bf16.mxu0 0
      %3953 = vmatpush1.bf16.msra.mxu0 0
      %3954 = vmatprep.subr.bf16.mxu0 0
      %3955 = vmatpush1.bf16.msra.mxu0 0
      %3956 = vmatprep.subr.bf16.mxu0 0
      %3957 = vmatpush1.bf16.msra.mxu0 0
      %3958 = vmatprep.subr.bf16.mxu0 0
      %3959 = vmatpush1.bf16.msra.mxu0 0
      %3960 = vmatprep.subr.bf16.mxu0 0
      %3961 = vmatpush1.bf16.msra.mxu0 0
      %3962 = vmatprep.subr.bf16.mxu0 0
      %3963 = vmatpush1.bf16.msra.mxu0 0
      %3964 = vmatprep.subr.bf16.mxu0 0
      %3965 = vmatpush1.bf16.msra.mxu0 0
      %3966 = vmatprep.subr.bf16.mxu0 %v3929
      %3967 = vmatpush1.bf16.msra.mxu0 %v3928
      %3968 = vmatprep.subr.bf16.mxu0 0
      %3969 = vmatpush2.bf16.msra.mxu0 0
      %3970 = vmatprep.subr.bf16.mxu0 0
      %3971 = vmatpush2.bf16.msra.mxu0 0
      %3972 = vmatprep.subr.bf16.mxu0 0
      %3973 = vmatpush2.bf16.msra.mxu0 0
      %3974 = vmatprep.subr.bf16.mxu0 0
      %3975 = vmatpush2.bf16.msra.mxu0 0
      %3976 = vmatprep.subr.bf16.mxu0 0
      %3977 = vmatpush2.bf16.msra.mxu0 0
      %3978 = vmatprep.subr.bf16.mxu0 0
      %3979 = vmatpush2.bf16.msra.mxu0 0
      %3980 = vmatprep.subr.bf16.mxu0 0
      %3981 = vmatpush2.bf16.msra.mxu0 0
      %3982 = vmatprep.subr.bf16.mxu0 0
      %3983 = vmatpush2.bf16.msra.mxu0 0
      %3984 = vmatprep.mubr.bf16.mxu0 0
      %3985 = vmatmul.mubr.bf16.gmra.mxu0 %v3947
      %v3986 = vpop.f32.mrf.mxu0
      %v3987 = vadd.f32 0.0, %v3986
      %v3988 = vpop.f32.mrf.mxu0
      %v3989 = vadd.f32 0.0, %v3988
      %v3990 = vpop.f32.mrf.mxu0
      %v3991 = vadd.f32 0.0, %v3990
      %v3992 = vpop.f32.mrf.mxu0
      %v3993 = vadd.f32 0.0, %v3992
      %3994 = vmatprep.mubr.bf16.mxu0 0
      %3995 = vmatmul.mubr.bf16.gmra.mxu0 %v3950
      %v3996 = vpop.f32.mrf.mxu0
      %v3997 = vadd.f32 0.0, %v3996
      %v3998 = vpop.f32.mrf.mxu0
      %v3999 = vadd.f32 0.0, %v3998
      %v4000 = vpop.f32.mrf.mxu0
      %v4001 = vadd.f32 0.0, %v4000
      %v4002 = vpop.f32.mrf.mxu0
      %v4003 = vadd.f32 0.0, %v4002
      %4004 = vdwg.mxu0
      %4005 = vmatprep.subr.bf16.mxu0 0
      %4006 = vmatpush1.bf16.msra.mxu0 0
      %4007 = vmatprep.subr.bf16.mxu0 0
      %4008 = vmatpush1.bf16.msra.mxu0 0
      %4009 = vmatprep.subr.bf16.mxu0 0
      %4010 = vmatpush1.bf16.msra.mxu0 0
      %4011 = vmatprep.subr.bf16.mxu0 0
      %4012 = vmatpush1.bf16.msra.mxu0 0
      %4013 = vmatprep.subr.bf16.mxu0 0
      %4014 = vmatpush1.bf16.msra.mxu0 0
      %4015 = vmatprep.subr.bf16.mxu0 0
      %4016 = vmatpush1.bf16.msra.mxu0 0
      %4017 = vmatprep.subr.bf16.mxu0 0
      %4018 = vmatpush1.bf16.msra.mxu0 0
      %4019 = vmatprep.subr.bf16.mxu0 %v3931
      %4020 = vmatpush1.bf16.msra.mxu0 %v3930
      %4021 = vmatprep.subr.bf16.mxu0 0
      %4022 = vmatpush2.bf16.msra.mxu0 0
      %4023 = vmatprep.subr.bf16.mxu0 0
      %4024 = vmatpush2.bf16.msra.mxu0 0
      %4025 = vmatprep.subr.bf16.mxu0 0
      %4026 = vmatpush2.bf16.msra.mxu0 0
      %4027 = vmatprep.subr.bf16.mxu0 0
      %4028 = vmatpush2.bf16.msra.mxu0 0
      %4029 = vmatprep.subr.bf16.mxu0 0
      %4030 = vmatpush2.bf16.msra.mxu0 0
      %4031 = vmatprep.subr.bf16.mxu0 0
      %4032 = vmatpush2.bf16.msra.mxu0 0
      %4033 = vmatprep.subr.bf16.mxu0 0
      %4034 = vmatpush2.bf16.msra.mxu0 0
      %4035 = vmatprep.subr.bf16.mxu0 0
      %4036 = vmatpush2.bf16.msra.mxu0 0
      %4037 = vmatprep.mubr.bf16.mxu0 0
      %4038 = vmatmul.mubr.bf16.gmra.mxu0 %v3947
      %v4039 = vpop.f32.mrf.mxu0
      %v4040 = vadd.f32 0.0, %v4039
      %v4041 = vpop.f32.mrf.mxu0
      %v4042 = vadd.f32 0.0, %v4041
      %v4043 = vpop.f32.mrf.mxu0
      %v4044 = vadd.f32 0.0, %v4043
      %v4045 = vpop.f32.mrf.mxu0
      %v4046 = vadd.f32 0.0, %v4045
      %4047 = vmatprep.mubr.bf16.mxu0 0
      %4048 = vmatmul.mubr.bf16.gmra.mxu0 %v3950
      %v4049 = vpop.f32.mrf.mxu0
      %v4050 = vadd.f32 0.0, %v4049
      %v4051 = vpop.f32.mrf.mxu0
      %v4052 = vadd.f32 0.0, %v4051
      %v4053 = vpop.f32.mrf.mxu0
      %v4054 = vadd.f32 0.0, %v4053
      %v4055 = vpop.f32.mrf.mxu0
      %v4056 = vadd.f32 0.0, %v4055
      %4057 = vdwg.mxu0
      %4058 = vmatprep.subr.bf16.mxu0 0
      %4059 = vmatpush1.bf16.msra.mxu0 0
      %4060 = vmatprep.subr.bf16.mxu0 0
      %4061 = vmatpush1.bf16.msra.mxu0 0
      %4062 = vmatprep.subr.bf16.mxu0 0
      %4063 = vmatpush1.bf16.msra.mxu0 0
      %4064 = vmatprep.subr.bf16.mxu0 0
      %4065 = vmatpush1.bf16.msra.mxu0 0
      %4066 = vmatprep.subr.bf16.mxu0 0
      %4067 = vmatpush1.bf16.msra.mxu0 0
      %4068 = vmatprep.subr.bf16.mxu0 0
      %4069 = vmatpush1.bf16.msra.mxu0 0
      %4070 = vmatprep.subr.bf16.mxu0 0
      %4071 = vmatpush1.bf16.msra.mxu0 0
      %4072 = vmatprep.subr.bf16.mxu0 %v3933
      %4073 = vmatpush1.bf16.msra.mxu0 %v3932
      %4074 = vmatprep.subr.bf16.mxu0 0
      %4075 = vmatpush2.bf16.msra.mxu0 0
      %4076 = vmatprep.subr.bf16.mxu0 0
      %4077 = vmatpush2.bf16.msra.mxu0 0
      %4078 = vmatprep.subr.bf16.mxu0 0
      %4079 = vmatpush2.bf16.msra.mxu0 0
      %4080 = vmatprep.subr.bf16.mxu0 0
      %4081 = vmatpush2.bf16.msra.mxu0 0
      %4082 = vmatprep.subr.bf16.mxu0 0
      %4083 = vmatpush2.bf16.msra.mxu0 0
      %4084 = vmatprep.subr.bf16.mxu0 0
      %4085 = vmatpush2.bf16.msra.mxu0 0
      %4086 = vmatprep.subr.bf16.mxu0 0
      %4087 = vmatpush2.bf16.msra.mxu0 0
      %4088 = vmatprep.subr.bf16.mxu0 0
      %4089 = vmatpush2.bf16.msra.mxu0 0
      %4090 = vmatprep.mubr.bf16.mxu0 0
      %4091 = vmatmul.mubr.bf16.gmra.mxu0 %v3947
      %v4092 = vpop.f32.mrf.mxu0
      %v4093 = vadd.f32 0.0, %v4092
      %v4094 = vpop.f32.mrf.mxu0
      %v4095 = vadd.f32 0.0, %v4094
      %v4096 = vpop.f32.mrf.mxu0
      %v4097 = vadd.f32 0.0, %v4096
      %v4098 = vpop.f32.mrf.mxu0
      %v4099 = vadd.f32 0.0, %v4098
      %4100 = vmatprep.mubr.bf16.mxu0 0
      %4101 = vmatmul.mubr.bf16.gmra.mxu0 %v3950
      %v4102 = vpop.f32.mrf.mxu0
      %v4103 = vadd.f32 0.0, %v4102
      %v4104 = vpop.f32.mrf.mxu0
      %v4105 = vadd.f32 0.0, %v4104
      %v4106 = vpop.f32.mrf.mxu0
      %v4107 = vadd.f32 0.0, %v4106
      %v4108 = vpop.f32.mrf.mxu0
      %v4109 = vadd.f32 0.0, %v4108
      %4110 = vdwg.mxu0
      %4111 = vmatprep.subr.bf16.mxu0 0
      %4112 = vmatpush1.bf16.msra.mxu0 0
      %4113 = vmatprep.subr.bf16.mxu0 0
      %4114 = vmatpush1.bf16.msra.mxu0 0
      %4115 = vmatprep.subr.bf16.mxu0 0
      %4116 = vmatpush1.bf16.msra.mxu0 0
      %4117 = vmatprep.subr.bf16.mxu0 0
      %4118 = vmatpush1.bf16.msra.mxu0 0
      %4119 = vmatprep.subr.bf16.mxu0 0
      %4120 = vmatpush1.bf16.msra.mxu0 0
      %4121 = vmatprep.subr.bf16.mxu0 0
      %4122 = vmatpush1.bf16.msra.mxu0 0
      %4123 = vmatprep.subr.bf16.mxu0 0
      %4124 = vmatpush1.bf16.msra.mxu0 0
      %4125 = vmatprep.subr.bf16.mxu0 %v3935
      %4126 = vmatpush1.bf16.msra.mxu0 %v3934
      %4127 = vmatprep.subr.bf16.mxu0 0
      %4128 = vmatpush2.bf16.msra.mxu0 0
      %4129 = vmatprep.subr.bf16.mxu0 0
      %4130 = vmatpush2.bf16.msra.mxu0 0
      %4131 = vmatprep.subr.bf16.mxu0 0
      %4132 = vmatpush2.bf16.msra.mxu0 0
      %4133 = vmatprep.subr.bf16.mxu0 0
      %4134 = vmatpush2.bf16.msra.mxu0 0
      %4135 = vmatprep.subr.bf16.mxu0 0
      %4136 = vmatpush2.bf16.msra.mxu0 0
      %4137 = vmatprep.subr.bf16.mxu0 0
      %4138 = vmatpush2.bf16.msra.mxu0 0
      %4139 = vmatprep.subr.bf16.mxu0 0
      %4140 = vmatpush2.bf16.msra.mxu0 0
      %4141 = vmatprep.subr.bf16.mxu0 0
      %4142 = vmatpush2.bf16.msra.mxu0 0
      %4143 = vmatprep.mubr.bf16.mxu0 0
      %4144 = vmatmul.mubr.bf16.gmra.mxu0 %v3947
      %v4145 = vpop.f32.mrf.mxu0
      %v4146 = vadd.f32 0.0, %v4145
      %v4147 = vpop.f32.mrf.mxu0
      %v4148 = vadd.f32 0.0, %v4147
      %v4149 = vpop.f32.mrf.mxu0
      %v4150 = vadd.f32 0.0, %v4149
      %v4151 = vpop.f32.mrf.mxu0
      %v4152 = vadd.f32 0.0, %v4151
      %4153 = vmatprep.mubr.bf16.mxu0 0
      %4154 = vmatmul.mubr.bf16.gmra.mxu0 %v3950
      %v4155 = vpop.f32.mrf.mxu0
      %v4156 = vadd.f32 0.0, %v4155
      %v4157 = vpop.f32.mrf.mxu0
      %v4158 = vadd.f32 0.0, %v4157
      %v4159 = vpop.f32.mrf.mxu0
      %v4160 = vadd.f32 0.0, %v4159
      %v4161 = vpop.f32.mrf.mxu0
      %v4162 = vadd.f32 0.0, %v4161
      %4163 = vdwg.mxu0
      %v4164 = vadd.f32 %v3606, %v3987
      %v4165 = vadd.f32 %v3607, %v3989
      %v4166 = vadd.f32 %v3608, %v4040
      %v4167 = vadd.f32 %v3609, %v4042
      %v4168 = vadd.f32 %v3610, %v4093
      %v4169 = vadd.f32 %v3611, %v4095
      %v4170 = vadd.f32 %v3612, %v4146
      %v4171 = vadd.f32 %v3613, %v4148
      %v4172 = vadd.f32 %v3614, %v3991
      %v4173 = vadd.f32 %v3615, %v3993
      %v4174 = vadd.f32 %v3616, %v4044
      %v4175 = vadd.f32 %v3617, %v4046
      %v4176 = vadd.f32 %v3618, %v4097
      %v4177 = vadd.f32 %v3619, %v4099
      %v4178 = vadd.f32 %v3620, %v4150
      %v4179 = vadd.f32 %v3621, %v4152
      %v4180 = vadd.f32 %v3622, %v3997
      %v4181 = vadd.f32 %v3623, %v3999
      %v4182 = vadd.f32 %v3624, %v4050
      %v4183 = vadd.f32 %v3625, %v4052
      %v4184 = vadd.f32 %v3626, %v4103
      %v4185 = vadd.f32 %v3627, %v4105
      %v4186 = vadd.f32 %v3628, %v4156
      %v4187 = vadd.f32 %v3629, %v4158
      %v4188 = vadd.f32 %v3630, %v4001
      %v4189 = vadd.f32 %v3631, %v4003
      %v4190 = vadd.f32 %v3632, %v4054
      %v4191 = vadd.f32 %v3633, %v4056
      %v4192 = vadd.f32 %v3634, %v4107
      %v4193 = vadd.f32 %v3635, %v4109
      %v4194 = vadd.f32 %v3636, %v4160
      %v4195 = vadd.f32 %v3637, %v4162
      %s4196 = scalar_lea.vmem %s326, 896
      %v4197 = vld [vmem:[%s4196] sm:$0xff]
      %v4198 = vld [vmem:[%s4196 + $0x8] sm:$0xff]
      %v4199 = vld [vmem:[%s4196 + $0x10] sm:$0xff]
      %v4200 = vld [vmem:[%s4196 + $0x18] sm:$0xff]
      %v4201 = vld [vmem:[%s4196 + $0x20] sm:$0xff]
      %v4202 = vld [vmem:[%s4196 + $0x28] sm:$0xff]
      %v4203 = vld [vmem:[%s4196 + $0x30] sm:$0xff]
      %v4204 = vld [vmem:[%s4196 + $0x38] sm:$0xff]
      %v4205 = vld [vmem:[%s4196 + $0x40] sm:$0xff]
      %v4206 = vld [vmem:[%s4196 + $0x48] sm:$0xff]
      %v4207 = vld [vmem:[%s4196 + $0x50] sm:$0xff]
      %v4208 = vld [vmem:[%s4196 + $0x58] sm:$0xff]
      %v4209 = vld [vmem:[%s4196 + $0x60] sm:$0xff]
      %v4210 = vld [vmem:[%s4196 + $0x68] sm:$0xff]
      %v4211 = vld [vmem:[%s4196 + $0x70] sm:$0xff]
      %v4212 = vld [vmem:[%s4196 + $0x78] sm:$0xff]
      %v4229 = vunpack.c.l.b16 %v4197
      %v4230 = vunpack.c.h.b16 %v4197
      %v4231 = vunpack.c.l.b16 %v4198
      %v4232 = vunpack.c.h.b16 %v4198
      %v4233 = vunpack.c.l.b16 %v4199
      %v4234 = vunpack.c.h.b16 %v4199
      %v4235 = vunpack.c.l.b16 %v4200
      %v4236 = vunpack.c.h.b16 %v4200
      %v4237 = vunpack.c.l.b16 %v4201
      %v4238 = vunpack.c.h.b16 %v4201
      %v4239 = vunpack.c.l.b16 %v4202
      %v4240 = vunpack.c.h.b16 %v4202
      %v4241 = vunpack.c.l.b16 %v4203
      %v4242 = vunpack.c.h.b16 %v4203
      %v4243 = vunpack.c.l.b16 %v4204
      %v4244 = vunpack.c.h.b16 %v4204
      %v4245 = vunpack.c.l.b16 %v4205
      %v4246 = vunpack.c.h.b16 %v4205
      %v4247 = vunpack.c.l.b16 %v4206
      %v4248 = vunpack.c.h.b16 %v4206
      %v4249 = vunpack.c.l.b16 %v4207
      %v4250 = vunpack.c.h.b16 %v4207
      %v4251 = vunpack.c.l.b16 %v4208
      %v4252 = vunpack.c.h.b16 %v4208
      %v4253 = vunpack.c.l.b16 %v4209
      %v4254 = vunpack.c.h.b16 %v4209
      %v4255 = vunpack.c.l.b16 %v4210
      %v4256 = vunpack.c.h.b16 %v4210
      %v4257 = vunpack.c.l.b16 %v4211
      %v4258 = vunpack.c.h.b16 %v4211
      %v4259 = vunpack.c.l.b16 %v4212
      %v4260 = vunpack.c.h.b16 %v4212
      %v4261 = vpack.c.b16 %v4237, %v4229
      %v4262 = vpack.c.b16 %v4238, %v4230
      %v4263 = vpack.c.b16 %v4239, %v4231
      %v4264 = vpack.c.b16 %v4240, %v4232
      %v4265 = vpack.c.b16 %v4241, %v4233
      %v4266 = vpack.c.b16 %v4242, %v4234
      %v4267 = vpack.c.b16 %v4243, %v4235
      %v4268 = vpack.c.b16 %v4244, %v4236
      %v4269 = vpack.c.b16 %v4253, %v4245
      %v4270 = vpack.c.b16 %v4254, %v4246
      %v4271 = vpack.c.b16 %v4255, %v4247
      %v4272 = vpack.c.b16 %v4256, %v4248
      %v4273 = vpack.c.b16 %v4257, %v4249
      %v4274 = vpack.c.b16 %v4258, %v4250
      %v4275 = vpack.c.b16 %v4259, %v4251
      %v4276 = vpack.c.b16 %v4260, %v4252
      %4293 = vmatprep.subr.bf16.mxu0 0
      %4294 = vmatpush1.bf16.msra.mxu0 0
      %4295 = vmatprep.subr.bf16.mxu0 0
      %4296 = vmatpush1.bf16.msra.mxu0 0
      %4297 = vmatprep.subr.bf16.mxu0 0
      %4298 = vmatpush1.bf16.msra.mxu0 0
      %4299 = vmatprep.subr.bf16.mxu0 0
      %4300 = vmatpush1.bf16.msra.mxu0 0
      %4301 = vmatprep.subr.bf16.mxu0 0
      %4302 = vmatpush1.bf16.msra.mxu0 0
      %4303 = vmatprep.subr.bf16.mxu0 0
      %4304 = vmatpush1.bf16.msra.mxu0 0
      %4305 = vmatprep.subr.bf16.mxu0 %v4270
      %4306 = vmatpush1.bf16.msra.mxu0 %v4269
      %4307 = vmatprep.subr.bf16.mxu0 %v4262
      %4308 = vmatpush1.bf16.msra.mxu0 %v4261
      %4309 = vmatprep.subr.bf16.mxu0 0
      %4310 = vmatpush2.bf16.msra.mxu0 0
      %4311 = vmatprep.subr.bf16.mxu0 0
      %4312 = vmatpush2.bf16.msra.mxu0 0
      %4313 = vmatprep.subr.bf16.mxu0 0
      %4314 = vmatpush2.bf16.msra.mxu0 0
      %4315 = vmatprep.subr.bf16.mxu0 0
      %4316 = vmatpush2.bf16.msra.mxu0 0
      %4317 = vmatprep.subr.bf16.mxu0 0
      %4318 = vmatpush2.bf16.msra.mxu0 0
      %4319 = vmatprep.subr.bf16.mxu0 0
      %4320 = vmatpush2.bf16.msra.mxu0 0
      %4321 = vmatprep.subr.bf16.mxu0 0
      %4322 = vmatpush2.bf16.msra.mxu0 0
      %4323 = vmatprep.subr.bf16.mxu0 0
      %4324 = vmatpush2.bf16.msra.mxu0 0
      %4325 = vmatprep.mubr.bf16.mxu0 0
      %4326 = vmatmul.mubr.bf16.gmra.mxu0 %v449
      %v4327 = vpop.f32.mrf.mxu0
      %v4328 = vadd.f32 %v355, %v4327
      %v4329 = vpop.f32.mrf.mxu0
      %v4330 = vadd.f32 %v355, %v4329
      %v4331 = vpop.f32.mrf.mxu0
      %v4332 = vadd.f32 %v360, %v4331
      %v4333 = vpop.f32.mrf.mxu0
      %v4334 = vadd.f32 %v360, %v4333
      %4335 = vdwg.mxu0
      %4336 = vmatprep.subr.bf16.mxu0 0
      %4337 = vmatpush1.bf16.msra.mxu0 0
      %4338 = vmatprep.subr.bf16.mxu0 0
      %4339 = vmatpush1.bf16.msra.mxu0 0
      %4340 = vmatprep.subr.bf16.mxu0 0
      %4341 = vmatpush1.bf16.msra.mxu0 0
      %4342 = vmatprep.subr.bf16.mxu0 0
      %4343 = vmatpush1.bf16.msra.mxu0 0
      %4344 = vmatprep.subr.bf16.mxu0 0
      %4345 = vmatpush1.bf16.msra.mxu0 0
      %4346 = vmatprep.subr.bf16.mxu0 0
      %4347 = vmatpush1.bf16.msra.mxu0 0
      %4348 = vmatprep.subr.bf16.mxu0 %v4272
      %4349 = vmatpush1.bf16.msra.mxu0 %v4271
      %4350 = vmatprep.subr.bf16.mxu0 %v4264
      %4351 = vmatpush1.bf16.msra.mxu0 %v4263
      %4352 = vmatprep.subr.bf16.mxu0 0
      %4353 = vmatpush2.bf16.msra.mxu0 0
      %4354 = vmatprep.subr.bf16.mxu0 0
      %4355 = vmatpush2.bf16.msra.mxu0 0
      %4356 = vmatprep.subr.bf16.mxu0 0
      %4357 = vmatpush2.bf16.msra.mxu0 0
      %4358 = vmatprep.subr.bf16.mxu0 0
      %4359 = vmatpush2.bf16.msra.mxu0 0
      %4360 = vmatprep.subr.bf16.mxu0 0
      %4361 = vmatpush2.bf16.msra.mxu0 0
      %4362 = vmatprep.subr.bf16.mxu0 0
      %4363 = vmatpush2.bf16.msra.mxu0 0
      %4364 = vmatprep.subr.bf16.mxu0 0
      %4365 = vmatpush2.bf16.msra.mxu0 0
      %4366 = vmatprep.subr.bf16.mxu0 0
      %4367 = vmatpush2.bf16.msra.mxu0 0
      %4368 = vmatprep.mubr.bf16.mxu0 0
      %4369 = vmatmul.mubr.bf16.gmra.mxu0 %v449
      %v4370 = vpop.f32.mrf.mxu0
      %v4371 = vadd.f32 %v355, %v4370
      %v4372 = vpop.f32.mrf.mxu0
      %v4373 = vadd.f32 %v355, %v4372
      %v4374 = vpop.f32.mrf.mxu0
      %v4375 = vadd.f32 %v360, %v4374
      %v4376 = vpop.f32.mrf.mxu0
      %v4377 = vadd.f32 %v360, %v4376
      %4378 = vdwg.mxu0
      %4379 = vmatprep.subr.bf16.mxu0 0
      %4380 = vmatpush1.bf16.msra.mxu0 0
      %4381 = vmatprep.subr.bf16.mxu0 0
      %4382 = vmatpush1.bf16.msra.mxu0 0
      %4383 = vmatprep.subr.bf16.mxu0 0
      %4384 = vmatpush1.bf16.msra.mxu0 0
      %4385 = vmatprep.subr.bf16.mxu0 0
      %4386 = vmatpush1.bf16.msra.mxu0 0
      %4387 = vmatprep.subr.bf16.mxu0 0
      %4388 = vmatpush1.bf16.msra.mxu0 0
      %4389 = vmatprep.subr.bf16.mxu0 0
      %4390 = vmatpush1.bf16.msra.mxu0 0
      %4391 = vmatprep.subr.bf16.mxu0 %v4274
      %4392 = vmatpush1.bf16.msra.mxu0 %v4273
      %4393 = vmatprep.subr.bf16.mxu0 %v4266
      %4394 = vmatpush1.bf16.msra.mxu0 %v4265
      %4395 = vmatprep.subr.bf16.mxu0 0
      %4396 = vmatpush2.bf16.msra.mxu0 0
      %4397 = vmatprep.subr.bf16.mxu0 0
      %4398 = vmatpush2.bf16.msra.mxu0 0
      %4399 = vmatprep.subr.bf16.mxu0 0
      %4400 = vmatpush2.bf16.msra.mxu0 0
      %4401 = vmatprep.subr.bf16.mxu0 0
      %4402 = vmatpush2.bf16.msra.mxu0 0
      %4403 = vmatprep.subr.bf16.mxu0 0
      %4404 = vmatpush2.bf16.msra.mxu0 0
      %4405 = vmatprep.subr.bf16.mxu0 0
      %4406 = vmatpush2.bf16.msra.mxu0 0
      %4407 = vmatprep.subr.bf16.mxu0 0
      %4408 = vmatpush2.bf16.msra.mxu0 0
      %4409 = vmatprep.subr.bf16.mxu0 0
      %4410 = vmatpush2.bf16.msra.mxu0 0
      %4411 = vmatprep.mubr.bf16.mxu0 0
      %4412 = vmatmul.mubr.bf16.gmra.mxu0 %v449
      %v4413 = vpop.f32.mrf.mxu0
      %v4414 = vadd.f32 %v355, %v4413
      %v4415 = vpop.f32.mrf.mxu0
      %v4416 = vadd.f32 %v355, %v4415
      %v4417 = vpop.f32.mrf.mxu0
      %v4418 = vadd.f32 %v360, %v4417
      %v4419 = vpop.f32.mrf.mxu0
      %v4420 = vadd.f32 %v360, %v4419
      %4421 = vdwg.mxu0
      %4422 = vmatprep.subr.bf16.mxu0 0
      %4423 = vmatpush1.bf16.msra.mxu0 0
      %4424 = vmatprep.subr.bf16.mxu0 0
      %4425 = vmatpush1.bf16.msra.mxu0 0
      %4426 = vmatprep.subr.bf16.mxu0 0
      %4427 = vmatpush1.bf16.msra.mxu0 0
      %4428 = vmatprep.subr.bf16.mxu0 0
      %4429 = vmatpush1.bf16.msra.mxu0 0
      %4430 = vmatprep.subr.bf16.mxu0 0
      %4431 = vmatpush1.bf16.msra.mxu0 0
      %4432 = vmatprep.subr.bf16.mxu0 0
      %4433 = vmatpush1.bf16.msra.mxu0 0
      %4434 = vmatprep.subr.bf16.mxu0 %v4276
      %4435 = vmatpush1.bf16.msra.mxu0 %v4275
      %4436 = vmatprep.subr.bf16.mxu0 %v4268
      %4437 = vmatpush1.bf16.msra.mxu0 %v4267
      %4438 = vmatprep.subr.bf16.mxu0 0
      %4439 = vmatpush2.bf16.msra.mxu0 0
      %4440 = vmatprep.subr.bf16.mxu0 0
      %4441 = vmatpush2.bf16.msra.mxu0 0
      %4442 = vmatprep.subr.bf16.mxu0 0
      %4443 = vmatpush2.bf16.msra.mxu0 0
      %4444 = vmatprep.subr.bf16.mxu0 0
      %4445 = vmatpush2.bf16.msra.mxu0 0
      %4446 = vmatprep.subr.bf16.mxu0 0
      %4447 = vmatpush2.bf16.msra.mxu0 0
      %4448 = vmatprep.subr.bf16.mxu0 0
      %4449 = vmatpush2.bf16.msra.mxu0 0
      %4450 = vmatprep.subr.bf16.mxu0 0
      %4451 = vmatpush2.bf16.msra.mxu0 0
      %4452 = vmatprep.subr.bf16.mxu0 0
      %4453 = vmatpush2.bf16.msra.mxu0 0
      %4454 = vmatprep.mubr.bf16.mxu0 0
      %4455 = vmatmul.mubr.bf16.gmra.mxu0 %v449
      %v4456 = vpop.f32.mrf.mxu0
      %v4457 = vadd.f32 %v355, %v4456
      %v4458 = vpop.f32.mrf.mxu0
      %v4459 = vadd.f32 %v355, %v4458
      %v4460 = vpop.f32.mrf.mxu0
      %v4461 = vadd.f32 %v360, %v4460
      %v4462 = vpop.f32.mrf.mxu0
      %v4463 = vadd.f32 %v360, %v4462
      %4464 = vdwg.mxu0
      %v4465 = vtanh.pop %v4328
      %v4466 = vtanh.pop %v4330
      %v4467 = vtanh.pop %v4371
      %v4468 = vtanh.pop %v4373
      %v4469 = vtanh.pop %v4414
      %v4470 = vtanh.pop %v4416
      %v4471 = vtanh.pop %v4457
      %v4472 = vtanh.pop %v4459
      %v4473 = vtanh.pop %v4332
      %v4474 = vtanh.pop %v4334
      %v4475 = vtanh.pop %v4375
      %v4476 = vtanh.pop %v4377
      %v4477 = vtanh.pop %v4418
      %v4478 = vtanh.pop %v4420
      %v4479 = vtanh.pop %v4461
      %v4480 = vtanh.pop %v4463
      %s4481 = scalar_lea.vmem %s3, 112
      %v4482 = vld [vmem:[%s4481] sm:$0xf]
      %v4483 = vld [vmem:[%s4481 + $0x4] sm:$0xf]
      %v4484 = vld [vmem:[%s4481 + $0x8] sm:$0xf]
      %v4485 = vld [vmem:[%s4481 + $0xc] sm:$0xf]
      %v4486 = vpack.c.bf16 %v4473, %v4465
      %v4487 = vpack.c.bf16 %v4474, %v4466
      %v4488 = vpack.c.bf16 %v4475, %v4467
      %v4489 = vpack.c.bf16 %v4476, %v4468
      %v4490 = vpack.c.bf16 %v4477, %v4469
      %v4491 = vpack.c.bf16 %v4478, %v4470
      %v4492 = vpack.c.bf16 %v4479, %v4471
      %v4493 = vpack.c.bf16 %v4480, %v4472
      %v4498 = vunpack.c.l.b16 %v4482
      %v4499 = vunpack.c.l.b16 %v4483
      %v4500 = vunpack.c.l.b16 %v4484
      %v4501 = vunpack.c.l.b16 %v4485
      %v4502 = vpack.c.b16 %v4499, %v4498
      %v4503 = vpack.c.b16 %v4501, %v4500
      %v4505 = vsel %vm959, %v4502, 0
      %v4508 = vsel %vm959, %v4503, 0
      %4510 = vmatprep.subr.bf16.mxu0 0
      %4511 = vmatpush1.bf16.msra.mxu0 0
      %4512 = vmatprep.subr.bf16.mxu0 0
      %4513 = vmatpush1.bf16.msra.mxu0 0
      %4514 = vmatprep.subr.bf16.mxu0 0
      %4515 = vmatpush1.bf16.msra.mxu0 0
      %4516 = vmatprep.subr.bf16.mxu0 0
      %4517 = vmatpush1.bf16.msra.mxu0 0
      %4518 = vmatprep.subr.bf16.mxu0 0
      %4519 = vmatpush1.bf16.msra.mxu0 0
      %4520 = vmatprep.subr.bf16.mxu0 0
      %4521 = vmatpush1.bf16.msra.mxu0 0
      %4522 = vmatprep.subr.bf16.mxu0 0
      %4523 = vmatpush1.bf16.msra.mxu0 0
      %4524 = vmatprep.subr.bf16.mxu0 %v4487
      %4525 = vmatpush1.bf16.msra.mxu0 %v4486
      %4526 = vmatprep.subr.bf16.mxu0 0
      %4527 = vmatpush2.bf16.msra.mxu0 0
      %4528 = vmatprep.subr.bf16.mxu0 0
      %4529 = vmatpush2.bf16.msra.mxu0 0
      %4530 = vmatprep.subr.bf16.mxu0 0
      %4531 = vmatpush2.bf16.msra.mxu0 0
      %4532 = vmatprep.subr.bf16.mxu0 0
      %4533 = vmatpush2.bf16.msra.mxu0 0
      %4534 = vmatprep.subr.bf16.mxu0 0
      %4535 = vmatpush2.bf16.msra.mxu0 0
      %4536 = vmatprep.subr.bf16.mxu0 0
      %4537 = vmatpush2.bf16.msra.mxu0 0
      %4538 = vmatprep.subr.bf16.mxu0 0
      %4539 = vmatpush2.bf16.msra.mxu0 0
      %4540 = vmatprep.subr.bf16.mxu0 0
      %4541 = vmatpush2.bf16.msra.mxu0 0
      %4542 = vmatprep.mubr.bf16.mxu0 0
      %4543 = vmatmul.mubr.bf16.gmra.mxu0 %v4505
      %v4544 = vpop.f32.mrf.mxu0
      %v4545 = vadd.f32 0.0, %v4544
      %v4546 = vpop.f32.mrf.mxu0
      %v4547 = vadd.f32 0.0, %v4546
      %v4548 = vpop.f32.mrf.mxu0
      %v4549 = vadd.f32 0.0, %v4548
      %v4550 = vpop.f32.mrf.mxu0
      %v4551 = vadd.f32 0.0, %v4550
      %4552 = vmatprep.mubr.bf16.mxu0 0
      %4553 = vmatmul.mubr.bf16.gmra.mxu0 %v4508
      %v4554 = vpop.f32.mrf.mxu0
      %v4555 = vadd.f32 0.0, %v4554
      %v4556 = vpop.f32.mrf.mxu0
      %v4557 = vadd.f32 0.0, %v4556
      %v4558 = vpop.f32.mrf.mxu0
      %v4559 = vadd.f32 0.0, %v4558
      %v4560 = vpop.f32.mrf.mxu0
      %v4561 = vadd.f32 0.0, %v4560
      %4562 = vdwg.mxu0
      %4563 = vmatprep.subr.bf16.mxu0 0
      %4564 = vmatpush1.bf16.msra.mxu0 0
      %4565 = vmatprep.subr.bf16.mxu0 0
      %4566 = vmatpush1.bf16.msra.mxu0 0
      %4567 = vmatprep.subr.bf16.mxu0 0
      %4568 = vmatpush1.bf16.msra.mxu0 0
      %4569 = vmatprep.subr.bf16.mxu0 0
      %4570 = vmatpush1.bf16.msra.mxu0 0
      %4571 = vmatprep.subr.bf16.mxu0 0
      %4572 = vmatpush1.bf16.msra.mxu0 0
      %4573 = vmatprep.subr.bf16.mxu0 0
      %4574 = vmatpush1.bf16.msra.mxu0 0
      %4575 = vmatprep.subr.bf16.mxu0 0
      %4576 = vmatpush1.bf16.msra.mxu0 0
      %4577 = vmatprep.subr.bf16.mxu0 %v4489
      %4578 = vmatpush1.bf16.msra.mxu0 %v4488
      %4579 = vmatprep.subr.bf16.mxu0 0
      %4580 = vmatpush2.bf16.msra.mxu0 0
      %4581 = vmatprep.subr.bf16.mxu0 0
      %4582 = vmatpush2.bf16.msra.mxu0 0
      %4583 = vmatprep.subr.bf16.mxu0 0
      %4584 = vmatpush2.bf16.msra.mxu0 0
      %4585 = vmatprep.subr.bf16.mxu0 0
      %4586 = vmatpush2.bf16.msra.mxu0 0
      %4587 = vmatprep.subr.bf16.mxu0 0
      %4588 = vmatpush2.bf16.msra.mxu0 0
      %4589 = vmatprep.subr.bf16.mxu0 0
      %4590 = vmatpush2.bf16.msra.mxu0 0
      %4591 = vmatprep.subr.bf16.mxu0 0
      %4592 = vmatpush2.bf16.msra.mxu0 0
      %4593 = vmatprep.subr.bf16.mxu0 0
      %4594 = vmatpush2.bf16.msra.mxu0 0
      %4595 = vmatprep.mubr.bf16.mxu0 0
      %4596 = vmatmul.mubr.bf16.gmra.mxu0 %v4505
      %v4597 = vpop.f32.mrf.mxu0
      %v4598 = vadd.f32 0.0, %v4597
      %v4599 = vpop.f32.mrf.mxu0
      %v4600 = vadd.f32 0.0, %v4599
      %v4601 = vpop.f32.mrf.mxu0
      %v4602 = vadd.f32 0.0, %v4601
      %v4603 = vpop.f32.mrf.mxu0
      %v4604 = vadd.f32 0.0, %v4603
      %4605 = vmatprep.mubr.bf16.mxu0 0
      %4606 = vmatmul.mubr.bf16.gmra.mxu0 %v4508
      %v4607 = vpop.f32.mrf.mxu0
      %v4608 = vadd.f32 0.0, %v4607
      %v4609 = vpop.f32.mrf.mxu0
      %v4610 = vadd.f32 0.0, %v4609
      %v4611 = vpop.f32.mrf.mxu0
      %v4612 = vadd.f32 0.0, %v4611
      %v4613 = vpop.f32.mrf.mxu0
      %v4614 = vadd.f32 0.0, %v4613
      %4615 = vdwg.mxu0
      %4616 = vmatprep.subr.bf16.mxu0 0
      %4617 = vmatpush1.bf16.msra.mxu0 0
      %4618 = vmatprep.subr.bf16.mxu0 0
      %4619 = vmatpush1.bf16.msra.mxu0 0
      %4620 = vmatprep.subr.bf16.mxu0 0
      %4621 = vmatpush1.bf16.msra.mxu0 0
      %4622 = vmatprep.subr.bf16.mxu0 0
      %4623 = vmatpush1.bf16.msra.mxu0 0
      %4624 = vmatprep.subr.bf16.mxu0 0
      %4625 = vmatpush1.bf16.msra.mxu0 0
      %4626 = vmatprep.subr.bf16.mxu0 0
      %4627 = vmatpush1.bf16.msra.mxu0 0
      %4628 = vmatprep.subr.bf16.mxu0 0
      %4629 = vmatpush1.bf16.msra.mxu0 0
      %4630 = vmatprep.subr.bf16.mxu0 %v4491
      %4631 = vmatpush1.bf16.msra.mxu0 %v4490
      %4632 = vmatprep.subr.bf16.mxu0 0
      %4633 = vmatpush2.bf16.msra.mxu0 0
      %4634 = vmatprep.subr.bf16.mxu0 0
      %4635 = vmatpush2.bf16.msra.mxu0 0
      %4636 = vmatprep.subr.bf16.mxu0 0
      %4637 = vmatpush2.bf16.msra.mxu0 0
      %4638 = vmatprep.subr.bf16.mxu0 0
      %4639 = vmatpush2.bf16.msra.mxu0 0
      %4640 = vmatprep.subr.bf16.mxu0 0
      %4641 = vmatpush2.bf16.msra.mxu0 0
      %4642 = vmatprep.subr.bf16.mxu0 0
      %4643 = vmatpush2.bf16.msra.mxu0 0
      %4644 = vmatprep.subr.bf16.mxu0 0
      %4645 = vmatpush2.bf16.msra.mxu0 0
      %4646 = vmatprep.subr.bf16.mxu0 0
      %4647 = vmatpush2.bf16.msra.mxu0 0
      %4648 = vmatprep.mubr.bf16.mxu0 0
      %4649 = vmatmul.mubr.bf16.gmra.mxu0 %v4505
      %v4650 = vpop.f32.mrf.mxu0
      %v4651 = vadd.f32 0.0, %v4650
      %v4652 = vpop.f32.mrf.mxu0
      %v4653 = vadd.f32 0.0, %v4652
      %v4654 = vpop.f32.mrf.mxu0
      %v4655 = vadd.f32 0.0, %v4654
      %v4656 = vpop.f32.mrf.mxu0
      %v4657 = vadd.f32 0.0, %v4656
      %4658 = vmatprep.mubr.bf16.mxu0 0
      %4659 = vmatmul.mubr.bf16.gmra.mxu0 %v4508
      %v4660 = vpop.f32.mrf.mxu0
      %v4661 = vadd.f32 0.0, %v4660
      %v4662 = vpop.f32.mrf.mxu0
      %v4663 = vadd.f32 0.0, %v4662
      %v4664 = vpop.f32.mrf.mxu0
      %v4665 = vadd.f32 0.0, %v4664
      %v4666 = vpop.f32.mrf.mxu0
      %v4667 = vadd.f32 0.0, %v4666
      %4668 = vdwg.mxu0
      %4669 = vmatprep.subr.bf16.mxu0 0
      %4670 = vmatpush1.bf16.msra.mxu0 0
      %4671 = vmatprep.subr.bf16.mxu0 0
      %4672 = vmatpush1.bf16.msra.mxu0 0
      %4673 = vmatprep.subr.bf16.mxu0 0
      %4674 = vmatpush1.bf16.msra.mxu0 0
      %4675 = vmatprep.subr.bf16.mxu0 0
      %4676 = vmatpush1.bf16.msra.mxu0 0
      %4677 = vmatprep.subr.bf16.mxu0 0
      %4678 = vmatpush1.bf16.msra.mxu0 0
      %4679 = vmatprep.subr.bf16.mxu0 0
      %4680 = vmatpush1.bf16.msra.mxu0 0
      %4681 = vmatprep.subr.bf16.mxu0 0
      %4682 = vmatpush1.bf16.msra.mxu0 0
      %4683 = vmatprep.subr.bf16.mxu0 %v4493
      %4684 = vmatpush1.bf16.msra.mxu0 %v4492
      %4685 = vmatprep.subr.bf16.mxu0 0
      %4686 = vmatpush2.bf16.msra.mxu0 0
      %4687 = vmatprep.subr.bf16.mxu0 0
      %4688 = vmatpush2.bf16.msra.mxu0 0
      %4689 = vmatprep.subr.bf16.mxu0 0
      %4690 = vmatpush2.bf16.msra.mxu0 0
      %4691 = vmatprep.subr.bf16.mxu0 0
      %4692 = vmatpush2.bf16.msra.mxu0 0
      %4693 = vmatprep.subr.bf16.mxu0 0
      %4694 = vmatpush2.bf16.msra.mxu0 0
      %4695 = vmatprep.subr.bf16.mxu0 0
      %4696 = vmatpush2.bf16.msra.mxu0 0
      %4697 = vmatprep.subr.bf16.mxu0 0
      %4698 = vmatpush2.bf16.msra.mxu0 0
      %4699 = vmatprep.subr.bf16.mxu0 0
      %4700 = vmatpush2.bf16.msra.mxu0 0
      %4701 = vmatprep.mubr.bf16.mxu0 0
      %4702 = vmatmul.mubr.bf16.gmra.mxu0 %v4505
      %v4703 = vpop.f32.mrf.mxu0
      %v4704 = vadd.f32 0.0, %v4703
      %v4705 = vpop.f32.mrf.mxu0
      %v4706 = vadd.f32 0.0, %v4705
      %v4707 = vpop.f32.mrf.mxu0
      %v4708 = vadd.f32 0.0, %v4707
      %v4709 = vpop.f32.mrf.mxu0
      %v4710 = vadd.f32 0.0, %v4709
      %4711 = vmatprep.mubr.bf16.mxu0 0
      %4712 = vmatmul.mubr.bf16.gmra.mxu0 %v4508
      %v4713 = vpop.f32.mrf.mxu0
      %v4714 = vadd.f32 0.0, %v4713
      %v4715 = vpop.f32.mrf.mxu0
      %v4716 = vadd.f32 0.0, %v4715
      %v4717 = vpop.f32.mrf.mxu0
      %v4718 = vadd.f32 0.0, %v4717
      %v4719 = vpop.f32.mrf.mxu0
      %v4720 = vadd.f32 0.0, %v4719
      %4721 = vdwg.mxu0
      %v4722 = vadd.f32 %v4164, %v4545
      %v4723 = vadd.f32 %v4165, %v4547
      %v4724 = vadd.f32 %v4166, %v4598
      %v4725 = vadd.f32 %v4167, %v4600
      %v4726 = vadd.f32 %v4168, %v4651
      %v4727 = vadd.f32 %v4169, %v4653
      %v4728 = vadd.f32 %v4170, %v4704
      %v4729 = vadd.f32 %v4171, %v4706
      %v4730 = vadd.f32 %v4172, %v4549
      %v4731 = vadd.f32 %v4173, %v4551
      %v4732 = vadd.f32 %v4174, %v4602
      %v4733 = vadd.f32 %v4175, %v4604
      %v4734 = vadd.f32 %v4176, %v4655
      %v4735 = vadd.f32 %v4177, %v4657
      %v4736 = vadd.f32 %v4178, %v4708
      %v4737 = vadd.f32 %v4179, %v4710
      %v4738 = vadd.f32 %v4180, %v4555
      %v4739 = vadd.f32 %v4181, %v4557
      %v4740 = vadd.f32 %v4182, %v4608
      %v4741 = vadd.f32 %v4183, %v4610
      %v4742 = vadd.f32 %v4184, %v4661
      %v4743 = vadd.f32 %v4185, %v4663
      %v4744 = vadd.f32 %v4186, %v4714
      %v4745 = vadd.f32 %v4187, %v4716
      %v4746 = vadd.f32 %v4188, %v4559
      %v4747 = vadd.f32 %v4189, %v4561
      %v4748 = vadd.f32 %v4190, %v4612
      %v4749 = vadd.f32 %v4191, %v4614
      %v4750 = vadd.f32 %v4192, %v4665
      %v4751 = vadd.f32 %v4193, %v4667
      %v4752 = vadd.f32 %v4194, %v4718
      %v4753 = vadd.f32 %v4195, %v4720
      %s4754 = scalar_lea.vmem %s326, 1024
      %v4755 = vld [vmem:[%s4754] sm:$0xff]
      %v4756 = vld [vmem:[%s4754 + $0x8] sm:$0xff]
      %v4757 = vld [vmem:[%s4754 + $0x10] sm:$0xff]
      %v4758 = vld [vmem:[%s4754 + $0x18] sm:$0xff]
      %v4759 = vld [vmem:[%s4754 + $0x20] sm:$0xff]
      %v4760 = vld [vmem:[%s4754 + $0x28] sm:$0xff]
      %v4761 = vld [vmem:[%s4754 + $0x30] sm:$0xff]
      %v4762 = vld [vmem:[%s4754 + $0x38] sm:$0xff]
      %v4763 = vld [vmem:[%s4754 + $0x40] sm:$0xff]
      %v4764 = vld [vmem:[%s4754 + $0x48] sm:$0xff]
      %v4765 = vld [vmem:[%s4754 + $0x50] sm:$0xff]
      %v4766 = vld [vmem:[%s4754 + $0x58] sm:$0xff]
      %v4767 = vld [vmem:[%s4754 + $0x60] sm:$0xff]
      %v4768 = vld [vmem:[%s4754 + $0x68] sm:$0xff]
      %v4769 = vld [vmem:[%s4754 + $0x70] sm:$0xff]
      %v4770 = vld [vmem:[%s4754 + $0x78] sm:$0xff]
      %v4787 = vunpack.c.l.b16 %v4755
      %v4788 = vunpack.c.h.b16 %v4755
      %v4789 = vunpack.c.l.b16 %v4756
      %v4790 = vunpack.c.h.b16 %v4756
      %v4791 = vunpack.c.l.b16 %v4757
      %v4792 = vunpack.c.h.b16 %v4757
      %v4793 = vunpack.c.l.b16 %v4758
      %v4794 = vunpack.c.h.b16 %v4758
      %v4795 = vunpack.c.l.b16 %v4759
      %v4796 = vunpack.c.h.b16 %v4759
      %v4797 = vunpack.c.l.b16 %v4760
      %v4798 = vunpack.c.h.b16 %v4760
      %v4799 = vunpack.c.l.b16 %v4761
      %v4800 = vunpack.c.h.b16 %v4761
      %v4801 = vunpack.c.l.b16 %v4762
      %v4802 = vunpack.c.h.b16 %v4762
      %v4803 = vunpack.c.l.b16 %v4763
      %v4804 = vunpack.c.h.b16 %v4763
      %v4805 = vunpack.c.l.b16 %v4764
      %v4806 = vunpack.c.h.b16 %v4764
      %v4807 = vunpack.c.l.b16 %v4765
      %v4808 = vunpack.c.h.b16 %v4765
      %v4809 = vunpack.c.l.b16 %v4766
      %v4810 = vunpack.c.h.b16 %v4766
      %v4811 = vunpack.c.l.b16 %v4767
      %v4812 = vunpack.c.h.b16 %v4767
      %v4813 = vunpack.c.l.b16 %v4768
      %v4814 = vunpack.c.h.b16 %v4768
      %v4815 = vunpack.c.l.b16 %v4769
      %v4816 = vunpack.c.h.b16 %v4769
      %v4817 = vunpack.c.l.b16 %v4770
      %v4818 = vunpack.c.h.b16 %v4770
      %v4819 = vpack.c.b16 %v4795, %v4787
      %v4820 = vpack.c.b16 %v4796, %v4788
      %v4821 = vpack.c.b16 %v4797, %v4789
      %v4822 = vpack.c.b16 %v4798, %v4790
      %v4823 = vpack.c.b16 %v4799, %v4791
      %v4824 = vpack.c.b16 %v4800, %v4792
      %v4825 = vpack.c.b16 %v4801, %v4793
      %v4826 = vpack.c.b16 %v4802, %v4794
      %v4827 = vpack.c.b16 %v4811, %v4803
      %v4828 = vpack.c.b16 %v4812, %v4804
      %v4829 = vpack.c.b16 %v4813, %v4805
      %v4830 = vpack.c.b16 %v4814, %v4806
      %v4831 = vpack.c.b16 %v4815, %v4807
      %v4832 = vpack.c.b16 %v4816, %v4808
      %v4833 = vpack.c.b16 %v4817, %v4809
      %v4834 = vpack.c.b16 %v4818, %v4810
      %4851 = vmatprep.subr.bf16.mxu0 0
      %4852 = vmatpush1.bf16.msra.mxu0 0
      %4853 = vmatprep.subr.bf16.mxu0 0
      %4854 = vmatpush1.bf16.msra.mxu0 0
      %4855 = vmatprep.subr.bf16.mxu0 0
      %4856 = vmatpush1.bf16.msra.mxu0 0
      %4857 = vmatprep.subr.bf16.mxu0 0
      %4858 = vmatpush1.bf16.msra.mxu0 0
      %4859 = vmatprep.subr.bf16.mxu0 0
      %4860 = vmatpush1.bf16.msra.mxu0 0
      %4861 = vmatprep.subr.bf16.mxu0 0
      %4862 = vmatpush1.bf16.msra.mxu0 0
      %4863 = vmatprep.subr.bf16.mxu0 %v4828
      %4864 = vmatpush1.bf16.msra.mxu0 %v4827
      %4865 = vmatprep.subr.bf16.mxu0 %v4820
      %4866 = vmatpush1.bf16.msra.mxu0 %v4819
      %4867 = vmatprep.subr.bf16.mxu0 0
      %4868 = vmatpush2.bf16.msra.mxu0 0
      %4869 = vmatprep.subr.bf16.mxu0 0
      %4870 = vmatpush2.bf16.msra.mxu0 0
      %4871 = vmatprep.subr.bf16.mxu0 0
      %4872 = vmatpush2.bf16.msra.mxu0 0
      %4873 = vmatprep.subr.bf16.mxu0 0
      %4874 = vmatpush2.bf16.msra.mxu0 0
      %4875 = vmatprep.subr.bf16.mxu0 0
      %4876 = vmatpush2.bf16.msra.mxu0 0
      %4877 = vmatprep.subr.bf16.mxu0 0
      %4878 = vmatpush2.bf16.msra.mxu0 0
      %4879 = vmatprep.subr.bf16.mxu0 0
      %4880 = vmatpush2.bf16.msra.mxu0 0
      %4881 = vmatprep.subr.bf16.mxu0 0
      %4882 = vmatpush2.bf16.msra.mxu0 0
      %4883 = vmatprep.mubr.bf16.mxu0 0
      %4884 = vmatmul.mubr.bf16.gmra.mxu0 %v449
      %v4885 = vpop.f32.mrf.mxu0
      %v4886 = vadd.f32 %v355, %v4885
      %v4887 = vpop.f32.mrf.mxu0
      %v4888 = vadd.f32 %v355, %v4887
      %v4889 = vpop.f32.mrf.mxu0
      %v4890 = vadd.f32 %v360, %v4889
      %v4891 = vpop.f32.mrf.mxu0
      %v4892 = vadd.f32 %v360, %v4891
      %4893 = vdwg.mxu0
      %4894 = vmatprep.subr.bf16.mxu0 0
      %4895 = vmatpush1.bf16.msra.mxu0 0
      %4896 = vmatprep.subr.bf16.mxu0 0
      %4897 = vmatpush1.bf16.msra.mxu0 0
      %4898 = vmatprep.subr.bf16.mxu0 0
      %4899 = vmatpush1.bf16.msra.mxu0 0
      %4900 = vmatprep.subr.bf16.mxu0 0
      %4901 = vmatpush1.bf16.msra.mxu0 0
      %4902 = vmatprep.subr.bf16.mxu0 0
      %4903 = vmatpush1.bf16.msra.mxu0 0
      %4904 = vmatprep.subr.bf16.mxu0 0
      %4905 = vmatpush1.bf16.msra.mxu0 0
      %4906 = vmatprep.subr.bf16.mxu0 %v4830
      %4907 = vmatpush1.bf16.msra.mxu0 %v4829
      %4908 = vmatprep.subr.bf16.mxu0 %v4822
      %4909 = vmatpush1.bf16.msra.mxu0 %v4821
      %4910 = vmatprep.subr.bf16.mxu0 0
      %4911 = vmatpush2.bf16.msra.mxu0 0
      %4912 = vmatprep.subr.bf16.mxu0 0
      %4913 = vmatpush2.bf16.msra.mxu0 0
      %4914 = vmatprep.subr.bf16.mxu0 0
      %4915 = vmatpush2.bf16.msra.mxu0 0
      %4916 = vmatprep.subr.bf16.mxu0 0
      %4917 = vmatpush2.bf16.msra.mxu0 0
      %4918 = vmatprep.subr.bf16.mxu0 0
      %4919 = vmatpush2.bf16.msra.mxu0 0
      %4920 = vmatprep.subr.bf16.mxu0 0
      %4921 = vmatpush2.bf16.msra.mxu0 0
      %4922 = vmatprep.subr.bf16.mxu0 0
      %4923 = vmatpush2.bf16.msra.mxu0 0
      %4924 = vmatprep.subr.bf16.mxu0 0
      %4925 = vmatpush2.bf16.msra.mxu0 0
      %4926 = vmatprep.mubr.bf16.mxu0 0
      %4927 = vmatmul.mubr.bf16.gmra.mxu0 %v449
      %v4928 = vpop.f32.mrf.mxu0
      %v4929 = vadd.f32 %v355, %v4928
      %v4930 = vpop.f32.mrf.mxu0
      %v4931 = vadd.f32 %v355, %v4930
      %v4932 = vpop.f32.mrf.mxu0
      %v4933 = vadd.f32 %v360, %v4932
      %v4934 = vpop.f32.mrf.mxu0
      %v4935 = vadd.f32 %v360, %v4934
      %4936 = vdwg.mxu0
      %4937 = vmatprep.subr.bf16.mxu0 0
      %4938 = vmatpush1.bf16.msra.mxu0 0
      %4939 = vmatprep.subr.bf16.mxu0 0
      %4940 = vmatpush1.bf16.msra.mxu0 0
      %4941 = vmatprep.subr.bf16.mxu0 0
      %4942 = vmatpush1.bf16.msra.mxu0 0
      %4943 = vmatprep.subr.bf16.mxu0 0
      %4944 = vmatpush1.bf16.msra.mxu0 0
      %4945 = vmatprep.subr.bf16.mxu0 0
      %4946 = vmatpush1.bf16.msra.mxu0 0
      %4947 = vmatprep.subr.bf16.mxu0 0
      %4948 = vmatpush1.bf16.msra.mxu0 0
      %4949 = vmatprep.subr.bf16.mxu0 %v4832
      %4950 = vmatpush1.bf16.msra.mxu0 %v4831
      %4951 = vmatprep.subr.bf16.mxu0 %v4824
      %4952 = vmatpush1.bf16.msra.mxu0 %v4823
      %4953 = vmatprep.subr.bf16.mxu0 0
      %4954 = vmatpush2.bf16.msra.mxu0 0
      %4955 = vmatprep.subr.bf16.mxu0 0
      %4956 = vmatpush2.bf16.msra.mxu0 0
      %4957 = vmatprep.subr.bf16.mxu0 0
      %4958 = vmatpush2.bf16.msra.mxu0 0
      %4959 = vmatprep.subr.bf16.mxu0 0
      %4960 = vmatpush2.bf16.msra.mxu0 0
      %4961 = vmatprep.subr.bf16.mxu0 0
      %4962 = vmatpush2.bf16.msra.mxu0 0
      %4963 = vmatprep.subr.bf16.mxu0 0
      %4964 = vmatpush2.bf16.msra.mxu0 0
      %4965 = vmatprep.subr.bf16.mxu0 0
      %4966 = vmatpush2.bf16.msra.mxu0 0
      %4967 = vmatprep.subr.bf16.mxu0 0
      %4968 = vmatpush2.bf16.msra.mxu0 0
      %4969 = vmatprep.mubr.bf16.mxu0 0
      %4970 = vmatmul.mubr.bf16.gmra.mxu0 %v449
      %v4971 = vpop.f32.mrf.mxu0
      %v4972 = vadd.f32 %v355, %v4971
      %v4973 = vpop.f32.mrf.mxu0
      %v4974 = vadd.f32 %v355, %v4973
      %v4975 = vpop.f32.mrf.mxu0
      %v4976 = vadd.f32 %v360, %v4975
      %v4977 = vpop.f32.mrf.mxu0
      %v4978 = vadd.f32 %v360, %v4977
      %4979 = vdwg.mxu0
      %4980 = vmatprep.subr.bf16.mxu0 0
      %4981 = vmatpush1.bf16.msra.mxu0 0
      %4982 = vmatprep.subr.bf16.mxu0 0
      %4983 = vmatpush1.bf16.msra.mxu0 0
      %4984 = vmatprep.subr.bf16.mxu0 0
      %4985 = vmatpush1.bf16.msra.mxu0 0
      %4986 = vmatprep.subr.bf16.mxu0 0
      %4987 = vmatpush1.bf16.msra.mxu0 0
      %4988 = vmatprep.subr.bf16.mxu0 0
      %4989 = vmatpush1.bf16.msra.mxu0 0
      %4990 = vmatprep.subr.bf16.mxu0 0
      %4991 = vmatpush1.bf16.msra.mxu0 0
      %4992 = vmatprep.subr.bf16.mxu0 %v4834
      %4993 = vmatpush1.bf16.msra.mxu0 %v4833
      %4994 = vmatprep.subr.bf16.mxu0 %v4826
      %4995 = vmatpush1.bf16.msra.mxu0 %v4825
      %4996 = vmatprep.subr.bf16.mxu0 0
      %4997 = vmatpush2.bf16.msra.mxu0 0
      %4998 = vmatprep.subr.bf16.mxu0 0
      %4999 = vmatpush2.bf16.msra.mxu0 0
      %5000 = vmatprep.subr.bf16.mxu0 0
      %5001 = vmatpush2.bf16.msra.mxu0 0
      %5002 = vmatprep.subr.bf16.mxu0 0
      %5003 = vmatpush2.bf16.msra.mxu0 0
      %5004 = vmatprep.subr.bf16.mxu0 0
      %5005 = vmatpush2.bf16.msra.mxu0 0
      %5006 = vmatprep.subr.bf16.mxu0 0
      %5007 = vmatpush2.bf16.msra.mxu0 0
      %5008 = vmatprep.subr.bf16.mxu0 0
      %5009 = vmatpush2.bf16.msra.mxu0 0
      %5010 = vmatprep.subr.bf16.mxu0 0
      %5011 = vmatpush2.bf16.msra.mxu0 0
      %5012 = vmatprep.mubr.bf16.mxu0 0
      %5013 = vmatmul.mubr.bf16.gmra.mxu0 %v449
      %v5014 = vpop.f32.mrf.mxu0
      %v5015 = vadd.f32 %v355, %v5014
      %v5016 = vpop.f32.mrf.mxu0
      %v5017 = vadd.f32 %v355, %v5016
      %v5018 = vpop.f32.mrf.mxu0
      %v5019 = vadd.f32 %v360, %v5018
      %v5020 = vpop.f32.mrf.mxu0
      %v5021 = vadd.f32 %v360, %v5020
      %5022 = vdwg.mxu0
      %v5023 = vtanh.pop %v4886
      %v5024 = vtanh.pop %v4888
      %v5025 = vtanh.pop %v4929
      %v5026 = vtanh.pop %v4931
      %v5027 = vtanh.pop %v4972
      %v5028 = vtanh.pop %v4974
      %v5029 = vtanh.pop %v5015
      %v5030 = vtanh.pop %v5017
      %v5031 = vtanh.pop %v4890
      %v5032 = vtanh.pop %v4892
      %v5033 = vtanh.pop %v4933
      %v5034 = vtanh.pop %v4935
      %v5035 = vtanh.pop %v4976
      %v5036 = vtanh.pop %v4978
      %v5037 = vtanh.pop %v5019
      %v5038 = vtanh.pop %v5021
      %s5039 = scalar_lea.vmem %s3, 128
      %v5040 = vld [vmem:[%s5039] sm:$0xf]
      %v5041 = vld [vmem:[%s5039 + $0x4] sm:$0xf]
      %v5042 = vld [vmem:[%s5039 + $0x8] sm:$0xf]
      %v5043 = vld [vmem:[%s5039 + $0xc] sm:$0xf]
      %v5044 = vpack.c.bf16 %v5031, %v5023
      %v5045 = vpack.c.bf16 %v5032, %v5024
      %v5046 = vpack.c.bf16 %v5033, %v5025
      %v5047 = vpack.c.bf16 %v5034, %v5026
      %v5048 = vpack.c.bf16 %v5035, %v5027
      %v5049 = vpack.c.bf16 %v5036, %v5028
      %v5050 = vpack.c.bf16 %v5037, %v5029
      %v5051 = vpack.c.bf16 %v5038, %v5030
      %v5056 = vunpack.c.l.b16 %v5040
      %v5057 = vunpack.c.l.b16 %v5041
      %v5058 = vunpack.c.l.b16 %v5042
      %v5059 = vunpack.c.l.b16 %v5043
      %v5060 = vpack.c.b16 %v5057, %v5056
      %v5061 = vpack.c.b16 %v5059, %v5058
      %v5063 = vsel %vm959, %v5060, 0
      %v5066 = vsel %vm959, %v5061, 0
      %5068 = vmatprep.subr.bf16.mxu0 0
      %5069 = vmatpush1.bf16.msra.mxu0 0
      %5070 = vmatprep.subr.bf16.mxu0 0
      %5071 = vmatpush1.bf16.msra.mxu0 0
      %5072 = vmatprep.subr.bf16.mxu0 0
      %5073 = vmatpush1.bf16.msra.mxu0 0
      %5074 = vmatprep.subr.bf16.mxu0 0
      %5075 = vmatpush1.bf16.msra.mxu0 0
      %5076 = vmatprep.subr.bf16.mxu0 0
      %5077 = vmatpush1.bf16.msra.mxu0 0
      %5078 = vmatprep.subr.bf16.mxu0 0
      %5079 = vmatpush1.bf16.msra.mxu0 0
      %5080 = vmatprep.subr.bf16.mxu0 0
      %5081 = vmatpush1.bf16.msra.mxu0 0
      %5082 = vmatprep.subr.bf16.mxu0 %v5045
      %5083 = vmatpush1.bf16.msra.mxu0 %v5044
      %5084 = vmatprep.subr.bf16.mxu0 0
      %5085 = vmatpush2.bf16.msra.mxu0 0
      %5086 = vmatprep.subr.bf16.mxu0 0
      %5087 = vmatpush2.bf16.msra.mxu0 0
      %5088 = vmatprep.subr.bf16.mxu0 0
      %5089 = vmatpush2.bf16.msra.mxu0 0
      %5090 = vmatprep.subr.bf16.mxu0 0
      %5091 = vmatpush2.bf16.msra.mxu0 0
      %5092 = vmatprep.subr.bf16.mxu0 0
      %5093 = vmatpush2.bf16.msra.mxu0 0
      %5094 = vmatprep.subr.bf16.mxu0 0
      %5095 = vmatpush2.bf16.msra.mxu0 0
      %5096 = vmatprep.subr.bf16.mxu0 0
      %5097 = vmatpush2.bf16.msra.mxu0 0
      %5098 = vmatprep.subr.bf16.mxu0 0
      %5099 = vmatpush2.bf16.msra.mxu0 0
      %5100 = vmatprep.mubr.bf16.mxu0 0
      %5101 = vmatmul.mubr.bf16.gmra.mxu0 %v5063
      %v5102 = vpop.f32.mrf.mxu0
      %v5103 = vadd.f32 0.0, %v5102
      %v5104 = vpop.f32.mrf.mxu0
      %v5105 = vadd.f32 0.0, %v5104
      %v5106 = vpop.f32.mrf.mxu0
      %v5107 = vadd.f32 0.0, %v5106
      %v5108 = vpop.f32.mrf.mxu0
      %v5109 = vadd.f32 0.0, %v5108
      %5110 = vmatprep.mubr.bf16.mxu0 0
      %5111 = vmatmul.mubr.bf16.gmra.mxu0 %v5066
      %v5112 = vpop.f32.mrf.mxu0
      %v5113 = vadd.f32 0.0, %v5112
      %v5114 = vpop.f32.mrf.mxu0
      %v5115 = vadd.f32 0.0, %v5114
      %v5116 = vpop.f32.mrf.mxu0
      %v5117 = vadd.f32 0.0, %v5116
      %v5118 = vpop.f32.mrf.mxu0
      %v5119 = vadd.f32 0.0, %v5118
      %5120 = vdwg.mxu0
      %5121 = vmatprep.subr.bf16.mxu0 0
      %5122 = vmatpush1.bf16.msra.mxu0 0
      %5123 = vmatprep.subr.bf16.mxu0 0
      %5124 = vmatpush1.bf16.msra.mxu0 0
      %5125 = vmatprep.subr.bf16.mxu0 0
      %5126 = vmatpush1.bf16.msra.mxu0 0
      %5127 = vmatprep.subr.bf16.mxu0 0
      %5128 = vmatpush1.bf16.msra.mxu0 0
      %5129 = vmatprep.subr.bf16.mxu0 0
      %5130 = vmatpush1.bf16.msra.mxu0 0
      %5131 = vmatprep.subr.bf16.mxu0 0
      %5132 = vmatpush1.bf16.msra.mxu0 0
      %5133 = vmatprep.subr.bf16.mxu0 0
      %5134 = vmatpush1.bf16.msra.mxu0 0
      %5135 = vmatprep.subr.bf16.mxu0 %v5047
      %5136 = vmatpush1.bf16.msra.mxu0 %v5046
      %5137 = vmatprep.subr.bf16.mxu0 0
      %5138 = vmatpush2.bf16.msra.mxu0 0
      %5139 = vmatprep.subr.bf16.mxu0 0
      %5140 = vmatpush2.bf16.msra.mxu0 0
      %5141 = vmatprep.subr.bf16.mxu0 0
      %5142 = vmatpush2.bf16.msra.mxu0 0
      %5143 = vmatprep.subr.bf16.mxu0 0
      %5144 = vmatpush2.bf16.msra.mxu0 0
      %5145 = vmatprep.subr.bf16.mxu0 0
      %5146 = vmatpush2.bf16.msra.mxu0 0
      %5147 = vmatprep.subr.bf16.mxu0 0
      %5148 = vmatpush2.bf16.msra.mxu0 0
      %5149 = vmatprep.subr.bf16.mxu0 0
      %5150 = vmatpush2.bf16.msra.mxu0 0
      %5151 = vmatprep.subr.bf16.mxu0 0
      %5152 = vmatpush2.bf16.msra.mxu0 0
      %5153 = vmatprep.mubr.bf16.mxu0 0
      %5154 = vmatmul.mubr.bf16.gmra.mxu0 %v5063
      %v5155 = vpop.f32.mrf.mxu0
      %v5156 = vadd.f32 0.0, %v5155
      %v5157 = vpop.f32.mrf.mxu0
      %v5158 = vadd.f32 0.0, %v5157
      %v5159 = vpop.f32.mrf.mxu0
      %v5160 = vadd.f32 0.0, %v5159
      %v5161 = vpop.f32.mrf.mxu0
      %v5162 = vadd.f32 0.0, %v5161
      %5163 = vmatprep.mubr.bf16.mxu0 0
      %5164 = vmatmul.mubr.bf16.gmra.mxu0 %v5066
      %v5165 = vpop.f32.mrf.mxu0
      %v5166 = vadd.f32 0.0, %v5165
      %v5167 = vpop.f32.mrf.mxu0
      %v5168 = vadd.f32 0.0, %v5167
      %v5169 = vpop.f32.mrf.mxu0
      %v5170 = vadd.f32 0.0, %v5169
      %v5171 = vpop.f32.mrf.mxu0
      %v5172 = vadd.f32 0.0, %v5171
      %5173 = vdwg.mxu0
      %5174 = vmatprep.subr.bf16.mxu0 0
      %5175 = vmatpush1.bf16.msra.mxu0 0
      %5176 = vmatprep.subr.bf16.mxu0 0
      %5177 = vmatpush1.bf16.msra.mxu0 0
      %5178 = vmatprep.subr.bf16.mxu0 0
      %5179 = vmatpush1.bf16.msra.mxu0 0
      %5180 = vmatprep.subr.bf16.mxu0 0
      %5181 = vmatpush1.bf16.msra.mxu0 0
      %5182 = vmatprep.subr.bf16.mxu0 0
      %5183 = vmatpush1.bf16.msra.mxu0 0
      %5184 = vmatprep.subr.bf16.mxu0 0
      %5185 = vmatpush1.bf16.msra.mxu0 0
      %5186 = vmatprep.subr.bf16.mxu0 0
      %5187 = vmatpush1.bf16.msra.mxu0 0
      %5188 = vmatprep.subr.bf16.mxu0 %v5049
      %5189 = vmatpush1.bf16.msra.mxu0 %v5048
      %5190 = vmatprep.subr.bf16.mxu0 0
      %5191 = vmatpush2.bf16.msra.mxu0 0
      %5192 = vmatprep.subr.bf16.mxu0 0
      %5193 = vmatpush2.bf16.msra.mxu0 0
      %5194 = vmatprep.subr.bf16.mxu0 0
      %5195 = vmatpush2.bf16.msra.mxu0 0
      %5196 = vmatprep.subr.bf16.mxu0 0
      %5197 = vmatpush2.bf16.msra.mxu0 0
      %5198 = vmatprep.subr.bf16.mxu0 0
      %5199 = vmatpush2.bf16.msra.mxu0 0
      %5200 = vmatprep.subr.bf16.mxu0 0
      %5201 = vmatpush2.bf16.msra.mxu0 0
      %5202 = vmatprep.subr.bf16.mxu0 0
      %5203 = vmatpush2.bf16.msra.mxu0 0
      %5204 = vmatprep.subr.bf16.mxu0 0
      %5205 = vmatpush2.bf16.msra.mxu0 0
      %5206 = vmatprep.mubr.bf16.mxu0 0
      %5207 = vmatmul.mubr.bf16.gmra.mxu0 %v5063
      %v5208 = vpop.f32.mrf.mxu0
      %v5209 = vadd.f32 0.0, %v5208
      %v5210 = vpop.f32.mrf.mxu0
      %v5211 = vadd.f32 0.0, %v5210
      %v5212 = vpop.f32.mrf.mxu0
      %v5213 = vadd.f32 0.0, %v5212
      %v5214 = vpop.f32.mrf.mxu0
      %v5215 = vadd.f32 0.0, %v5214
      %5216 = vmatprep.mubr.bf16.mxu0 0
      %5217 = vmatmul.mubr.bf16.gmra.mxu0 %v5066
      %v5218 = vpop.f32.mrf.mxu0
      %v5219 = vadd.f32 0.0, %v5218
      %v5220 = vpop.f32.mrf.mxu0
      %v5221 = vadd.f32 0.0, %v5220
      %v5222 = vpop.f32.mrf.mxu0
      %v5223 = vadd.f32 0.0, %v5222
      %v5224 = vpop.f32.mrf.mxu0
      %v5225 = vadd.f32 0.0, %v5224
      %5226 = vdwg.mxu0
      %5227 = vmatprep.subr.bf16.mxu0 0
      %5228 = vmatpush1.bf16.msra.mxu0 0
      %5229 = vmatprep.subr.bf16.mxu0 0
      %5230 = vmatpush1.bf16.msra.mxu0 0
      %5231 = vmatprep.subr.bf16.mxu0 0
      %5232 = vmatpush1.bf16.msra.mxu0 0
      %5233 = vmatprep.subr.bf16.mxu0 0
      %5234 = vmatpush1.bf16.msra.mxu0 0
      %5235 = vmatprep.subr.bf16.mxu0 0
      %5236 = vmatpush1.bf16.msra.mxu0 0
      %5237 = vmatprep.subr.bf16.mxu0 0
      %5238 = vmatpush1.bf16.msra.mxu0 0
      %5239 = vmatprep.subr.bf16.mxu0 0
      %5240 = vmatpush1.bf16.msra.mxu0 0
      %5241 = vmatprep.subr.bf16.mxu0 %v5051
      %5242 = vmatpush1.bf16.msra.mxu0 %v5050
      %5243 = vmatprep.subr.bf16.mxu0 0
      %5244 = vmatpush2.bf16.msra.mxu0 0
      %5245 = vmatprep.subr.bf16.mxu0 0
      %5246 = vmatpush2.bf16.msra.mxu0 0
      %5247 = vmatprep.subr.bf16.mxu0 0
      %5248 = vmatpush2.bf16.msra.mxu0 0
      %5249 = vmatprep.subr.bf16.mxu0 0
      %5250 = vmatpush2.bf16.msra.mxu0 0
      %5251 = vmatprep.subr.bf16.mxu0 0
      %5252 = vmatpush2.bf16.msra.mxu0 0
      %5253 = vmatprep.subr.bf16.mxu0 0
      %5254 = vmatpush2.bf16.msra.mxu0 0
      %5255 = vmatprep.subr.bf16.mxu0 0
      %5256 = vmatpush2.bf16.msra.mxu0 0
      %5257 = vmatprep.subr.bf16.mxu0 0
      %5258 = vmatpush2.bf16.msra.mxu0 0
      %5259 = vmatprep.mubr.bf16.mxu0 0
      %5260 = vmatmul.mubr.bf16.gmra.mxu0 %v5063
      %v5261 = vpop.f32.mrf.mxu0
      %v5262 = vadd.f32 0.0, %v5261
      %v5263 = vpop.f32.mrf.mxu0
      %v5264 = vadd.f32 0.0, %v5263
      %v5265 = vpop.f32.mrf.mxu0
      %v5266 = vadd.f32 0.0, %v5265
      %v5267 = vpop.f32.mrf.mxu0
      %v5268 = vadd.f32 0.0, %v5267
      %5269 = vmatprep.mubr.bf16.mxu0 0
      %5270 = vmatmul.mubr.bf16.gmra.mxu0 %v5066
      %v5271 = vpop.f32.mrf.mxu0
      %v5272 = vadd.f32 0.0, %v5271
      %v5273 = vpop.f32.mrf.mxu0
      %v5274 = vadd.f32 0.0, %v5273
      %v5275 = vpop.f32.mrf.mxu0
      %v5276 = vadd.f32 0.0, %v5275
      %v5277 = vpop.f32.mrf.mxu0
      %v5278 = vadd.f32 0.0, %v5277
      %5279 = vdwg.mxu0
      %v5280 = vadd.f32 %v4722, %v5103
      %v5281 = vadd.f32 %v4723, %v5105
      %v5282 = vadd.f32 %v4724, %v5156
      %v5283 = vadd.f32 %v4725, %v5158
      %v5284 = vadd.f32 %v4726, %v5209
      %v5285 = vadd.f32 %v4727, %v5211
      %v5286 = vadd.f32 %v4728, %v5262
      %v5287 = vadd.f32 %v4729, %v5264
      %v5288 = vadd.f32 %v4730, %v5107
      %v5289 = vadd.f32 %v4731, %v5109
      %v5290 = vadd.f32 %v4732, %v5160
      %v5291 = vadd.f32 %v4733, %v5162
      %v5292 = vadd.f32 %v4734, %v5213
      %v5293 = vadd.f32 %v4735, %v5215
      %v5294 = vadd.f32 %v4736, %v5266
      %v5295 = vadd.f32 %v4737, %v5268
      %v5296 = vadd.f32 %v4738, %v5113
      %v5297 = vadd.f32 %v4739, %v5115
      %v5298 = vadd.f32 %v4740, %v5166
      %v5299 = vadd.f32 %v4741, %v5168
      %v5300 = vadd.f32 %v4742, %v5219
      %v5301 = vadd.f32 %v4743, %v5221
      %v5302 = vadd.f32 %v4744, %v5272
      %v5303 = vadd.f32 %v4745, %v5274
      %v5304 = vadd.f32 %v4746, %v5117
      %v5305 = vadd.f32 %v4747, %v5119
      %v5306 = vadd.f32 %v4748, %v5170
      %v5307 = vadd.f32 %v4749, %v5172
      %v5308 = vadd.f32 %v4750, %v5223
      %v5309 = vadd.f32 %v4751, %v5225
      %v5310 = vadd.f32 %v4752, %v5276
      %v5311 = vadd.f32 %v4753, %v5278
      %v5312 = vld [vmem:[%s4] sm:$0xff]
      %v5313 = vld [vmem:[%s4 + $0x8] sm:$0xff]
      %v5314 = vld [vmem:[%s4 + $0x10] sm:$0xff]
      %v5315 = vld [vmem:[%s4 + $0x18] sm:$0xff]
      %5317 = vset.pattern.permute.xlu0 0
      %5318 = vperm.xlu0 %5317, %v5312
      %v5319 = vpop.permute.xlu0 %5318
      %5322 = vset.pattern.permute.xlu0 0
      %5323 = vperm.xlu0 %5322, %v5313
      %v5324 = vpop.permute.xlu0 %5323
      %5327 = vset.pattern.permute.xlu0 0
      %5328 = vperm.xlu0 %5327, %v5314
      %v5329 = vpop.permute.xlu0 %5328
      %5332 = vset.pattern.permute.xlu0 0
      %5333 = vperm.xlu0 %5332, %v5315
      %v5334 = vpop.permute.xlu0 %5333
      %v5336 = vadd.f32 %v5280, %v5319
      %v5337 = vadd.f32 %v5281, %v5319
      %v5338 = vadd.f32 %v5282, %v5319
      %v5339 = vadd.f32 %v5283, %v5319
      %v5340 = vadd.f32 %v5284, %v5319
      %v5341 = vadd.f32 %v5285, %v5319
      %v5342 = vadd.f32 %v5286, %v5319
      %v5343 = vadd.f32 %v5287, %v5319
      %v5344 = vadd.f32 %v5288, %v5324
      %v5345 = vadd.f32 %v5289, %v5324
      %v5346 = vadd.f32 %v5290, %v5324
      %v5347 = vadd.f32 %v5291, %v5324
      %v5348 = vadd.f32 %v5292, %v5324
      %v5349 = vadd.f32 %v5293, %v5324
      %v5350 = vadd.f32 %v5294, %v5324
      %v5351 = vadd.f32 %v5295, %v5324
      %v5352 = vadd.f32 %v5296, %v5329
      %v5353 = vadd.f32 %v5297, %v5329
      %v5354 = vadd.f32 %v5298, %v5329
      %v5355 = vadd.f32 %v5299, %v5329
      %v5356 = vadd.f32 %v5300, %v5329
      %v5357 = vadd.f32 %v5301, %v5329
      %v5358 = vadd.f32 %v5302, %v5329
      %v5359 = vadd.f32 %v5303, %v5329
      %v5360 = vadd.f32 %v5304, %v5334
      %v5361 = vadd.f32 %v5305, %v5334
      %v5362 = vadd.f32 %v5306, %v5334
      %v5363 = vadd.f32 %v5307, %v5334
      %v5364 = vadd.f32 %v5308, %v5334
      %v5365 = vadd.f32 %v5309, %v5334
      %v5366 = vadd.f32 %v5310, %v5334
      %v5367 = vadd.f32 %v5311, %v5334
      %v5368 = vtanh.pop %v5336
      %v5369 = vtanh.pop %v5337
      %v5370 = vtanh.pop %v5338
      %v5371 = vtanh.pop %v5339
      %v5372 = vtanh.pop %v5340
      %v5373 = vtanh.pop %v5341
      %v5374 = vtanh.pop %v5342
      %v5375 = vtanh.pop %v5343
      %v5376 = vtanh.pop %v5344
      %v5377 = vtanh.pop %v5345
      %v5378 = vtanh.pop %v5346
      %v5379 = vtanh.pop %v5347
      %v5380 = vtanh.pop %v5348
      %v5381 = vtanh.pop %v5349
      %v5382 = vtanh.pop %v5350
      %v5383 = vtanh.pop %v5351
      %v5384 = vtanh.pop %v5352
      %v5385 = vtanh.pop %v5353
      %v5386 = vtanh.pop %v5354
      %v5387 = vtanh.pop %v5355
      %v5388 = vtanh.pop %v5356
      %v5389 = vtanh.pop %v5357
      %v5390 = vtanh.pop %v5358
      %v5391 = vtanh.pop %v5359
      %v5392 = vtanh.pop %v5360
      %v5393 = vtanh.pop %v5361
      %v5394 = vtanh.pop %v5362
      %v5395 = vtanh.pop %v5363
      %v5396 = vtanh.pop %v5364
      %v5397 = vtanh.pop %v5365
      %v5398 = vtanh.pop %v5366
      %v5399 = vtanh.pop %v5367
      %5400 = vst [vmem:[#allocation2] sm:$0xff] %v5368
      %5401 = vst [vmem:[#allocation2 + $0x8] sm:$0xff] %v5376
      %5402 = vst [vmem:[#allocation2 + $0x10] sm:$0xff] %v5384
      %5403 = vst [vmem:[#allocation2 + $0x18] sm:$0xff] %v5392
      %5404 = vst [vmem:[#allocation2 + $0x20] sm:$0xff] %v5369
      %5405 = vst [vmem:[#allocation2 + $0x28] sm:$0xff] %v5377
      %5406 = vst [vmem:[#allocation2 + $0x30] sm:$0xff] %v5385
      %5407 = vst [vmem:[#allocation2 + $0x38] sm:$0xff] %v5393
      %5408 = vst [vmem:[#allocation2 + $0x40] sm:$0xff] %v5370
      %5409 = vst [vmem:[#allocation2 + $0x48] sm:$0xff] %v5378
      %5410 = vst [vmem:[#allocation2 + $0x50] sm:$0xff] %v5386
      %5411 = vst [vmem:[#allocation2 + $0x58] sm:$0xff] %v5394
      %5412 = vst [vmem:[#allocation2 + $0x60] sm:$0xff] %v5371
      %5413 = vst [vmem:[#allocation2 + $0x68] sm:$0xff] %v5379
      %5414 = vst [vmem:[#allocation2 + $0x70] sm:$0xff] %v5387
      %5415 = vst [vmem:[#allocation2 + $0x78] sm:$0xff] %v5395
      %5416 = vst [vmem:[#allocation2 + $0x80] sm:$0xff] %v5372
      %5417 = vst [vmem:[#allocation2 + $0x88] sm:$0xff] %v5380
      %5418 = vst [vmem:[#allocation2 + $0x90] sm:$0xff] %v5388
      %5419 = vst [vmem:[#allocation2 + $0x98] sm:$0xff] %v5396
      %5420 = vst [vmem:[#allocation2 + $0xa0] sm:$0xff] %v5373
      %5421 = vst [vmem:[#allocation2 + $0xa8] sm:$0xff] %v5381
      %5422 = vst [vmem:[#allocation2 + $0xb0] sm:$0xff] %v5389
      %5423 = vst [vmem:[#allocation2 + $0xb8] sm:$0xff] %v5397
      %5424 = vst [vmem:[#allocation2 + $0xc0] sm:$0xff] %v5374
      %5425 = vst [vmem:[#allocation2 + $0xc8] sm:$0xff] %v5382
      %5426 = vst [vmem:[#allocation2 + $0xd0] sm:$0xff] %v5390
      %5427 = vst [vmem:[#allocation2 + $0xd8] sm:$0xff] %v5398
      %5428 = vst [vmem:[#allocation2 + $0xe0] sm:$0xff] %v5375
      %5429 = vst [vmem:[#allocation2 + $0xe8] sm:$0xff] %v5383
      %5430 = vst [vmem:[#allocation2 + $0xf0] sm:$0xff] %v5391
      %5431 = vst [vmem:[#allocation2 + $0xf8] sm:$0xff] %v5399
      %v5432 = vld [vmem:[#allocation2] ss:$32 sm:$0x1]
      %v5433 = vld [vmem:[#allocation2] ss:$32 sm:$0x2]
      %v5434 = vor.u32 %v5432, %v5433
      %v5435 = vld [vmem:[#allocation2] ss:$32 sm:$0x4]
      %v5436 = vor.u32 %v5434, %v5435
      %v5437 = vld [vmem:[#allocation2] ss:$32 sm:$0x8]
      %v5438 = vor.u32 %v5436, %v5437
      %v5439 = vld [vmem:[#allocation2] ss:$32 sm:$0x10]
      %v5440 = vor.u32 %v5438, %v5439
      %v5441 = vld [vmem:[#allocation2] ss:$32 sm:$0x20]
      %v5442 = vor.u32 %v5440, %v5441
      %v5443 = vld [vmem:[#allocation2] ss:$32 sm:$0x40]
      %v5444 = vor.u32 %v5442, %v5443
      %v5445 = vld [vmem:[#allocation2] ss:$32 sm:$0x80]
      %v5446 = vor.u32 %v5444, %v5445
      %v5447 = vpack.c.bf16 %v5446, %v5446
      %v5448 = vld [vmem:[%s5] sm:$0xff]
      %v5449 = vld [vmem:[%s5 + $0x8] sm:$0xff]
      %v5450 = vld [vmem:[%s5 + $0x10] sm:$0xff]
      %v5451 = vld [vmem:[%s5 + $0x18] sm:$0xff]
      %v5452 = vld [vmem:[%s5 + $0x20] sm:$0xff]
      %v5453 = vld [vmem:[%s5 + $0x28] sm:$0xff]
      %v5454 = vld [vmem:[%s5 + $0x30] sm:$0xff]
      %v5455 = vld [vmem:[%s5 + $0x38] sm:$0xff]
      %v5456 = vld [vmem:[%s5 + $0x40] sm:$0xff]
      %v5457 = vld [vmem:[%s5 + $0x48] sm:$0xff]
      %v5458 = vld [vmem:[%s5 + $0x50] sm:$0xff]
      %v5459 = vld [vmem:[%s5 + $0x58] sm:$0xff]
      %v5460 = vld [vmem:[%s5 + $0x60] sm:$0xff]
      %v5461 = vld [vmem:[%s5 + $0x68] sm:$0xff]
      %v5462 = vld [vmem:[%s5 + $0x70] sm:$0xff]
      %v5463 = vld [vmem:[%s5 + $0x78] sm:$0xff]
      %s5464 = scalar_lea.vmem [#allocation2], 1
      %v5465 = vld [vmem:[%s5464] ss:$32 sm:$0x1]
      %v5466 = vld [vmem:[%s5464] ss:$32 sm:$0x2]
      %v5467 = vor.u32 %v5465, %v5466
      %v5468 = vld [vmem:[%s5464] ss:$32 sm:$0x4]
      %v5469 = vor.u32 %v5467, %v5468
      %v5470 = vld [vmem:[%s5464] ss:$32 sm:$0x8]
      %v5471 = vor.u32 %v5469, %v5470
      %v5472 = vld [vmem:[%s5464] ss:$32 sm:$0x10]
      %v5473 = vor.u32 %v5471, %v5472
      %v5474 = vld [vmem:[%s5464] ss:$32 sm:$0x20]
      %v5475 = vor.u32 %v5473, %v5474
      %v5476 = vld [vmem:[%s5464] ss:$32 sm:$0x40]
      %v5477 = vor.u32 %v5475, %v5476
      %v5478 = vld [vmem:[%s5464] ss:$32 sm:$0x80]
      %v5479 = vor.u32 %v5477, %v5478
      %v5480 = vpack.c.bf16 %v5479, %v5479
      %s5481 = scalar_lea.vmem %s5, 128
      %v5482 = vld [vmem:[%s5481] sm:$0xff]
      %v5483 = vld [vmem:[%s5481 + $0x8] sm:$0xff]
      %v5484 = vld [vmem:[%s5481 + $0x10] sm:$0xff]
      %v5485 = vld [vmem:[%s5481 + $0x18] sm:$0xff]
      %v5486 = vld [vmem:[%s5481 + $0x20] sm:$0xff]
      %v5487 = vld [vmem:[%s5481 + $0x28] sm:$0xff]
      %v5488 = vld [vmem:[%s5481 + $0x30] sm:$0xff]
      %v5489 = vld [vmem:[%s5481 + $0x38] sm:$0xff]
      %v5490 = vld [vmem:[%s5481 + $0x40] sm:$0xff]
      %v5491 = vld [vmem:[%s5481 + $0x48] sm:$0xff]
      %v5492 = vld [vmem:[%s5481 + $0x50] sm:$0xff]
      %v5493 = vld [vmem:[%s5481 + $0x58] sm:$0xff]
      %v5494 = vld [vmem:[%s5481 + $0x60] sm:$0xff]
      %v5495 = vld [vmem:[%s5481 + $0x68] sm:$0xff]
      %v5496 = vld [vmem:[%s5481 + $0x70] sm:$0xff]
      %v5497 = vld [vmem:[%s5481 + $0x78] sm:$0xff]
      %v5514 = vunpack.c.l.b16 %v5482
      %v5515 = vunpack.c.h.b16 %v5482
      %v5516 = vunpack.c.l.b16 %v5483
      %v5517 = vunpack.c.h.b16 %v5483
      %v5518 = vunpack.c.l.b16 %v5484
      %v5519 = vunpack.c.h.b16 %v5484
      %v5520 = vunpack.c.l.b16 %v5485
      %v5521 = vunpack.c.h.b16 %v5485
      %v5522 = vunpack.c.l.b16 %v5486
      %v5523 = vunpack.c.h.b16 %v5486
      %v5524 = vunpack.c.l.b16 %v5487
      %v5525 = vunpack.c.h.b16 %v5487
      %v5526 = vunpack.c.l.b16 %v5488
      %v5527 = vunpack.c.h.b16 %v5488
      %v5528 = vunpack.c.l.b16 %v5489
      %v5529 = vunpack.c.h.b16 %v5489
      %v5530 = vunpack.c.l.b16 %v5490
      %v5531 = vunpack.c.h.b16 %v5490
      %v5532 = vunpack.c.l.b16 %v5491
      %v5533 = vunpack.c.h.b16 %v5491
      %v5534 = vunpack.c.l.b16 %v5492
      %v5535 = vunpack.c.h.b16 %v5492
      %v5536 = vunpack.c.l.b16 %v5493
      %v5537 = vunpack.c.h.b16 %v5493
      %v5538 = vunpack.c.l.b16 %v5494
      %v5539 = vunpack.c.h.b16 %v5494
      %v5540 = vunpack.c.l.b16 %v5495
      %v5541 = vunpack.c.h.b16 %v5495
      %v5542 = vunpack.c.l.b16 %v5496
      %v5543 = vunpack.c.h.b16 %v5496
      %v5544 = vunpack.c.l.b16 %v5497
      %v5545 = vunpack.c.h.b16 %v5497
      %v5546 = vpack.c.b16 %v5516, %v5514
      %v5547 = vpack.c.b16 %v5517, %v5515
      %v5548 = vpack.c.b16 %v5520, %v5518
      %v5549 = vpack.c.b16 %v5521, %v5519
      %v5550 = vpack.c.b16 %v5524, %v5522
      %v5551 = vpack.c.b16 %v5525, %v5523
      %v5552 = vpack.c.b16 %v5528, %v5526
      %v5553 = vpack.c.b16 %v5529, %v5527
      %v5554 = vpack.c.b16 %v5532, %v5530
      %v5555 = vpack.c.b16 %v5533, %v5531
      %v5556 = vpack.c.b16 %v5536, %v5534
      %v5557 = vpack.c.b16 %v5537, %v5535
      %v5558 = vpack.c.b16 %v5540, %v5538
      %v5559 = vpack.c.b16 %v5541, %v5539
      %v5560 = vpack.c.b16 %v5544, %v5542
      %v5561 = vpack.c.b16 %v5545, %v5543
      %5578 = vmatprep.subr.bf16.mxu0 %v5561
      %5579 = vmatpush1.bf16.msra.mxu0 %v5560
      %5580 = vmatprep.subr.bf16.mxu0 %v5559
      %5581 = vmatpush1.bf16.msra.mxu0 %v5558
      %5582 = vmatprep.subr.bf16.mxu0 %v5557
      %5583 = vmatpush1.bf16.msra.mxu0 %v5556
      %5584 = vmatprep.subr.bf16.mxu0 %v5555
      %5585 = vmatpush1.bf16.msra.mxu0 %v5554
      %5586 = vmatprep.subr.bf16.mxu0 %v5553
      %5587 = vmatpush1.bf16.msra.mxu0 %v5552
      %5588 = vmatprep.subr.bf16.mxu0 %v5551
      %5589 = vmatpush1.bf16.msra.mxu0 %v5550
      %5590 = vmatprep.subr.bf16.mxu0 %v5549
      %5591 = vmatpush1.bf16.msra.mxu0 %v5548
      %5592 = vmatprep.subr.bf16.mxu0 %v5547
      %5593 = vmatpush1.bf16.msra.mxu0 %v5546
      %5594 = vmatprep.subr.bf16.mxu0 0
      %5595 = vmatpush2.bf16.msra.mxu0 0
      %5596 = vmatprep.subr.bf16.mxu0 0
      %5597 = vmatpush2.bf16.msra.mxu0 0
      %5598 = vmatprep.subr.bf16.mxu0 0
      %5599 = vmatpush2.bf16.msra.mxu0 0
      %5600 = vmatprep.subr.bf16.mxu0 0
      %5601 = vmatpush2.bf16.msra.mxu0 0
      %5602 = vmatprep.subr.bf16.mxu0 0
      %5603 = vmatpush2.bf16.msra.mxu0 0
      %5604 = vmatprep.subr.bf16.mxu0 0
      %5605 = vmatpush2.bf16.msra.mxu0 0
      %5606 = vmatprep.subr.bf16.mxu0 0
      %5607 = vmatpush2.bf16.msra.mxu0 0
      %5608 = vmatprep.subr.bf16.mxu0 0
      %5609 = vmatpush2.bf16.msra.mxu0 0
      %5610 = vmatprep.mubr.bf16.mxu0 0
      %5611 = vmatmul.mubr.bf16.gmra.mxu0 %v5480
      %v5612 = vpop.f32.mrf.mxu0
      %v5613 = vadd.f32 0.0, %v5612
      %v5614 = vpop.f32.mrf.mxu0
      %v5615 = vadd.f32 0.0, %v5614
      %v5616 = vpop.f32.mrf.mxu0
      %v5617 = vpop.f32.mrf.mxu0
      %5618 = vdwg.mxu0
      %v5635 = vunpack.c.l.b16 %v5448
      %v5636 = vunpack.c.h.b16 %v5448
      %v5637 = vunpack.c.l.b16 %v5449
      %v5638 = vunpack.c.h.b16 %v5449
      %v5639 = vunpack.c.l.b16 %v5450
      %v5640 = vunpack.c.h.b16 %v5450
      %v5641 = vunpack.c.l.b16 %v5451
      %v5642 = vunpack.c.h.b16 %v5451
      %v5643 = vunpack.c.l.b16 %v5452
      %v5644 = vunpack.c.h.b16 %v5452
      %v5645 = vunpack.c.l.b16 %v5453
      %v5646 = vunpack.c.h.b16 %v5453
      %v5647 = vunpack.c.l.b16 %v5454
      %v5648 = vunpack.c.h.b16 %v5454
      %v5649 = vunpack.c.l.b16 %v5455
      %v5650 = vunpack.c.h.b16 %v5455
      %v5651 = vunpack.c.l.b16 %v5456
      %v5652 = vunpack.c.h.b16 %v5456
      %v5653 = vunpack.c.l.b16 %v5457
      %v5654 = vunpack.c.h.b16 %v5457
      %v5655 = vunpack.c.l.b16 %v5458
      %v5656 = vunpack.c.h.b16 %v5458
      %v5657 = vunpack.c.l.b16 %v5459
      %v5658 = vunpack.c.h.b16 %v5459
      %v5659 = vunpack.c.l.b16 %v5460
      %v5660 = vunpack.c.h.b16 %v5460
      %v5661 = vunpack.c.l.b16 %v5461
      %v5662 = vunpack.c.h.b16 %v5461
      %v5663 = vunpack.c.l.b16 %v5462
      %v5664 = vunpack.c.h.b16 %v5462
      %v5665 = vunpack.c.l.b16 %v5463
      %v5666 = vunpack.c.h.b16 %v5463
      %v5667 = vpack.c.b16 %v5637, %v5635
      %v5668 = vpack.c.b16 %v5638, %v5636
      %v5669 = vpack.c.b16 %v5641, %v5639
      %v5670 = vpack.c.b16 %v5642, %v5640
      %v5671 = vpack.c.b16 %v5645, %v5643
      %v5672 = vpack.c.b16 %v5646, %v5644
      %v5673 = vpack.c.b16 %v5649, %v5647
      %v5674 = vpack.c.b16 %v5650, %v5648
      %v5675 = vpack.c.b16 %v5653, %v5651
      %v5676 = vpack.c.b16 %v5654, %v5652
      %v5677 = vpack.c.b16 %v5657, %v5655
      %v5678 = vpack.c.b16 %v5658, %v5656
      %v5679 = vpack.c.b16 %v5661, %v5659
      %v5680 = vpack.c.b16 %v5662, %v5660
      %v5681 = vpack.c.b16 %v5665, %v5663
      %v5682 = vpack.c.b16 %v5666, %v5664
      %5699 = vmatprep.subr.bf16.mxu0 %v5682
      %5700 = vmatpush1.bf16.msra.mxu0 %v5681
      %5701 = vmatprep.subr.bf16.mxu0 %v5680
      %5702 = vmatpush1.bf16.msra.mxu0 %v5679
      %5703 = vmatprep.subr.bf16.mxu0 %v5678
      %5704 = vmatpush1.bf16.msra.mxu0 %v5677
      %5705 = vmatprep.subr.bf16.mxu0 %v5676
      %5706 = vmatpush1.bf16.msra.mxu0 %v5675
      %5707 = vmatprep.subr.bf16.mxu0 %v5674
      %5708 = vmatpush1.bf16.msra.mxu0 %v5673
      %5709 = vmatprep.subr.bf16.mxu0 %v5672
      %5710 = vmatpush1.bf16.msra.mxu0 %v5671
      %5711 = vmatprep.subr.bf16.mxu0 %v5670
      %5712 = vmatpush1.bf16.msra.mxu0 %v5669
      %5713 = vmatprep.subr.bf16.mxu0 %v5668
      %5714 = vmatpush1.bf16.msra.mxu0 %v5667
      %5715 = vmatprep.subr.bf16.mxu0 0
      %5716 = vmatpush2.bf16.msra.mxu0 0
      %5717 = vmatprep.subr.bf16.mxu0 0
      %5718 = vmatpush2.bf16.msra.mxu0 0
      %5719 = vmatprep.subr.bf16.mxu0 0
      %5720 = vmatpush2.bf16.msra.mxu0 0
      %5721 = vmatprep.subr.bf16.mxu0 0
      %5722 = vmatpush2.bf16.msra.mxu0 0
      %5723 = vmatprep.subr.bf16.mxu0 0
      %5724 = vmatpush2.bf16.msra.mxu0 0
      %5725 = vmatprep.subr.bf16.mxu0 0
      %5726 = vmatpush2.bf16.msra.mxu0 0
      %5727 = vmatprep.subr.bf16.mxu0 0
      %5728 = vmatpush2.bf16.msra.mxu0 0
      %5729 = vmatprep.subr.bf16.mxu0 0
      %5730 = vmatpush2.bf16.msra.mxu0 0
      %5731 = vmatprep.mubr.bf16.mxu0 0
      %5732 = vmatmul.mubr.bf16.gmra.mxu0 %v5447
      %v5733 = vpop.f32.mrf.mxu0
      %v5734 = vadd.f32 %v5613, %v5733
      %v5735 = vpop.f32.mrf.mxu0
      %v5736 = vadd.f32 %v5615, %v5735
      %v5737 = vpop.f32.mrf.mxu0
      %v5738 = vpop.f32.mrf.mxu0
      %5739 = vdwg.mxu0
      %s5740 = scalar_lea.vmem [#allocation2], 2
      %v5741 = vld [vmem:[%s5740] ss:$32 sm:$0x1]
      %v5742 = vld [vmem:[%s5740] ss:$32 sm:$0x2]
      %v5743 = vor.u32 %v5741, %v5742
      %v5744 = vld [vmem:[%s5740] ss:$32 sm:$0x4]
      %v5745 = vor.u32 %v5743, %v5744
      %v5746 = vld [vmem:[%s5740] ss:$32 sm:$0x8]
      %v5747 = vor.u32 %v5745, %v5746
      %v5748 = vld [vmem:[%s5740] ss:$32 sm:$0x10]
      %v5749 = vor.u32 %v5747, %v5748
      %v5750 = vld [vmem:[%s5740] ss:$32 sm:$0x20]
      %v5751 = vor.u32 %v5749, %v5750
      %v5752 = vld [vmem:[%s5740] ss:$32 sm:$0x40]
      %v5753 = vor.u32 %v5751, %v5752
      %v5754 = vld [vmem:[%s5740] ss:$32 sm:$0x80]
      %v5755 = vor.u32 %v5753, %v5754
      %v5756 = vpack.c.bf16 %v5755, %v5755
      %s5757 = scalar_lea.vmem %s5, 256
      %v5758 = vld [vmem:[%s5757] sm:$0xff]
      %v5759 = vld [vmem:[%s5757 + $0x8] sm:$0xff]
      %v5760 = vld [vmem:[%s5757 + $0x10] sm:$0xff]
      %v5761 = vld [vmem:[%s5757 + $0x18] sm:$0xff]
      %v5762 = vld [vmem:[%s5757 + $0x20] sm:$0xff]
      %v5763 = vld [vmem:[%s5757 + $0x28] sm:$0xff]
      %v5764 = vld [vmem:[%s5757 + $0x30] sm:$0xff]
      %v5765 = vld [vmem:[%s5757 + $0x38] sm:$0xff]
      %v5766 = vld [vmem:[%s5757 + $0x40] sm:$0xff]
      %v5767 = vld [vmem:[%s5757 + $0x48] sm:$0xff]
      %v5768 = vld [vmem:[%s5757 + $0x50] sm:$0xff]
      %v5769 = vld [vmem:[%s5757 + $0x58] sm:$0xff]
      %v5770 = vld [vmem:[%s5757 + $0x60] sm:$0xff]
      %v5771 = vld [vmem:[%s5757 + $0x68] sm:$0xff]
      %v5772 = vld [vmem:[%s5757 + $0x70] sm:$0xff]
      %v5773 = vld [vmem:[%s5757 + $0x78] sm:$0xff]
      %v5790 = vunpack.c.l.b16 %v5758
      %v5791 = vunpack.c.h.b16 %v5758
      %v5792 = vunpack.c.l.b16 %v5759
      %v5793 = vunpack.c.h.b16 %v5759
      %v5794 = vunpack.c.l.b16 %v5760
      %v5795 = vunpack.c.h.b16 %v5760
      %v5796 = vunpack.c.l.b16 %v5761
      %v5797 = vunpack.c.h.b16 %v5761
      %v5798 = vunpack.c.l.b16 %v5762
      %v5799 = vunpack.c.h.b16 %v5762
      %v5800 = vunpack.c.l.b16 %v5763
      %v5801 = vunpack.c.h.b16 %v5763
      %v5802 = vunpack.c.l.b16 %v5764
      %v5803 = vunpack.c.h.b16 %v5764
      %v5804 = vunpack.c.l.b16 %v5765
      %v5805 = vunpack.c.h.b16 %v5765
      %v5806 = vunpack.c.l.b16 %v5766
      %v5807 = vunpack.c.h.b16 %v5766
      %v5808 = vunpack.c.l.b16 %v5767
      %v5809 = vunpack.c.h.b16 %v5767
      %v5810 = vunpack.c.l.b16 %v5768
      %v5811 = vunpack.c.h.b16 %v5768
      %v5812 = vunpack.c.l.b16 %v5769
      %v5813 = vunpack.c.h.b16 %v5769
      %v5814 = vunpack.c.l.b16 %v5770
      %v5815 = vunpack.c.h.b16 %v5770
      %v5816 = vunpack.c.l.b16 %v5771
      %v5817 = vunpack.c.h.b16 %v5771
      %v5818 = vunpack.c.l.b16 %v5772
      %v5819 = vunpack.c.h.b16 %v5772
      %v5820 = vunpack.c.l.b16 %v5773
      %v5821 = vunpack.c.h.b16 %v5773
      %v5822 = vpack.c.b16 %v5792, %v5790
      %v5823 = vpack.c.b16 %v5793, %v5791
      %v5824 = vpack.c.b16 %v5796, %v5794
      %v5825 = vpack.c.b16 %v5797, %v5795
      %v5826 = vpack.c.b16 %v5800, %v5798
      %v5827 = vpack.c.b16 %v5801, %v5799
      %v5828 = vpack.c.b16 %v5804, %v5802
      %v5829 = vpack.c.b16 %v5805, %v5803
      %v5830 = vpack.c.b16 %v5808, %v5806
      %v5831 = vpack.c.b16 %v5809, %v5807
      %v5832 = vpack.c.b16 %v5812, %v5810
      %v5833 = vpack.c.b16 %v5813, %v5811
      %v5834 = vpack.c.b16 %v5816, %v5814
      %v5835 = vpack.c.b16 %v5817, %v5815
      %v5836 = vpack.c.b16 %v5820, %v5818
      %v5837 = vpack.c.b16 %v5821, %v5819
      %5854 = vmatprep.subr.bf16.mxu0 %v5837
      %5855 = vmatpush1.bf16.msra.mxu0 %v5836
      %5856 = vmatprep.subr.bf16.mxu0 %v5835
      %5857 = vmatpush1.bf16.msra.mxu0 %v5834
      %5858 = vmatprep.subr.bf16.mxu0 %v5833
      %5859 = vmatpush1.bf16.msra.mxu0 %v5832
      %5860 = vmatprep.subr.bf16.mxu0 %v5831
      %5861 = vmatpush1.bf16.msra.mxu0 %v5830
      %5862 = vmatprep.subr.bf16.mxu0 %v5829
      %5863 = vmatpush1.bf16.msra.mxu0 %v5828
      %5864 = vmatprep.subr.bf16.mxu0 %v5827
      %5865 = vmatpush1.bf16.msra.mxu0 %v5826
      %5866 = vmatprep.subr.bf16.mxu0 %v5825
      %5867 = vmatpush1.bf16.msra.mxu0 %v5824
      %5868 = vmatprep.subr.bf16.mxu0 %v5823
      %5869 = vmatpush1.bf16.msra.mxu0 %v5822
      %5870 = vmatprep.subr.bf16.mxu0 0
      %5871 = vmatpush2.bf16.msra.mxu0 0
      %5872 = vmatprep.subr.bf16.mxu0 0
      %5873 = vmatpush2.bf16.msra.mxu0 0
      %5874 = vmatprep.subr.bf16.mxu0 0
      %5875 = vmatpush2.bf16.msra.mxu0 0
      %5876 = vmatprep.subr.bf16.mxu0 0
      %5877 = vmatpush2.bf16.msra.mxu0 0
      %5878 = vmatprep.subr.bf16.mxu0 0
      %5879 = vmatpush2.bf16.msra.mxu0 0
      %5880 = vmatprep.subr.bf16.mxu0 0
      %5881 = vmatpush2.bf16.msra.mxu0 0
      %5882 = vmatprep.subr.bf16.mxu0 0
      %5883 = vmatpush2.bf16.msra.mxu0 0
      %5884 = vmatprep.subr.bf16.mxu0 0
      %5885 = vmatpush2.bf16.msra.mxu0 0
      %5886 = vmatprep.mubr.bf16.mxu0 0
      %5887 = vmatmul.mubr.bf16.gmra.mxu0 %v5756
      %v5888 = vpop.f32.mrf.mxu0
      %v5889 = vadd.f32 0.0, %v5888
      %v5890 = vpop.f32.mrf.mxu0
      %v5891 = vadd.f32 0.0, %v5890
      %v5892 = vpop.f32.mrf.mxu0
      %v5893 = vpop.f32.mrf.mxu0
      %5894 = vdwg.mxu0
      %v5895 = vadd.f32 %v5734, %v5889
      %v5896 = vadd.f32 %v5736, %v5891
      %s5897 = scalar_lea.vmem [#allocation2], 3
      %v5898 = vld [vmem:[%s5897] ss:$32 sm:$0x1]
      %v5899 = vld [vmem:[%s5897] ss:$32 sm:$0x2]
      %v5900 = vor.u32 %v5898, %v5899
      %v5901 = vld [vmem:[%s5897] ss:$32 sm:$0x4]
      %v5902 = vor.u32 %v5900, %v5901
      %v5903 = vld [vmem:[%s5897] ss:$32 sm:$0x8]
      %v5904 = vor.u32 %v5902, %v5903
      %v5905 = vld [vmem:[%s5897] ss:$32 sm:$0x10]
      %v5906 = vor.u32 %v5904, %v5905
      %v5907 = vld [vmem:[%s5897] ss:$32 sm:$0x20]
      %v5908 = vor.u32 %v5906, %v5907
      %v5909 = vld [vmem:[%s5897] ss:$32 sm:$0x40]
      %v5910 = vor.u32 %v5908, %v5909
      %v5911 = vld [vmem:[%s5897] ss:$32 sm:$0x80]
      %v5912 = vor.u32 %v5910, %v5911
      %v5913 = vpack.c.bf16 %v5912, %v5912
      %s5914 = scalar_lea.vmem %s5, 384
      %v5915 = vld [vmem:[%s5914] sm:$0xff]
      %v5916 = vld [vmem:[%s5914 + $0x8] sm:$0xff]
      %v5917 = vld [vmem:[%s5914 + $0x10] sm:$0xff]
      %v5918 = vld [vmem:[%s5914 + $0x18] sm:$0xff]
      %v5919 = vld [vmem:[%s5914 + $0x20] sm:$0xff]
      %v5920 = vld [vmem:[%s5914 + $0x28] sm:$0xff]
      %v5921 = vld [vmem:[%s5914 + $0x30] sm:$0xff]
      %v5922 = vld [vmem:[%s5914 + $0x38] sm:$0xff]
      %v5923 = vld [vmem:[%s5914 + $0x40] sm:$0xff]
      %v5924 = vld [vmem:[%s5914 + $0x48] sm:$0xff]
      %v5925 = vld [vmem:[%s5914 + $0x50] sm:$0xff]
      %v5926 = vld [vmem:[%s5914 + $0x58] sm:$0xff]
      %v5927 = vld [vmem:[%s5914 + $0x60] sm:$0xff]
      %v5928 = vld [vmem:[%s5914 + $0x68] sm:$0xff]
      %v5929 = vld [vmem:[%s5914 + $0x70] sm:$0xff]
      %v5930 = vld [vmem:[%s5914 + $0x78] sm:$0xff]
      %v5947 = vunpack.c.l.b16 %v5915
      %v5948 = vunpack.c.h.b16 %v5915
      %v5949 = vunpack.c.l.b16 %v5916
      %v5950 = vunpack.c.h.b16 %v5916
      %v5951 = vunpack.c.l.b16 %v5917
      %v5952 = vunpack.c.h.b16 %v5917
      %v5953 = vunpack.c.l.b16 %v5918
      %v5954 = vunpack.c.h.b16 %v5918
      %v5955 = vunpack.c.l.b16 %v5919
      %v5956 = vunpack.c.h.b16 %v5919
      %v5957 = vunpack.c.l.b16 %v5920
      %v5958 = vunpack.c.h.b16 %v5920
      %v5959 = vunpack.c.l.b16 %v5921
      %v5960 = vunpack.c.h.b16 %v5921
      %v5961 = vunpack.c.l.b16 %v5922
      %v5962 = vunpack.c.h.b16 %v5922
      %v5963 = vunpack.c.l.b16 %v5923
      %v5964 = vunpack.c.h.b16 %v5923
      %v5965 = vunpack.c.l.b16 %v5924
      %v5966 = vunpack.c.h.b16 %v5924
      %v5967 = vunpack.c.l.b16 %v5925
      %v5968 = vunpack.c.h.b16 %v5925
      %v5969 = vunpack.c.l.b16 %v5926
      %v5970 = vunpack.c.h.b16 %v5926
      %v5971 = vunpack.c.l.b16 %v5927
      %v5972 = vunpack.c.h.b16 %v5927
      %v5973 = vunpack.c.l.b16 %v5928
      %v5974 = vunpack.c.h.b16 %v5928
      %v5975 = vunpack.c.l.b16 %v5929
      %v5976 = vunpack.c.h.b16 %v5929
      %v5977 = vunpack.c.l.b16 %v5930
      %v5978 = vunpack.c.h.b16 %v5930
      %v5979 = vpack.c.b16 %v5949, %v5947
      %v5980 = vpack.c.b16 %v5950, %v5948
      %v5981 = vpack.c.b16 %v5953, %v5951
      %v5982 = vpack.c.b16 %v5954, %v5952
      %v5983 = vpack.c.b16 %v5957, %v5955
      %v5984 = vpack.c.b16 %v5958, %v5956
      %v5985 = vpack.c.b16 %v5961, %v5959
      %v5986 = vpack.c.b16 %v5962, %v5960
      %v5987 = vpack.c.b16 %v5965, %v5963
      %v5988 = vpack.c.b16 %v5966, %v5964
      %v5989 = vpack.c.b16 %v5969, %v5967
      %v5990 = vpack.c.b16 %v5970, %v5968
      %v5991 = vpack.c.b16 %v5973, %v5971
      %v5992 = vpack.c.b16 %v5974, %v5972
      %v5993 = vpack.c.b16 %v5977, %v5975
      %v5994 = vpack.c.b16 %v5978, %v5976
      %6011 = vmatprep.subr.bf16.mxu0 %v5994
      %6012 = vmatpush1.bf16.msra.mxu0 %v5993
      %6013 = vmatprep.subr.bf16.mxu0 %v5992
      %6014 = vmatpush1.bf16.msra.mxu0 %v5991
      %6015 = vmatprep.subr.bf16.mxu0 %v5990
      %6016 = vmatpush1.bf16.msra.mxu0 %v5989
      %6017 = vmatprep.subr.bf16.mxu0 %v5988
      %6018 = vmatpush1.bf16.msra.mxu0 %v5987
      %6019 = vmatprep.subr.bf16.mxu0 %v5986
      %6020 = vmatpush1.bf16.msra.mxu0 %v5985
      %6021 = vmatprep.subr.bf16.mxu0 %v5984
      %6022 = vmatpush1.bf16.msra.mxu0 %v5983
      %6023 = vmatprep.subr.bf16.mxu0 %v5982
      %6024 = vmatpush1.bf16.msra.mxu0 %v5981
      %6025 = vmatprep.subr.bf16.mxu0 %v5980
      %6026 = vmatpush1.bf16.msra.mxu0 %v5979
      %6027 = vmatprep.subr.bf16.mxu0 0
      %6028 = vmatpush2.bf16.msra.mxu0 0
      %6029 = vmatprep.subr.bf16.mxu0 0
      %6030 = vmatpush2.bf16.msra.mxu0 0
      %6031 = vmatprep.subr.bf16.mxu0 0
      %6032 = vmatpush2.bf16.msra.mxu0 0
      %6033 = vmatprep.subr.bf16.mxu0 0
      %6034 = vmatpush2.bf16.msra.mxu0 0
      %6035 = vmatprep.subr.bf16.mxu0 0
      %6036 = vmatpush2.bf16.msra.mxu0 0
      %6037 = vmatprep.subr.bf16.mxu0 0
      %6038 = vmatpush2.bf16.msra.mxu0 0
      %6039 = vmatprep.subr.bf16.mxu0 0
      %6040 = vmatpush2.bf16.msra.mxu0 0
      %6041 = vmatprep.subr.bf16.mxu0 0
      %6042 = vmatpush2.bf16.msra.mxu0 0
      %6043 = vmatprep.mubr.bf16.mxu0 0
      %6044 = vmatmul.mubr.bf16.gmra.mxu0 %v5913
      %v6045 = vpop.f32.mrf.mxu0
      %v6046 = vadd.f32 0.0, %v6045
      %v6047 = vpop.f32.mrf.mxu0
      %v6048 = vadd.f32 0.0, %v6047
      %v6049 = vpop.f32.mrf.mxu0
      %v6050 = vpop.f32.mrf.mxu0
      %6051 = vdwg.mxu0
      %v6052 = vadd.f32 %v5895, %v6046
      %v6053 = vadd.f32 %v5896, %v6048
      %s6054 = scalar_lea.vmem [#allocation2], 4
      %v6055 = vld [vmem:[%s6054] ss:$32 sm:$0x1]
      %v6056 = vld [vmem:[%s6054] ss:$32 sm:$0x2]
      %v6057 = vor.u32 %v6055, %v6056
      %v6058 = vld [vmem:[%s6054] ss:$32 sm:$0x4]
      %v6059 = vor.u32 %v6057, %v6058
      %v6060 = vld [vmem:[%s6054] ss:$32 sm:$0x8]
      %v6061 = vor.u32 %v6059, %v6060
      %v6062 = vld [vmem:[%s6054] ss:$32 sm:$0x10]
      %v6063 = vor.u32 %v6061, %v6062
      %v6064 = vld [vmem:[%s6054] ss:$32 sm:$0x20]
      %v6065 = vor.u32 %v6063, %v6064
      %v6066 = vld [vmem:[%s6054] ss:$32 sm:$0x40]
      %v6067 = vor.u32 %v6065, %v6066
      %v6068 = vld [vmem:[%s6054] ss:$32 sm:$0x80]
      %v6069 = vor.u32 %v6067, %v6068
      %v6070 = vpack.c.bf16 %v6069, %v6069
      %s6071 = scalar_lea.vmem %s5, 512
      %v6072 = vld [vmem:[%s6071] sm:$0xff]
      %v6073 = vld [vmem:[%s6071 + $0x8] sm:$0xff]
      %v6074 = vld [vmem:[%s6071 + $0x10] sm:$0xff]
      %v6075 = vld [vmem:[%s6071 + $0x18] sm:$0xff]
      %v6076 = vld [vmem:[%s6071 + $0x20] sm:$0xff]
      %v6077 = vld [vmem:[%s6071 + $0x28] sm:$0xff]
      %v6078 = vld [vmem:[%s6071 + $0x30] sm:$0xff]
      %v6079 = vld [vmem:[%s6071 + $0x38] sm:$0xff]
      %v6080 = vld [vmem:[%s6071 + $0x40] sm:$0xff]
      %v6081 = vld [vmem:[%s6071 + $0x48] sm:$0xff]
      %v6082 = vld [vmem:[%s6071 + $0x50] sm:$0xff]
      %v6083 = vld [vmem:[%s6071 + $0x58] sm:$0xff]
      %v6084 = vld [vmem:[%s6071 + $0x60] sm:$0xff]
      %v6085 = vld [vmem:[%s6071 + $0x68] sm:$0xff]
      %v6086 = vld [vmem:[%s6071 + $0x70] sm:$0xff]
      %v6087 = vld [vmem:[%s6071 + $0x78] sm:$0xff]
      %v6104 = vunpack.c.l.b16 %v6072
      %v6105 = vunpack.c.h.b16 %v6072
      %v6106 = vunpack.c.l.b16 %v6073
      %v6107 = vunpack.c.h.b16 %v6073
      %v6108 = vunpack.c.l.b16 %v6074
      %v6109 = vunpack.c.h.b16 %v6074
      %v6110 = vunpack.c.l.b16 %v6075
      %v6111 = vunpack.c.h.b16 %v6075
      %v6112 = vunpack.c.l.b16 %v6076
      %v6113 = vunpack.c.h.b16 %v6076
      %v6114 = vunpack.c.l.b16 %v6077
      %v6115 = vunpack.c.h.b16 %v6077
      %v6116 = vunpack.c.l.b16 %v6078
      %v6117 = vunpack.c.h.b16 %v6078
      %v6118 = vunpack.c.l.b16 %v6079
      %v6119 = vunpack.c.h.b16 %v6079
      %v6120 = vunpack.c.l.b16 %v6080
      %v6121 = vunpack.c.h.b16 %v6080
      %v6122 = vunpack.c.l.b16 %v6081
      %v6123 = vunpack.c.h.b16 %v6081
      %v6124 = vunpack.c.l.b16 %v6082
      %v6125 = vunpack.c.h.b16 %v6082
      %v6126 = vunpack.c.l.b16 %v6083
      %v6127 = vunpack.c.h.b16 %v6083
      %v6128 = vunpack.c.l.b16 %v6084
      %v6129 = vunpack.c.h.b16 %v6084
      %v6130 = vunpack.c.l.b16 %v6085
      %v6131 = vunpack.c.h.b16 %v6085
      %v6132 = vunpack.c.l.b16 %v6086
      %v6133 = vunpack.c.h.b16 %v6086
      %v6134 = vunpack.c.l.b16 %v6087
      %v6135 = vunpack.c.h.b16 %v6087
      %v6136 = vpack.c.b16 %v6106, %v6104
      %v6137 = vpack.c.b16 %v6107, %v6105
      %v6138 = vpack.c.b16 %v6110, %v6108
      %v6139 = vpack.c.b16 %v6111, %v6109
      %v6140 = vpack.c.b16 %v6114, %v6112
      %v6141 = vpack.c.b16 %v6115, %v6113
      %v6142 = vpack.c.b16 %v6118, %v6116
      %v6143 = vpack.c.b16 %v6119, %v6117
      %v6144 = vpack.c.b16 %v6122, %v6120
      %v6145 = vpack.c.b16 %v6123, %v6121
      %v6146 = vpack.c.b16 %v6126, %v6124
      %v6147 = vpack.c.b16 %v6127, %v6125
      %v6148 = vpack.c.b16 %v6130, %v6128
      %v6149 = vpack.c.b16 %v6131, %v6129
      %v6150 = vpack.c.b16 %v6134, %v6132
      %v6151 = vpack.c.b16 %v6135, %v6133
      %6168 = vmatprep.subr.bf16.mxu0 %v6151
      %6169 = vmatpush1.bf16.msra.mxu0 %v6150
      %6170 = vmatprep.subr.bf16.mxu0 %v6149
      %6171 = vmatpush1.bf16.msra.mxu0 %v6148
      %6172 = vmatprep.subr.bf16.mxu0 %v6147
      %6173 = vmatpush1.bf16.msra.mxu0 %v6146
      %6174 = vmatprep.subr.bf16.mxu0 %v6145
      %6175 = vmatpush1.bf16.msra.mxu0 %v6144
      %6176 = vmatprep.subr.bf16.mxu0 %v6143
      %6177 = vmatpush1.bf16.msra.mxu0 %v6142
      %6178 = vmatprep.subr.bf16.mxu0 %v6141
      %6179 = vmatpush1.bf16.msra.mxu0 %v6140
      %6180 = vmatprep.subr.bf16.mxu0 %v6139
      %6181 = vmatpush1.bf16.msra.mxu0 %v6138
      %6182 = vmatprep.subr.bf16.mxu0 %v6137
      %6183 = vmatpush1.bf16.msra.mxu0 %v6136
      %6184 = vmatprep.subr.bf16.mxu0 0
      %6185 = vmatpush2.bf16.msra.mxu0 0
      %6186 = vmatprep.subr.bf16.mxu0 0
      %6187 = vmatpush2.bf16.msra.mxu0 0
      %6188 = vmatprep.subr.bf16.mxu0 0
      %6189 = vmatpush2.bf16.msra.mxu0 0
      %6190 = vmatprep.subr.bf16.mxu0 0
      %6191 = vmatpush2.bf16.msra.mxu0 0
      %6192 = vmatprep.subr.bf16.mxu0 0
      %6193 = vmatpush2.bf16.msra.mxu0 0
      %6194 = vmatprep.subr.bf16.mxu0 0
      %6195 = vmatpush2.bf16.msra.mxu0 0
      %6196 = vmatprep.subr.bf16.mxu0 0
      %6197 = vmatpush2.bf16.msra.mxu0 0
      %6198 = vmatprep.subr.bf16.mxu0 0
      %6199 = vmatpush2.bf16.msra.mxu0 0
      %6200 = vmatprep.mubr.bf16.mxu0 0
      %6201 = vmatmul.mubr.bf16.gmra.mxu0 %v6070
      %v6202 = vpop.f32.mrf.mxu0
      %v6203 = vadd.f32 0.0, %v6202
      %v6204 = vpop.f32.mrf.mxu0
      %v6205 = vadd.f32 0.0, %v6204
      %v6206 = vpop.f32.mrf.mxu0
      %v6207 = vpop.f32.mrf.mxu0
      %6208 = vdwg.mxu0
      %v6209 = vadd.f32 %v6052, %v6203
      %v6210 = vadd.f32 %v6053, %v6205
      %s6211 = scalar_lea.vmem [#allocation2], 5
      %v6212 = vld [vmem:[%s6211] ss:$32 sm:$0x1]
      %v6213 = vld [vmem:[%s6211] ss:$32 sm:$0x2]
      %v6214 = vor.u32 %v6212, %v6213
      %v6215 = vld [vmem:[%s6211] ss:$32 sm:$0x4]
      %v6216 = vor.u32 %v6214, %v6215
      %v6217 = vld [vmem:[%s6211] ss:$32 sm:$0x8]
      %v6218 = vor.u32 %v6216, %v6217
      %v6219 = vld [vmem:[%s6211] ss:$32 sm:$0x10]
      %v6220 = vor.u32 %v6218, %v6219
      %v6221 = vld [vmem:[%s6211] ss:$32 sm:$0x20]
      %v6222 = vor.u32 %v6220, %v6221
      %v6223 = vld [vmem:[%s6211] ss:$32 sm:$0x40]
      %v6224 = vor.u32 %v6222, %v6223
      %v6225 = vld [vmem:[%s6211] ss:$32 sm:$0x80]
      %v6226 = vor.u32 %v6224, %v6225
      %v6227 = vpack.c.bf16 %v6226, %v6226
      %s6228 = scalar_lea.vmem %s5, 640
      %v6229 = vld [vmem:[%s6228] sm:$0xff]
      %v6230 = vld [vmem:[%s6228 + $0x8] sm:$0xff]
      %v6231 = vld [vmem:[%s6228 + $0x10] sm:$0xff]
      %v6232 = vld [vmem:[%s6228 + $0x18] sm:$0xff]
      %v6233 = vld [vmem:[%s6228 + $0x20] sm:$0xff]
      %v6234 = vld [vmem:[%s6228 + $0x28] sm:$0xff]
      %v6235 = vld [vmem:[%s6228 + $0x30] sm:$0xff]
      %v6236 = vld [vmem:[%s6228 + $0x38] sm:$0xff]
      %v6237 = vld [vmem:[%s6228 + $0x40] sm:$0xff]
      %v6238 = vld [vmem:[%s6228 + $0x48] sm:$0xff]
      %v6239 = vld [vmem:[%s6228 + $0x50] sm:$0xff]
      %v6240 = vld [vmem:[%s6228 + $0x58] sm:$0xff]
      %v6241 = vld [vmem:[%s6228 + $0x60] sm:$0xff]
      %v6242 = vld [vmem:[%s6228 + $0x68] sm:$0xff]
      %v6243 = vld [vmem:[%s6228 + $0x70] sm:$0xff]
      %v6244 = vld [vmem:[%s6228 + $0x78] sm:$0xff]
      %v6261 = vunpack.c.l.b16 %v6229
      %v6262 = vunpack.c.h.b16 %v6229
      %v6263 = vunpack.c.l.b16 %v6230
      %v6264 = vunpack.c.h.b16 %v6230
      %v6265 = vunpack.c.l.b16 %v6231
      %v6266 = vunpack.c.h.b16 %v6231
      %v6267 = vunpack.c.l.b16 %v6232
      %v6268 = vunpack.c.h.b16 %v6232
      %v6269 = vunpack.c.l.b16 %v6233
      %v6270 = vunpack.c.h.b16 %v6233
      %v6271 = vunpack.c.l.b16 %v6234
      %v6272 = vunpack.c.h.b16 %v6234
      %v6273 = vunpack.c.l.b16 %v6235
      %v6274 = vunpack.c.h.b16 %v6235
      %v6275 = vunpack.c.l.b16 %v6236
      %v6276 = vunpack.c.h.b16 %v6236
      %v6277 = vunpack.c.l.b16 %v6237
      %v6278 = vunpack.c.h.b16 %v6237
      %v6279 = vunpack.c.l.b16 %v6238
      %v6280 = vunpack.c.h.b16 %v6238
      %v6281 = vunpack.c.l.b16 %v6239
      %v6282 = vunpack.c.h.b16 %v6239
      %v6283 = vunpack.c.l.b16 %v6240
      %v6284 = vunpack.c.h.b16 %v6240
      %v6285 = vunpack.c.l.b16 %v6241
      %v6286 = vunpack.c.h.b16 %v6241
      %v6287 = vunpack.c.l.b16 %v6242
      %v6288 = vunpack.c.h.b16 %v6242
      %v6289 = vunpack.c.l.b16 %v6243
      %v6290 = vunpack.c.h.b16 %v6243
      %v6291 = vunpack.c.l.b16 %v6244
      %v6292 = vunpack.c.h.b16 %v6244
      %v6293 = vpack.c.b16 %v6263, %v6261
      %v6294 = vpack.c.b16 %v6264, %v6262
      %v6295 = vpack.c.b16 %v6267, %v6265
      %v6296 = vpack.c.b16 %v6268, %v6266
      %v6297 = vpack.c.b16 %v6271, %v6269
      %v6298 = vpack.c.b16 %v6272, %v6270
      %v6299 = vpack.c.b16 %v6275, %v6273
      %v6300 = vpack.c.b16 %v6276, %v6274
      %v6301 = vpack.c.b16 %v6279, %v6277
      %v6302 = vpack.c.b16 %v6280, %v6278
      %v6303 = vpack.c.b16 %v6283, %v6281
      %v6304 = vpack.c.b16 %v6284, %v6282
      %v6305 = vpack.c.b16 %v6287, %v6285
      %v6306 = vpack.c.b16 %v6288, %v6286
      %v6307 = vpack.c.b16 %v6291, %v6289
      %v6308 = vpack.c.b16 %v6292, %v6290
      %6325 = vmatprep.subr.bf16.mxu0 %v6308
      %6326 = vmatpush1.bf16.msra.mxu0 %v6307
      %6327 = vmatprep.subr.bf16.mxu0 %v6306
      %6328 = vmatpush1.bf16.msra.mxu0 %v6305
      %6329 = vmatprep.subr.bf16.mxu0 %v6304
      %6330 = vmatpush1.bf16.msra.mxu0 %v6303
      %6331 = vmatprep.subr.bf16.mxu0 %v6302
      %6332 = vmatpush1.bf16.msra.mxu0 %v6301
      %6333 = vmatprep.subr.bf16.mxu0 %v6300
      %6334 = vmatpush1.bf16.msra.mxu0 %v6299
      %6335 = vmatprep.subr.bf16.mxu0 %v6298
      %6336 = vmatpush1.bf16.msra.mxu0 %v6297
      %6337 = vmatprep.subr.bf16.mxu0 %v6296
      %6338 = vmatpush1.bf16.msra.mxu0 %v6295
      %6339 = vmatprep.subr.bf16.mxu0 %v6294
      %6340 = vmatpush1.bf16.msra.mxu0 %v6293
      %6341 = vmatprep.subr.bf16.mxu0 0
      %6342 = vmatpush2.bf16.msra.mxu0 0
      %6343 = vmatprep.subr.bf16.mxu0 0
      %6344 = vmatpush2.bf16.msra.mxu0 0
      %6345 = vmatprep.subr.bf16.mxu0 0
      %6346 = vmatpush2.bf16.msra.mxu0 0
      %6347 = vmatprep.subr.bf16.mxu0 0
      %6348 = vmatpush2.bf16.msra.mxu0 0
      %6349 = vmatprep.subr.bf16.mxu0 0
      %6350 = vmatpush2.bf16.msra.mxu0 0
      %6351 = vmatprep.subr.bf16.mxu0 0
      %6352 = vmatpush2.bf16.msra.mxu0 0
      %6353 = vmatprep.subr.bf16.mxu0 0
      %6354 = vmatpush2.bf16.msra.mxu0 0
      %6355 = vmatprep.subr.bf16.mxu0 0
      %6356 = vmatpush2.bf16.msra.mxu0 0
      %6357 = vmatprep.mubr.bf16.mxu0 0
      %6358 = vmatmul.mubr.bf16.gmra.mxu0 %v6227
      %v6359 = vpop.f32.mrf.mxu0
      %v6360 = vadd.f32 0.0, %v6359
      %v6361 = vpop.f32.mrf.mxu0
      %v6362 = vadd.f32 0.0, %v6361
      %v6363 = vpop.f32.mrf.mxu0
      %v6364 = vpop.f32.mrf.mxu0
      %6365 = vdwg.mxu0
      %v6366 = vadd.f32 %v6209, %v6360
      %v6367 = vadd.f32 %v6210, %v6362
      %s6368 = scalar_lea.vmem [#allocation2], 6
      %v6369 = vld [vmem:[%s6368] ss:$32 sm:$0x1]
      %v6370 = vld [vmem:[%s6368] ss:$32 sm:$0x2]
      %v6371 = vor.u32 %v6369, %v6370
      %v6372 = vld [vmem:[%s6368] ss:$32 sm:$0x4]
      %v6373 = vor.u32 %v6371, %v6372
      %v6374 = vld [vmem:[%s6368] ss:$32 sm:$0x8]
      %v6375 = vor.u32 %v6373, %v6374
      %v6376 = vld [vmem:[%s6368] ss:$32 sm:$0x10]
      %v6377 = vor.u32 %v6375, %v6376
      %v6378 = vld [vmem:[%s6368] ss:$32 sm:$0x20]
      %v6379 = vor.u32 %v6377, %v6378
      %v6380 = vld [vmem:[%s6368] ss:$32 sm:$0x40]
      %v6381 = vor.u32 %v6379, %v6380
      %v6382 = vld [vmem:[%s6368] ss:$32 sm:$0x80]
      %v6383 = vor.u32 %v6381, %v6382
      %v6384 = vpack.c.bf16 %v6383, %v6383
      %s6385 = scalar_lea.vmem %s5, 768
      %v6386 = vld [vmem:[%s6385] sm:$0xff]
      %v6387 = vld [vmem:[%s6385 + $0x8] sm:$0xff]
      %v6388 = vld [vmem:[%s6385 + $0x10] sm:$0xff]
      %v6389 = vld [vmem:[%s6385 + $0x18] sm:$0xff]
      %v6390 = vld [vmem:[%s6385 + $0x20] sm:$0xff]
      %v6391 = vld [vmem:[%s6385 + $0x28] sm:$0xff]
      %v6392 = vld [vmem:[%s6385 + $0x30] sm:$0xff]
      %v6393 = vld [vmem:[%s6385 + $0x38] sm:$0xff]
      %v6394 = vld [vmem:[%s6385 + $0x40] sm:$0xff]
      %v6395 = vld [vmem:[%s6385 + $0x48] sm:$0xff]
      %v6396 = vld [vmem:[%s6385 + $0x50] sm:$0xff]
      %v6397 = vld [vmem:[%s6385 + $0x58] sm:$0xff]
      %v6398 = vld [vmem:[%s6385 + $0x60] sm:$0xff]
      %v6399 = vld [vmem:[%s6385 + $0x68] sm:$0xff]
      %v6400 = vld [vmem:[%s6385 + $0x70] sm:$0xff]
      %v6401 = vld [vmem:[%s6385 + $0x78] sm:$0xff]
      %v6418 = vunpack.c.l.b16 %v6386
      %v6419 = vunpack.c.h.b16 %v6386
      %v6420 = vunpack.c.l.b16 %v6387
      %v6421 = vunpack.c.h.b16 %v6387
      %v6422 = vunpack.c.l.b16 %v6388
      %v6423 = vunpack.c.h.b16 %v6388
      %v6424 = vunpack.c.l.b16 %v6389
      %v6425 = vunpack.c.h.b16 %v6389
      %v6426 = vunpack.c.l.b16 %v6390
      %v6427 = vunpack.c.h.b16 %v6390
      %v6428 = vunpack.c.l.b16 %v6391
      %v6429 = vunpack.c.h.b16 %v6391
      %v6430 = vunpack.c.l.b16 %v6392
      %v6431 = vunpack.c.h.b16 %v6392
      %v6432 = vunpack.c.l.b16 %v6393
      %v6433 = vunpack.c.h.b16 %v6393
      %v6434 = vunpack.c.l.b16 %v6394
      %v6435 = vunpack.c.h.b16 %v6394
      %v6436 = vunpack.c.l.b16 %v6395
      %v6437 = vunpack.c.h.b16 %v6395
      %v6438 = vunpack.c.l.b16 %v6396
      %v6439 = vunpack.c.h.b16 %v6396
      %v6440 = vunpack.c.l.b16 %v6397
      %v6441 = vunpack.c.h.b16 %v6397
      %v6442 = vunpack.c.l.b16 %v6398
      %v6443 = vunpack.c.h.b16 %v6398
      %v6444 = vunpack.c.l.b16 %v6399
      %v6445 = vunpack.c.h.b16 %v6399
      %v6446 = vunpack.c.l.b16 %v6400
      %v6447 = vunpack.c.h.b16 %v6400
      %v6448 = vunpack.c.l.b16 %v6401
      %v6449 = vunpack.c.h.b16 %v6401
      %v6450 = vpack.c.b16 %v6420, %v6418
      %v6451 = vpack.c.b16 %v6421, %v6419
      %v6452 = vpack.c.b16 %v6424, %v6422
      %v6453 = vpack.c.b16 %v6425, %v6423
      %v6454 = vpack.c.b16 %v6428, %v6426
      %v6455 = vpack.c.b16 %v6429, %v6427
      %v6456 = vpack.c.b16 %v6432, %v6430
      %v6457 = vpack.c.b16 %v6433, %v6431
      %v6458 = vpack.c.b16 %v6436, %v6434
      %v6459 = vpack.c.b16 %v6437, %v6435
      %v6460 = vpack.c.b16 %v6440, %v6438
      %v6461 = vpack.c.b16 %v6441, %v6439
      %v6462 = vpack.c.b16 %v6444, %v6442
      %v6463 = vpack.c.b16 %v6445, %v6443
      %v6464 = vpack.c.b16 %v6448, %v6446
      %v6465 = vpack.c.b16 %v6449, %v6447
      %6482 = vmatprep.subr.bf16.mxu0 %v6465
      %6483 = vmatpush1.bf16.msra.mxu0 %v6464
      %6484 = vmatprep.subr.bf16.mxu0 %v6463
      %6485 = vmatpush1.bf16.msra.mxu0 %v6462
      %6486 = vmatprep.subr.bf16.mxu0 %v6461
      %6487 = vmatpush1.bf16.msra.mxu0 %v6460
      %6488 = vmatprep.subr.bf16.mxu0 %v6459
      %6489 = vmatpush1.bf16.msra.mxu0 %v6458
      %6490 = vmatprep.subr.bf16.mxu0 %v6457
      %6491 = vmatpush1.bf16.msra.mxu0 %v6456
      %6492 = vmatprep.subr.bf16.mxu0 %v6455
      %6493 = vmatpush1.bf16.msra.mxu0 %v6454
      %6494 = vmatprep.subr.bf16.mxu0 %v6453
      %6495 = vmatpush1.bf16.msra.mxu0 %v6452
      %6496 = vmatprep.subr.bf16.mxu0 %v6451
      %6497 = vmatpush1.bf16.msra.mxu0 %v6450
      %6498 = vmatprep.subr.bf16.mxu0 0
      %6499 = vmatpush2.bf16.msra.mxu0 0
      %6500 = vmatprep.subr.bf16.mxu0 0
      %6501 = vmatpush2.bf16.msra.mxu0 0
      %6502 = vmatprep.subr.bf16.mxu0 0
      %6503 = vmatpush2.bf16.msra.mxu0 0
      %6504 = vmatprep.subr.bf16.mxu0 0
      %6505 = vmatpush2.bf16.msra.mxu0 0
      %6506 = vmatprep.subr.bf16.mxu0 0
      %6507 = vmatpush2.bf16.msra.mxu0 0
      %6508 = vmatprep.subr.bf16.mxu0 0
      %6509 = vmatpush2.bf16.msra.mxu0 0
      %6510 = vmatprep.subr.bf16.mxu0 0
      %6511 = vmatpush2.bf16.msra.mxu0 0
      %6512 = vmatprep.subr.bf16.mxu0 0
      %6513 = vmatpush2.bf16.msra.mxu0 0
      %6514 = vmatprep.mubr.bf16.mxu0 0
      %6515 = vmatmul.mubr.bf16.gmra.mxu0 %v6384
      %v6516 = vpop.f32.mrf.mxu0
      %v6517 = vadd.f32 0.0, %v6516
      %v6518 = vpop.f32.mrf.mxu0
      %v6519 = vadd.f32 0.0, %v6518
      %v6520 = vpop.f32.mrf.mxu0
      %v6521 = vpop.f32.mrf.mxu0
      %6522 = vdwg.mxu0
      %v6523 = vadd.f32 %v6366, %v6517
      %v6524 = vadd.f32 %v6367, %v6519
      %s6525 = scalar_lea.vmem [#allocation2], 7
      %v6526 = vld [vmem:[%s6525] ss:$32 sm:$0x1]
      %v6527 = vld [vmem:[%s6525] ss:$32 sm:$0x2]
      %v6528 = vor.u32 %v6526, %v6527
      %v6529 = vld [vmem:[%s6525] ss:$32 sm:$0x4]
      %v6530 = vor.u32 %v6528, %v6529
      %v6531 = vld [vmem:[%s6525] ss:$32 sm:$0x8]
      %v6532 = vor.u32 %v6530, %v6531
      %v6533 = vld [vmem:[%s6525] ss:$32 sm:$0x10]
      %v6534 = vor.u32 %v6532, %v6533
      %v6535 = vld [vmem:[%s6525] ss:$32 sm:$0x20]
      %v6536 = vor.u32 %v6534, %v6535
      %v6537 = vld [vmem:[%s6525] ss:$32 sm:$0x40]
      %v6538 = vor.u32 %v6536, %v6537
      %v6539 = vld [vmem:[%s6525] ss:$32 sm:$0x80]
      %v6540 = vor.u32 %v6538, %v6539
      %v6541 = vpack.c.bf16 %v6540, %v6540
      %s6542 = scalar_lea.vmem %s5, 896
      %v6543 = vld [vmem:[%s6542] sm:$0xff]
      %v6544 = vld [vmem:[%s6542 + $0x8] sm:$0xff]
      %v6545 = vld [vmem:[%s6542 + $0x10] sm:$0xff]
      %v6546 = vld [vmem:[%s6542 + $0x18] sm:$0xff]
      %v6547 = vld [vmem:[%s6542 + $0x20] sm:$0xff]
      %v6548 = vld [vmem:[%s6542 + $0x28] sm:$0xff]
      %v6549 = vld [vmem:[%s6542 + $0x30] sm:$0xff]
      %v6550 = vld [vmem:[%s6542 + $0x38] sm:$0xff]
      %v6551 = vld [vmem:[%s6542 + $0x40] sm:$0xff]
      %v6552 = vld [vmem:[%s6542 + $0x48] sm:$0xff]
      %v6553 = vld [vmem:[%s6542 + $0x50] sm:$0xff]
      %v6554 = vld [vmem:[%s6542 + $0x58] sm:$0xff]
      %v6555 = vld [vmem:[%s6542 + $0x60] sm:$0xff]
      %v6556 = vld [vmem:[%s6542 + $0x68] sm:$0xff]
      %v6557 = vld [vmem:[%s6542 + $0x70] sm:$0xff]
      %v6558 = vld [vmem:[%s6542 + $0x78] sm:$0xff]
      %v6575 = vunpack.c.l.b16 %v6543
      %v6576 = vunpack.c.h.b16 %v6543
      %v6577 = vunpack.c.l.b16 %v6544
      %v6578 = vunpack.c.h.b16 %v6544
      %v6579 = vunpack.c.l.b16 %v6545
      %v6580 = vunpack.c.h.b16 %v6545
      %v6581 = vunpack.c.l.b16 %v6546
      %v6582 = vunpack.c.h.b16 %v6546
      %v6583 = vunpack.c.l.b16 %v6547
      %v6584 = vunpack.c.h.b16 %v6547
      %v6585 = vunpack.c.l.b16 %v6548
      %v6586 = vunpack.c.h.b16 %v6548
      %v6587 = vunpack.c.l.b16 %v6549
      %v6588 = vunpack.c.h.b16 %v6549
      %v6589 = vunpack.c.l.b16 %v6550
      %v6590 = vunpack.c.h.b16 %v6550
      %v6591 = vunpack.c.l.b16 %v6551
      %v6592 = vunpack.c.h.b16 %v6551
      %v6593 = vunpack.c.l.b16 %v6552
      %v6594 = vunpack.c.h.b16 %v6552
      %v6595 = vunpack.c.l.b16 %v6553
      %v6596 = vunpack.c.h.b16 %v6553
      %v6597 = vunpack.c.l.b16 %v6554
      %v6598 = vunpack.c.h.b16 %v6554
      %v6599 = vunpack.c.l.b16 %v6555
      %v6600 = vunpack.c.h.b16 %v6555
      %v6601 = vunpack.c.l.b16 %v6556
      %v6602 = vunpack.c.h.b16 %v6556
      %v6603 = vunpack.c.l.b16 %v6557
      %v6604 = vunpack.c.h.b16 %v6557
      %v6605 = vunpack.c.l.b16 %v6558
      %v6606 = vunpack.c.h.b16 %v6558
      %v6607 = vpack.c.b16 %v6577, %v6575
      %v6608 = vpack.c.b16 %v6578, %v6576
      %v6609 = vpack.c.b16 %v6581, %v6579
      %v6610 = vpack.c.b16 %v6582, %v6580
      %v6611 = vpack.c.b16 %v6585, %v6583
      %v6612 = vpack.c.b16 %v6586, %v6584
      %v6613 = vpack.c.b16 %v6589, %v6587
      %v6614 = vpack.c.b16 %v6590, %v6588
      %v6615 = vpack.c.b16 %v6593, %v6591
      %v6616 = vpack.c.b16 %v6594, %v6592
      %v6617 = vpack.c.b16 %v6597, %v6595
      %v6618 = vpack.c.b16 %v6598, %v6596
      %v6619 = vpack.c.b16 %v6601, %v6599
      %v6620 = vpack.c.b16 %v6602, %v6600
      %v6621 = vpack.c.b16 %v6605, %v6603
      %v6622 = vpack.c.b16 %v6606, %v6604
      %6639 = vmatprep.subr.bf16.mxu0 %v6622
      %6640 = vmatpush1.bf16.msra.mxu0 %v6621
      %6641 = vmatprep.subr.bf16.mxu0 %v6620
      %6642 = vmatpush1.bf16.msra.mxu0 %v6619
      %6643 = vmatprep.subr.bf16.mxu0 %v6618
      %6644 = vmatpush1.bf16.msra.mxu0 %v6617
      %6645 = vmatprep.subr.bf16.mxu0 %v6616
      %6646 = vmatpush1.bf16.msra.mxu0 %v6615
      %6647 = vmatprep.subr.bf16.mxu0 %v6614
      %6648 = vmatpush1.bf16.msra.mxu0 %v6613
      %6649 = vmatprep.subr.bf16.mxu0 %v6612
      %6650 = vmatpush1.bf16.msra.mxu0 %v6611
      %6651 = vmatprep.subr.bf16.mxu0 %v6610
      %6652 = vmatpush1.bf16.msra.mxu0 %v6609
      %6653 = vmatprep.subr.bf16.mxu0 %v6608
      %6654 = vmatpush1.bf16.msra.mxu0 %v6607
      %6655 = vmatprep.subr.bf16.mxu0 0
      %6656 = vmatpush2.bf16.msra.mxu0 0
      %6657 = vmatprep.subr.bf16.mxu0 0
      %6658 = vmatpush2.bf16.msra.mxu0 0
      %6659 = vmatprep.subr.bf16.mxu0 0
      %6660 = vmatpush2.bf16.msra.mxu0 0
      %6661 = vmatprep.subr.bf16.mxu0 0
      %6662 = vmatpush2.bf16.msra.mxu0 0
      %6663 = vmatprep.subr.bf16.mxu0 0
      %6664 = vmatpush2.bf16.msra.mxu0 0
      %6665 = vmatprep.subr.bf16.mxu0 0
      %6666 = vmatpush2.bf16.msra.mxu0 0
      %6667 = vmatprep.subr.bf16.mxu0 0
      %6668 = vmatpush2.bf16.msra.mxu0 0
      %6669 = vmatprep.subr.bf16.mxu0 0
      %6670 = vmatpush2.bf16.msra.mxu0 0
      %6671 = vmatprep.mubr.bf16.mxu0 0
      %6672 = vmatmul.mubr.bf16.gmra.mxu0 %v6541
      %v6673 = vpop.f32.mrf.mxu0
      %v6674 = vadd.f32 0.0, %v6673
      %v6675 = vpop.f32.mrf.mxu0
      %v6676 = vadd.f32 0.0, %v6675
      %v6677 = vpop.f32.mrf.mxu0
      %v6678 = vpop.f32.mrf.mxu0
      %6679 = vdwg.mxu0
      %v6680 = vadd.f32 %v6523, %v6674
      %v6681 = vadd.f32 %v6524, %v6676
      %s6682 = scalar_lea.vmem [#allocation2], 8
      %v6683 = vld [vmem:[%s6682] ss:$32 sm:$0x1]
      %v6684 = vld [vmem:[%s6682] ss:$32 sm:$0x2]
      %v6685 = vor.u32 %v6683, %v6684
      %v6686 = vld [vmem:[%s6682] ss:$32 sm:$0x4]
      %v6687 = vor.u32 %v6685, %v6686
      %v6688 = vld [vmem:[%s6682] ss:$32 sm:$0x8]
      %v6689 = vor.u32 %v6687, %v6688
      %v6690 = vld [vmem:[%s6682] ss:$32 sm:$0x10]
      %v6691 = vor.u32 %v6689, %v6690
      %v6692 = vld [vmem:[%s6682] ss:$32 sm:$0x20]
      %v6693 = vor.u32 %v6691, %v6692
      %v6694 = vld [vmem:[%s6682] ss:$32 sm:$0x40]
      %v6695 = vor.u32 %v6693, %v6694
      %v6696 = vld [vmem:[%s6682] ss:$32 sm:$0x80]
      %v6697 = vor.u32 %v6695, %v6696
      %v6698 = vpack.c.bf16 %v6697, %v6697
      %s6699 = scalar_lea.vmem %s5, 1024
      %v6700 = vld [vmem:[%s6699] sm:$0xff]
      %v6701 = vld [vmem:[%s6699 + $0x8] sm:$0xff]
      %v6702 = vld [vmem:[%s6699 + $0x10] sm:$0xff]
      %v6703 = vld [vmem:[%s6699 + $0x18] sm:$0xff]
      %v6704 = vld [vmem:[%s6699 + $0x20] sm:$0xff]
      %v6705 = vld [vmem:[%s6699 + $0x28] sm:$0xff]
      %v6706 = vld [vmem:[%s6699 + $0x30] sm:$0xff]
      %v6707 = vld [vmem:[%s6699 + $0x38] sm:$0xff]
      %v6708 = vld [vmem:[%s6699 + $0x40] sm:$0xff]
      %v6709 = vld [vmem:[%s6699 + $0x48] sm:$0xff]
      %v6710 = vld [vmem:[%s6699 + $0x50] sm:$0xff]
      %v6711 = vld [vmem:[%s6699 + $0x58] sm:$0xff]
      %v6712 = vld [vmem:[%s6699 + $0x60] sm:$0xff]
      %v6713 = vld [vmem:[%s6699 + $0x68] sm:$0xff]
      %v6714 = vld [vmem:[%s6699 + $0x70] sm:$0xff]
      %v6715 = vld [vmem:[%s6699 + $0x78] sm:$0xff]
      %v6732 = vunpack.c.l.b16 %v6700
      %v6733 = vunpack.c.h.b16 %v6700
      %v6734 = vunpack.c.l.b16 %v6701
      %v6735 = vunpack.c.h.b16 %v6701
      %v6736 = vunpack.c.l.b16 %v6702
      %v6737 = vunpack.c.h.b16 %v6702
      %v6738 = vunpack.c.l.b16 %v6703
      %v6739 = vunpack.c.h.b16 %v6703
      %v6740 = vunpack.c.l.b16 %v6704
      %v6741 = vunpack.c.h.b16 %v6704
      %v6742 = vunpack.c.l.b16 %v6705
      %v6743 = vunpack.c.h.b16 %v6705
      %v6744 = vunpack.c.l.b16 %v6706
      %v6745 = vunpack.c.h.b16 %v6706
      %v6746 = vunpack.c.l.b16 %v6707
      %v6747 = vunpack.c.h.b16 %v6707
      %v6748 = vunpack.c.l.b16 %v6708
      %v6749 = vunpack.c.h.b16 %v6708
      %v6750 = vunpack.c.l.b16 %v6709
      %v6751 = vunpack.c.h.b16 %v6709
      %v6752 = vunpack.c.l.b16 %v6710
      %v6753 = vunpack.c.h.b16 %v6710
      %v6754 = vunpack.c.l.b16 %v6711
      %v6755 = vunpack.c.h.b16 %v6711
      %v6756 = vunpack.c.l.b16 %v6712
      %v6757 = vunpack.c.h.b16 %v6712
      %v6758 = vunpack.c.l.b16 %v6713
      %v6759 = vunpack.c.h.b16 %v6713
      %v6760 = vunpack.c.l.b16 %v6714
      %v6761 = vunpack.c.h.b16 %v6714
      %v6762 = vunpack.c.l.b16 %v6715
      %v6763 = vunpack.c.h.b16 %v6715
      %v6764 = vpack.c.b16 %v6734, %v6732
      %v6765 = vpack.c.b16 %v6735, %v6733
      %v6766 = vpack.c.b16 %v6738, %v6736
      %v6767 = vpack.c.b16 %v6739, %v6737
      %v6768 = vpack.c.b16 %v6742, %v6740
      %v6769 = vpack.c.b16 %v6743, %v6741
      %v6770 = vpack.c.b16 %v6746, %v6744
      %v6771 = vpack.c.b16 %v6747, %v6745
      %v6772 = vpack.c.b16 %v6750, %v6748
      %v6773 = vpack.c.b16 %v6751, %v6749
      %v6774 = vpack.c.b16 %v6754, %v6752
      %v6775 = vpack.c.b16 %v6755, %v6753
      %v6776 = vpack.c.b16 %v6758, %v6756
      %v6777 = vpack.c.b16 %v6759, %v6757
      %v6778 = vpack.c.b16 %v6762, %v6760
      %v6779 = vpack.c.b16 %v6763, %v6761
      %6796 = vmatprep.subr.bf16.mxu0 %v6779
      %6797 = vmatpush1.bf16.msra.mxu0 %v6778
      %6798 = vmatprep.subr.bf16.mxu0 %v6777
      %6799 = vmatpush1.bf16.msra.mxu0 %v6776
      %6800 = vmatprep.subr.bf16.mxu0 %v6775
      %6801 = vmatpush1.bf16.msra.mxu0 %v6774
      %6802 = vmatprep.subr.bf16.mxu0 %v6773
      %6803 = vmatpush1.bf16.msra.mxu0 %v6772
      %6804 = vmatprep.subr.bf16.mxu0 %v6771
      %6805 = vmatpush1.bf16.msra.mxu0 %v6770
      %6806 = vmatprep.subr.bf16.mxu0 %v6769
      %6807 = vmatpush1.bf16.msra.mxu0 %v6768
      %6808 = vmatprep.subr.bf16.mxu0 %v6767
      %6809 = vmatpush1.bf16.msra.mxu0 %v6766
      %6810 = vmatprep.subr.bf16.mxu0 %v6765
      %6811 = vmatpush1.bf16.msra.mxu0 %v6764
      %6812 = vmatprep.subr.bf16.mxu0 0
      %6813 = vmatpush2.bf16.msra.mxu0 0
      %6814 = vmatprep.subr.bf16.mxu0 0
      %6815 = vmatpush2.bf16.msra.mxu0 0
      %6816 = vmatprep.subr.bf16.mxu0 0
      %6817 = vmatpush2.bf16.msra.mxu0 0
      %6818 = vmatprep.subr.bf16.mxu0 0
      %6819 = vmatpush2.bf16.msra.mxu0 0
      %6820 = vmatprep.subr.bf16.mxu0 0
      %6821 = vmatpush2.bf16.msra.mxu0 0
      %6822 = vmatprep.subr.bf16.mxu0 0
      %6823 = vmatpush2.bf16.msra.mxu0 0
      %6824 = vmatprep.subr.bf16.mxu0 0
      %6825 = vmatpush2.bf16.msra.mxu0 0
      %6826 = vmatprep.subr.bf16.mxu0 0
      %6827 = vmatpush2.bf16.msra.mxu0 0
      %6828 = vmatprep.mubr.bf16.mxu0 0
      %6829 = vmatmul.mubr.bf16.gmra.mxu0 %v6698
      %v6830 = vpop.f32.mrf.mxu0
      %v6831 = vadd.f32 0.0, %v6830
      %v6832 = vpop.f32.mrf.mxu0
      %v6833 = vadd.f32 0.0, %v6832
      %v6834 = vpop.f32.mrf.mxu0
      %v6835 = vpop.f32.mrf.mxu0
      %6836 = vdwg.mxu0
      %v6837 = vadd.f32 %v6680, %v6831
      %v6838 = vadd.f32 %v6681, %v6833
      %s6839 = scalar_lea.vmem [#allocation2], 9
      %v6840 = vld [vmem:[%s6839] ss:$32 sm:$0x1]
      %v6841 = vld [vmem:[%s6839] ss:$32 sm:$0x2]
      %v6842 = vor.u32 %v6840, %v6841
      %v6843 = vld [vmem:[%s6839] ss:$32 sm:$0x4]
      %v6844 = vor.u32 %v6842, %v6843
      %v6845 = vld [vmem:[%s6839] ss:$32 sm:$0x8]
      %v6846 = vor.u32 %v6844, %v6845
      %v6847 = vld [vmem:[%s6839] ss:$32 sm:$0x10]
      %v6848 = vor.u32 %v6846, %v6847
      %v6849 = vld [vmem:[%s6839] ss:$32 sm:$0x20]
      %v6850 = vor.u32 %v6848, %v6849
      %v6851 = vld [vmem:[%s6839] ss:$32 sm:$0x40]
      %v6852 = vor.u32 %v6850, %v6851
      %v6853 = vld [vmem:[%s6839] ss:$32 sm:$0x80]
      %v6854 = vor.u32 %v6852, %v6853
      %v6855 = vpack.c.bf16 %v6854, %v6854
      %s6856 = scalar_lea.vmem %s5, 1152
      %v6857 = vld [vmem:[%s6856] sm:$0xff]
      %v6858 = vld [vmem:[%s6856 + $0x8] sm:$0xff]
      %v6859 = vld [vmem:[%s6856 + $0x10] sm:$0xff]
      %v6860 = vld [vmem:[%s6856 + $0x18] sm:$0xff]
      %v6861 = vld [vmem:[%s6856 + $0x20] sm:$0xff]
      %v6862 = vld [vmem:[%s6856 + $0x28] sm:$0xff]
      %v6863 = vld [vmem:[%s6856 + $0x30] sm:$0xff]
      %v6864 = vld [vmem:[%s6856 + $0x38] sm:$0xff]
      %v6865 = vld [vmem:[%s6856 + $0x40] sm:$0xff]
      %v6866 = vld [vmem:[%s6856 + $0x48] sm:$0xff]
      %v6867 = vld [vmem:[%s6856 + $0x50] sm:$0xff]
      %v6868 = vld [vmem:[%s6856 + $0x58] sm:$0xff]
      %v6869 = vld [vmem:[%s6856 + $0x60] sm:$0xff]
      %v6870 = vld [vmem:[%s6856 + $0x68] sm:$0xff]
      %v6871 = vld [vmem:[%s6856 + $0x70] sm:$0xff]
      %v6872 = vld [vmem:[%s6856 + $0x78] sm:$0xff]
      %v6889 = vunpack.c.l.b16 %v6857
      %v6890 = vunpack.c.h.b16 %v6857
      %v6891 = vunpack.c.l.b16 %v6858
      %v6892 = vunpack.c.h.b16 %v6858
      %v6893 = vunpack.c.l.b16 %v6859
      %v6894 = vunpack.c.h.b16 %v6859
      %v6895 = vunpack.c.l.b16 %v6860
      %v6896 = vunpack.c.h.b16 %v6860
      %v6897 = vunpack.c.l.b16 %v6861
      %v6898 = vunpack.c.h.b16 %v6861
      %v6899 = vunpack.c.l.b16 %v6862
      %v6900 = vunpack.c.h.b16 %v6862
      %v6901 = vunpack.c.l.b16 %v6863
      %v6902 = vunpack.c.h.b16 %v6863
      %v6903 = vunpack.c.l.b16 %v6864
      %v6904 = vunpack.c.h.b16 %v6864
      %v6905 = vunpack.c.l.b16 %v6865
      %v6906 = vunpack.c.h.b16 %v6865
      %v6907 = vunpack.c.l.b16 %v6866
      %v6908 = vunpack.c.h.b16 %v6866
      %v6909 = vunpack.c.l.b16 %v6867
      %v6910 = vunpack.c.h.b16 %v6867
      %v6911 = vunpack.c.l.b16 %v6868
      %v6912 = vunpack.c.h.b16 %v6868
      %v6913 = vunpack.c.l.b16 %v6869
      %v6914 = vunpack.c.h.b16 %v6869
      %v6915 = vunpack.c.l.b16 %v6870
      %v6916 = vunpack.c.h.b16 %v6870
      %v6917 = vunpack.c.l.b16 %v6871
      %v6918 = vunpack.c.h.b16 %v6871
      %v6919 = vunpack.c.l.b16 %v6872
      %v6920 = vunpack.c.h.b16 %v6872
      %v6921 = vpack.c.b16 %v6891, %v6889
      %v6922 = vpack.c.b16 %v6892, %v6890
      %v6923 = vpack.c.b16 %v6895, %v6893
      %v6924 = vpack.c.b16 %v6896, %v6894
      %v6925 = vpack.c.b16 %v6899, %v6897
      %v6926 = vpack.c.b16 %v6900, %v6898
      %v6927 = vpack.c.b16 %v6903, %v6901
      %v6928 = vpack.c.b16 %v6904, %v6902
      %v6929 = vpack.c.b16 %v6907, %v6905
      %v6930 = vpack.c.b16 %v6908, %v6906
      %v6931 = vpack.c.b16 %v6911, %v6909
      %v6932 = vpack.c.b16 %v6912, %v6910
      %v6933 = vpack.c.b16 %v6915, %v6913
      %v6934 = vpack.c.b16 %v6916, %v6914
      %v6935 = vpack.c.b16 %v6919, %v6917
      %v6936 = vpack.c.b16 %v6920, %v6918
      %6953 = vmatprep.subr.bf16.mxu0 %v6936
      %6954 = vmatpush1.bf16.msra.mxu0 %v6935
      %6955 = vmatprep.subr.bf16.mxu0 %v6934
      %6956 = vmatpush1.bf16.msra.mxu0 %v6933
      %6957 = vmatprep.subr.bf16.mxu0 %v6932
      %6958 = vmatpush1.bf16.msra.mxu0 %v6931
      %6959 = vmatprep.subr.bf16.mxu0 %v6930
      %6960 = vmatpush1.bf16.msra.mxu0 %v6929
      %6961 = vmatprep.subr.bf16.mxu0 %v6928
      %6962 = vmatpush1.bf16.msra.mxu0 %v6927
      %6963 = vmatprep.subr.bf16.mxu0 %v6926
      %6964 = vmatpush1.bf16.msra.mxu0 %v6925
      %6965 = vmatprep.subr.bf16.mxu0 %v6924
      %6966 = vmatpush1.bf16.msra.mxu0 %v6923
      %6967 = vmatprep.subr.bf16.mxu0 %v6922
      %6968 = vmatpush1.bf16.msra.mxu0 %v6921
      %6969 = vmatprep.subr.bf16.mxu0 0
      %6970 = vmatpush2.bf16.msra.mxu0 0
      %6971 = vmatprep.subr.bf16.mxu0 0
      %6972 = vmatpush2.bf16.msra.mxu0 0
      %6973 = vmatprep.subr.bf16.mxu0 0
      %6974 = vmatpush2.bf16.msra.mxu0 0
      %6975 = vmatprep.subr.bf16.mxu0 0
      %6976 = vmatpush2.bf16.msra.mxu0 0
      %6977 = vmatprep.subr.bf16.mxu0 0
      %6978 = vmatpush2.bf16.msra.mxu0 0
      %6979 = vmatprep.subr.bf16.mxu0 0
      %6980 = vmatpush2.bf16.msra.mxu0 0
      %6981 = vmatprep.subr.bf16.mxu0 0
      %6982 = vmatpush2.bf16.msra.mxu0 0
      %6983 = vmatprep.subr.bf16.mxu0 0
      %6984 = vmatpush2.bf16.msra.mxu0 0
      %6985 = vmatprep.mubr.bf16.mxu0 0
      %6986 = vmatmul.mubr.bf16.gmra.mxu0 %v6855
      %v6987 = vpop.f32.mrf.mxu0
      %v6988 = vadd.f32 0.0, %v6987
      %v6989 = vpop.f32.mrf.mxu0
      %v6990 = vadd.f32 0.0, %v6989
      %v6991 = vpop.f32.mrf.mxu0
      %v6992 = vpop.f32.mrf.mxu0
      %6993 = vdwg.mxu0
      %v6994 = vadd.f32 %v6837, %v6988
      %v6995 = vadd.f32 %v6838, %v6990
      %s6996 = scalar_lea.vmem [#allocation2], 10
      %v6997 = vld [vmem:[%s6996] ss:$32 sm:$0x1]
      %v6998 = vld [vmem:[%s6996] ss:$32 sm:$0x2]
      %v6999 = vor.u32 %v6997, %v6998
      %v7000 = vld [vmem:[%s6996] ss:$32 sm:$0x4]
      %v7001 = vor.u32 %v6999, %v7000
      %v7002 = vld [vmem:[%s6996] ss:$32 sm:$0x8]
      %v7003 = vor.u32 %v7001, %v7002
      %v7004 = vld [vmem:[%s6996] ss:$32 sm:$0x10]
      %v7005 = vor.u32 %v7003, %v7004
      %v7006 = vld [vmem:[%s6996] ss:$32 sm:$0x20]
      %v7007 = vor.u32 %v7005, %v7006
      %v7008 = vld [vmem:[%s6996] ss:$32 sm:$0x40]
      %v7009 = vor.u32 %v7007, %v7008
      %v7010 = vld [vmem:[%s6996] ss:$32 sm:$0x80]
      %v7011 = vor.u32 %v7009, %v7010
      %v7012 = vpack.c.bf16 %v7011, %v7011
      %s7013 = scalar_lea.vmem %s5, 1280
      %v7014 = vld [vmem:[%s7013] sm:$0xff]
      %v7015 = vld [vmem:[%s7013 + $0x8] sm:$0xff]
      %v7016 = vld [vmem:[%s7013 + $0x10] sm:$0xff]
      %v7017 = vld [vmem:[%s7013 + $0x18] sm:$0xff]
      %v7018 = vld [vmem:[%s7013 + $0x20] sm:$0xff]
      %v7019 = vld [vmem:[%s7013 + $0x28] sm:$0xff]
      %v7020 = vld [vmem:[%s7013 + $0x30] sm:$0xff]
      %v7021 = vld [vmem:[%s7013 + $0x38] sm:$0xff]
      %v7022 = vld [vmem:[%s7013 + $0x40] sm:$0xff]
      %v7023 = vld [vmem:[%s7013 + $0x48] sm:$0xff]
      %v7024 = vld [vmem:[%s7013 + $0x50] sm:$0xff]
      %v7025 = vld [vmem:[%s7013 + $0x58] sm:$0xff]
      %v7026 = vld [vmem:[%s7013 + $0x60] sm:$0xff]
      %v7027 = vld [vmem:[%s7013 + $0x68] sm:$0xff]
      %v7028 = vld [vmem:[%s7013 + $0x70] sm:$0xff]
      %v7029 = vld [vmem:[%s7013 + $0x78] sm:$0xff]
      %v7046 = vunpack.c.l.b16 %v7014
      %v7047 = vunpack.c.h.b16 %v7014
      %v7048 = vunpack.c.l.b16 %v7015
      %v7049 = vunpack.c.h.b16 %v7015
      %v7050 = vunpack.c.l.b16 %v7016
      %v7051 = vunpack.c.h.b16 %v7016
      %v7052 = vunpack.c.l.b16 %v7017
      %v7053 = vunpack.c.h.b16 %v7017
      %v7054 = vunpack.c.l.b16 %v7018
      %v7055 = vunpack.c.h.b16 %v7018
      %v7056 = vunpack.c.l.b16 %v7019
      %v7057 = vunpack.c.h.b16 %v7019
      %v7058 = vunpack.c.l.b16 %v7020
      %v7059 = vunpack.c.h.b16 %v7020
      %v7060 = vunpack.c.l.b16 %v7021
      %v7061 = vunpack.c.h.b16 %v7021
      %v7062 = vunpack.c.l.b16 %v7022
      %v7063 = vunpack.c.h.b16 %v7022
      %v7064 = vunpack.c.l.b16 %v7023
      %v7065 = vunpack.c.h.b16 %v7023
      %v7066 = vunpack.c.l.b16 %v7024
      %v7067 = vunpack.c.h.b16 %v7024
      %v7068 = vunpack.c.l.b16 %v7025
      %v7069 = vunpack.c.h.b16 %v7025
      %v7070 = vunpack.c.l.b16 %v7026
      %v7071 = vunpack.c.h.b16 %v7026
      %v7072 = vunpack.c.l.b16 %v7027
      %v7073 = vunpack.c.h.b16 %v7027
      %v7074 = vunpack.c.l.b16 %v7028
      %v7075 = vunpack.c.h.b16 %v7028
      %v7076 = vunpack.c.l.b16 %v7029
      %v7077 = vunpack.c.h.b16 %v7029
      %v7078 = vpack.c.b16 %v7048, %v7046
      %v7079 = vpack.c.b16 %v7049, %v7047
      %v7080 = vpack.c.b16 %v7052, %v7050
      %v7081 = vpack.c.b16 %v7053, %v7051
      %v7082 = vpack.c.b16 %v7056, %v7054
      %v7083 = vpack.c.b16 %v7057, %v7055
      %v7084 = vpack.c.b16 %v7060, %v7058
      %v7085 = vpack.c.b16 %v7061, %v7059
      %v7086 = vpack.c.b16 %v7064, %v7062
      %v7087 = vpack.c.b16 %v7065, %v7063
      %v7088 = vpack.c.b16 %v7068, %v7066
      %v7089 = vpack.c.b16 %v7069, %v7067
      %v7090 = vpack.c.b16 %v7072, %v7070
      %v7091 = vpack.c.b16 %v7073, %v7071
      %v7092 = vpack.c.b16 %v7076, %v7074
      %v7093 = vpack.c.b16 %v7077, %v7075
      %7110 = vmatprep.subr.bf16.mxu0 %v7093
      %7111 = vmatpush1.bf16.msra.mxu0 %v7092
      %7112 = vmatprep.subr.bf16.mxu0 %v7091
      %7113 = vmatpush1.bf16.msra.mxu0 %v7090
      %7114 = vmatprep.subr.bf16.mxu0 %v7089
      %7115 = vmatpush1.bf16.msra.mxu0 %v7088
      %7116 = vmatprep.subr.bf16.mxu0 %v7087
      %7117 = vmatpush1.bf16.msra.mxu0 %v7086
      %7118 = vmatprep.subr.bf16.mxu0 %v7085
      %7119 = vmatpush1.bf16.msra.mxu0 %v7084
      %7120 = vmatprep.subr.bf16.mxu0 %v7083
      %7121 = vmatpush1.bf16.msra.mxu0 %v7082
      %7122 = vmatprep.subr.bf16.mxu0 %v7081
      %7123 = vmatpush1.bf16.msra.mxu0 %v7080
      %7124 = vmatprep.subr.bf16.mxu0 %v7079
      %7125 = vmatpush1.bf16.msra.mxu0 %v7078
      %7126 = vmatprep.subr.bf16.mxu0 0
      %7127 = vmatpush2.bf16.msra.mxu0 0
      %7128 = vmatprep.subr.bf16.mxu0 0
      %7129 = vmatpush2.bf16.msra.mxu0 0
      %7130 = vmatprep.subr.bf16.mxu0 0
      %7131 = vmatpush2.bf16.msra.mxu0 0
      %7132 = vmatprep.subr.bf16.mxu0 0
      %7133 = vmatpush2.bf16.msra.mxu0 0
      %7134 = vmatprep.subr.bf16.mxu0 0
      %7135 = vmatpush2.bf16.msra.mxu0 0
      %7136 = vmatprep.subr.bf16.mxu0 0
      %7137 = vmatpush2.bf16.msra.mxu0 0
      %7138 = vmatprep.subr.bf16.mxu0 0
      %7139 = vmatpush2.bf16.msra.mxu0 0
      %7140 = vmatprep.subr.bf16.mxu0 0
      %7141 = vmatpush2.bf16.msra.mxu0 0
      %7142 = vmatprep.mubr.bf16.mxu0 0
      %7143 = vmatmul.mubr.bf16.gmra.mxu0 %v7012
      %v7144 = vpop.f32.mrf.mxu0
      %v7145 = vadd.f32 0.0, %v7144
      %v7146 = vpop.f32.mrf.mxu0
      %v7147 = vadd.f32 0.0, %v7146
      %v7148 = vpop.f32.mrf.mxu0
      %v7149 = vpop.f32.mrf.mxu0
      %7150 = vdwg.mxu0
      %v7151 = vadd.f32 %v6994, %v7145
      %v7152 = vadd.f32 %v6995, %v7147
      %s7153 = scalar_lea.vmem [#allocation2], 11
      %v7154 = vld [vmem:[%s7153] ss:$32 sm:$0x1]
      %v7155 = vld [vmem:[%s7153] ss:$32 sm:$0x2]
      %v7156 = vor.u32 %v7154, %v7155
      %v7157 = vld [vmem:[%s7153] ss:$32 sm:$0x4]
      %v7158 = vor.u32 %v7156, %v7157
      %v7159 = vld [vmem:[%s7153] ss:$32 sm:$0x8]
      %v7160 = vor.u32 %v7158, %v7159
      %v7161 = vld [vmem:[%s7153] ss:$32 sm:$0x10]
      %v7162 = vor.u32 %v7160, %v7161
      %v7163 = vld [vmem:[%s7153] ss:$32 sm:$0x20]
      %v7164 = vor.u32 %v7162, %v7163
      %v7165 = vld [vmem:[%s7153] ss:$32 sm:$0x40]
      %v7166 = vor.u32 %v7164, %v7165
      %v7167 = vld [vmem:[%s7153] ss:$32 sm:$0x80]
      %v7168 = vor.u32 %v7166, %v7167
      %v7169 = vpack.c.bf16 %v7168, %v7168
      %s7170 = scalar_lea.vmem %s5, 1408
      %v7171 = vld [vmem:[%s7170] sm:$0xff]
      %v7172 = vld [vmem:[%s7170 + $0x8] sm:$0xff]
      %v7173 = vld [vmem:[%s7170 + $0x10] sm:$0xff]
      %v7174 = vld [vmem:[%s7170 + $0x18] sm:$0xff]
      %v7175 = vld [vmem:[%s7170 + $0x20] sm:$0xff]
      %v7176 = vld [vmem:[%s7170 + $0x28] sm:$0xff]
      %v7177 = vld [vmem:[%s7170 + $0x30] sm:$0xff]
      %v7178 = vld [vmem:[%s7170 + $0x38] sm:$0xff]
      %v7179 = vld [vmem:[%s7170 + $0x40] sm:$0xff]
      %v7180 = vld [vmem:[%s7170 + $0x48] sm:$0xff]
      %v7181 = vld [vmem:[%s7170 + $0x50] sm:$0xff]
      %v7182 = vld [vmem:[%s7170 + $0x58] sm:$0xff]
      %v7183 = vld [vmem:[%s7170 + $0x60] sm:$0xff]
      %v7184 = vld [vmem:[%s7170 + $0x68] sm:$0xff]
      %v7185 = vld [vmem:[%s7170 + $0x70] sm:$0xff]
      %v7186 = vld [vmem:[%s7170 + $0x78] sm:$0xff]
      %v7203 = vunpack.c.l.b16 %v7171
      %v7204 = vunpack.c.h.b16 %v7171
      %v7205 = vunpack.c.l.b16 %v7172
      %v7206 = vunpack.c.h.b16 %v7172
      %v7207 = vunpack.c.l.b16 %v7173
      %v7208 = vunpack.c.h.b16 %v7173
      %v7209 = vunpack.c.l.b16 %v7174
      %v7210 = vunpack.c.h.b16 %v7174
      %v7211 = vunpack.c.l.b16 %v7175
      %v7212 = vunpack.c.h.b16 %v7175
      %v7213 = vunpack.c.l.b16 %v7176
      %v7214 = vunpack.c.h.b16 %v7176
      %v7215 = vunpack.c.l.b16 %v7177
      %v7216 = vunpack.c.h.b16 %v7177
      %v7217 = vunpack.c.l.b16 %v7178
      %v7218 = vunpack.c.h.b16 %v7178
      %v7219 = vunpack.c.l.b16 %v7179
      %v7220 = vunpack.c.h.b16 %v7179
      %v7221 = vunpack.c.l.b16 %v7180
      %v7222 = vunpack.c.h.b16 %v7180
      %v7223 = vunpack.c.l.b16 %v7181
      %v7224 = vunpack.c.h.b16 %v7181
      %v7225 = vunpack.c.l.b16 %v7182
      %v7226 = vunpack.c.h.b16 %v7182
      %v7227 = vunpack.c.l.b16 %v7183
      %v7228 = vunpack.c.h.b16 %v7183
      %v7229 = vunpack.c.l.b16 %v7184
      %v7230 = vunpack.c.h.b16 %v7184
      %v7231 = vunpack.c.l.b16 %v7185
      %v7232 = vunpack.c.h.b16 %v7185
      %v7233 = vunpack.c.l.b16 %v7186
      %v7234 = vunpack.c.h.b16 %v7186
      %v7235 = vpack.c.b16 %v7205, %v7203
      %v7236 = vpack.c.b16 %v7206, %v7204
      %v7237 = vpack.c.b16 %v7209, %v7207
      %v7238 = vpack.c.b16 %v7210, %v7208
      %v7239 = vpack.c.b16 %v7213, %v7211
      %v7240 = vpack.c.b16 %v7214, %v7212
      %v7241 = vpack.c.b16 %v7217, %v7215
      %v7242 = vpack.c.b16 %v7218, %v7216
      %v7243 = vpack.c.b16 %v7221, %v7219
      %v7244 = vpack.c.b16 %v7222, %v7220
      %v7245 = vpack.c.b16 %v7225, %v7223
      %v7246 = vpack.c.b16 %v7226, %v7224
      %v7247 = vpack.c.b16 %v7229, %v7227
      %v7248 = vpack.c.b16 %v7230, %v7228
      %v7249 = vpack.c.b16 %v7233, %v7231
      %v7250 = vpack.c.b16 %v7234, %v7232
      %7267 = vmatprep.subr.bf16.mxu0 %v7250
      %7268 = vmatpush1.bf16.msra.mxu0 %v7249
      %7269 = vmatprep.subr.bf16.mxu0 %v7248
      %7270 = vmatpush1.bf16.msra.mxu0 %v7247
      %7271 = vmatprep.subr.bf16.mxu0 %v7246
      %7272 = vmatpush1.bf16.msra.mxu0 %v7245
      %7273 = vmatprep.subr.bf16.mxu0 %v7244
      %7274 = vmatpush1.bf16.msra.mxu0 %v7243
      %7275 = vmatprep.subr.bf16.mxu0 %v7242
      %7276 = vmatpush1.bf16.msra.mxu0 %v7241
      %7277 = vmatprep.subr.bf16.mxu0 %v7240
      %7278 = vmatpush1.bf16.msra.mxu0 %v7239
      %7279 = vmatprep.subr.bf16.mxu0 %v7238
      %7280 = vmatpush1.bf16.msra.mxu0 %v7237
      %7281 = vmatprep.subr.bf16.mxu0 %v7236
      %7282 = vmatpush1.bf16.msra.mxu0 %v7235
      %7283 = vmatprep.subr.bf16.mxu0 0
      %7284 = vmatpush2.bf16.msra.mxu0 0
      %7285 = vmatprep.subr.bf16.mxu0 0
      %7286 = vmatpush2.bf16.msra.mxu0 0
      %7287 = vmatprep.subr.bf16.mxu0 0
      %7288 = vmatpush2.bf16.msra.mxu0 0
      %7289 = vmatprep.subr.bf16.mxu0 0
      %7290 = vmatpush2.bf16.msra.mxu0 0
      %7291 = vmatprep.subr.bf16.mxu0 0
      %7292 = vmatpush2.bf16.msra.mxu0 0
      %7293 = vmatprep.subr.bf16.mxu0 0
      %7294 = vmatpush2.bf16.msra.mxu0 0
      %7295 = vmatprep.subr.bf16.mxu0 0
      %7296 = vmatpush2.bf16.msra.mxu0 0
      %7297 = vmatprep.subr.bf16.mxu0 0
      %7298 = vmatpush2.bf16.msra.mxu0 0
      %7299 = vmatprep.mubr.bf16.mxu0 0
      %7300 = vmatmul.mubr.bf16.gmra.mxu0 %v7169
      %v7301 = vpop.f32.mrf.mxu0
      %v7302 = vadd.f32 0.0, %v7301
      %v7303 = vpop.f32.mrf.mxu0
      %v7304 = vadd.f32 0.0, %v7303
      %v7305 = vpop.f32.mrf.mxu0
      %v7306 = vpop.f32.mrf.mxu0
      %7307 = vdwg.mxu0
      %v7308 = vadd.f32 %v7151, %v7302
      %v7309 = vadd.f32 %v7152, %v7304
      %s7310 = scalar_lea.vmem [#allocation2], 12
      %v7311 = vld [vmem:[%s7310] ss:$32 sm:$0x1]
      %v7312 = vld [vmem:[%s7310] ss:$32 sm:$0x2]
      %v7313 = vor.u32 %v7311, %v7312
      %v7314 = vld [vmem:[%s7310] ss:$32 sm:$0x4]
      %v7315 = vor.u32 %v7313, %v7314
      %v7316 = vld [vmem:[%s7310] ss:$32 sm:$0x8]
      %v7317 = vor.u32 %v7315, %v7316
      %v7318 = vld [vmem:[%s7310] ss:$32 sm:$0x10]
      %v7319 = vor.u32 %v7317, %v7318
      %v7320 = vld [vmem:[%s7310] ss:$32 sm:$0x20]
      %v7321 = vor.u32 %v7319, %v7320
      %v7322 = vld [vmem:[%s7310] ss:$32 sm:$0x40]
      %v7323 = vor.u32 %v7321, %v7322
      %v7324 = vld [vmem:[%s7310] ss:$32 sm:$0x80]
      %v7325 = vor.u32 %v7323, %v7324
      %v7326 = vpack.c.bf16 %v7325, %v7325
      %s7327 = scalar_lea.vmem %s5, 1536
      %v7328 = vld [vmem:[%s7327] sm:$0xff]
      %v7329 = vld [vmem:[%s7327 + $0x8] sm:$0xff]
      %v7330 = vld [vmem:[%s7327 + $0x10] sm:$0xff]
      %v7331 = vld [vmem:[%s7327 + $0x18] sm:$0xff]
      %v7332 = vld [vmem:[%s7327 + $0x20] sm:$0xff]
      %v7333 = vld [vmem:[%s7327 + $0x28] sm:$0xff]
      %v7334 = vld [vmem:[%s7327 + $0x30] sm:$0xff]
      %v7335 = vld [vmem:[%s7327 + $0x38] sm:$0xff]
      %v7336 = vld [vmem:[%s7327 + $0x40] sm:$0xff]
      %v7337 = vld [vmem:[%s7327 + $0x48] sm:$0xff]
      %v7338 = vld [vmem:[%s7327 + $0x50] sm:$0xff]
      %v7339 = vld [vmem:[%s7327 + $0x58] sm:$0xff]
      %v7340 = vld [vmem:[%s7327 + $0x60] sm:$0xff]
      %v7341 = vld [vmem:[%s7327 + $0x68] sm:$0xff]
      %v7342 = vld [vmem:[%s7327 + $0x70] sm:$0xff]
      %v7343 = vld [vmem:[%s7327 + $0x78] sm:$0xff]
      %v7360 = vunpack.c.l.b16 %v7328
      %v7361 = vunpack.c.h.b16 %v7328
      %v7362 = vunpack.c.l.b16 %v7329
      %v7363 = vunpack.c.h.b16 %v7329
      %v7364 = vunpack.c.l.b16 %v7330
      %v7365 = vunpack.c.h.b16 %v7330
      %v7366 = vunpack.c.l.b16 %v7331
      %v7367 = vunpack.c.h.b16 %v7331
      %v7368 = vunpack.c.l.b16 %v7332
      %v7369 = vunpack.c.h.b16 %v7332
      %v7370 = vunpack.c.l.b16 %v7333
      %v7371 = vunpack.c.h.b16 %v7333
      %v7372 = vunpack.c.l.b16 %v7334
      %v7373 = vunpack.c.h.b16 %v7334
      %v7374 = vunpack.c.l.b16 %v7335
      %v7375 = vunpack.c.h.b16 %v7335
      %v7376 = vunpack.c.l.b16 %v7336
      %v7377 = vunpack.c.h.b16 %v7336
      %v7378 = vunpack.c.l.b16 %v7337
      %v7379 = vunpack.c.h.b16 %v7337
      %v7380 = vunpack.c.l.b16 %v7338
      %v7381 = vunpack.c.h.b16 %v7338
      %v7382 = vunpack.c.l.b16 %v7339
      %v7383 = vunpack.c.h.b16 %v7339
      %v7384 = vunpack.c.l.b16 %v7340
      %v7385 = vunpack.c.h.b16 %v7340
      %v7386 = vunpack.c.l.b16 %v7341
      %v7387 = vunpack.c.h.b16 %v7341
      %v7388 = vunpack.c.l.b16 %v7342
      %v7389 = vunpack.c.h.b16 %v7342
      %v7390 = vunpack.c.l.b16 %v7343
      %v7391 = vunpack.c.h.b16 %v7343
      %v7392 = vpack.c.b16 %v7362, %v7360
      %v7393 = vpack.c.b16 %v7363, %v7361
      %v7394 = vpack.c.b16 %v7366, %v7364
      %v7395 = vpack.c.b16 %v7367, %v7365
      %v7396 = vpack.c.b16 %v7370, %v7368
      %v7397 = vpack.c.b16 %v7371, %v7369
      %v7398 = vpack.c.b16 %v7374, %v7372
      %v7399 = vpack.c.b16 %v7375, %v7373
      %v7400 = vpack.c.b16 %v7378, %v7376
      %v7401 = vpack.c.b16 %v7379, %v7377
      %v7402 = vpack.c.b16 %v7382, %v7380
      %v7403 = vpack.c.b16 %v7383, %v7381
      %v7404 = vpack.c.b16 %v7386, %v7384
      %v7405 = vpack.c.b16 %v7387, %v7385
      %v7406 = vpack.c.b16 %v7390, %v7388
      %v7407 = vpack.c.b16 %v7391, %v7389
      %7424 = vmatprep.subr.bf16.mxu0 %v7407
      %7425 = vmatpush1.bf16.msra.mxu0 %v7406
      %7426 = vmatprep.subr.bf16.mxu0 %v7405
      %7427 = vmatpush1.bf16.msra.mxu0 %v7404
      %7428 = vmatprep.subr.bf16.mxu0 %v7403
      %7429 = vmatpush1.bf16.msra.mxu0 %v7402
      %7430 = vmatprep.subr.bf16.mxu0 %v7401
      %7431 = vmatpush1.bf16.msra.mxu0 %v7400
      %7432 = vmatprep.subr.bf16.mxu0 %v7399
      %7433 = vmatpush1.bf16.msra.mxu0 %v7398
      %7434 = vmatprep.subr.bf16.mxu0 %v7397
      %7435 = vmatpush1.bf16.msra.mxu0 %v7396
      %7436 = vmatprep.subr.bf16.mxu0 %v7395
      %7437 = vmatpush1.bf16.msra.mxu0 %v7394
      %7438 = vmatprep.subr.bf16.mxu0 %v7393
      %7439 = vmatpush1.bf16.msra.mxu0 %v7392
      %7440 = vmatprep.subr.bf16.mxu0 0
      %7441 = vmatpush2.bf16.msra.mxu0 0
      %7442 = vmatprep.subr.bf16.mxu0 0
      %7443 = vmatpush2.bf16.msra.mxu0 0
      %7444 = vmatprep.subr.bf16.mxu0 0
      %7445 = vmatpush2.bf16.msra.mxu0 0
      %7446 = vmatprep.subr.bf16.mxu0 0
      %7447 = vmatpush2.bf16.msra.mxu0 0
      %7448 = vmatprep.subr.bf16.mxu0 0
      %7449 = vmatpush2.bf16.msra.mxu0 0
      %7450 = vmatprep.subr.bf16.mxu0 0
      %7451 = vmatpush2.bf16.msra.mxu0 0
      %7452 = vmatprep.subr.bf16.mxu0 0
      %7453 = vmatpush2.bf16.msra.mxu0 0
      %7454 = vmatprep.subr.bf16.mxu0 0
      %7455 = vmatpush2.bf16.msra.mxu0 0
      %7456 = vmatprep.mubr.bf16.mxu0 0
      %7457 = vmatmul.mubr.bf16.gmra.mxu0 %v7326
      %v7458 = vpop.f32.mrf.mxu0
      %v7459 = vadd.f32 0.0, %v7458
      %v7460 = vpop.f32.mrf.mxu0
      %v7461 = vadd.f32 0.0, %v7460
      %v7462 = vpop.f32.mrf.mxu0
      %v7463 = vpop.f32.mrf.mxu0
      %7464 = vdwg.mxu0
      %v7465 = vadd.f32 %v7308, %v7459
      %v7466 = vadd.f32 %v7309, %v7461
      %s7467 = scalar_lea.vmem [#allocation2], 13
      %v7468 = vld [vmem:[%s7467] ss:$32 sm:$0x1]
      %v7469 = vld [vmem:[%s7467] ss:$32 sm:$0x2]
      %v7470 = vor.u32 %v7468, %v7469
      %v7471 = vld [vmem:[%s7467] ss:$32 sm:$0x4]
      %v7472 = vor.u32 %v7470, %v7471
      %v7473 = vld [vmem:[%s7467] ss:$32 sm:$0x8]
      %v7474 = vor.u32 %v7472, %v7473
      %v7475 = vld [vmem:[%s7467] ss:$32 sm:$0x10]
      %v7476 = vor.u32 %v7474, %v7475
      %v7477 = vld [vmem:[%s7467] ss:$32 sm:$0x20]
      %v7478 = vor.u32 %v7476, %v7477
      %v7479 = vld [vmem:[%s7467] ss:$32 sm:$0x40]
      %v7480 = vor.u32 %v7478, %v7479
      %v7481 = vld [vmem:[%s7467] ss:$32 sm:$0x80]
      %v7482 = vor.u32 %v7480, %v7481
      %v7483 = vpack.c.bf16 %v7482, %v7482
      %s7484 = scalar_lea.vmem %s5, 1664
      %v7485 = vld [vmem:[%s7484] sm:$0xff]
      %v7486 = vld [vmem:[%s7484 + $0x8] sm:$0xff]
      %v7487 = vld [vmem:[%s7484 + $0x10] sm:$0xff]
      %v7488 = vld [vmem:[%s7484 + $0x18] sm:$0xff]
      %v7489 = vld [vmem:[%s7484 + $0x20] sm:$0xff]
      %v7490 = vld [vmem:[%s7484 + $0x28] sm:$0xff]
      %v7491 = vld [vmem:[%s7484 + $0x30] sm:$0xff]
      %v7492 = vld [vmem:[%s7484 + $0x38] sm:$0xff]
      %v7493 = vld [vmem:[%s7484 + $0x40] sm:$0xff]
      %v7494 = vld [vmem:[%s7484 + $0x48] sm:$0xff]
      %v7495 = vld [vmem:[%s7484 + $0x50] sm:$0xff]
      %v7496 = vld [vmem:[%s7484 + $0x58] sm:$0xff]
      %v7497 = vld [vmem:[%s7484 + $0x60] sm:$0xff]
      %v7498 = vld [vmem:[%s7484 + $0x68] sm:$0xff]
      %v7499 = vld [vmem:[%s7484 + $0x70] sm:$0xff]
      %v7500 = vld [vmem:[%s7484 + $0x78] sm:$0xff]
      %v7517 = vunpack.c.l.b16 %v7485
      %v7518 = vunpack.c.h.b16 %v7485
      %v7519 = vunpack.c.l.b16 %v7486
      %v7520 = vunpack.c.h.b16 %v7486
      %v7521 = vunpack.c.l.b16 %v7487
      %v7522 = vunpack.c.h.b16 %v7487
      %v7523 = vunpack.c.l.b16 %v7488
      %v7524 = vunpack.c.h.b16 %v7488
      %v7525 = vunpack.c.l.b16 %v7489
      %v7526 = vunpack.c.h.b16 %v7489
      %v7527 = vunpack.c.l.b16 %v7490
      %v7528 = vunpack.c.h.b16 %v7490
      %v7529 = vunpack.c.l.b16 %v7491
      %v7530 = vunpack.c.h.b16 %v7491
      %v7531 = vunpack.c.l.b16 %v7492
      %v7532 = vunpack.c.h.b16 %v7492
      %v7533 = vunpack.c.l.b16 %v7493
      %v7534 = vunpack.c.h.b16 %v7493
      %v7535 = vunpack.c.l.b16 %v7494
      %v7536 = vunpack.c.h.b16 %v7494
      %v7537 = vunpack.c.l.b16 %v7495
      %v7538 = vunpack.c.h.b16 %v7495
      %v7539 = vunpack.c.l.b16 %v7496
      %v7540 = vunpack.c.h.b16 %v7496
      %v7541 = vunpack.c.l.b16 %v7497
      %v7542 = vunpack.c.h.b16 %v7497
      %v7543 = vunpack.c.l.b16 %v7498
      %v7544 = vunpack.c.h.b16 %v7498
      %v7545 = vunpack.c.l.b16 %v7499
      %v7546 = vunpack.c.h.b16 %v7499
      %v7547 = vunpack.c.l.b16 %v7500
      %v7548 = vunpack.c.h.b16 %v7500
      %v7549 = vpack.c.b16 %v7519, %v7517
      %v7550 = vpack.c.b16 %v7520, %v7518
      %v7551 = vpack.c.b16 %v7523, %v7521
      %v7552 = vpack.c.b16 %v7524, %v7522
      %v7553 = vpack.c.b16 %v7527, %v7525
      %v7554 = vpack.c.b16 %v7528, %v7526
      %v7555 = vpack.c.b16 %v7531, %v7529
      %v7556 = vpack.c.b16 %v7532, %v7530
      %v7557 = vpack.c.b16 %v7535, %v7533
      %v7558 = vpack.c.b16 %v7536, %v7534
      %v7559 = vpack.c.b16 %v7539, %v7537
      %v7560 = vpack.c.b16 %v7540, %v7538
      %v7561 = vpack.c.b16 %v7543, %v7541
      %v7562 = vpack.c.b16 %v7544, %v7542
      %v7563 = vpack.c.b16 %v7547, %v7545
      %v7564 = vpack.c.b16 %v7548, %v7546
      %7581 = vmatprep.subr.bf16.mxu0 %v7564
      %7582 = vmatpush1.bf16.msra.mxu0 %v7563
      %7583 = vmatprep.subr.bf16.mxu0 %v7562
      %7584 = vmatpush1.bf16.msra.mxu0 %v7561
      %7585 = vmatprep.subr.bf16.mxu0 %v7560
      %7586 = vmatpush1.bf16.msra.mxu0 %v7559
      %7587 = vmatprep.subr.bf16.mxu0 %v7558
      %7588 = vmatpush1.bf16.msra.mxu0 %v7557
      %7589 = vmatprep.subr.bf16.mxu0 %v7556
      %7590 = vmatpush1.bf16.msra.mxu0 %v7555
      %7591 = vmatprep.subr.bf16.mxu0 %v7554
      %7592 = vmatpush1.bf16.msra.mxu0 %v7553
      %7593 = vmatprep.subr.bf16.mxu0 %v7552
      %7594 = vmatpush1.bf16.msra.mxu0 %v7551
      %7595 = vmatprep.subr.bf16.mxu0 %v7550
      %7596 = vmatpush1.bf16.msra.mxu0 %v7549
      %7597 = vmatprep.subr.bf16.mxu0 0
      %7598 = vmatpush2.bf16.msra.mxu0 0
      %7599 = vmatprep.subr.bf16.mxu0 0
      %7600 = vmatpush2.bf16.msra.mxu0 0
      %7601 = vmatprep.subr.bf16.mxu0 0
      %7602 = vmatpush2.bf16.msra.mxu0 0
      %7603 = vmatprep.subr.bf16.mxu0 0
      %7604 = vmatpush2.bf16.msra.mxu0 0
      %7605 = vmatprep.subr.bf16.mxu0 0
      %7606 = vmatpush2.bf16.msra.mxu0 0
      %7607 = vmatprep.subr.bf16.mxu0 0
      %7608 = vmatpush2.bf16.msra.mxu0 0
      %7609 = vmatprep.subr.bf16.mxu0 0
      %7610 = vmatpush2.bf16.msra.mxu0 0
      %7611 = vmatprep.subr.bf16.mxu0 0
      %7612 = vmatpush2.bf16.msra.mxu0 0
      %7613 = vmatprep.mubr.bf16.mxu0 0
      %7614 = vmatmul.mubr.bf16.gmra.mxu0 %v7483
      %v7615 = vpop.f32.mrf.mxu0
      %v7616 = vadd.f32 0.0, %v7615
      %v7617 = vpop.f32.mrf.mxu0
      %v7618 = vadd.f32 0.0, %v7617
      %v7619 = vpop.f32.mrf.mxu0
      %v7620 = vpop.f32.mrf.mxu0
      %7621 = vdwg.mxu0
      %v7622 = vadd.f32 %v7465, %v7616
      %v7623 = vadd.f32 %v7466, %v7618
      %s7624 = scalar_lea.vmem [#allocation2], 14
      %v7625 = vld [vmem:[%s7624] ss:$32 sm:$0x1]
      %v7626 = vld [vmem:[%s7624] ss:$32 sm:$0x2]
      %v7627 = vor.u32 %v7625, %v7626
      %v7628 = vld [vmem:[%s7624] ss:$32 sm:$0x4]
      %v7629 = vor.u32 %v7627, %v7628
      %v7630 = vld [vmem:[%s7624] ss:$32 sm:$0x8]
      %v7631 = vor.u32 %v7629, %v7630
      %v7632 = vld [vmem:[%s7624] ss:$32 sm:$0x10]
      %v7633 = vor.u32 %v7631, %v7632
      %v7634 = vld [vmem:[%s7624] ss:$32 sm:$0x20]
      %v7635 = vor.u32 %v7633, %v7634
      %v7636 = vld [vmem:[%s7624] ss:$32 sm:$0x40]
      %v7637 = vor.u32 %v7635, %v7636
      %v7638 = vld [vmem:[%s7624] ss:$32 sm:$0x80]
      %v7639 = vor.u32 %v7637, %v7638
      %v7640 = vpack.c.bf16 %v7639, %v7639
      %s7641 = scalar_lea.vmem %s5, 1792
      %v7642 = vld [vmem:[%s7641] sm:$0xff]
      %v7643 = vld [vmem:[%s7641 + $0x8] sm:$0xff]
      %v7644 = vld [vmem:[%s7641 + $0x10] sm:$0xff]
      %v7645 = vld [vmem:[%s7641 + $0x18] sm:$0xff]
      %v7646 = vld [vmem:[%s7641 + $0x20] sm:$0xff]
      %v7647 = vld [vmem:[%s7641 + $0x28] sm:$0xff]
      %v7648 = vld [vmem:[%s7641 + $0x30] sm:$0xff]
      %v7649 = vld [vmem:[%s7641 + $0x38] sm:$0xff]
      %v7650 = vld [vmem:[%s7641 + $0x40] sm:$0xff]
      %v7651 = vld [vmem:[%s7641 + $0x48] sm:$0xff]
      %v7652 = vld [vmem:[%s7641 + $0x50] sm:$0xff]
      %v7653 = vld [vmem:[%s7641 + $0x58] sm:$0xff]
      %v7654 = vld [vmem:[%s7641 + $0x60] sm:$0xff]
      %v7655 = vld [vmem:[%s7641 + $0x68] sm:$0xff]
      %v7656 = vld [vmem:[%s7641 + $0x70] sm:$0xff]
      %v7657 = vld [vmem:[%s7641 + $0x78] sm:$0xff]
      %v7674 = vunpack.c.l.b16 %v7642
      %v7675 = vunpack.c.h.b16 %v7642
      %v7676 = vunpack.c.l.b16 %v7643
      %v7677 = vunpack.c.h.b16 %v7643
      %v7678 = vunpack.c.l.b16 %v7644
      %v7679 = vunpack.c.h.b16 %v7644
      %v7680 = vunpack.c.l.b16 %v7645
      %v7681 = vunpack.c.h.b16 %v7645
      %v7682 = vunpack.c.l.b16 %v7646
      %v7683 = vunpack.c.h.b16 %v7646
      %v7684 = vunpack.c.l.b16 %v7647
      %v7685 = vunpack.c.h.b16 %v7647
      %v7686 = vunpack.c.l.b16 %v7648
      %v7687 = vunpack.c.h.b16 %v7648
      %v7688 = vunpack.c.l.b16 %v7649
      %v7689 = vunpack.c.h.b16 %v7649
      %v7690 = vunpack.c.l.b16 %v7650
      %v7691 = vunpack.c.h.b16 %v7650
      %v7692 = vunpack.c.l.b16 %v7651
      %v7693 = vunpack.c.h.b16 %v7651
      %v7694 = vunpack.c.l.b16 %v7652
      %v7695 = vunpack.c.h.b16 %v7652
      %v7696 = vunpack.c.l.b16 %v7653
      %v7697 = vunpack.c.h.b16 %v7653
      %v7698 = vunpack.c.l.b16 %v7654
      %v7699 = vunpack.c.h.b16 %v7654
      %v7700 = vunpack.c.l.b16 %v7655
      %v7701 = vunpack.c.h.b16 %v7655
      %v7702 = vunpack.c.l.b16 %v7656
      %v7703 = vunpack.c.h.b16 %v7656
      %v7704 = vunpack.c.l.b16 %v7657
      %v7705 = vunpack.c.h.b16 %v7657
      %v7706 = vpack.c.b16 %v7676, %v7674
      %v7707 = vpack.c.b16 %v7677, %v7675
      %v7708 = vpack.c.b16 %v7680, %v7678
      %v7709 = vpack.c.b16 %v7681, %v7679
      %v7710 = vpack.c.b16 %v7684, %v7682
      %v7711 = vpack.c.b16 %v7685, %v7683
      %v7712 = vpack.c.b16 %v7688, %v7686
      %v7713 = vpack.c.b16 %v7689, %v7687
      %v7714 = vpack.c.b16 %v7692, %v7690
      %v7715 = vpack.c.b16 %v7693, %v7691
      %v7716 = vpack.c.b16 %v7696, %v7694
      %v7717 = vpack.c.b16 %v7697, %v7695
      %v7718 = vpack.c.b16 %v7700, %v7698
      %v7719 = vpack.c.b16 %v7701, %v7699
      %v7720 = vpack.c.b16 %v7704, %v7702
      %v7721 = vpack.c.b16 %v7705, %v7703
      %7738 = vmatprep.subr.bf16.mxu0 %v7721
      %7739 = vmatpush1.bf16.msra.mxu0 %v7720
      %7740 = vmatprep.subr.bf16.mxu0 %v7719
      %7741 = vmatpush1.bf16.msra.mxu0 %v7718
      %7742 = vmatprep.subr.bf16.mxu0 %v7717
      %7743 = vmatpush1.bf16.msra.mxu0 %v7716
      %7744 = vmatprep.subr.bf16.mxu0 %v7715
      %7745 = vmatpush1.bf16.msra.mxu0 %v7714
      %7746 = vmatprep.subr.bf16.mxu0 %v7713
      %7747 = vmatpush1.bf16.msra.mxu0 %v7712
      %7748 = vmatprep.subr.bf16.mxu0 %v7711
      %7749 = vmatpush1.bf16.msra.mxu0 %v7710
      %7750 = vmatprep.subr.bf16.mxu0 %v7709
      %7751 = vmatpush1.bf16.msra.mxu0 %v7708
      %7752 = vmatprep.subr.bf16.mxu0 %v7707
      %7753 = vmatpush1.bf16.msra.mxu0 %v7706
      %7754 = vmatprep.subr.bf16.mxu0 0
      %7755 = vmatpush2.bf16.msra.mxu0 0
      %7756 = vmatprep.subr.bf16.mxu0 0
      %7757 = vmatpush2.bf16.msra.mxu0 0
      %7758 = vmatprep.subr.bf16.mxu0 0
      %7759 = vmatpush2.bf16.msra.mxu0 0
      %7760 = vmatprep.subr.bf16.mxu0 0
      %7761 = vmatpush2.bf16.msra.mxu0 0
      %7762 = vmatprep.subr.bf16.mxu0 0
      %7763 = vmatpush2.bf16.msra.mxu0 0
      %7764 = vmatprep.subr.bf16.mxu0 0
      %7765 = vmatpush2.bf16.msra.mxu0 0
      %7766 = vmatprep.subr.bf16.mxu0 0
      %7767 = vmatpush2.bf16.msra.mxu0 0
      %7768 = vmatprep.subr.bf16.mxu0 0
      %7769 = vmatpush2.bf16.msra.mxu0 0
      %7770 = vmatprep.mubr.bf16.mxu0 0
      %7771 = vmatmul.mubr.bf16.gmra.mxu0 %v7640
      %v7772 = vpop.f32.mrf.mxu0
      %v7773 = vadd.f32 0.0, %v7772
      %v7774 = vpop.f32.mrf.mxu0
      %v7775 = vadd.f32 0.0, %v7774
      %v7776 = vpop.f32.mrf.mxu0
      %v7777 = vpop.f32.mrf.mxu0
      %7778 = vdwg.mxu0
      %v7779 = vadd.f32 %v7622, %v7773
      %v7780 = vadd.f32 %v7623, %v7775
      %s7781 = scalar_lea.vmem [#allocation2], 15
      %v7782 = vld [vmem:[%s7781] ss:$32 sm:$0x1]
      %v7783 = vld [vmem:[%s7781] ss:$32 sm:$0x2]
      %v7784 = vor.u32 %v7782, %v7783
      %v7785 = vld [vmem:[%s7781] ss:$32 sm:$0x4]
      %v7786 = vor.u32 %v7784, %v7785
      %v7787 = vld [vmem:[%s7781] ss:$32 sm:$0x8]
      %v7788 = vor.u32 %v7786, %v7787
      %v7789 = vld [vmem:[%s7781] ss:$32 sm:$0x10]
      %v7790 = vor.u32 %v7788, %v7789
      %v7791 = vld [vmem:[%s7781] ss:$32 sm:$0x20]
      %v7792 = vor.u32 %v7790, %v7791
      %v7793 = vld [vmem:[%s7781] ss:$32 sm:$0x40]
      %v7794 = vor.u32 %v7792, %v7793
      %v7795 = vld [vmem:[%s7781] ss:$32 sm:$0x80]
      %v7796 = vor.u32 %v7794, %v7795
      %v7797 = vpack.c.bf16 %v7796, %v7796
      %s7798 = scalar_lea.vmem %s5, 1920
      %v7799 = vld [vmem:[%s7798] sm:$0xff]
      %v7800 = vld [vmem:[%s7798 + $0x8] sm:$0xff]
      %v7801 = vld [vmem:[%s7798 + $0x10] sm:$0xff]
      %v7802 = vld [vmem:[%s7798 + $0x18] sm:$0xff]
      %v7803 = vld [vmem:[%s7798 + $0x20] sm:$0xff]
      %v7804 = vld [vmem:[%s7798 + $0x28] sm:$0xff]
      %v7805 = vld [vmem:[%s7798 + $0x30] sm:$0xff]
      %v7806 = vld [vmem:[%s7798 + $0x38] sm:$0xff]
      %v7807 = vld [vmem:[%s7798 + $0x40] sm:$0xff]
      %v7808 = vld [vmem:[%s7798 + $0x48] sm:$0xff]
      %v7809 = vld [vmem:[%s7798 + $0x50] sm:$0xff]
      %v7810 = vld [vmem:[%s7798 + $0x58] sm:$0xff]
      %v7811 = vld [vmem:[%s7798 + $0x60] sm:$0xff]
      %v7812 = vld [vmem:[%s7798 + $0x68] sm:$0xff]
      %v7813 = vld [vmem:[%s7798 + $0x70] sm:$0xff]
      %v7814 = vld [vmem:[%s7798 + $0x78] sm:$0xff]
      %v7831 = vunpack.c.l.b16 %v7799
      %v7832 = vunpack.c.h.b16 %v7799
      %v7833 = vunpack.c.l.b16 %v7800
      %v7834 = vunpack.c.h.b16 %v7800
      %v7835 = vunpack.c.l.b16 %v7801
      %v7836 = vunpack.c.h.b16 %v7801
      %v7837 = vunpack.c.l.b16 %v7802
      %v7838 = vunpack.c.h.b16 %v7802
      %v7839 = vunpack.c.l.b16 %v7803
      %v7840 = vunpack.c.h.b16 %v7803
      %v7841 = vunpack.c.l.b16 %v7804
      %v7842 = vunpack.c.h.b16 %v7804
      %v7843 = vunpack.c.l.b16 %v7805
      %v7844 = vunpack.c.h.b16 %v7805
      %v7845 = vunpack.c.l.b16 %v7806
      %v7846 = vunpack.c.h.b16 %v7806
      %v7847 = vunpack.c.l.b16 %v7807
      %v7848 = vunpack.c.h.b16 %v7807
      %v7849 = vunpack.c.l.b16 %v7808
      %v7850 = vunpack.c.h.b16 %v7808
      %v7851 = vunpack.c.l.b16 %v7809
      %v7852 = vunpack.c.h.b16 %v7809
      %v7853 = vunpack.c.l.b16 %v7810
      %v7854 = vunpack.c.h.b16 %v7810
      %v7855 = vunpack.c.l.b16 %v7811
      %v7856 = vunpack.c.h.b16 %v7811
      %v7857 = vunpack.c.l.b16 %v7812
      %v7858 = vunpack.c.h.b16 %v7812
      %v7859 = vunpack.c.l.b16 %v7813
      %v7860 = vunpack.c.h.b16 %v7813
      %v7861 = vunpack.c.l.b16 %v7814
      %v7862 = vunpack.c.h.b16 %v7814
      %v7863 = vpack.c.b16 %v7833, %v7831
      %v7864 = vpack.c.b16 %v7834, %v7832
      %v7865 = vpack.c.b16 %v7837, %v7835
      %v7866 = vpack.c.b16 %v7838, %v7836
      %v7867 = vpack.c.b16 %v7841, %v7839
      %v7868 = vpack.c.b16 %v7842, %v7840
      %v7869 = vpack.c.b16 %v7845, %v7843
      %v7870 = vpack.c.b16 %v7846, %v7844
      %v7871 = vpack.c.b16 %v7849, %v7847
      %v7872 = vpack.c.b16 %v7850, %v7848
      %v7873 = vpack.c.b16 %v7853, %v7851
      %v7874 = vpack.c.b16 %v7854, %v7852
      %v7875 = vpack.c.b16 %v7857, %v7855
      %v7876 = vpack.c.b16 %v7858, %v7856
      %v7877 = vpack.c.b16 %v7861, %v7859
      %v7878 = vpack.c.b16 %v7862, %v7860
      %7895 = vmatprep.subr.bf16.mxu0 %v7878
      %7896 = vmatpush1.bf16.msra.mxu0 %v7877
      %7897 = vmatprep.subr.bf16.mxu0 %v7876
      %7898 = vmatpush1.bf16.msra.mxu0 %v7875
      %7899 = vmatprep.subr.bf16.mxu0 %v7874
      %7900 = vmatpush1.bf16.msra.mxu0 %v7873
      %7901 = vmatprep.subr.bf16.mxu0 %v7872
      %7902 = vmatpush1.bf16.msra.mxu0 %v7871
      %7903 = vmatprep.subr.bf16.mxu0 %v7870
      %7904 = vmatpush1.bf16.msra.mxu0 %v7869
      %7905 = vmatprep.subr.bf16.mxu0 %v7868
      %7906 = vmatpush1.bf16.msra.mxu0 %v7867
      %7907 = vmatprep.subr.bf16.mxu0 %v7866
      %7908 = vmatpush1.bf16.msra.mxu0 %v7865
      %7909 = vmatprep.subr.bf16.mxu0 %v7864
      %7910 = vmatpush1.bf16.msra.mxu0 %v7863
      %7911 = vmatprep.subr.bf16.mxu0 0
      %7912 = vmatpush2.bf16.msra.mxu0 0
      %7913 = vmatprep.subr.bf16.mxu0 0
      %7914 = vmatpush2.bf16.msra.mxu0 0
      %7915 = vmatprep.subr.bf16.mxu0 0
      %7916 = vmatpush2.bf16.msra.mxu0 0
      %7917 = vmatprep.subr.bf16.mxu0 0
      %7918 = vmatpush2.bf16.msra.mxu0 0
      %7919 = vmatprep.subr.bf16.mxu0 0
      %7920 = vmatpush2.bf16.msra.mxu0 0
      %7921 = vmatprep.subr.bf16.mxu0 0
      %7922 = vmatpush2.bf16.msra.mxu0 0
      %7923 = vmatprep.subr.bf16.mxu0 0
      %7924 = vmatpush2.bf16.msra.mxu0 0
      %7925 = vmatprep.subr.bf16.mxu0 0
      %7926 = vmatpush2.bf16.msra.mxu0 0
      %7927 = vmatprep.mubr.bf16.mxu0 0
      %7928 = vmatmul.mubr.bf16.gmra.mxu0 %v7797
      %v7929 = vpop.f32.mrf.mxu0
      %v7930 = vadd.f32 0.0, %v7929
      %v7931 = vpop.f32.mrf.mxu0
      %v7932 = vadd.f32 0.0, %v7931
      %v7933 = vpop.f32.mrf.mxu0
      %v7934 = vpop.f32.mrf.mxu0
      %7935 = vdwg.mxu0
      %v7936 = vadd.f32 %v7779, %v7930
      %v7937 = vadd.f32 %v7780, %v7932
      %s7938 = scalar_lea.vmem [#allocation2], 16
      %v7939 = vld [vmem:[%s7938] ss:$32 sm:$0x1]
      %v7940 = vld [vmem:[%s7938] ss:$32 sm:$0x2]
      %v7941 = vor.u32 %v7939, %v7940
      %v7942 = vld [vmem:[%s7938] ss:$32 sm:$0x4]
      %v7943 = vor.u32 %v7941, %v7942
      %v7944 = vld [vmem:[%s7938] ss:$32 sm:$0x8]
      %v7945 = vor.u32 %v7943, %v7944
      %v7946 = vld [vmem:[%s7938] ss:$32 sm:$0x10]
      %v7947 = vor.u32 %v7945, %v7946
      %v7948 = vld [vmem:[%s7938] ss:$32 sm:$0x20]
      %v7949 = vor.u32 %v7947, %v7948
      %v7950 = vld [vmem:[%s7938] ss:$32 sm:$0x40]
      %v7951 = vor.u32 %v7949, %v7950
      %v7952 = vld [vmem:[%s7938] ss:$32 sm:$0x80]
      %v7953 = vor.u32 %v7951, %v7952
      %v7954 = vpack.c.bf16 %v7953, %v7953
      %s7955 = scalar_lea.vmem %s5, 2048
      %v7956 = vld [vmem:[%s7955] sm:$0xff]
      %v7957 = vld [vmem:[%s7955 + $0x8] sm:$0xff]
      %v7958 = vld [vmem:[%s7955 + $0x10] sm:$0xff]
      %v7959 = vld [vmem:[%s7955 + $0x18] sm:$0xff]
      %v7960 = vld [vmem:[%s7955 + $0x20] sm:$0xff]
      %v7961 = vld [vmem:[%s7955 + $0x28] sm:$0xff]
      %v7962 = vld [vmem:[%s7955 + $0x30] sm:$0xff]
      %v7963 = vld [vmem:[%s7955 + $0x38] sm:$0xff]
      %v7964 = vld [vmem:[%s7955 + $0x40] sm:$0xff]
      %v7965 = vld [vmem:[%s7955 + $0x48] sm:$0xff]
      %v7966 = vld [vmem:[%s7955 + $0x50] sm:$0xff]
      %v7967 = vld [vmem:[%s7955 + $0x58] sm:$0xff]
      %v7968 = vld [vmem:[%s7955 + $0x60] sm:$0xff]
      %v7969 = vld [vmem:[%s7955 + $0x68] sm:$0xff]
      %v7970 = vld [vmem:[%s7955 + $0x70] sm:$0xff]
      %v7971 = vld [vmem:[%s7955 + $0x78] sm:$0xff]
      %v7988 = vunpack.c.l.b16 %v7956
      %v7989 = vunpack.c.h.b16 %v7956
      %v7990 = vunpack.c.l.b16 %v7957
      %v7991 = vunpack.c.h.b16 %v7957
      %v7992 = vunpack.c.l.b16 %v7958
      %v7993 = vunpack.c.h.b16 %v7958
      %v7994 = vunpack.c.l.b16 %v7959
      %v7995 = vunpack.c.h.b16 %v7959
      %v7996 = vunpack.c.l.b16 %v7960
      %v7997 = vunpack.c.h.b16 %v7960
      %v7998 = vunpack.c.l.b16 %v7961
      %v7999 = vunpack.c.h.b16 %v7961
      %v8000 = vunpack.c.l.b16 %v7962
      %v8001 = vunpack.c.h.b16 %v7962
      %v8002 = vunpack.c.l.b16 %v7963
      %v8003 = vunpack.c.h.b16 %v7963
      %v8004 = vunpack.c.l.b16 %v7964
      %v8005 = vunpack.c.h.b16 %v7964
      %v8006 = vunpack.c.l.b16 %v7965
      %v8007 = vunpack.c.h.b16 %v7965
      %v8008 = vunpack.c.l.b16 %v7966
      %v8009 = vunpack.c.h.b16 %v7966
      %v8010 = vunpack.c.l.b16 %v7967
      %v8011 = vunpack.c.h.b16 %v7967
      %v8012 = vunpack.c.l.b16 %v7968
      %v8013 = vunpack.c.h.b16 %v7968
      %v8014 = vunpack.c.l.b16 %v7969
      %v8015 = vunpack.c.h.b16 %v7969
      %v8016 = vunpack.c.l.b16 %v7970
      %v8017 = vunpack.c.h.b16 %v7970
      %v8018 = vunpack.c.l.b16 %v7971
      %v8019 = vunpack.c.h.b16 %v7971
      %v8020 = vpack.c.b16 %v7990, %v7988
      %v8021 = vpack.c.b16 %v7991, %v7989
      %v8022 = vpack.c.b16 %v7994, %v7992
      %v8023 = vpack.c.b16 %v7995, %v7993
      %v8024 = vpack.c.b16 %v7998, %v7996
      %v8025 = vpack.c.b16 %v7999, %v7997
      %v8026 = vpack.c.b16 %v8002, %v8000
      %v8027 = vpack.c.b16 %v8003, %v8001
      %v8028 = vpack.c.b16 %v8006, %v8004
      %v8029 = vpack.c.b16 %v8007, %v8005
      %v8030 = vpack.c.b16 %v8010, %v8008
      %v8031 = vpack.c.b16 %v8011, %v8009
      %v8032 = vpack.c.b16 %v8014, %v8012
      %v8033 = vpack.c.b16 %v8015, %v8013
      %v8034 = vpack.c.b16 %v8018, %v8016
      %v8035 = vpack.c.b16 %v8019, %v8017
      %8052 = vmatprep.subr.bf16.mxu0 %v8035
      %8053 = vmatpush1.bf16.msra.mxu0 %v8034
      %8054 = vmatprep.subr.bf16.mxu0 %v8033
      %8055 = vmatpush1.bf16.msra.mxu0 %v8032
      %8056 = vmatprep.subr.bf16.mxu0 %v8031
      %8057 = vmatpush1.bf16.msra.mxu0 %v8030
      %8058 = vmatprep.subr.bf16.mxu0 %v8029
      %8059 = vmatpush1.bf16.msra.mxu0 %v8028
      %8060 = vmatprep.subr.bf16.mxu0 %v8027
      %8061 = vmatpush1.bf16.msra.mxu0 %v8026
      %8062 = vmatprep.subr.bf16.mxu0 %v8025
      %8063 = vmatpush1.bf16.msra.mxu0 %v8024
      %8064 = vmatprep.subr.bf16.mxu0 %v8023
      %8065 = vmatpush1.bf16.msra.mxu0 %v8022
      %8066 = vmatprep.subr.bf16.mxu0 %v8021
      %8067 = vmatpush1.bf16.msra.mxu0 %v8020
      %8068 = vmatprep.subr.bf16.mxu0 0
      %8069 = vmatpush2.bf16.msra.mxu0 0
      %8070 = vmatprep.subr.bf16.mxu0 0
      %8071 = vmatpush2.bf16.msra.mxu0 0
      %8072 = vmatprep.subr.bf16.mxu0 0
      %8073 = vmatpush2.bf16.msra.mxu0 0
      %8074 = vmatprep.subr.bf16.mxu0 0
      %8075 = vmatpush2.bf16.msra.mxu0 0
      %8076 = vmatprep.subr.bf16.mxu0 0
      %8077 = vmatpush2.bf16.msra.mxu0 0
      %8078 = vmatprep.subr.bf16.mxu0 0
      %8079 = vmatpush2.bf16.msra.mxu0 0
      %8080 = vmatprep.subr.bf16.mxu0 0
      %8081 = vmatpush2.bf16.msra.mxu0 0
      %8082 = vmatprep.subr.bf16.mxu0 0
      %8083 = vmatpush2.bf16.msra.mxu0 0
      %8084 = vmatprep.mubr.bf16.mxu0 0
      %8085 = vmatmul.mubr.bf16.gmra.mxu0 %v7954
      %v8086 = vpop.f32.mrf.mxu0
      %v8087 = vadd.f32 0.0, %v8086
      %v8088 = vpop.f32.mrf.mxu0
      %v8089 = vadd.f32 0.0, %v8088
      %v8090 = vpop.f32.mrf.mxu0
      %v8091 = vpop.f32.mrf.mxu0
      %8092 = vdwg.mxu0
      %v8093 = vadd.f32 %v7936, %v8087
      %v8094 = vadd.f32 %v7937, %v8089
      %s8095 = scalar_lea.vmem [#allocation2], 17
      %v8096 = vld [vmem:[%s8095] ss:$32 sm:$0x1]
      %v8097 = vld [vmem:[%s8095] ss:$32 sm:$0x2]
      %v8098 = vor.u32 %v8096, %v8097
      %v8099 = vld [vmem:[%s8095] ss:$32 sm:$0x4]
      %v8100 = vor.u32 %v8098, %v8099
      %v8101 = vld [vmem:[%s8095] ss:$32 sm:$0x8]
      %v8102 = vor.u32 %v8100, %v8101
      %v8103 = vld [vmem:[%s8095] ss:$32 sm:$0x10]
      %v8104 = vor.u32 %v8102, %v8103
      %v8105 = vld [vmem:[%s8095] ss:$32 sm:$0x20]
      %v8106 = vor.u32 %v8104, %v8105
      %v8107 = vld [vmem:[%s8095] ss:$32 sm:$0x40]
      %v8108 = vor.u32 %v8106, %v8107
      %v8109 = vld [vmem:[%s8095] ss:$32 sm:$0x80]
      %v8110 = vor.u32 %v8108, %v8109
      %v8111 = vpack.c.bf16 %v8110, %v8110
      %s8112 = scalar_lea.vmem %s5, 2176
      %v8113 = vld [vmem:[%s8112] sm:$0xff]
      %v8114 = vld [vmem:[%s8112 + $0x8] sm:$0xff]
      %v8115 = vld [vmem:[%s8112 + $0x10] sm:$0xff]
      %v8116 = vld [vmem:[%s8112 + $0x18] sm:$0xff]
      %v8117 = vld [vmem:[%s8112 + $0x20] sm:$0xff]
      %v8118 = vld [vmem:[%s8112 + $0x28] sm:$0xff]
      %v8119 = vld [vmem:[%s8112 + $0x30] sm:$0xff]
      %v8120 = vld [vmem:[%s8112 + $0x38] sm:$0xff]
      %v8121 = vld [vmem:[%s8112 + $0x40] sm:$0xff]
      %v8122 = vld [vmem:[%s8112 + $0x48] sm:$0xff]
      %v8123 = vld [vmem:[%s8112 + $0x50] sm:$0xff]
      %v8124 = vld [vmem:[%s8112 + $0x58] sm:$0xff]
      %v8125 = vld [vmem:[%s8112 + $0x60] sm:$0xff]
      %v8126 = vld [vmem:[%s8112 + $0x68] sm:$0xff]
      %v8127 = vld [vmem:[%s8112 + $0x70] sm:$0xff]
      %v8128 = vld [vmem:[%s8112 + $0x78] sm:$0xff]
      %v8145 = vunpack.c.l.b16 %v8113
      %v8146 = vunpack.c.h.b16 %v8113
      %v8147 = vunpack.c.l.b16 %v8114
      %v8148 = vunpack.c.h.b16 %v8114
      %v8149 = vunpack.c.l.b16 %v8115
      %v8150 = vunpack.c.h.b16 %v8115
      %v8151 = vunpack.c.l.b16 %v8116
      %v8152 = vunpack.c.h.b16 %v8116
      %v8153 = vunpack.c.l.b16 %v8117
      %v8154 = vunpack.c.h.b16 %v8117
      %v8155 = vunpack.c.l.b16 %v8118
      %v8156 = vunpack.c.h.b16 %v8118
      %v8157 = vunpack.c.l.b16 %v8119
      %v8158 = vunpack.c.h.b16 %v8119
      %v8159 = vunpack.c.l.b16 %v8120
      %v8160 = vunpack.c.h.b16 %v8120
      %v8161 = vunpack.c.l.b16 %v8121
      %v8162 = vunpack.c.h.b16 %v8121
      %v8163 = vunpack.c.l.b16 %v8122
      %v8164 = vunpack.c.h.b16 %v8122
      %v8165 = vunpack.c.l.b16 %v8123
      %v8166 = vunpack.c.h.b16 %v8123
      %v8167 = vunpack.c.l.b16 %v8124
      %v8168 = vunpack.c.h.b16 %v8124
      %v8169 = vunpack.c.l.b16 %v8125
      %v8170 = vunpack.c.h.b16 %v8125
      %v8171 = vunpack.c.l.b16 %v8126
      %v8172 = vunpack.c.h.b16 %v8126
      %v8173 = vunpack.c.l.b16 %v8127
      %v8174 = vunpack.c.h.b16 %v8127
      %v8175 = vunpack.c.l.b16 %v8128
      %v8176 = vunpack.c.h.b16 %v8128
      %v8177 = vpack.c.b16 %v8147, %v8145
      %v8178 = vpack.c.b16 %v8148, %v8146
      %v8179 = vpack.c.b16 %v8151, %v8149
      %v8180 = vpack.c.b16 %v8152, %v8150
      %v8181 = vpack.c.b16 %v8155, %v8153
      %v8182 = vpack.c.b16 %v8156, %v8154
      %v8183 = vpack.c.b16 %v8159, %v8157
      %v8184 = vpack.c.b16 %v8160, %v8158
      %v8185 = vpack.c.b16 %v8163, %v8161
      %v8186 = vpack.c.b16 %v8164, %v8162
      %v8187 = vpack.c.b16 %v8167, %v8165
      %v8188 = vpack.c.b16 %v8168, %v8166
      %v8189 = vpack.c.b16 %v8171, %v8169
      %v8190 = vpack.c.b16 %v8172, %v8170
      %v8191 = vpack.c.b16 %v8175, %v8173
      %v8192 = vpack.c.b16 %v8176, %v8174
      %8209 = vmatprep.subr.bf16.mxu0 %v8192
      %8210 = vmatpush1.bf16.msra.mxu0 %v8191
      %8211 = vmatprep.subr.bf16.mxu0 %v8190
      %8212 = vmatpush1.bf16.msra.mxu0 %v8189
      %8213 = vmatprep.subr.bf16.mxu0 %v8188
      %8214 = vmatpush1.bf16.msra.mxu0 %v8187
      %8215 = vmatprep.subr.bf16.mxu0 %v8186
      %8216 = vmatpush1.bf16.msra.mxu0 %v8185
      %8217 = vmatprep.subr.bf16.mxu0 %v8184
      %8218 = vmatpush1.bf16.msra.mxu0 %v8183
      %8219 = vmatprep.subr.bf16.mxu0 %v8182
      %8220 = vmatpush1.bf16.msra.mxu0 %v8181
      %8221 = vmatprep.subr.bf16.mxu0 %v8180
      %8222 = vmatpush1.bf16.msra.mxu0 %v8179
      %8223 = vmatprep.subr.bf16.mxu0 %v8178
      %8224 = vmatpush1.bf16.msra.mxu0 %v8177
      %8225 = vmatprep.subr.bf16.mxu0 0
      %8226 = vmatpush2.bf16.msra.mxu0 0
      %8227 = vmatprep.subr.bf16.mxu0 0
      %8228 = vmatpush2.bf16.msra.mxu0 0
      %8229 = vmatprep.subr.bf16.mxu0 0
      %8230 = vmatpush2.bf16.msra.mxu0 0
      %8231 = vmatprep.subr.bf16.mxu0 0
      %8232 = vmatpush2.bf16.msra.mxu0 0
      %8233 = vmatprep.subr.bf16.mxu0 0
      %8234 = vmatpush2.bf16.msra.mxu0 0
      %8235 = vmatprep.subr.bf16.mxu0 0
      %8236 = vmatpush2.bf16.msra.mxu0 0
      %8237 = vmatprep.subr.bf16.mxu0 0
      %8238 = vmatpush2.bf16.msra.mxu0 0
      %8239 = vmatprep.subr.bf16.mxu0 0
      %8240 = vmatpush2.bf16.msra.mxu0 0
      %8241 = vmatprep.mubr.bf16.mxu0 0
      %8242 = vmatmul.mubr.bf16.gmra.mxu0 %v8111
      %v8243 = vpop.f32.mrf.mxu0
      %v8244 = vadd.f32 0.0, %v8243
      %v8245 = vpop.f32.mrf.mxu0
      %v8246 = vadd.f32 0.0, %v8245
      %v8247 = vpop.f32.mrf.mxu0
      %v8248 = vpop.f32.mrf.mxu0
      %8249 = vdwg.mxu0
      %v8250 = vadd.f32 %v8093, %v8244
      %v8251 = vadd.f32 %v8094, %v8246
      %s8252 = scalar_lea.vmem [#allocation2], 18
      %v8253 = vld [vmem:[%s8252] ss:$32 sm:$0x1]
      %v8254 = vld [vmem:[%s8252] ss:$32 sm:$0x2]
      %v8255 = vor.u32 %v8253, %v8254
      %v8256 = vld [vmem:[%s8252] ss:$32 sm:$0x4]
      %v8257 = vor.u32 %v8255, %v8256
      %v8258 = vld [vmem:[%s8252] ss:$32 sm:$0x8]
      %v8259 = vor.u32 %v8257, %v8258
      %v8260 = vld [vmem:[%s8252] ss:$32 sm:$0x10]
      %v8261 = vor.u32 %v8259, %v8260
      %v8262 = vld [vmem:[%s8252] ss:$32 sm:$0x20]
      %v8263 = vor.u32 %v8261, %v8262
      %v8264 = vld [vmem:[%s8252] ss:$32 sm:$0x40]
      %v8265 = vor.u32 %v8263, %v8264
      %v8266 = vld [vmem:[%s8252] ss:$32 sm:$0x80]
      %v8267 = vor.u32 %v8265, %v8266
      %v8268 = vpack.c.bf16 %v8267, %v8267
      %s8269 = scalar_lea.vmem %s5, 2304
      %v8270 = vld [vmem:[%s8269] sm:$0xff]
      %v8271 = vld [vmem:[%s8269 + $0x8] sm:$0xff]
      %v8272 = vld [vmem:[%s8269 + $0x10] sm:$0xff]
      %v8273 = vld [vmem:[%s8269 + $0x18] sm:$0xff]
      %v8274 = vld [vmem:[%s8269 + $0x20] sm:$0xff]
      %v8275 = vld [vmem:[%s8269 + $0x28] sm:$0xff]
      %v8276 = vld [vmem:[%s8269 + $0x30] sm:$0xff]
      %v8277 = vld [vmem:[%s8269 + $0x38] sm:$0xff]
      %v8278 = vld [vmem:[%s8269 + $0x40] sm:$0xff]
      %v8279 = vld [vmem:[%s8269 + $0x48] sm:$0xff]
      %v8280 = vld [vmem:[%s8269 + $0x50] sm:$0xff]
      %v8281 = vld [vmem:[%s8269 + $0x58] sm:$0xff]
      %v8282 = vld [vmem:[%s8269 + $0x60] sm:$0xff]
      %v8283 = vld [vmem:[%s8269 + $0x68] sm:$0xff]
      %v8284 = vld [vmem:[%s8269 + $0x70] sm:$0xff]
      %v8285 = vld [vmem:[%s8269 + $0x78] sm:$0xff]
      %v8302 = vunpack.c.l.b16 %v8270
      %v8303 = vunpack.c.h.b16 %v8270
      %v8304 = vunpack.c.l.b16 %v8271
      %v8305 = vunpack.c.h.b16 %v8271
      %v8306 = vunpack.c.l.b16 %v8272
      %v8307 = vunpack.c.h.b16 %v8272
      %v8308 = vunpack.c.l.b16 %v8273
      %v8309 = vunpack.c.h.b16 %v8273
      %v8310 = vunpack.c.l.b16 %v8274
      %v8311 = vunpack.c.h.b16 %v8274
      %v8312 = vunpack.c.l.b16 %v8275
      %v8313 = vunpack.c.h.b16 %v8275
      %v8314 = vunpack.c.l.b16 %v8276
      %v8315 = vunpack.c.h.b16 %v8276
      %v8316 = vunpack.c.l.b16 %v8277
      %v8317 = vunpack.c.h.b16 %v8277
      %v8318 = vunpack.c.l.b16 %v8278
      %v8319 = vunpack.c.h.b16 %v8278
      %v8320 = vunpack.c.l.b16 %v8279
      %v8321 = vunpack.c.h.b16 %v8279
      %v8322 = vunpack.c.l.b16 %v8280
      %v8323 = vunpack.c.h.b16 %v8280
      %v8324 = vunpack.c.l.b16 %v8281
      %v8325 = vunpack.c.h.b16 %v8281
      %v8326 = vunpack.c.l.b16 %v8282
      %v8327 = vunpack.c.h.b16 %v8282
      %v8328 = vunpack.c.l.b16 %v8283
      %v8329 = vunpack.c.h.b16 %v8283
      %v8330 = vunpack.c.l.b16 %v8284
      %v8331 = vunpack.c.h.b16 %v8284
      %v8332 = vunpack.c.l.b16 %v8285
      %v8333 = vunpack.c.h.b16 %v8285
      %v8334 = vpack.c.b16 %v8304, %v8302
      %v8335 = vpack.c.b16 %v8305, %v8303
      %v8336 = vpack.c.b16 %v8308, %v8306
      %v8337 = vpack.c.b16 %v8309, %v8307
      %v8338 = vpack.c.b16 %v8312, %v8310
      %v8339 = vpack.c.b16 %v8313, %v8311
      %v8340 = vpack.c.b16 %v8316, %v8314
      %v8341 = vpack.c.b16 %v8317, %v8315
      %v8342 = vpack.c.b16 %v8320, %v8318
      %v8343 = vpack.c.b16 %v8321, %v8319
      %v8344 = vpack.c.b16 %v8324, %v8322
      %v8345 = vpack.c.b16 %v8325, %v8323
      %v8346 = vpack.c.b16 %v8328, %v8326
      %v8347 = vpack.c.b16 %v8329, %v8327
      %v8348 = vpack.c.b16 %v8332, %v8330
      %v8349 = vpack.c.b16 %v8333, %v8331
      %8366 = vmatprep.subr.bf16.mxu0 %v8349
      %8367 = vmatpush1.bf16.msra.mxu0 %v8348
      %8368 = vmatprep.subr.bf16.mxu0 %v8347
      %8369 = vmatpush1.bf16.msra.mxu0 %v8346
      %8370 = vmatprep.subr.bf16.mxu0 %v8345
      %8371 = vmatpush1.bf16.msra.mxu0 %v8344
      %8372 = vmatprep.subr.bf16.mxu0 %v8343
      %8373 = vmatpush1.bf16.msra.mxu0 %v8342
      %8374 = vmatprep.subr.bf16.mxu0 %v8341
      %8375 = vmatpush1.bf16.msra.mxu0 %v8340
      %8376 = vmatprep.subr.bf16.mxu0 %v8339
      %8377 = vmatpush1.bf16.msra.mxu0 %v8338
      %8378 = vmatprep.subr.bf16.mxu0 %v8337
      %8379 = vmatpush1.bf16.msra.mxu0 %v8336
      %8380 = vmatprep.subr.bf16.mxu0 %v8335
      %8381 = vmatpush1.bf16.msra.mxu0 %v8334
      %8382 = vmatprep.subr.bf16.mxu0 0
      %8383 = vmatpush2.bf16.msra.mxu0 0
      %8384 = vmatprep.subr.bf16.mxu0 0
      %8385 = vmatpush2.bf16.msra.mxu0 0
      %8386 = vmatprep.subr.bf16.mxu0 0
      %8387 = vmatpush2.bf16.msra.mxu0 0
      %8388 = vmatprep.subr.bf16.mxu0 0
      %8389 = vmatpush2.bf16.msra.mxu0 0
      %8390 = vmatprep.subr.bf16.mxu0 0
      %8391 = vmatpush2.bf16.msra.mxu0 0
      %8392 = vmatprep.subr.bf16.mxu0 0
      %8393 = vmatpush2.bf16.msra.mxu0 0
      %8394 = vmatprep.subr.bf16.mxu0 0
      %8395 = vmatpush2.bf16.msra.mxu0 0
      %8396 = vmatprep.subr.bf16.mxu0 0
      %8397 = vmatpush2.bf16.msra.mxu0 0
      %8398 = vmatprep.mubr.bf16.mxu0 0
      %8399 = vmatmul.mubr.bf16.gmra.mxu0 %v8268
      %v8400 = vpop.f32.mrf.mxu0
      %v8401 = vadd.f32 0.0, %v8400
      %v8402 = vpop.f32.mrf.mxu0
      %v8403 = vadd.f32 0.0, %v8402
      %v8404 = vpop.f32.mrf.mxu0
      %v8405 = vpop.f32.mrf.mxu0
      %8406 = vdwg.mxu0
      %v8407 = vadd.f32 %v8250, %v8401
      %v8408 = vadd.f32 %v8251, %v8403
      %s8409 = scalar_lea.vmem [#allocation2], 19
      %v8410 = vld [vmem:[%s8409] ss:$32 sm:$0x1]
      %v8411 = vld [vmem:[%s8409] ss:$32 sm:$0x2]
      %v8412 = vor.u32 %v8410, %v8411
      %v8413 = vld [vmem:[%s8409] ss:$32 sm:$0x4]
      %v8414 = vor.u32 %v8412, %v8413
      %v8415 = vld [vmem:[%s8409] ss:$32 sm:$0x8]
      %v8416 = vor.u32 %v8414, %v8415
      %v8417 = vld [vmem:[%s8409] ss:$32 sm:$0x10]
      %v8418 = vor.u32 %v8416, %v8417
      %v8419 = vld [vmem:[%s8409] ss:$32 sm:$0x20]
      %v8420 = vor.u32 %v8418, %v8419
      %v8421 = vld [vmem:[%s8409] ss:$32 sm:$0x40]
      %v8422 = vor.u32 %v8420, %v8421
      %v8423 = vld [vmem:[%s8409] ss:$32 sm:$0x80]
      %v8424 = vor.u32 %v8422, %v8423
      %v8425 = vpack.c.bf16 %v8424, %v8424
      %s8426 = scalar_lea.vmem %s5, 2432
      %v8427 = vld [vmem:[%s8426] sm:$0xff]
      %v8428 = vld [vmem:[%s8426 + $0x8] sm:$0xff]
      %v8429 = vld [vmem:[%s8426 + $0x10] sm:$0xff]
      %v8430 = vld [vmem:[%s8426 + $0x18] sm:$0xff]
      %v8431 = vld [vmem:[%s8426 + $0x20] sm:$0xff]
      %v8432 = vld [vmem:[%s8426 + $0x28] sm:$0xff]
      %v8433 = vld [vmem:[%s8426 + $0x30] sm:$0xff]
      %v8434 = vld [vmem:[%s8426 + $0x38] sm:$0xff]
      %v8435 = vld [vmem:[%s8426 + $0x40] sm:$0xff]
      %v8436 = vld [vmem:[%s8426 + $0x48] sm:$0xff]
      %v8437 = vld [vmem:[%s8426 + $0x50] sm:$0xff]
      %v8438 = vld [vmem:[%s8426 + $0x58] sm:$0xff]
      %v8439 = vld [vmem:[%s8426 + $0x60] sm:$0xff]
      %v8440 = vld [vmem:[%s8426 + $0x68] sm:$0xff]
      %v8441 = vld [vmem:[%s8426 + $0x70] sm:$0xff]
      %v8442 = vld [vmem:[%s8426 + $0x78] sm:$0xff]
      %v8459 = vunpack.c.l.b16 %v8427
      %v8460 = vunpack.c.h.b16 %v8427
      %v8461 = vunpack.c.l.b16 %v8428
      %v8462 = vunpack.c.h.b16 %v8428
      %v8463 = vunpack.c.l.b16 %v8429
      %v8464 = vunpack.c.h.b16 %v8429
      %v8465 = vunpack.c.l.b16 %v8430
      %v8466 = vunpack.c.h.b16 %v8430
      %v8467 = vunpack.c.l.b16 %v8431
      %v8468 = vunpack.c.h.b16 %v8431
      %v8469 = vunpack.c.l.b16 %v8432
      %v8470 = vunpack.c.h.b16 %v8432
      %v8471 = vunpack.c.l.b16 %v8433
      %v8472 = vunpack.c.h.b16 %v8433
      %v8473 = vunpack.c.l.b16 %v8434
      %v8474 = vunpack.c.h.b16 %v8434
      %v8475 = vunpack.c.l.b16 %v8435
      %v8476 = vunpack.c.h.b16 %v8435
      %v8477 = vunpack.c.l.b16 %v8436
      %v8478 = vunpack.c.h.b16 %v8436
      %v8479 = vunpack.c.l.b16 %v8437
      %v8480 = vunpack.c.h.b16 %v8437
      %v8481 = vunpack.c.l.b16 %v8438
      %v8482 = vunpack.c.h.b16 %v8438
      %v8483 = vunpack.c.l.b16 %v8439
      %v8484 = vunpack.c.h.b16 %v8439
      %v8485 = vunpack.c.l.b16 %v8440
      %v8486 = vunpack.c.h.b16 %v8440
      %v8487 = vunpack.c.l.b16 %v8441
      %v8488 = vunpack.c.h.b16 %v8441
      %v8489 = vunpack.c.l.b16 %v8442
      %v8490 = vunpack.c.h.b16 %v8442
      %v8491 = vpack.c.b16 %v8461, %v8459
      %v8492 = vpack.c.b16 %v8462, %v8460
      %v8493 = vpack.c.b16 %v8465, %v8463
      %v8494 = vpack.c.b16 %v8466, %v8464
      %v8495 = vpack.c.b16 %v8469, %v8467
      %v8496 = vpack.c.b16 %v8470, %v8468
      %v8497 = vpack.c.b16 %v8473, %v8471
      %v8498 = vpack.c.b16 %v8474, %v8472
      %v8499 = vpack.c.b16 %v8477, %v8475
      %v8500 = vpack.c.b16 %v8478, %v8476
      %v8501 = vpack.c.b16 %v8481, %v8479
      %v8502 = vpack.c.b16 %v8482, %v8480
      %v8503 = vpack.c.b16 %v8485, %v8483
      %v8504 = vpack.c.b16 %v8486, %v8484
      %v8505 = vpack.c.b16 %v8489, %v8487
      %v8506 = vpack.c.b16 %v8490, %v8488
      %8523 = vmatprep.subr.bf16.mxu0 %v8506
      %8524 = vmatpush1.bf16.msra.mxu0 %v8505
      %8525 = vmatprep.subr.bf16.mxu0 %v8504
      %8526 = vmatpush1.bf16.msra.mxu0 %v8503
      %8527 = vmatprep.subr.bf16.mxu0 %v8502
      %8528 = vmatpush1.bf16.msra.mxu0 %v8501
      %8529 = vmatprep.subr.bf16.mxu0 %v8500
      %8530 = vmatpush1.bf16.msra.mxu0 %v8499
      %8531 = vmatprep.subr.bf16.mxu0 %v8498
      %8532 = vmatpush1.bf16.msra.mxu0 %v8497
      %8533 = vmatprep.subr.bf16.mxu0 %v8496
      %8534 = vmatpush1.bf16.msra.mxu0 %v8495
      %8535 = vmatprep.subr.bf16.mxu0 %v8494
      %8536 = vmatpush1.bf16.msra.mxu0 %v8493
      %8537 = vmatprep.subr.bf16.mxu0 %v8492
      %8538 = vmatpush1.bf16.msra.mxu0 %v8491
      %8539 = vmatprep.subr.bf16.mxu0 0
      %8540 = vmatpush2.bf16.msra.mxu0 0
      %8541 = vmatprep.subr.bf16.mxu0 0
      %8542 = vmatpush2.bf16.msra.mxu0 0
      %8543 = vmatprep.subr.bf16.mxu0 0
      %8544 = vmatpush2.bf16.msra.mxu0 0
      %8545 = vmatprep.subr.bf16.mxu0 0
      %8546 = vmatpush2.bf16.msra.mxu0 0
      %8547 = vmatprep.subr.bf16.mxu0 0
      %8548 = vmatpush2.bf16.msra.mxu0 0
      %8549 = vmatprep.subr.bf16.mxu0 0
      %8550 = vmatpush2.bf16.msra.mxu0 0
      %8551 = vmatprep.subr.bf16.mxu0 0
      %8552 = vmatpush2.bf16.msra.mxu0 0
      %8553 = vmatprep.subr.bf16.mxu0 0
      %8554 = vmatpush2.bf16.msra.mxu0 0
      %8555 = vmatprep.mubr.bf16.mxu0 0
      %8556 = vmatmul.mubr.bf16.gmra.mxu0 %v8425
      %v8557 = vpop.f32.mrf.mxu0
      %v8558 = vadd.f32 0.0, %v8557
      %v8559 = vpop.f32.mrf.mxu0
      %v8560 = vadd.f32 0.0, %v8559
      %v8561 = vpop.f32.mrf.mxu0
      %v8562 = vpop.f32.mrf.mxu0
      %8563 = vdwg.mxu0
      %v8564 = vadd.f32 %v8407, %v8558
      %v8565 = vadd.f32 %v8408, %v8560
      %s8566 = scalar_lea.vmem [#allocation2], 20
      %v8567 = vld [vmem:[%s8566] ss:$32 sm:$0x1]
      %v8568 = vld [vmem:[%s8566] ss:$32 sm:$0x2]
      %v8569 = vor.u32 %v8567, %v8568
      %v8570 = vld [vmem:[%s8566] ss:$32 sm:$0x4]
      %v8571 = vor.u32 %v8569, %v8570
      %v8572 = vld [vmem:[%s8566] ss:$32 sm:$0x8]
      %v8573 = vor.u32 %v8571, %v8572
      %v8574 = vld [vmem:[%s8566] ss:$32 sm:$0x10]
      %v8575 = vor.u32 %v8573, %v8574
      %v8576 = vld [vmem:[%s8566] ss:$32 sm:$0x20]
      %v8577 = vor.u32 %v8575, %v8576
      %v8578 = vld [vmem:[%s8566] ss:$32 sm:$0x40]
      %v8579 = vor.u32 %v8577, %v8578
      %v8580 = vld [vmem:[%s8566] ss:$32 sm:$0x80]
      %v8581 = vor.u32 %v8579, %v8580
      %v8582 = vpack.c.bf16 %v8581, %v8581
      %s8583 = scalar_lea.vmem %s5, 2560
      %v8584 = vld [vmem:[%s8583] sm:$0xff]
      %v8585 = vld [vmem:[%s8583 + $0x8] sm:$0xff]
      %v8586 = vld [vmem:[%s8583 + $0x10] sm:$0xff]
      %v8587 = vld [vmem:[%s8583 + $0x18] sm:$0xff]
      %v8588 = vld [vmem:[%s8583 + $0x20] sm:$0xff]
      %v8589 = vld [vmem:[%s8583 + $0x28] sm:$0xff]
      %v8590 = vld [vmem:[%s8583 + $0x30] sm:$0xff]
      %v8591 = vld [vmem:[%s8583 + $0x38] sm:$0xff]
      %v8592 = vld [vmem:[%s8583 + $0x40] sm:$0xff]
      %v8593 = vld [vmem:[%s8583 + $0x48] sm:$0xff]
      %v8594 = vld [vmem:[%s8583 + $0x50] sm:$0xff]
      %v8595 = vld [vmem:[%s8583 + $0x58] sm:$0xff]
      %v8596 = vld [vmem:[%s8583 + $0x60] sm:$0xff]
      %v8597 = vld [vmem:[%s8583 + $0x68] sm:$0xff]
      %v8598 = vld [vmem:[%s8583 + $0x70] sm:$0xff]
      %v8599 = vld [vmem:[%s8583 + $0x78] sm:$0xff]
      %v8616 = vunpack.c.l.b16 %v8584
      %v8617 = vunpack.c.h.b16 %v8584
      %v8618 = vunpack.c.l.b16 %v8585
      %v8619 = vunpack.c.h.b16 %v8585
      %v8620 = vunpack.c.l.b16 %v8586
      %v8621 = vunpack.c.h.b16 %v8586
      %v8622 = vunpack.c.l.b16 %v8587
      %v8623 = vunpack.c.h.b16 %v8587
      %v8624 = vunpack.c.l.b16 %v8588
      %v8625 = vunpack.c.h.b16 %v8588
      %v8626 = vunpack.c.l.b16 %v8589
      %v8627 = vunpack.c.h.b16 %v8589
      %v8628 = vunpack.c.l.b16 %v8590
      %v8629 = vunpack.c.h.b16 %v8590
      %v8630 = vunpack.c.l.b16 %v8591
      %v8631 = vunpack.c.h.b16 %v8591
      %v8632 = vunpack.c.l.b16 %v8592
      %v8633 = vunpack.c.h.b16 %v8592
      %v8634 = vunpack.c.l.b16 %v8593
      %v8635 = vunpack.c.h.b16 %v8593
      %v8636 = vunpack.c.l.b16 %v8594
      %v8637 = vunpack.c.h.b16 %v8594
      %v8638 = vunpack.c.l.b16 %v8595
      %v8639 = vunpack.c.h.b16 %v8595
      %v8640 = vunpack.c.l.b16 %v8596
      %v8641 = vunpack.c.h.b16 %v8596
      %v8642 = vunpack.c.l.b16 %v8597
      %v8643 = vunpack.c.h.b16 %v8597
      %v8644 = vunpack.c.l.b16 %v8598
      %v8645 = vunpack.c.h.b16 %v8598
      %v8646 = vunpack.c.l.b16 %v8599
      %v8647 = vunpack.c.h.b16 %v8599
      %v8648 = vpack.c.b16 %v8618, %v8616
      %v8649 = vpack.c.b16 %v8619, %v8617
      %v8650 = vpack.c.b16 %v8622, %v8620
      %v8651 = vpack.c.b16 %v8623, %v8621
      %v8652 = vpack.c.b16 %v8626, %v8624
      %v8653 = vpack.c.b16 %v8627, %v8625
      %v8654 = vpack.c.b16 %v8630, %v8628
      %v8655 = vpack.c.b16 %v8631, %v8629
      %v8656 = vpack.c.b16 %v8634, %v8632
      %v8657 = vpack.c.b16 %v8635, %v8633
      %v8658 = vpack.c.b16 %v8638, %v8636
      %v8659 = vpack.c.b16 %v8639, %v8637
      %v8660 = vpack.c.b16 %v8642, %v8640
      %v8661 = vpack.c.b16 %v8643, %v8641
      %v8662 = vpack.c.b16 %v8646, %v8644
      %v8663 = vpack.c.b16 %v8647, %v8645
      %8680 = vmatprep.subr.bf16.mxu0 %v8663
      %8681 = vmatpush1.bf16.msra.mxu0 %v8662
      %8682 = vmatprep.subr.bf16.mxu0 %v8661
      %8683 = vmatpush1.bf16.msra.mxu0 %v8660
      %8684 = vmatprep.subr.bf16.mxu0 %v8659
      %8685 = vmatpush1.bf16.msra.mxu0 %v8658
      %8686 = vmatprep.subr.bf16.mxu0 %v8657
      %8687 = vmatpush1.bf16.msra.mxu0 %v8656
      %8688 = vmatprep.subr.bf16.mxu0 %v8655
      %8689 = vmatpush1.bf16.msra.mxu0 %v8654
      %8690 = vmatprep.subr.bf16.mxu0 %v8653
      %8691 = vmatpush1.bf16.msra.mxu0 %v8652
      %8692 = vmatprep.subr.bf16.mxu0 %v8651
      %8693 = vmatpush1.bf16.msra.mxu0 %v8650
      %8694 = vmatprep.subr.bf16.mxu0 %v8649
      %8695 = vmatpush1.bf16.msra.mxu0 %v8648
      %8696 = vmatprep.subr.bf16.mxu0 0
      %8697 = vmatpush2.bf16.msra.mxu0 0
      %8698 = vmatprep.subr.bf16.mxu0 0
      %8699 = vmatpush2.bf16.msra.mxu0 0
      %8700 = vmatprep.subr.bf16.mxu0 0
      %8701 = vmatpush2.bf16.msra.mxu0 0
      %8702 = vmatprep.subr.bf16.mxu0 0
      %8703 = vmatpush2.bf16.msra.mxu0 0
      %8704 = vmatprep.subr.bf16.mxu0 0
      %8705 = vmatpush2.bf16.msra.mxu0 0
      %8706 = vmatprep.subr.bf16.mxu0 0
      %8707 = vmatpush2.bf16.msra.mxu0 0
      %8708 = vmatprep.subr.bf16.mxu0 0
      %8709 = vmatpush2.bf16.msra.mxu0 0
      %8710 = vmatprep.subr.bf16.mxu0 0
      %8711 = vmatpush2.bf16.msra.mxu0 0
      %8712 = vmatprep.mubr.bf16.mxu0 0
      %8713 = vmatmul.mubr.bf16.gmra.mxu0 %v8582
      %v8714 = vpop.f32.mrf.mxu0
      %v8715 = vadd.f32 0.0, %v8714
      %v8716 = vpop.f32.mrf.mxu0
      %v8717 = vadd.f32 0.0, %v8716
      %v8718 = vpop.f32.mrf.mxu0
      %v8719 = vpop.f32.mrf.mxu0
      %8720 = vdwg.mxu0
      %v8721 = vadd.f32 %v8564, %v8715
      %v8722 = vadd.f32 %v8565, %v8717
      %s8723 = scalar_lea.vmem [#allocation2], 21
      %v8724 = vld [vmem:[%s8723] ss:$32 sm:$0x1]
      %v8725 = vld [vmem:[%s8723] ss:$32 sm:$0x2]
      %v8726 = vor.u32 %v8724, %v8725
      %v8727 = vld [vmem:[%s8723] ss:$32 sm:$0x4]
      %v8728 = vor.u32 %v8726, %v8727
      %v8729 = vld [vmem:[%s8723] ss:$32 sm:$0x8]
      %v8730 = vor.u32 %v8728, %v8729
      %v8731 = vld [vmem:[%s8723] ss:$32 sm:$0x10]
      %v8732 = vor.u32 %v8730, %v8731
      %v8733 = vld [vmem:[%s8723] ss:$32 sm:$0x20]
      %v8734 = vor.u32 %v8732, %v8733
      %v8735 = vld [vmem:[%s8723] ss:$32 sm:$0x40]
      %v8736 = vor.u32 %v8734, %v8735
      %v8737 = vld [vmem:[%s8723] ss:$32 sm:$0x80]
      %v8738 = vor.u32 %v8736, %v8737
      %v8739 = vpack.c.bf16 %v8738, %v8738
      %s8740 = scalar_lea.vmem %s5, 2688
      %v8741 = vld [vmem:[%s8740] sm:$0xff]
      %v8742 = vld [vmem:[%s8740 + $0x8] sm:$0xff]
      %v8743 = vld [vmem:[%s8740 + $0x10] sm:$0xff]
      %v8744 = vld [vmem:[%s8740 + $0x18] sm:$0xff]
      %v8745 = vld [vmem:[%s8740 + $0x20] sm:$0xff]
      %v8746 = vld [vmem:[%s8740 + $0x28] sm:$0xff]
      %v8747 = vld [vmem:[%s8740 + $0x30] sm:$0xff]
      %v8748 = vld [vmem:[%s8740 + $0x38] sm:$0xff]
      %v8749 = vld [vmem:[%s8740 + $0x40] sm:$0xff]
      %v8750 = vld [vmem:[%s8740 + $0x48] sm:$0xff]
      %v8751 = vld [vmem:[%s8740 + $0x50] sm:$0xff]
      %v8752 = vld [vmem:[%s8740 + $0x58] sm:$0xff]
      %v8753 = vld [vmem:[%s8740 + $0x60] sm:$0xff]
      %v8754 = vld [vmem:[%s8740 + $0x68] sm:$0xff]
      %v8755 = vld [vmem:[%s8740 + $0x70] sm:$0xff]
      %v8756 = vld [vmem:[%s8740 + $0x78] sm:$0xff]
      %v8773 = vunpack.c.l.b16 %v8741
      %v8774 = vunpack.c.h.b16 %v8741
      %v8775 = vunpack.c.l.b16 %v8742
      %v8776 = vunpack.c.h.b16 %v8742
      %v8777 = vunpack.c.l.b16 %v8743
      %v8778 = vunpack.c.h.b16 %v8743
      %v8779 = vunpack.c.l.b16 %v8744
      %v8780 = vunpack.c.h.b16 %v8744
      %v8781 = vunpack.c.l.b16 %v8745
      %v8782 = vunpack.c.h.b16 %v8745
      %v8783 = vunpack.c.l.b16 %v8746
      %v8784 = vunpack.c.h.b16 %v8746
      %v8785 = vunpack.c.l.b16 %v8747
      %v8786 = vunpack.c.h.b16 %v8747
      %v8787 = vunpack.c.l.b16 %v8748
      %v8788 = vunpack.c.h.b16 %v8748
      %v8789 = vunpack.c.l.b16 %v8749
      %v8790 = vunpack.c.h.b16 %v8749
      %v8791 = vunpack.c.l.b16 %v8750
      %v8792 = vunpack.c.h.b16 %v8750
      %v8793 = vunpack.c.l.b16 %v8751
      %v8794 = vunpack.c.h.b16 %v8751
      %v8795 = vunpack.c.l.b16 %v8752
      %v8796 = vunpack.c.h.b16 %v8752
      %v8797 = vunpack.c.l.b16 %v8753
      %v8798 = vunpack.c.h.b16 %v8753
      %v8799 = vunpack.c.l.b16 %v8754
      %v8800 = vunpack.c.h.b16 %v8754
      %v8801 = vunpack.c.l.b16 %v8755
      %v8802 = vunpack.c.h.b16 %v8755
      %v8803 = vunpack.c.l.b16 %v8756
      %v8804 = vunpack.c.h.b16 %v8756
      %v8805 = vpack.c.b16 %v8775, %v8773
      %v8806 = vpack.c.b16 %v8776, %v8774
      %v8807 = vpack.c.b16 %v8779, %v8777
      %v8808 = vpack.c.b16 %v8780, %v8778
      %v8809 = vpack.c.b16 %v8783, %v8781
      %v8810 = vpack.c.b16 %v8784, %v8782
      %v8811 = vpack.c.b16 %v8787, %v8785
      %v8812 = vpack.c.b16 %v8788, %v8786
      %v8813 = vpack.c.b16 %v8791, %v8789
      %v8814 = vpack.c.b16 %v8792, %v8790
      %v8815 = vpack.c.b16 %v8795, %v8793
      %v8816 = vpack.c.b16 %v8796, %v8794
      %v8817 = vpack.c.b16 %v8799, %v8797
      %v8818 = vpack.c.b16 %v8800, %v8798
      %v8819 = vpack.c.b16 %v8803, %v8801
      %v8820 = vpack.c.b16 %v8804, %v8802
      %8837 = vmatprep.subr.bf16.mxu0 %v8820
      %8838 = vmatpush1.bf16.msra.mxu0 %v8819
      %8839 = vmatprep.subr.bf16.mxu0 %v8818
      %8840 = vmatpush1.bf16.msra.mxu0 %v8817
      %8841 = vmatprep.subr.bf16.mxu0 %v8816
      %8842 = vmatpush1.bf16.msra.mxu0 %v8815
      %8843 = vmatprep.subr.bf16.mxu0 %v8814
      %8844 = vmatpush1.bf16.msra.mxu0 %v8813
      %8845 = vmatprep.subr.bf16.mxu0 %v8812
      %8846 = vmatpush1.bf16.msra.mxu0 %v8811
      %8847 = vmatprep.subr.bf16.mxu0 %v8810
      %8848 = vmatpush1.bf16.msra.mxu0 %v8809
      %8849 = vmatprep.subr.bf16.mxu0 %v8808
      %8850 = vmatpush1.bf16.msra.mxu0 %v8807
      %8851 = vmatprep.subr.bf16.mxu0 %v8806
      %8852 = vmatpush1.bf16.msra.mxu0 %v8805
      %8853 = vmatprep.subr.bf16.mxu0 0
      %8854 = vmatpush2.bf16.msra.mxu0 0
      %8855 = vmatprep.subr.bf16.mxu0 0
      %8856 = vmatpush2.bf16.msra.mxu0 0
      %8857 = vmatprep.subr.bf16.mxu0 0
      %8858 = vmatpush2.bf16.msra.mxu0 0
      %8859 = vmatprep.subr.bf16.mxu0 0
      %8860 = vmatpush2.bf16.msra.mxu0 0
      %8861 = vmatprep.subr.bf16.mxu0 0
      %8862 = vmatpush2.bf16.msra.mxu0 0
      %8863 = vmatprep.subr.bf16.mxu0 0
      %8864 = vmatpush2.bf16.msra.mxu0 0
      %8865 = vmatprep.subr.bf16.mxu0 0
      %8866 = vmatpush2.bf16.msra.mxu0 0
      %8867 = vmatprep.subr.bf16.mxu0 0
      %8868 = vmatpush2.bf16.msra.mxu0 0
      %8869 = vmatprep.mubr.bf16.mxu0 0
      %8870 = vmatmul.mubr.bf16.gmra.mxu0 %v8739
      %v8871 = vpop.f32.mrf.mxu0
      %v8872 = vadd.f32 0.0, %v8871
      %v8873 = vpop.f32.mrf.mxu0
      %v8874 = vadd.f32 0.0, %v8873
      %v8875 = vpop.f32.mrf.mxu0
      %v8876 = vpop.f32.mrf.mxu0
      %8877 = vdwg.mxu0
      %v8878 = vadd.f32 %v8721, %v8872
      %v8879 = vadd.f32 %v8722, %v8874
      %s8880 = scalar_lea.vmem [#allocation2], 22
      %v8881 = vld [vmem:[%s8880] ss:$32 sm:$0x1]
      %v8882 = vld [vmem:[%s8880] ss:$32 sm:$0x2]
      %v8883 = vor.u32 %v8881, %v8882
      %v8884 = vld [vmem:[%s8880] ss:$32 sm:$0x4]
      %v8885 = vor.u32 %v8883, %v8884
      %v8886 = vld [vmem:[%s8880] ss:$32 sm:$0x8]
      %v8887 = vor.u32 %v8885, %v8886
      %v8888 = vld [vmem:[%s8880] ss:$32 sm:$0x10]
      %v8889 = vor.u32 %v8887, %v8888
      %v8890 = vld [vmem:[%s8880] ss:$32 sm:$0x20]
      %v8891 = vor.u32 %v8889, %v8890
      %v8892 = vld [vmem:[%s8880] ss:$32 sm:$0x40]
      %v8893 = vor.u32 %v8891, %v8892
      %v8894 = vld [vmem:[%s8880] ss:$32 sm:$0x80]
      %v8895 = vor.u32 %v8893, %v8894
      %v8896 = vpack.c.bf16 %v8895, %v8895
      %s8897 = scalar_lea.vmem %s5, 2816
      %v8898 = vld [vmem:[%s8897] sm:$0xff]
      %v8899 = vld [vmem:[%s8897 + $0x8] sm:$0xff]
      %v8900 = vld [vmem:[%s8897 + $0x10] sm:$0xff]
      %v8901 = vld [vmem:[%s8897 + $0x18] sm:$0xff]
      %v8902 = vld [vmem:[%s8897 + $0x20] sm:$0xff]
      %v8903 = vld [vmem:[%s8897 + $0x28] sm:$0xff]
      %v8904 = vld [vmem:[%s8897 + $0x30] sm:$0xff]
      %v8905 = vld [vmem:[%s8897 + $0x38] sm:$0xff]
      %v8906 = vld [vmem:[%s8897 + $0x40] sm:$0xff]
      %v8907 = vld [vmem:[%s8897 + $0x48] sm:$0xff]
      %v8908 = vld [vmem:[%s8897 + $0x50] sm:$0xff]
      %v8909 = vld [vmem:[%s8897 + $0x58] sm:$0xff]
      %v8910 = vld [vmem:[%s8897 + $0x60] sm:$0xff]
      %v8911 = vld [vmem:[%s8897 + $0x68] sm:$0xff]
      %v8912 = vld [vmem:[%s8897 + $0x70] sm:$0xff]
      %v8913 = vld [vmem:[%s8897 + $0x78] sm:$0xff]
      %v8930 = vunpack.c.l.b16 %v8898
      %v8931 = vunpack.c.h.b16 %v8898
      %v8932 = vunpack.c.l.b16 %v8899
      %v8933 = vunpack.c.h.b16 %v8899
      %v8934 = vunpack.c.l.b16 %v8900
      %v8935 = vunpack.c.h.b16 %v8900
      %v8936 = vunpack.c.l.b16 %v8901
      %v8937 = vunpack.c.h.b16 %v8901
      %v8938 = vunpack.c.l.b16 %v8902
      %v8939 = vunpack.c.h.b16 %v8902
      %v8940 = vunpack.c.l.b16 %v8903
      %v8941 = vunpack.c.h.b16 %v8903
      %v8942 = vunpack.c.l.b16 %v8904
      %v8943 = vunpack.c.h.b16 %v8904
      %v8944 = vunpack.c.l.b16 %v8905
      %v8945 = vunpack.c.h.b16 %v8905
      %v8946 = vunpack.c.l.b16 %v8906
      %v8947 = vunpack.c.h.b16 %v8906
      %v8948 = vunpack.c.l.b16 %v8907
      %v8949 = vunpack.c.h.b16 %v8907
      %v8950 = vunpack.c.l.b16 %v8908
      %v8951 = vunpack.c.h.b16 %v8908
      %v8952 = vunpack.c.l.b16 %v8909
      %v8953 = vunpack.c.h.b16 %v8909
      %v8954 = vunpack.c.l.b16 %v8910
      %v8955 = vunpack.c.h.b16 %v8910
      %v8956 = vunpack.c.l.b16 %v8911
      %v8957 = vunpack.c.h.b16 %v8911
      %v8958 = vunpack.c.l.b16 %v8912
      %v8959 = vunpack.c.h.b16 %v8912
      %v8960 = vunpack.c.l.b16 %v8913
      %v8961 = vunpack.c.h.b16 %v8913
      %v8962 = vpack.c.b16 %v8932, %v8930
      %v8963 = vpack.c.b16 %v8933, %v8931
      %v8964 = vpack.c.b16 %v8936, %v8934
      %v8965 = vpack.c.b16 %v8937, %v8935
      %v8966 = vpack.c.b16 %v8940, %v8938
      %v8967 = vpack.c.b16 %v8941, %v8939
      %v8968 = vpack.c.b16 %v8944, %v8942
      %v8969 = vpack.c.b16 %v8945, %v8943
      %v8970 = vpack.c.b16 %v8948, %v8946
      %v8971 = vpack.c.b16 %v8949, %v8947
      %v8972 = vpack.c.b16 %v8952, %v8950
      %v8973 = vpack.c.b16 %v8953, %v8951
      %v8974 = vpack.c.b16 %v8956, %v8954
      %v8975 = vpack.c.b16 %v8957, %v8955
      %v8976 = vpack.c.b16 %v8960, %v8958
      %v8977 = vpack.c.b16 %v8961, %v8959
      %8994 = vmatprep.subr.bf16.mxu0 %v8977
      %8995 = vmatpush1.bf16.msra.mxu0 %v8976
      %8996 = vmatprep.subr.bf16.mxu0 %v8975
      %8997 = vmatpush1.bf16.msra.mxu0 %v8974
      %8998 = vmatprep.subr.bf16.mxu0 %v8973
      %8999 = vmatpush1.bf16.msra.mxu0 %v8972
      %9000 = vmatprep.subr.bf16.mxu0 %v8971
      %9001 = vmatpush1.bf16.msra.mxu0 %v8970
      %9002 = vmatprep.subr.bf16.mxu0 %v8969
      %9003 = vmatpush1.bf16.msra.mxu0 %v8968
      %9004 = vmatprep.subr.bf16.mxu0 %v8967
      %9005 = vmatpush1.bf16.msra.mxu0 %v8966
      %9006 = vmatprep.subr.bf16.mxu0 %v8965
      %9007 = vmatpush1.bf16.msra.mxu0 %v8964
      %9008 = vmatprep.subr.bf16.mxu0 %v8963
      %9009 = vmatpush1.bf16.msra.mxu0 %v8962
      %9010 = vmatprep.subr.bf16.mxu0 0
      %9011 = vmatpush2.bf16.msra.mxu0 0
      %9012 = vmatprep.subr.bf16.mxu0 0
      %9013 = vmatpush2.bf16.msra.mxu0 0
      %9014 = vmatprep.subr.bf16.mxu0 0
      %9015 = vmatpush2.bf16.msra.mxu0 0
      %9016 = vmatprep.subr.bf16.mxu0 0
      %9017 = vmatpush2.bf16.msra.mxu0 0
      %9018 = vmatprep.subr.bf16.mxu0 0
      %9019 = vmatpush2.bf16.msra.mxu0 0
      %9020 = vmatprep.subr.bf16.mxu0 0
      %9021 = vmatpush2.bf16.msra.mxu0 0
      %9022 = vmatprep.subr.bf16.mxu0 0
      %9023 = vmatpush2.bf16.msra.mxu0 0
      %9024 = vmatprep.subr.bf16.mxu0 0
      %9025 = vmatpush2.bf16.msra.mxu0 0
      %9026 = vmatprep.mubr.bf16.mxu0 0
      %9027 = vmatmul.mubr.bf16.gmra.mxu0 %v8896
      %v9028 = vpop.f32.mrf.mxu0
      %v9029 = vadd.f32 0.0, %v9028
      %v9030 = vpop.f32.mrf.mxu0
      %v9031 = vadd.f32 0.0, %v9030
      %v9032 = vpop.f32.mrf.mxu0
      %v9033 = vpop.f32.mrf.mxu0
      %9034 = vdwg.mxu0
      %v9035 = vadd.f32 %v8878, %v9029
      %v9036 = vadd.f32 %v8879, %v9031
      %s9037 = scalar_lea.vmem [#allocation2], 23
      %v9038 = vld [vmem:[%s9037] ss:$32 sm:$0x1]
      %v9039 = vld [vmem:[%s9037] ss:$32 sm:$0x2]
      %v9040 = vor.u32 %v9038, %v9039
      %v9041 = vld [vmem:[%s9037] ss:$32 sm:$0x4]
      %v9042 = vor.u32 %v9040, %v9041
      %v9043 = vld [vmem:[%s9037] ss:$32 sm:$0x8]
      %v9044 = vor.u32 %v9042, %v9043
      %v9045 = vld [vmem:[%s9037] ss:$32 sm:$0x10]
      %v9046 = vor.u32 %v9044, %v9045
      %v9047 = vld [vmem:[%s9037] ss:$32 sm:$0x20]
      %v9048 = vor.u32 %v9046, %v9047
      %v9049 = vld [vmem:[%s9037] ss:$32 sm:$0x40]
      %v9050 = vor.u32 %v9048, %v9049
      %v9051 = vld [vmem:[%s9037] ss:$32 sm:$0x80]
      %v9052 = vor.u32 %v9050, %v9051
      %v9053 = vpack.c.bf16 %v9052, %v9052
      %s9054 = scalar_lea.vmem %s5, 2944
      %v9055 = vld [vmem:[%s9054] sm:$0xff]
      %v9056 = vld [vmem:[%s9054 + $0x8] sm:$0xff]
      %v9057 = vld [vmem:[%s9054 + $0x10] sm:$0xff]
      %v9058 = vld [vmem:[%s9054 + $0x18] sm:$0xff]
      %v9059 = vld [vmem:[%s9054 + $0x20] sm:$0xff]
      %v9060 = vld [vmem:[%s9054 + $0x28] sm:$0xff]
      %v9061 = vld [vmem:[%s9054 + $0x30] sm:$0xff]
      %v9062 = vld [vmem:[%s9054 + $0x38] sm:$0xff]
      %v9063 = vld [vmem:[%s9054 + $0x40] sm:$0xff]
      %v9064 = vld [vmem:[%s9054 + $0x48] sm:$0xff]
      %v9065 = vld [vmem:[%s9054 + $0x50] sm:$0xff]
      %v9066 = vld [vmem:[%s9054 + $0x58] sm:$0xff]
      %v9067 = vld [vmem:[%s9054 + $0x60] sm:$0xff]
      %v9068 = vld [vmem:[%s9054 + $0x68] sm:$0xff]
      %v9069 = vld [vmem:[%s9054 + $0x70] sm:$0xff]
      %v9070 = vld [vmem:[%s9054 + $0x78] sm:$0xff]
      %v9087 = vunpack.c.l.b16 %v9055
      %v9088 = vunpack.c.h.b16 %v9055
      %v9089 = vunpack.c.l.b16 %v9056
      %v9090 = vunpack.c.h.b16 %v9056
      %v9091 = vunpack.c.l.b16 %v9057
      %v9092 = vunpack.c.h.b16 %v9057
      %v9093 = vunpack.c.l.b16 %v9058
      %v9094 = vunpack.c.h.b16 %v9058
      %v9095 = vunpack.c.l.b16 %v9059
      %v9096 = vunpack.c.h.b16 %v9059
      %v9097 = vunpack.c.l.b16 %v9060
      %v9098 = vunpack.c.h.b16 %v9060
      %v9099 = vunpack.c.l.b16 %v9061
      %v9100 = vunpack.c.h.b16 %v9061
      %v9101 = vunpack.c.l.b16 %v9062
      %v9102 = vunpack.c.h.b16 %v9062
      %v9103 = vunpack.c.l.b16 %v9063
      %v9104 = vunpack.c.h.b16 %v9063
      %v9105 = vunpack.c.l.b16 %v9064
      %v9106 = vunpack.c.h.b16 %v9064
      %v9107 = vunpack.c.l.b16 %v9065
      %v9108 = vunpack.c.h.b16 %v9065
      %v9109 = vunpack.c.l.b16 %v9066
      %v9110 = vunpack.c.h.b16 %v9066
      %v9111 = vunpack.c.l.b16 %v9067
      %v9112 = vunpack.c.h.b16 %v9067
      %v9113 = vunpack.c.l.b16 %v9068
      %v9114 = vunpack.c.h.b16 %v9068
      %v9115 = vunpack.c.l.b16 %v9069
      %v9116 = vunpack.c.h.b16 %v9069
      %v9117 = vunpack.c.l.b16 %v9070
      %v9118 = vunpack.c.h.b16 %v9070
      %v9119 = vpack.c.b16 %v9089, %v9087
      %v9120 = vpack.c.b16 %v9090, %v9088
      %v9121 = vpack.c.b16 %v9093, %v9091
      %v9122 = vpack.c.b16 %v9094, %v9092
      %v9123 = vpack.c.b16 %v9097, %v9095
      %v9124 = vpack.c.b16 %v9098, %v9096
      %v9125 = vpack.c.b16 %v9101, %v9099
      %v9126 = vpack.c.b16 %v9102, %v9100
      %v9127 = vpack.c.b16 %v9105, %v9103
      %v9128 = vpack.c.b16 %v9106, %v9104
      %v9129 = vpack.c.b16 %v9109, %v9107
      %v9130 = vpack.c.b16 %v9110, %v9108
      %v9131 = vpack.c.b16 %v9113, %v9111
      %v9132 = vpack.c.b16 %v9114, %v9112
      %v9133 = vpack.c.b16 %v9117, %v9115
      %v9134 = vpack.c.b16 %v9118, %v9116
      %9151 = vmatprep.subr.bf16.mxu0 %v9134
      %9152 = vmatpush1.bf16.msra.mxu0 %v9133
      %9153 = vmatprep.subr.bf16.mxu0 %v9132
      %9154 = vmatpush1.bf16.msra.mxu0 %v9131
      %9155 = vmatprep.subr.bf16.mxu0 %v9130
      %9156 = vmatpush1.bf16.msra.mxu0 %v9129
      %9157 = vmatprep.subr.bf16.mxu0 %v9128
      %9158 = vmatpush1.bf16.msra.mxu0 %v9127
      %9159 = vmatprep.subr.bf16.mxu0 %v9126
      %9160 = vmatpush1.bf16.msra.mxu0 %v9125
      %9161 = vmatprep.subr.bf16.mxu0 %v9124
      %9162 = vmatpush1.bf16.msra.mxu0 %v9123
      %9163 = vmatprep.subr.bf16.mxu0 %v9122
      %9164 = vmatpush1.bf16.msra.mxu0 %v9121
      %9165 = vmatprep.subr.bf16.mxu0 %v9120
      %9166 = vmatpush1.bf16.msra.mxu0 %v9119
      %9167 = vmatprep.subr.bf16.mxu0 0
      %9168 = vmatpush2.bf16.msra.mxu0 0
      %9169 = vmatprep.subr.bf16.mxu0 0
      %9170 = vmatpush2.bf16.msra.mxu0 0
      %9171 = vmatprep.subr.bf16.mxu0 0
      %9172 = vmatpush2.bf16.msra.mxu0 0
      %9173 = vmatprep.subr.bf16.mxu0 0
      %9174 = vmatpush2.bf16.msra.mxu0 0
      %9175 = vmatprep.subr.bf16.mxu0 0
      %9176 = vmatpush2.bf16.msra.mxu0 0
      %9177 = vmatprep.subr.bf16.mxu0 0
      %9178 = vmatpush2.bf16.msra.mxu0 0
      %9179 = vmatprep.subr.bf16.mxu0 0
      %9180 = vmatpush2.bf16.msra.mxu0 0
      %9181 = vmatprep.subr.bf16.mxu0 0
      %9182 = vmatpush2.bf16.msra.mxu0 0
      %9183 = vmatprep.mubr.bf16.mxu0 0
      %9184 = vmatmul.mubr.bf16.gmra.mxu0 %v9053
      %v9185 = vpop.f32.mrf.mxu0
      %v9186 = vadd.f32 0.0, %v9185
      %v9187 = vpop.f32.mrf.mxu0
      %v9188 = vadd.f32 0.0, %v9187
      %v9189 = vpop.f32.mrf.mxu0
      %v9190 = vpop.f32.mrf.mxu0
      %9191 = vdwg.mxu0
      %v9192 = vadd.f32 %v9035, %v9186
      %v9193 = vadd.f32 %v9036, %v9188
      %s9194 = scalar_lea.vmem [#allocation2], 24
      %v9195 = vld [vmem:[%s9194] ss:$32 sm:$0x1]
      %v9196 = vld [vmem:[%s9194] ss:$32 sm:$0x2]
      %v9197 = vor.u32 %v9195, %v9196
      %v9198 = vld [vmem:[%s9194] ss:$32 sm:$0x4]
      %v9199 = vor.u32 %v9197, %v9198
      %v9200 = vld [vmem:[%s9194] ss:$32 sm:$0x8]
      %v9201 = vor.u32 %v9199, %v9200
      %v9202 = vld [vmem:[%s9194] ss:$32 sm:$0x10]
      %v9203 = vor.u32 %v9201, %v9202
      %v9204 = vld [vmem:[%s9194] ss:$32 sm:$0x20]
      %v9205 = vor.u32 %v9203, %v9204
      %v9206 = vld [vmem:[%s9194] ss:$32 sm:$0x40]
      %v9207 = vor.u32 %v9205, %v9206
      %v9208 = vld [vmem:[%s9194] ss:$32 sm:$0x80]
      %v9209 = vor.u32 %v9207, %v9208
      %v9210 = vpack.c.bf16 %v9209, %v9209
      %s9211 = scalar_lea.vmem %s5, 3072
      %v9212 = vld [vmem:[%s9211] sm:$0xff]
      %v9213 = vld [vmem:[%s9211 + $0x8] sm:$0xff]
      %v9214 = vld [vmem:[%s9211 + $0x10] sm:$0xff]
      %v9215 = vld [vmem:[%s9211 + $0x18] sm:$0xff]
      %v9216 = vld [vmem:[%s9211 + $0x20] sm:$0xff]
      %v9217 = vld [vmem:[%s9211 + $0x28] sm:$0xff]
      %v9218 = vld [vmem:[%s9211 + $0x30] sm:$0xff]
      %v9219 = vld [vmem:[%s9211 + $0x38] sm:$0xff]
      %v9220 = vld [vmem:[%s9211 + $0x40] sm:$0xff]
      %v9221 = vld [vmem:[%s9211 + $0x48] sm:$0xff]
      %v9222 = vld [vmem:[%s9211 + $0x50] sm:$0xff]
      %v9223 = vld [vmem:[%s9211 + $0x58] sm:$0xff]
      %v9224 = vld [vmem:[%s9211 + $0x60] sm:$0xff]
      %v9225 = vld [vmem:[%s9211 + $0x68] sm:$0xff]
      %v9226 = vld [vmem:[%s9211 + $0x70] sm:$0xff]
      %v9227 = vld [vmem:[%s9211 + $0x78] sm:$0xff]
      %v9244 = vunpack.c.l.b16 %v9212
      %v9245 = vunpack.c.h.b16 %v9212
      %v9246 = vunpack.c.l.b16 %v9213
      %v9247 = vunpack.c.h.b16 %v9213
      %v9248 = vunpack.c.l.b16 %v9214
      %v9249 = vunpack.c.h.b16 %v9214
      %v9250 = vunpack.c.l.b16 %v9215
      %v9251 = vunpack.c.h.b16 %v9215
      %v9252 = vunpack.c.l.b16 %v9216
      %v9253 = vunpack.c.h.b16 %v9216
      %v9254 = vunpack.c.l.b16 %v9217
      %v9255 = vunpack.c.h.b16 %v9217
      %v9256 = vunpack.c.l.b16 %v9218
      %v9257 = vunpack.c.h.b16 %v9218
      %v9258 = vunpack.c.l.b16 %v9219
      %v9259 = vunpack.c.h.b16 %v9219
      %v9260 = vunpack.c.l.b16 %v9220
      %v9261 = vunpack.c.h.b16 %v9220
      %v9262 = vunpack.c.l.b16 %v9221
      %v9263 = vunpack.c.h.b16 %v9221
      %v9264 = vunpack.c.l.b16 %v9222
      %v9265 = vunpack.c.h.b16 %v9222
      %v9266 = vunpack.c.l.b16 %v9223
      %v9267 = vunpack.c.h.b16 %v9223
      %v9268 = vunpack.c.l.b16 %v9224
      %v9269 = vunpack.c.h.b16 %v9224
      %v9270 = vunpack.c.l.b16 %v9225
      %v9271 = vunpack.c.h.b16 %v9225
      %v9272 = vunpack.c.l.b16 %v9226
      %v9273 = vunpack.c.h.b16 %v9226
      %v9274 = vunpack.c.l.b16 %v9227
      %v9275 = vunpack.c.h.b16 %v9227
      %v9276 = vpack.c.b16 %v9246, %v9244
      %v9277 = vpack.c.b16 %v9247, %v9245
      %v9278 = vpack.c.b16 %v9250, %v9248
      %v9279 = vpack.c.b16 %v9251, %v9249
      %v9280 = vpack.c.b16 %v9254, %v9252
      %v9281 = vpack.c.b16 %v9255, %v9253
      %v9282 = vpack.c.b16 %v9258, %v9256
      %v9283 = vpack.c.b16 %v9259, %v9257
      %v9284 = vpack.c.b16 %v9262, %v9260
      %v9285 = vpack.c.b16 %v9263, %v9261
      %v9286 = vpack.c.b16 %v9266, %v9264
      %v9287 = vpack.c.b16 %v9267, %v9265
      %v9288 = vpack.c.b16 %v9270, %v9268
      %v9289 = vpack.c.b16 %v9271, %v9269
      %v9290 = vpack.c.b16 %v9274, %v9272
      %v9291 = vpack.c.b16 %v9275, %v9273
      %9308 = vmatprep.subr.bf16.mxu0 %v9291
      %9309 = vmatpush1.bf16.msra.mxu0 %v9290
      %9310 = vmatprep.subr.bf16.mxu0 %v9289
      %9311 = vmatpush1.bf16.msra.mxu0 %v9288
      %9312 = vmatprep.subr.bf16.mxu0 %v9287
      %9313 = vmatpush1.bf16.msra.mxu0 %v9286
      %9314 = vmatprep.subr.bf16.mxu0 %v9285
      %9315 = vmatpush1.bf16.msra.mxu0 %v9284
      %9316 = vmatprep.subr.bf16.mxu0 %v9283
      %9317 = vmatpush1.bf16.msra.mxu0 %v9282
      %9318 = vmatprep.subr.bf16.mxu0 %v9281
      %9319 = vmatpush1.bf16.msra.mxu0 %v9280
      %9320 = vmatprep.subr.bf16.mxu0 %v9279
      %9321 = vmatpush1.bf16.msra.mxu0 %v9278
      %9322 = vmatprep.subr.bf16.mxu0 %v9277
      %9323 = vmatpush1.bf16.msra.mxu0 %v9276
      %9324 = vmatprep.subr.bf16.mxu0 0
      %9325 = vmatpush2.bf16.msra.mxu0 0
      %9326 = vmatprep.subr.bf16.mxu0 0
      %9327 = vmatpush2.bf16.msra.mxu0 0
      %9328 = vmatprep.subr.bf16.mxu0 0
      %9329 = vmatpush2.bf16.msra.mxu0 0
      %9330 = vmatprep.subr.bf16.mxu0 0
      %9331 = vmatpush2.bf16.msra.mxu0 0
      %9332 = vmatprep.subr.bf16.mxu0 0
      %9333 = vmatpush2.bf16.msra.mxu0 0
      %9334 = vmatprep.subr.bf16.mxu0 0
      %9335 = vmatpush2.bf16.msra.mxu0 0
      %9336 = vmatprep.subr.bf16.mxu0 0
      %9337 = vmatpush2.bf16.msra.mxu0 0
      %9338 = vmatprep.subr.bf16.mxu0 0
      %9339 = vmatpush2.bf16.msra.mxu0 0
      %9340 = vmatprep.mubr.bf16.mxu0 0
      %9341 = vmatmul.mubr.bf16.gmra.mxu0 %v9210
      %v9342 = vpop.f32.mrf.mxu0
      %v9343 = vadd.f32 0.0, %v9342
      %v9344 = vpop.f32.mrf.mxu0
      %v9345 = vadd.f32 0.0, %v9344
      %v9346 = vpop.f32.mrf.mxu0
      %v9347 = vpop.f32.mrf.mxu0
      %9348 = vdwg.mxu0
      %v9349 = vadd.f32 %v9192, %v9343
      %v9350 = vadd.f32 %v9193, %v9345
      %s9351 = scalar_lea.vmem [#allocation2], 25
      %v9352 = vld [vmem:[%s9351] ss:$32 sm:$0x1]
      %v9353 = vld [vmem:[%s9351] ss:$32 sm:$0x2]
      %v9354 = vor.u32 %v9352, %v9353
      %v9355 = vld [vmem:[%s9351] ss:$32 sm:$0x4]
      %v9356 = vor.u32 %v9354, %v9355
      %v9357 = vld [vmem:[%s9351] ss:$32 sm:$0x8]
      %v9358 = vor.u32 %v9356, %v9357
      %v9359 = vld [vmem:[%s9351] ss:$32 sm:$0x10]
      %v9360 = vor.u32 %v9358, %v9359
      %v9361 = vld [vmem:[%s9351] ss:$32 sm:$0x20]
      %v9362 = vor.u32 %v9360, %v9361
      %v9363 = vld [vmem:[%s9351] ss:$32 sm:$0x40]
      %v9364 = vor.u32 %v9362, %v9363
      %v9365 = vld [vmem:[%s9351] ss:$32 sm:$0x80]
      %v9366 = vor.u32 %v9364, %v9365
      %v9367 = vpack.c.bf16 %v9366, %v9366
      %s9368 = scalar_lea.vmem %s5, 3200
      %v9369 = vld [vmem:[%s9368] sm:$0xff]
      %v9370 = vld [vmem:[%s9368 + $0x8] sm:$0xff]
      %v9371 = vld [vmem:[%s9368 + $0x10] sm:$0xff]
      %v9372 = vld [vmem:[%s9368 + $0x18] sm:$0xff]
      %v9373 = vld [vmem:[%s9368 + $0x20] sm:$0xff]
      %v9374 = vld [vmem:[%s9368 + $0x28] sm:$0xff]
      %v9375 = vld [vmem:[%s9368 + $0x30] sm:$0xff]
      %v9376 = vld [vmem:[%s9368 + $0x38] sm:$0xff]
      %v9377 = vld [vmem:[%s9368 + $0x40] sm:$0xff]
      %v9378 = vld [vmem:[%s9368 + $0x48] sm:$0xff]
      %v9379 = vld [vmem:[%s9368 + $0x50] sm:$0xff]
      %v9380 = vld [vmem:[%s9368 + $0x58] sm:$0xff]
      %v9381 = vld [vmem:[%s9368 + $0x60] sm:$0xff]
      %v9382 = vld [vmem:[%s9368 + $0x68] sm:$0xff]
      %v9383 = vld [vmem:[%s9368 + $0x70] sm:$0xff]
      %v9384 = vld [vmem:[%s9368 + $0x78] sm:$0xff]
      %v9401 = vunpack.c.l.b16 %v9369
      %v9402 = vunpack.c.h.b16 %v9369
      %v9403 = vunpack.c.l.b16 %v9370
      %v9404 = vunpack.c.h.b16 %v9370
      %v9405 = vunpack.c.l.b16 %v9371
      %v9406 = vunpack.c.h.b16 %v9371
      %v9407 = vunpack.c.l.b16 %v9372
      %v9408 = vunpack.c.h.b16 %v9372
      %v9409 = vunpack.c.l.b16 %v9373
      %v9410 = vunpack.c.h.b16 %v9373
      %v9411 = vunpack.c.l.b16 %v9374
      %v9412 = vunpack.c.h.b16 %v9374
      %v9413 = vunpack.c.l.b16 %v9375
      %v9414 = vunpack.c.h.b16 %v9375
      %v9415 = vunpack.c.l.b16 %v9376
      %v9416 = vunpack.c.h.b16 %v9376
      %v9417 = vunpack.c.l.b16 %v9377
      %v9418 = vunpack.c.h.b16 %v9377
      %v9419 = vunpack.c.l.b16 %v9378
      %v9420 = vunpack.c.h.b16 %v9378
      %v9421 = vunpack.c.l.b16 %v9379
      %v9422 = vunpack.c.h.b16 %v9379
      %v9423 = vunpack.c.l.b16 %v9380
      %v9424 = vunpack.c.h.b16 %v9380
      %v9425 = vunpack.c.l.b16 %v9381
      %v9426 = vunpack.c.h.b16 %v9381
      %v9427 = vunpack.c.l.b16 %v9382
      %v9428 = vunpack.c.h.b16 %v9382
      %v9429 = vunpack.c.l.b16 %v9383
      %v9430 = vunpack.c.h.b16 %v9383
      %v9431 = vunpack.c.l.b16 %v9384
      %v9432 = vunpack.c.h.b16 %v9384
      %v9433 = vpack.c.b16 %v9403, %v9401
      %v9434 = vpack.c.b16 %v9404, %v9402
      %v9435 = vpack.c.b16 %v9407, %v9405
      %v9436 = vpack.c.b16 %v9408, %v9406
      %v9437 = vpack.c.b16 %v9411, %v9409
      %v9438 = vpack.c.b16 %v9412, %v9410
      %v9439 = vpack.c.b16 %v9415, %v9413
      %v9440 = vpack.c.b16 %v9416, %v9414
      %v9441 = vpack.c.b16 %v9419, %v9417
      %v9442 = vpack.c.b16 %v9420, %v9418
      %v9443 = vpack.c.b16 %v9423, %v9421
      %v9444 = vpack.c.b16 %v9424, %v9422
      %v9445 = vpack.c.b16 %v9427, %v9425
      %v9446 = vpack.c.b16 %v9428, %v9426
      %v9447 = vpack.c.b16 %v9431, %v9429
      %v9448 = vpack.c.b16 %v9432, %v9430
      %9465 = vmatprep.subr.bf16.mxu0 %v9448
      %9466 = vmatpush1.bf16.msra.mxu0 %v9447
      %9467 = vmatprep.subr.bf16.mxu0 %v9446
      %9468 = vmatpush1.bf16.msra.mxu0 %v9445
      %9469 = vmatprep.subr.bf16.mxu0 %v9444
      %9470 = vmatpush1.bf16.msra.mxu0 %v9443
      %9471 = vmatprep.subr.bf16.mxu0 %v9442
      %9472 = vmatpush1.bf16.msra.mxu0 %v9441
      %9473 = vmatprep.subr.bf16.mxu0 %v9440
      %9474 = vmatpush1.bf16.msra.mxu0 %v9439
      %9475 = vmatprep.subr.bf16.mxu0 %v9438
      %9476 = vmatpush1.bf16.msra.mxu0 %v9437
      %9477 = vmatprep.subr.bf16.mxu0 %v9436
      %9478 = vmatpush1.bf16.msra.mxu0 %v9435
      %9479 = vmatprep.subr.bf16.mxu0 %v9434
      %9480 = vmatpush1.bf16.msra.mxu0 %v9433
      %9481 = vmatprep.subr.bf16.mxu0 0
      %9482 = vmatpush2.bf16.msra.mxu0 0
      %9483 = vmatprep.subr.bf16.mxu0 0
      %9484 = vmatpush2.bf16.msra.mxu0 0
      %9485 = vmatprep.subr.bf16.mxu0 0
      %9486 = vmatpush2.bf16.msra.mxu0 0
      %9487 = vmatprep.subr.bf16.mxu0 0
      %9488 = vmatpush2.bf16.msra.mxu0 0
      %9489 = vmatprep.subr.bf16.mxu0 0
      %9490 = vmatpush2.bf16.msra.mxu0 0
      %9491 = vmatprep.subr.bf16.mxu0 0
      %9492 = vmatpush2.bf16.msra.mxu0 0
      %9493 = vmatprep.subr.bf16.mxu0 0
      %9494 = vmatpush2.bf16.msra.mxu0 0
      %9495 = vmatprep.subr.bf16.mxu0 0
      %9496 = vmatpush2.bf16.msra.mxu0 0
      %9497 = vmatprep.mubr.bf16.mxu0 0
      %9498 = vmatmul.mubr.bf16.gmra.mxu0 %v9367
      %v9499 = vpop.f32.mrf.mxu0
      %v9500 = vadd.f32 0.0, %v9499
      %v9501 = vpop.f32.mrf.mxu0
      %v9502 = vadd.f32 0.0, %v9501
      %v9503 = vpop.f32.mrf.mxu0
      %v9504 = vpop.f32.mrf.mxu0
      %9505 = vdwg.mxu0
      %v9506 = vadd.f32 %v9349, %v9500
      %v9507 = vadd.f32 %v9350, %v9502
      %s9508 = scalar_lea.vmem [#allocation2], 26
      %v9509 = vld [vmem:[%s9508] ss:$32 sm:$0x1]
      %v9510 = vld [vmem:[%s9508] ss:$32 sm:$0x2]
      %v9511 = vor.u32 %v9509, %v9510
      %v9512 = vld [vmem:[%s9508] ss:$32 sm:$0x4]
      %v9513 = vor.u32 %v9511, %v9512
      %v9514 = vld [vmem:[%s9508] ss:$32 sm:$0x8]
      %v9515 = vor.u32 %v9513, %v9514
      %v9516 = vld [vmem:[%s9508] ss:$32 sm:$0x10]
      %v9517 = vor.u32 %v9515, %v9516
      %v9518 = vld [vmem:[%s9508] ss:$32 sm:$0x20]
      %v9519 = vor.u32 %v9517, %v9518
      %v9520 = vld [vmem:[%s9508] ss:$32 sm:$0x40]
      %v9521 = vor.u32 %v9519, %v9520
      %v9522 = vld [vmem:[%s9508] ss:$32 sm:$0x80]
      %v9523 = vor.u32 %v9521, %v9522
      %v9524 = vpack.c.bf16 %v9523, %v9523
      %s9525 = scalar_lea.vmem %s5, 3328
      %v9526 = vld [vmem:[%s9525] sm:$0xff]
      %v9527 = vld [vmem:[%s9525 + $0x8] sm:$0xff]
      %v9528 = vld [vmem:[%s9525 + $0x10] sm:$0xff]
      %v9529 = vld [vmem:[%s9525 + $0x18] sm:$0xff]
      %v9530 = vld [vmem:[%s9525 + $0x20] sm:$0xff]
      %v9531 = vld [vmem:[%s9525 + $0x28] sm:$0xff]
      %v9532 = vld [vmem:[%s9525 + $0x30] sm:$0xff]
      %v9533 = vld [vmem:[%s9525 + $0x38] sm:$0xff]
      %v9534 = vld [vmem:[%s9525 + $0x40] sm:$0xff]
      %v9535 = vld [vmem:[%s9525 + $0x48] sm:$0xff]
      %v9536 = vld [vmem:[%s9525 + $0x50] sm:$0xff]
      %v9537 = vld [vmem:[%s9525 + $0x58] sm:$0xff]
      %v9538 = vld [vmem:[%s9525 + $0x60] sm:$0xff]
      %v9539 = vld [vmem:[%s9525 + $0x68] sm:$0xff]
      %v9540 = vld [vmem:[%s9525 + $0x70] sm:$0xff]
      %v9541 = vld [vmem:[%s9525 + $0x78] sm:$0xff]
      %v9558 = vunpack.c.l.b16 %v9526
      %v9559 = vunpack.c.h.b16 %v9526
      %v9560 = vunpack.c.l.b16 %v9527
      %v9561 = vunpack.c.h.b16 %v9527
      %v9562 = vunpack.c.l.b16 %v9528
      %v9563 = vunpack.c.h.b16 %v9528
      %v9564 = vunpack.c.l.b16 %v9529
      %v9565 = vunpack.c.h.b16 %v9529
      %v9566 = vunpack.c.l.b16 %v9530
      %v9567 = vunpack.c.h.b16 %v9530
      %v9568 = vunpack.c.l.b16 %v9531
      %v9569 = vunpack.c.h.b16 %v9531
      %v9570 = vunpack.c.l.b16 %v9532
      %v9571 = vunpack.c.h.b16 %v9532
      %v9572 = vunpack.c.l.b16 %v9533
      %v9573 = vunpack.c.h.b16 %v9533
      %v9574 = vunpack.c.l.b16 %v9534
      %v9575 = vunpack.c.h.b16 %v9534
      %v9576 = vunpack.c.l.b16 %v9535
      %v9577 = vunpack.c.h.b16 %v9535
      %v9578 = vunpack.c.l.b16 %v9536
      %v9579 = vunpack.c.h.b16 %v9536
      %v9580 = vunpack.c.l.b16 %v9537
      %v9581 = vunpack.c.h.b16 %v9537
      %v9582 = vunpack.c.l.b16 %v9538
      %v9583 = vunpack.c.h.b16 %v9538
      %v9584 = vunpack.c.l.b16 %v9539
      %v9585 = vunpack.c.h.b16 %v9539
      %v9586 = vunpack.c.l.b16 %v9540
      %v9587 = vunpack.c.h.b16 %v9540
      %v9588 = vunpack.c.l.b16 %v9541
      %v9589 = vunpack.c.h.b16 %v9541
      %v9590 = vpack.c.b16 %v9560, %v9558
      %v9591 = vpack.c.b16 %v9561, %v9559
      %v9592 = vpack.c.b16 %v9564, %v9562
      %v9593 = vpack.c.b16 %v9565, %v9563
      %v9594 = vpack.c.b16 %v9568, %v9566
      %v9595 = vpack.c.b16 %v9569, %v9567
      %v9596 = vpack.c.b16 %v9572, %v9570
      %v9597 = vpack.c.b16 %v9573, %v9571
      %v9598 = vpack.c.b16 %v9576, %v9574
      %v9599 = vpack.c.b16 %v9577, %v9575
      %v9600 = vpack.c.b16 %v9580, %v9578
      %v9601 = vpack.c.b16 %v9581, %v9579
      %v9602 = vpack.c.b16 %v9584, %v9582
      %v9603 = vpack.c.b16 %v9585, %v9583
      %v9604 = vpack.c.b16 %v9588, %v9586
      %v9605 = vpack.c.b16 %v9589, %v9587
      %9622 = vmatprep.subr.bf16.mxu0 %v9605
      %9623 = vmatpush1.bf16.msra.mxu0 %v9604
      %9624 = vmatprep.subr.bf16.mxu0 %v9603
      %9625 = vmatpush1.bf16.msra.mxu0 %v9602
      %9626 = vmatprep.subr.bf16.mxu0 %v9601
      %9627 = vmatpush1.bf16.msra.mxu0 %v9600
      %9628 = vmatprep.subr.bf16.mxu0 %v9599
      %9629 = vmatpush1.bf16.msra.mxu0 %v9598
      %9630 = vmatprep.subr.bf16.mxu0 %v9597
      %9631 = vmatpush1.bf16.msra.mxu0 %v9596
      %9632 = vmatprep.subr.bf16.mxu0 %v9595
      %9633 = vmatpush1.bf16.msra.mxu0 %v9594
      %9634 = vmatprep.subr.bf16.mxu0 %v9593
      %9635 = vmatpush1.bf16.msra.mxu0 %v9592
      %9636 = vmatprep.subr.bf16.mxu0 %v9591
      %9637 = vmatpush1.bf16.msra.mxu0 %v9590
      %9638 = vmatprep.subr.bf16.mxu0 0
      %9639 = vmatpush2.bf16.msra.mxu0 0
      %9640 = vmatprep.subr.bf16.mxu0 0
      %9641 = vmatpush2.bf16.msra.mxu0 0
      %9642 = vmatprep.subr.bf16.mxu0 0
      %9643 = vmatpush2.bf16.msra.mxu0 0
      %9644 = vmatprep.subr.bf16.mxu0 0
      %9645 = vmatpush2.bf16.msra.mxu0 0
      %9646 = vmatprep.subr.bf16.mxu0 0
      %9647 = vmatpush2.bf16.msra.mxu0 0
      %9648 = vmatprep.subr.bf16.mxu0 0
      %9649 = vmatpush2.bf16.msra.mxu0 0
      %9650 = vmatprep.subr.bf16.mxu0 0
      %9651 = vmatpush2.bf16.msra.mxu0 0
      %9652 = vmatprep.subr.bf16.mxu0 0
      %9653 = vmatpush2.bf16.msra.mxu0 0
      %9654 = vmatprep.mubr.bf16.mxu0 0
      %9655 = vmatmul.mubr.bf16.gmra.mxu0 %v9524
      %v9656 = vpop.f32.mrf.mxu0
      %v9657 = vadd.f32 0.0, %v9656
      %v9658 = vpop.f32.mrf.mxu0
      %v9659 = vadd.f32 0.0, %v9658
      %v9660 = vpop.f32.mrf.mxu0
      %v9661 = vpop.f32.mrf.mxu0
      %9662 = vdwg.mxu0
      %v9663 = vadd.f32 %v9506, %v9657
      %v9664 = vadd.f32 %v9507, %v9659
      %s9665 = scalar_lea.vmem [#allocation2], 27
      %v9666 = vld [vmem:[%s9665] ss:$32 sm:$0x1]
      %v9667 = vld [vmem:[%s9665] ss:$32 sm:$0x2]
      %v9668 = vor.u32 %v9666, %v9667
      %v9669 = vld [vmem:[%s9665] ss:$32 sm:$0x4]
      %v9670 = vor.u32 %v9668, %v9669
      %v9671 = vld [vmem:[%s9665] ss:$32 sm:$0x8]
      %v9672 = vor.u32 %v9670, %v9671
      %v9673 = vld [vmem:[%s9665] ss:$32 sm:$0x10]
      %v9674 = vor.u32 %v9672, %v9673
      %v9675 = vld [vmem:[%s9665] ss:$32 sm:$0x20]
      %v9676 = vor.u32 %v9674, %v9675
      %v9677 = vld [vmem:[%s9665] ss:$32 sm:$0x40]
      %v9678 = vor.u32 %v9676, %v9677
      %v9679 = vld [vmem:[%s9665] ss:$32 sm:$0x80]
      %v9680 = vor.u32 %v9678, %v9679
      %v9681 = vpack.c.bf16 %v9680, %v9680
      %s9682 = scalar_lea.vmem %s5, 3456
      %v9683 = vld [vmem:[%s9682] sm:$0xff]
      %v9684 = vld [vmem:[%s9682 + $0x8] sm:$0xff]
      %v9685 = vld [vmem:[%s9682 + $0x10] sm:$0xff]
      %v9686 = vld [vmem:[%s9682 + $0x18] sm:$0xff]
      %v9687 = vld [vmem:[%s9682 + $0x20] sm:$0xff]
      %v9688 = vld [vmem:[%s9682 + $0x28] sm:$0xff]
      %v9689 = vld [vmem:[%s9682 + $0x30] sm:$0xff]
      %v9690 = vld [vmem:[%s9682 + $0x38] sm:$0xff]
      %v9691 = vld [vmem:[%s9682 + $0x40] sm:$0xff]
      %v9692 = vld [vmem:[%s9682 + $0x48] sm:$0xff]
      %v9693 = vld [vmem:[%s9682 + $0x50] sm:$0xff]
      %v9694 = vld [vmem:[%s9682 + $0x58] sm:$0xff]
      %v9695 = vld [vmem:[%s9682 + $0x60] sm:$0xff]
      %v9696 = vld [vmem:[%s9682 + $0x68] sm:$0xff]
      %v9697 = vld [vmem:[%s9682 + $0x70] sm:$0xff]
      %v9698 = vld [vmem:[%s9682 + $0x78] sm:$0xff]
      %v9715 = vunpack.c.l.b16 %v9683
      %v9716 = vunpack.c.h.b16 %v9683
      %v9717 = vunpack.c.l.b16 %v9684
      %v9718 = vunpack.c.h.b16 %v9684
      %v9719 = vunpack.c.l.b16 %v9685
      %v9720 = vunpack.c.h.b16 %v9685
      %v9721 = vunpack.c.l.b16 %v9686
      %v9722 = vunpack.c.h.b16 %v9686
      %v9723 = vunpack.c.l.b16 %v9687
      %v9724 = vunpack.c.h.b16 %v9687
      %v9725 = vunpack.c.l.b16 %v9688
      %v9726 = vunpack.c.h.b16 %v9688
      %v9727 = vunpack.c.l.b16 %v9689
      %v9728 = vunpack.c.h.b16 %v9689
      %v9729 = vunpack.c.l.b16 %v9690
      %v9730 = vunpack.c.h.b16 %v9690
      %v9731 = vunpack.c.l.b16 %v9691
      %v9732 = vunpack.c.h.b16 %v9691
      %v9733 = vunpack.c.l.b16 %v9692
      %v9734 = vunpack.c.h.b16 %v9692
      %v9735 = vunpack.c.l.b16 %v9693
      %v9736 = vunpack.c.h.b16 %v9693
      %v9737 = vunpack.c.l.b16 %v9694
      %v9738 = vunpack.c.h.b16 %v9694
      %v9739 = vunpack.c.l.b16 %v9695
      %v9740 = vunpack.c.h.b16 %v9695
      %v9741 = vunpack.c.l.b16 %v9696
      %v9742 = vunpack.c.h.b16 %v9696
      %v9743 = vunpack.c.l.b16 %v9697
      %v9744 = vunpack.c.h.b16 %v9697
      %v9745 = vunpack.c.l.b16 %v9698
      %v9746 = vunpack.c.h.b16 %v9698
      %v9747 = vpack.c.b16 %v9717, %v9715
      %v9748 = vpack.c.b16 %v9718, %v9716
      %v9749 = vpack.c.b16 %v9721, %v9719
      %v9750 = vpack.c.b16 %v9722, %v9720
      %v9751 = vpack.c.b16 %v9725, %v9723
      %v9752 = vpack.c.b16 %v9726, %v9724
      %v9753 = vpack.c.b16 %v9729, %v9727
      %v9754 = vpack.c.b16 %v9730, %v9728
      %v9755 = vpack.c.b16 %v9733, %v9731
      %v9756 = vpack.c.b16 %v9734, %v9732
      %v9757 = vpack.c.b16 %v9737, %v9735
      %v9758 = vpack.c.b16 %v9738, %v9736
      %v9759 = vpack.c.b16 %v9741, %v9739
      %v9760 = vpack.c.b16 %v9742, %v9740
      %v9761 = vpack.c.b16 %v9745, %v9743
      %v9762 = vpack.c.b16 %v9746, %v9744
      %9779 = vmatprep.subr.bf16.mxu0 %v9762
      %9780 = vmatpush1.bf16.msra.mxu0 %v9761
      %9781 = vmatprep.subr.bf16.mxu0 %v9760
      %9782 = vmatpush1.bf16.msra.mxu0 %v9759
      %9783 = vmatprep.subr.bf16.mxu0 %v9758
      %9784 = vmatpush1.bf16.msra.mxu0 %v9757
      %9785 = vmatprep.subr.bf16.mxu0 %v9756
      %9786 = vmatpush1.bf16.msra.mxu0 %v9755
      %9787 = vmatprep.subr.bf16.mxu0 %v9754
      %9788 = vmatpush1.bf16.msra.mxu0 %v9753
      %9789 = vmatprep.subr.bf16.mxu0 %v9752
      %9790 = vmatpush1.bf16.msra.mxu0 %v9751
      %9791 = vmatprep.subr.bf16.mxu0 %v9750
      %9792 = vmatpush1.bf16.msra.mxu0 %v9749
      %9793 = vmatprep.subr.bf16.mxu0 %v9748
      %9794 = vmatpush1.bf16.msra.mxu0 %v9747
      %9795 = vmatprep.subr.bf16.mxu0 0
      %9796 = vmatpush2.bf16.msra.mxu0 0
      %9797 = vmatprep.subr.bf16.mxu0 0
      %9798 = vmatpush2.bf16.msra.mxu0 0
      %9799 = vmatprep.subr.bf16.mxu0 0
      %9800 = vmatpush2.bf16.msra.mxu0 0
      %9801 = vmatprep.subr.bf16.mxu0 0
      %9802 = vmatpush2.bf16.msra.mxu0 0
      %9803 = vmatprep.subr.bf16.mxu0 0
      %9804 = vmatpush2.bf16.msra.mxu0 0
      %9805 = vmatprep.subr.bf16.mxu0 0
      %9806 = vmatpush2.bf16.msra.mxu0 0
      %9807 = vmatprep.subr.bf16.mxu0 0
      %9808 = vmatpush2.bf16.msra.mxu0 0
      %9809 = vmatprep.subr.bf16.mxu0 0
      %9810 = vmatpush2.bf16.msra.mxu0 0
      %9811 = vmatprep.mubr.bf16.mxu0 0
      %9812 = vmatmul.mubr.bf16.gmra.mxu0 %v9681
      %v9813 = vpop.f32.mrf.mxu0
      %v9814 = vadd.f32 0.0, %v9813
      %v9815 = vpop.f32.mrf.mxu0
      %v9816 = vadd.f32 0.0, %v9815
      %v9817 = vpop.f32.mrf.mxu0
      %v9818 = vpop.f32.mrf.mxu0
      %9819 = vdwg.mxu0
      %v9820 = vadd.f32 %v9663, %v9814
      %v9821 = vadd.f32 %v9664, %v9816
      %s9822 = scalar_lea.vmem [#allocation2], 28
      %v9823 = vld [vmem:[%s9822] ss:$32 sm:$0x1]
      %v9824 = vld [vmem:[%s9822] ss:$32 sm:$0x2]
      %v9825 = vor.u32 %v9823, %v9824
      %v9826 = vld [vmem:[%s9822] ss:$32 sm:$0x4]
      %v9827 = vor.u32 %v9825, %v9826
      %v9828 = vld [vmem:[%s9822] ss:$32 sm:$0x8]
      %v9829 = vor.u32 %v9827, %v9828
      %v9830 = vld [vmem:[%s9822] ss:$32 sm:$0x10]
      %v9831 = vor.u32 %v9829, %v9830
      %v9832 = vld [vmem:[%s9822] ss:$32 sm:$0x20]
      %v9833 = vor.u32 %v9831, %v9832
      %v9834 = vld [vmem:[%s9822] ss:$32 sm:$0x40]
      %v9835 = vor.u32 %v9833, %v9834
      %v9836 = vld [vmem:[%s9822] ss:$32 sm:$0x80]
      %v9837 = vor.u32 %v9835, %v9836
      %v9838 = vpack.c.bf16 %v9837, %v9837
      %s9839 = scalar_lea.vmem %s5, 3584
      %v9840 = vld [vmem:[%s9839] sm:$0xff]
      %v9841 = vld [vmem:[%s9839 + $0x8] sm:$0xff]
      %v9842 = vld [vmem:[%s9839 + $0x10] sm:$0xff]
      %v9843 = vld [vmem:[%s9839 + $0x18] sm:$0xff]
      %v9844 = vld [vmem:[%s9839 + $0x20] sm:$0xff]
      %v9845 = vld [vmem:[%s9839 + $0x28] sm:$0xff]
      %v9846 = vld [vmem:[%s9839 + $0x30] sm:$0xff]
      %v9847 = vld [vmem:[%s9839 + $0x38] sm:$0xff]
      %v9848 = vld [vmem:[%s9839 + $0x40] sm:$0xff]
      %v9849 = vld [vmem:[%s9839 + $0x48] sm:$0xff]
      %v9850 = vld [vmem:[%s9839 + $0x50] sm:$0xff]
      %v9851 = vld [vmem:[%s9839 + $0x58] sm:$0xff]
      %v9852 = vld [vmem:[%s9839 + $0x60] sm:$0xff]
      %v9853 = vld [vmem:[%s9839 + $0x68] sm:$0xff]
      %v9854 = vld [vmem:[%s9839 + $0x70] sm:$0xff]
      %v9855 = vld [vmem:[%s9839 + $0x78] sm:$0xff]
      %v9872 = vunpack.c.l.b16 %v9840
      %v9873 = vunpack.c.h.b16 %v9840
      %v9874 = vunpack.c.l.b16 %v9841
      %v9875 = vunpack.c.h.b16 %v9841
      %v9876 = vunpack.c.l.b16 %v9842
      %v9877 = vunpack.c.h.b16 %v9842
      %v9878 = vunpack.c.l.b16 %v9843
      %v9879 = vunpack.c.h.b16 %v9843
      %v9880 = vunpack.c.l.b16 %v9844
      %v9881 = vunpack.c.h.b16 %v9844
      %v9882 = vunpack.c.l.b16 %v9845
      %v9883 = vunpack.c.h.b16 %v9845
      %v9884 = vunpack.c.l.b16 %v9846
      %v9885 = vunpack.c.h.b16 %v9846
      %v9886 = vunpack.c.l.b16 %v9847
      %v9887 = vunpack.c.h.b16 %v9847
      %v9888 = vunpack.c.l.b16 %v9848
      %v9889 = vunpack.c.h.b16 %v9848
      %v9890 = vunpack.c.l.b16 %v9849
      %v9891 = vunpack.c.h.b16 %v9849
      %v9892 = vunpack.c.l.b16 %v9850
      %v9893 = vunpack.c.h.b16 %v9850
      %v9894 = vunpack.c.l.b16 %v9851
      %v9895 = vunpack.c.h.b16 %v9851
      %v9896 = vunpack.c.l.b16 %v9852
      %v9897 = vunpack.c.h.b16 %v9852
      %v9898 = vunpack.c.l.b16 %v9853
      %v9899 = vunpack.c.h.b16 %v9853
      %v9900 = vunpack.c.l.b16 %v9854
      %v9901 = vunpack.c.h.b16 %v9854
      %v9902 = vunpack.c.l.b16 %v9855
      %v9903 = vunpack.c.h.b16 %v9855
      %v9904 = vpack.c.b16 %v9874, %v9872
      %v9905 = vpack.c.b16 %v9875, %v9873
      %v9906 = vpack.c.b16 %v9878, %v9876
      %v9907 = vpack.c.b16 %v9879, %v9877
      %v9908 = vpack.c.b16 %v9882, %v9880
      %v9909 = vpack.c.b16 %v9883, %v9881
      %v9910 = vpack.c.b16 %v9886, %v9884
      %v9911 = vpack.c.b16 %v9887, %v9885
      %v9912 = vpack.c.b16 %v9890, %v9888
      %v9913 = vpack.c.b16 %v9891, %v9889
      %v9914 = vpack.c.b16 %v9894, %v9892
      %v9915 = vpack.c.b16 %v9895, %v9893
      %v9916 = vpack.c.b16 %v9898, %v9896
      %v9917 = vpack.c.b16 %v9899, %v9897
      %v9918 = vpack.c.b16 %v9902, %v9900
      %v9919 = vpack.c.b16 %v9903, %v9901
      %9936 = vmatprep.subr.bf16.mxu0 %v9919
      %9937 = vmatpush1.bf16.msra.mxu0 %v9918
      %9938 = vmatprep.subr.bf16.mxu0 %v9917
      %9939 = vmatpush1.bf16.msra.mxu0 %v9916
      %9940 = vmatprep.subr.bf16.mxu0 %v9915
      %9941 = vmatpush1.bf16.msra.mxu0 %v9914
      %9942 = vmatprep.subr.bf16.mxu0 %v9913
      %9943 = vmatpush1.bf16.msra.mxu0 %v9912
      %9944 = vmatprep.subr.bf16.mxu0 %v9911
      %9945 = vmatpush1.bf16.msra.mxu0 %v9910
      %9946 = vmatprep.subr.bf16.mxu0 %v9909
      %9947 = vmatpush1.bf16.msra.mxu0 %v9908
      %9948 = vmatprep.subr.bf16.mxu0 %v9907
      %9949 = vmatpush1.bf16.msra.mxu0 %v9906
      %9950 = vmatprep.subr.bf16.mxu0 %v9905
      %9951 = vmatpush1.bf16.msra.mxu0 %v9904
      %9952 = vmatprep.subr.bf16.mxu0 0
      %9953 = vmatpush2.bf16.msra.mxu0 0
      %9954 = vmatprep.subr.bf16.mxu0 0
      %9955 = vmatpush2.bf16.msra.mxu0 0
      %9956 = vmatprep.subr.bf16.mxu0 0
      %9957 = vmatpush2.bf16.msra.mxu0 0
      %9958 = vmatprep.subr.bf16.mxu0 0
      %9959 = vmatpush2.bf16.msra.mxu0 0
      %9960 = vmatprep.subr.bf16.mxu0 0
      %9961 = vmatpush2.bf16.msra.mxu0 0
      %9962 = vmatprep.subr.bf16.mxu0 0
      %9963 = vmatpush2.bf16.msra.mxu0 0
      %9964 = vmatprep.subr.bf16.mxu0 0
      %9965 = vmatpush2.bf16.msra.mxu0 0
      %9966 = vmatprep.subr.bf16.mxu0 0
      %9967 = vmatpush2.bf16.msra.mxu0 0
      %9968 = vmatprep.mubr.bf16.mxu0 0
      %9969 = vmatmul.mubr.bf16.gmra.mxu0 %v9838
      %v9970 = vpop.f32.mrf.mxu0
      %v9971 = vadd.f32 0.0, %v9970
      %v9972 = vpop.f32.mrf.mxu0
      %v9973 = vadd.f32 0.0, %v9972
      %v9974 = vpop.f32.mrf.mxu0
      %v9975 = vpop.f32.mrf.mxu0
      %9976 = vdwg.mxu0
      %v9977 = vadd.f32 %v9820, %v9971
      %v9978 = vadd.f32 %v9821, %v9973
      %s9979 = scalar_lea.vmem [#allocation2], 29
      %v9980 = vld [vmem:[%s9979] ss:$32 sm:$0x1]
      %v9981 = vld [vmem:[%s9979] ss:$32 sm:$0x2]
      %v9982 = vor.u32 %v9980, %v9981
      %v9983 = vld [vmem:[%s9979] ss:$32 sm:$0x4]
      %v9984 = vor.u32 %v9982, %v9983
      %v9985 = vld [vmem:[%s9979] ss:$32 sm:$0x8]
      %v9986 = vor.u32 %v9984, %v9985
      %v9987 = vld [vmem:[%s9979] ss:$32 sm:$0x10]
      %v9988 = vor.u32 %v9986, %v9987
      %v9989 = vld [vmem:[%s9979] ss:$32 sm:$0x20]
      %v9990 = vor.u32 %v9988, %v9989
      %v9991 = vld [vmem:[%s9979] ss:$32 sm:$0x40]
      %v9992 = vor.u32 %v9990, %v9991
      %v9993 = vld [vmem:[%s9979] ss:$32 sm:$0x80]
      %v9994 = vor.u32 %v9992, %v9993
      %v9995 = vpack.c.bf16 %v9994, %v9994
      %s9996 = scalar_lea.vmem %s5, 3712
      %v9997 = vld [vmem:[%s9996] sm:$0xff]
      %v9998 = vld [vmem:[%s9996 + $0x8] sm:$0xff]
      %v9999 = vld [vmem:[%s9996 + $0x10] sm:$0xff]
      %v10000 = vld [vmem:[%s9996 + $0x18] sm:$0xff]
      %v10001 = vld [vmem:[%s9996 + $0x20] sm:$0xff]
      %v10002 = vld [vmem:[%s9996 + $0x28] sm:$0xff]
      %v10003 = vld [vmem:[%s9996 + $0x30] sm:$0xff]
      %v10004 = vld [vmem:[%s9996 + $0x38] sm:$0xff]
      %v10005 = vld [vmem:[%s9996 + $0x40] sm:$0xff]
      %v10006 = vld [vmem:[%s9996 + $0x48] sm:$0xff]
      %v10007 = vld [vmem:[%s9996 + $0x50] sm:$0xff]
      %v10008 = vld [vmem:[%s9996 + $0x58] sm:$0xff]
      %v10009 = vld [vmem:[%s9996 + $0x60] sm:$0xff]
      %v10010 = vld [vmem:[%s9996 + $0x68] sm:$0xff]
      %v10011 = vld [vmem:[%s9996 + $0x70] sm:$0xff]
      %v10012 = vld [vmem:[%s9996 + $0x78] sm:$0xff]
      %v10029 = vunpack.c.l.b16 %v9997
      %v10030 = vunpack.c.h.b16 %v9997
      %v10031 = vunpack.c.l.b16 %v9998
      %v10032 = vunpack.c.h.b16 %v9998
      %v10033 = vunpack.c.l.b16 %v9999
      %v10034 = vunpack.c.h.b16 %v9999
      %v10035 = vunpack.c.l.b16 %v10000
      %v10036 = vunpack.c.h.b16 %v10000
      %v10037 = vunpack.c.l.b16 %v10001
      %v10038 = vunpack.c.h.b16 %v10001
      %v10039 = vunpack.c.l.b16 %v10002
      %v10040 = vunpack.c.h.b16 %v10002
      %v10041 = vunpack.c.l.b16 %v10003
      %v10042 = vunpack.c.h.b16 %v10003
      %v10043 = vunpack.c.l.b16 %v10004
      %v10044 = vunpack.c.h.b16 %v10004
      %v10045 = vunpack.c.l.b16 %v10005
      %v10046 = vunpack.c.h.b16 %v10005
      %v10047 = vunpack.c.l.b16 %v10006
      %v10048 = vunpack.c.h.b16 %v10006
      %v10049 = vunpack.c.l.b16 %v10007
      %v10050 = vunpack.c.h.b16 %v10007
      %v10051 = vunpack.c.l.b16 %v10008
      %v10052 = vunpack.c.h.b16 %v10008
      %v10053 = vunpack.c.l.b16 %v10009
      %v10054 = vunpack.c.h.b16 %v10009
      %v10055 = vunpack.c.l.b16 %v10010
      %v10056 = vunpack.c.h.b16 %v10010
      %v10057 = vunpack.c.l.b16 %v10011
      %v10058 = vunpack.c.h.b16 %v10011
      %v10059 = vunpack.c.l.b16 %v10012
      %v10060 = vunpack.c.h.b16 %v10012
      %v10061 = vpack.c.b16 %v10031, %v10029
      %v10062 = vpack.c.b16 %v10032, %v10030
      %v10063 = vpack.c.b16 %v10035, %v10033
      %v10064 = vpack.c.b16 %v10036, %v10034
      %v10065 = vpack.c.b16 %v10039, %v10037
      %v10066 = vpack.c.b16 %v10040, %v10038
      %v10067 = vpack.c.b16 %v10043, %v10041
      %v10068 = vpack.c.b16 %v10044, %v10042
      %v10069 = vpack.c.b16 %v10047, %v10045
      %v10070 = vpack.c.b16 %v10048, %v10046
      %v10071 = vpack.c.b16 %v10051, %v10049
      %v10072 = vpack.c.b16 %v10052, %v10050
      %v10073 = vpack.c.b16 %v10055, %v10053
      %v10074 = vpack.c.b16 %v10056, %v10054
      %v10075 = vpack.c.b16 %v10059, %v10057
      %v10076 = vpack.c.b16 %v10060, %v10058
      %10093 = vmatprep.subr.bf16.mxu0 %v10076
      %10094 = vmatpush1.bf16.msra.mxu0 %v10075
      %10095 = vmatprep.subr.bf16.mxu0 %v10074
      %10096 = vmatpush1.bf16.msra.mxu0 %v10073
      %10097 = vmatprep.subr.bf16.mxu0 %v10072
      %10098 = vmatpush1.bf16.msra.mxu0 %v10071
      %10099 = vmatprep.subr.bf16.mxu0 %v10070
      %10100 = vmatpush1.bf16.msra.mxu0 %v10069
      %10101 = vmatprep.subr.bf16.mxu0 %v10068
      %10102 = vmatpush1.bf16.msra.mxu0 %v10067
      %10103 = vmatprep.subr.bf16.mxu0 %v10066
      %10104 = vmatpush1.bf16.msra.mxu0 %v10065
      %10105 = vmatprep.subr.bf16.mxu0 %v10064
      %10106 = vmatpush1.bf16.msra.mxu0 %v10063
      %10107 = vmatprep.subr.bf16.mxu0 %v10062
      %10108 = vmatpush1.bf16.msra.mxu0 %v10061
      %10109 = vmatprep.subr.bf16.mxu0 0
      %10110 = vmatpush2.bf16.msra.mxu0 0
      %10111 = vmatprep.subr.bf16.mxu0 0
      %10112 = vmatpush2.bf16.msra.mxu0 0
      %10113 = vmatprep.subr.bf16.mxu0 0
      %10114 = vmatpush2.bf16.msra.mxu0 0
      %10115 = vmatprep.subr.bf16.mxu0 0
      %10116 = vmatpush2.bf16.msra.mxu0 0
      %10117 = vmatprep.subr.bf16.mxu0 0
      %10118 = vmatpush2.bf16.msra.mxu0 0
      %10119 = vmatprep.subr.bf16.mxu0 0
      %10120 = vmatpush2.bf16.msra.mxu0 0
      %10121 = vmatprep.subr.bf16.mxu0 0
      %10122 = vmatpush2.bf16.msra.mxu0 0
      %10123 = vmatprep.subr.bf16.mxu0 0
      %10124 = vmatpush2.bf16.msra.mxu0 0
      %10125 = vmatprep.mubr.bf16.mxu0 0
      %10126 = vmatmul.mubr.bf16.gmra.mxu0 %v9995
      %v10127 = vpop.f32.mrf.mxu0
      %v10128 = vadd.f32 0.0, %v10127
      %v10129 = vpop.f32.mrf.mxu0
      %v10130 = vadd.f32 0.0, %v10129
      %v10131 = vpop.f32.mrf.mxu0
      %v10132 = vpop.f32.mrf.mxu0
      %10133 = vdwg.mxu0
      %v10134 = vadd.f32 %v9977, %v10128
      %v10135 = vadd.f32 %v9978, %v10130
      %s10136 = scalar_lea.vmem [#allocation2], 30
      %v10137 = vld [vmem:[%s10136] ss:$32 sm:$0x1]
      %v10138 = vld [vmem:[%s10136] ss:$32 sm:$0x2]
      %v10139 = vor.u32 %v10137, %v10138
      %v10140 = vld [vmem:[%s10136] ss:$32 sm:$0x4]
      %v10141 = vor.u32 %v10139, %v10140
      %v10142 = vld [vmem:[%s10136] ss:$32 sm:$0x8]
      %v10143 = vor.u32 %v10141, %v10142
      %v10144 = vld [vmem:[%s10136] ss:$32 sm:$0x10]
      %v10145 = vor.u32 %v10143, %v10144
      %v10146 = vld [vmem:[%s10136] ss:$32 sm:$0x20]
      %v10147 = vor.u32 %v10145, %v10146
      %v10148 = vld [vmem:[%s10136] ss:$32 sm:$0x40]
      %v10149 = vor.u32 %v10147, %v10148
      %v10150 = vld [vmem:[%s10136] ss:$32 sm:$0x80]
      %v10151 = vor.u32 %v10149, %v10150
      %v10152 = vpack.c.bf16 %v10151, %v10151
      %s10153 = scalar_lea.vmem %s5, 3840
      %v10154 = vld [vmem:[%s10153] sm:$0xff]
      %v10155 = vld [vmem:[%s10153 + $0x8] sm:$0xff]
      %v10156 = vld [vmem:[%s10153 + $0x10] sm:$0xff]
      %v10157 = vld [vmem:[%s10153 + $0x18] sm:$0xff]
      %v10158 = vld [vmem:[%s10153 + $0x20] sm:$0xff]
      %v10159 = vld [vmem:[%s10153 + $0x28] sm:$0xff]
      %v10160 = vld [vmem:[%s10153 + $0x30] sm:$0xff]
      %v10161 = vld [vmem:[%s10153 + $0x38] sm:$0xff]
      %v10162 = vld [vmem:[%s10153 + $0x40] sm:$0xff]
      %v10163 = vld [vmem:[%s10153 + $0x48] sm:$0xff]
      %v10164 = vld [vmem:[%s10153 + $0x50] sm:$0xff]
      %v10165 = vld [vmem:[%s10153 + $0x58] sm:$0xff]
      %v10166 = vld [vmem:[%s10153 + $0x60] sm:$0xff]
      %v10167 = vld [vmem:[%s10153 + $0x68] sm:$0xff]
      %v10168 = vld [vmem:[%s10153 + $0x70] sm:$0xff]
      %v10169 = vld [vmem:[%s10153 + $0x78] sm:$0xff]
      %v10186 = vunpack.c.l.b16 %v10154
      %v10187 = vunpack.c.h.b16 %v10154
      %v10188 = vunpack.c.l.b16 %v10155
      %v10189 = vunpack.c.h.b16 %v10155
      %v10190 = vunpack.c.l.b16 %v10156
      %v10191 = vunpack.c.h.b16 %v10156
      %v10192 = vunpack.c.l.b16 %v10157
      %v10193 = vunpack.c.h.b16 %v10157
      %v10194 = vunpack.c.l.b16 %v10158
      %v10195 = vunpack.c.h.b16 %v10158
      %v10196 = vunpack.c.l.b16 %v10159
      %v10197 = vunpack.c.h.b16 %v10159
      %v10198 = vunpack.c.l.b16 %v10160
      %v10199 = vunpack.c.h.b16 %v10160
      %v10200 = vunpack.c.l.b16 %v10161
      %v10201 = vunpack.c.h.b16 %v10161
      %v10202 = vunpack.c.l.b16 %v10162
      %v10203 = vunpack.c.h.b16 %v10162
      %v10204 = vunpack.c.l.b16 %v10163
      %v10205 = vunpack.c.h.b16 %v10163
      %v10206 = vunpack.c.l.b16 %v10164
      %v10207 = vunpack.c.h.b16 %v10164
      %v10208 = vunpack.c.l.b16 %v10165
      %v10209 = vunpack.c.h.b16 %v10165
      %v10210 = vunpack.c.l.b16 %v10166
      %v10211 = vunpack.c.h.b16 %v10166
      %v10212 = vunpack.c.l.b16 %v10167
      %v10213 = vunpack.c.h.b16 %v10167
      %v10214 = vunpack.c.l.b16 %v10168
      %v10215 = vunpack.c.h.b16 %v10168
      %v10216 = vunpack.c.l.b16 %v10169
      %v10217 = vunpack.c.h.b16 %v10169
      %v10218 = vpack.c.b16 %v10188, %v10186
      %v10219 = vpack.c.b16 %v10189, %v10187
      %v10220 = vpack.c.b16 %v10192, %v10190
      %v10221 = vpack.c.b16 %v10193, %v10191
      %v10222 = vpack.c.b16 %v10196, %v10194
      %v10223 = vpack.c.b16 %v10197, %v10195
      %v10224 = vpack.c.b16 %v10200, %v10198
      %v10225 = vpack.c.b16 %v10201, %v10199
      %v10226 = vpack.c.b16 %v10204, %v10202
      %v10227 = vpack.c.b16 %v10205, %v10203
      %v10228 = vpack.c.b16 %v10208, %v10206
      %v10229 = vpack.c.b16 %v10209, %v10207
      %v10230 = vpack.c.b16 %v10212, %v10210
      %v10231 = vpack.c.b16 %v10213, %v10211
      %v10232 = vpack.c.b16 %v10216, %v10214
      %v10233 = vpack.c.b16 %v10217, %v10215
      %10250 = vmatprep.subr.bf16.mxu0 %v10233
      %10251 = vmatpush1.bf16.msra.mxu0 %v10232
      %10252 = vmatprep.subr.bf16.mxu0 %v10231
      %10253 = vmatpush1.bf16.msra.mxu0 %v10230
      %10254 = vmatprep.subr.bf16.mxu0 %v10229
      %10255 = vmatpush1.bf16.msra.mxu0 %v10228
      %10256 = vmatprep.subr.bf16.mxu0 %v10227
      %10257 = vmatpush1.bf16.msra.mxu0 %v10226
      %10258 = vmatprep.subr.bf16.mxu0 %v10225
      %10259 = vmatpush1.bf16.msra.mxu0 %v10224
      %10260 = vmatprep.subr.bf16.mxu0 %v10223
      %10261 = vmatpush1.bf16.msra.mxu0 %v10222
      %10262 = vmatprep.subr.bf16.mxu0 %v10221
      %10263 = vmatpush1.bf16.msra.mxu0 %v10220
      %10264 = vmatprep.subr.bf16.mxu0 %v10219
      %10265 = vmatpush1.bf16.msra.mxu0 %v10218
      %10266 = vmatprep.subr.bf16.mxu0 0
      %10267 = vmatpush2.bf16.msra.mxu0 0
      %10268 = vmatprep.subr.bf16.mxu0 0
      %10269 = vmatpush2.bf16.msra.mxu0 0
      %10270 = vmatprep.subr.bf16.mxu0 0
      %10271 = vmatpush2.bf16.msra.mxu0 0
      %10272 = vmatprep.subr.bf16.mxu0 0
      %10273 = vmatpush2.bf16.msra.mxu0 0
      %10274 = vmatprep.subr.bf16.mxu0 0
      %10275 = vmatpush2.bf16.msra.mxu0 0
      %10276 = vmatprep.subr.bf16.mxu0 0
      %10277 = vmatpush2.bf16.msra.mxu0 0
      %10278 = vmatprep.subr.bf16.mxu0 0
      %10279 = vmatpush2.bf16.msra.mxu0 0
      %10280 = vmatprep.subr.bf16.mxu0 0
      %10281 = vmatpush2.bf16.msra.mxu0 0
      %10282 = vmatprep.mubr.bf16.mxu0 0
      %10283 = vmatmul.mubr.bf16.gmra.mxu0 %v10152
      %v10284 = vpop.f32.mrf.mxu0
      %v10285 = vadd.f32 0.0, %v10284
      %v10286 = vpop.f32.mrf.mxu0
      %v10287 = vadd.f32 0.0, %v10286
      %v10288 = vpop.f32.mrf.mxu0
      %v10289 = vpop.f32.mrf.mxu0
      %10290 = vdwg.mxu0
      %v10291 = vadd.f32 %v10134, %v10285
      %v10292 = vadd.f32 %v10135, %v10287
      %s10293 = scalar_lea.vmem [#allocation2], 31
      %v10294 = vld [vmem:[%s10293] ss:$32 sm:$0x1]
      %v10295 = vld [vmem:[%s10293] ss:$32 sm:$0x2]
      %v10296 = vor.u32 %v10294, %v10295
      %v10297 = vld [vmem:[%s10293] ss:$32 sm:$0x4]
      %v10298 = vor.u32 %v10296, %v10297
      %v10299 = vld [vmem:[%s10293] ss:$32 sm:$0x8]
      %v10300 = vor.u32 %v10298, %v10299
      %v10301 = vld [vmem:[%s10293] ss:$32 sm:$0x10]
      %v10302 = vor.u32 %v10300, %v10301
      %v10303 = vld [vmem:[%s10293] ss:$32 sm:$0x20]
      %v10304 = vor.u32 %v10302, %v10303
      %v10305 = vld [vmem:[%s10293] ss:$32 sm:$0x40]
      %v10306 = vor.u32 %v10304, %v10305
      %v10307 = vld [vmem:[%s10293] ss:$32 sm:$0x80]
      %v10308 = vor.u32 %v10306, %v10307
      %v10309 = vpack.c.bf16 %v10308, %v10308
      %s10310 = scalar_lea.vmem %s5, 3968
      %v10311 = vld [vmem:[%s10310] sm:$0xff]
      %v10312 = vld [vmem:[%s10310 + $0x8] sm:$0xff]
      %v10313 = vld [vmem:[%s10310 + $0x10] sm:$0xff]
      %v10314 = vld [vmem:[%s10310 + $0x18] sm:$0xff]
      %v10315 = vld [vmem:[%s10310 + $0x20] sm:$0xff]
      %v10316 = vld [vmem:[%s10310 + $0x28] sm:$0xff]
      %v10317 = vld [vmem:[%s10310 + $0x30] sm:$0xff]
      %v10318 = vld [vmem:[%s10310 + $0x38] sm:$0xff]
      %v10319 = vld [vmem:[%s10310 + $0x40] sm:$0xff]
      %v10320 = vld [vmem:[%s10310 + $0x48] sm:$0xff]
      %v10321 = vld [vmem:[%s10310 + $0x50] sm:$0xff]
      %v10322 = vld [vmem:[%s10310 + $0x58] sm:$0xff]
      %v10323 = vld [vmem:[%s10310 + $0x60] sm:$0xff]
      %v10324 = vld [vmem:[%s10310 + $0x68] sm:$0xff]
      %v10325 = vld [vmem:[%s10310 + $0x70] sm:$0xff]
      %v10326 = vld [vmem:[%s10310 + $0x78] sm:$0xff]
      %v10343 = vunpack.c.l.b16 %v10311
      %v10344 = vunpack.c.h.b16 %v10311
      %v10345 = vunpack.c.l.b16 %v10312
      %v10346 = vunpack.c.h.b16 %v10312
      %v10347 = vunpack.c.l.b16 %v10313
      %v10348 = vunpack.c.h.b16 %v10313
      %v10349 = vunpack.c.l.b16 %v10314
      %v10350 = vunpack.c.h.b16 %v10314
      %v10351 = vunpack.c.l.b16 %v10315
      %v10352 = vunpack.c.h.b16 %v10315
      %v10353 = vunpack.c.l.b16 %v10316
      %v10354 = vunpack.c.h.b16 %v10316
      %v10355 = vunpack.c.l.b16 %v10317
      %v10356 = vunpack.c.h.b16 %v10317
      %v10357 = vunpack.c.l.b16 %v10318
      %v10358 = vunpack.c.h.b16 %v10318
      %v10359 = vunpack.c.l.b16 %v10319
      %v10360 = vunpack.c.h.b16 %v10319
      %v10361 = vunpack.c.l.b16 %v10320
      %v10362 = vunpack.c.h.b16 %v10320
      %v10363 = vunpack.c.l.b16 %v10321
      %v10364 = vunpack.c.h.b16 %v10321
      %v10365 = vunpack.c.l.b16 %v10322
      %v10366 = vunpack.c.h.b16 %v10322
      %v10367 = vunpack.c.l.b16 %v10323
      %v10368 = vunpack.c.h.b16 %v10323
      %v10369 = vunpack.c.l.b16 %v10324
      %v10370 = vunpack.c.h.b16 %v10324
      %v10371 = vunpack.c.l.b16 %v10325
      %v10372 = vunpack.c.h.b16 %v10325
      %v10373 = vunpack.c.l.b16 %v10326
      %v10374 = vunpack.c.h.b16 %v10326
      %v10375 = vpack.c.b16 %v10345, %v10343
      %v10376 = vpack.c.b16 %v10346, %v10344
      %v10377 = vpack.c.b16 %v10349, %v10347
      %v10378 = vpack.c.b16 %v10350, %v10348
      %v10379 = vpack.c.b16 %v10353, %v10351
      %v10380 = vpack.c.b16 %v10354, %v10352
      %v10381 = vpack.c.b16 %v10357, %v10355
      %v10382 = vpack.c.b16 %v10358, %v10356
      %v10383 = vpack.c.b16 %v10361, %v10359
      %v10384 = vpack.c.b16 %v10362, %v10360
      %v10385 = vpack.c.b16 %v10365, %v10363
      %v10386 = vpack.c.b16 %v10366, %v10364
      %v10387 = vpack.c.b16 %v10369, %v10367
      %v10388 = vpack.c.b16 %v10370, %v10368
      %v10389 = vpack.c.b16 %v10373, %v10371
      %v10390 = vpack.c.b16 %v10374, %v10372
      %10407 = vmatprep.subr.bf16.mxu0 %v10390
      %10408 = vmatpush1.bf16.msra.mxu0 %v10389
      %10409 = vmatprep.subr.bf16.mxu0 %v10388
      %10410 = vmatpush1.bf16.msra.mxu0 %v10387
      %10411 = vmatprep.subr.bf16.mxu0 %v10386
      %10412 = vmatpush1.bf16.msra.mxu0 %v10385
      %10413 = vmatprep.subr.bf16.mxu0 %v10384
      %10414 = vmatpush1.bf16.msra.mxu0 %v10383
      %10415 = vmatprep.subr.bf16.mxu0 %v10382
      %10416 = vmatpush1.bf16.msra.mxu0 %v10381
      %10417 = vmatprep.subr.bf16.mxu0 %v10380
      %10418 = vmatpush1.bf16.msra.mxu0 %v10379
      %10419 = vmatprep.subr.bf16.mxu0 %v10378
      %10420 = vmatpush1.bf16.msra.mxu0 %v10377
      %10421 = vmatprep.subr.bf16.mxu0 %v10376
      %10422 = vmatpush1.bf16.msra.mxu0 %v10375
      %10423 = vmatprep.subr.bf16.mxu0 0
      %10424 = vmatpush2.bf16.msra.mxu0 0
      %10425 = vmatprep.subr.bf16.mxu0 0
      %10426 = vmatpush2.bf16.msra.mxu0 0
      %10427 = vmatprep.subr.bf16.mxu0 0
      %10428 = vmatpush2.bf16.msra.mxu0 0
      %10429 = vmatprep.subr.bf16.mxu0 0
      %10430 = vmatpush2.bf16.msra.mxu0 0
      %10431 = vmatprep.subr.bf16.mxu0 0
      %10432 = vmatpush2.bf16.msra.mxu0 0
      %10433 = vmatprep.subr.bf16.mxu0 0
      %10434 = vmatpush2.bf16.msra.mxu0 0
      %10435 = vmatprep.subr.bf16.mxu0 0
      %10436 = vmatpush2.bf16.msra.mxu0 0
      %10437 = vmatprep.subr.bf16.mxu0 0
      %10438 = vmatpush2.bf16.msra.mxu0 0
      %10439 = vmatprep.mubr.bf16.mxu0 0
      %10440 = vmatmul.mubr.bf16.gmra.mxu0 %v10309
      %v10441 = vpop.f32.mrf.mxu0
      %v10442 = vadd.f32 0.0, %v10441
      %v10443 = vpop.f32.mrf.mxu0
      %v10444 = vadd.f32 0.0, %v10443
      %v10445 = vpop.f32.mrf.mxu0
      %v10446 = vpop.f32.mrf.mxu0
      %10447 = vdwg.mxu0
      %v10448 = vadd.f32 %v10291, %v10442
      %v10449 = vadd.f32 %v10292, %v10444
      %v10450 = vld [vmem:[%s6] sm:$0x3]
      %v10452 = vlaneseq
      %v10453 = vshrl.u32 %v10452, 7
      %v10454 = vsub.s32 0, %v10453
      %v10455 = vrot.slane %v10450, %v10454
      %v10456 = vlaneseq
      %v10457 = vshrl.u32 %v10456, 7
      %v10458 = vsub.s32 1, %v10457
      %v10459 = vrot.slane %v10450, %v10458
      %v10462 = vadd.f32 %v10448, %v10455
      %v10463 = vadd.f32 %v10449, %v10459
      %v10464 = vmax.f32 %v10462, 0.0
      %v10465 = vmax.f32 %v10463, 0.0
      %v10466 = vpack.c.bf16 %v10464, %v10464
      %v10467 = vpack.c.bf16 %v10465, %v10465
      %v10468 = vld [vmem:[%s7] sm:$0xf]
      %v10469 = vld [vmem:[%s7 + $0x4] sm:$0xf]
      %v10470 = vld [vmem:[%s7 + $0x8] sm:$0xf]
      %v10471 = vld [vmem:[%s7 + $0xc] sm:$0xf]
      %v10472 = vld [vmem:[%s7 + $0x10] sm:$0xf]
      %v10473 = vld [vmem:[%s7 + $0x14] sm:$0xf]
      %v10474 = vld [vmem:[%s7 + $0x18] sm:$0xf]
      %v10475 = vld [vmem:[%s7 + $0x1c] sm:$0xf]
      %v10476 = vld [vmem:[%s7 + $0x20] sm:$0xf]
      %v10477 = vld [vmem:[%s7 + $0x24] sm:$0xf]
      %v10478 = vld [vmem:[%s7 + $0x28] sm:$0xf]
      %v10479 = vld [vmem:[%s7 + $0x2c] sm:$0xf]
      %v10480 = vld [vmem:[%s7 + $0x30] sm:$0xf]
      %v10481 = vld [vmem:[%s7 + $0x34] sm:$0xf]
      %v10482 = vld [vmem:[%s7 + $0x38] sm:$0xf]
      %v10483 = vld [vmem:[%s7 + $0x3c] sm:$0xf]
      %v10484 = vld [vmem:[%s7 + $0x40] sm:$0xf]
      %v10485 = vld [vmem:[%s7 + $0x44] sm:$0xf]
      %v10486 = vld [vmem:[%s7 + $0x48] sm:$0xf]
      %v10487 = vld [vmem:[%s7 + $0x4c] sm:$0xf]
      %v10488 = vld [vmem:[%s7 + $0x50] sm:$0xf]
      %v10489 = vld [vmem:[%s7 + $0x54] sm:$0xf]
      %v10490 = vld [vmem:[%s7 + $0x58] sm:$0xf]
      %v10491 = vld [vmem:[%s7 + $0x5c] sm:$0xf]
      %v10492 = vld [vmem:[%s7 + $0x60] sm:$0xf]
      %v10493 = vld [vmem:[%s7 + $0x64] sm:$0xf]
      %v10494 = vld [vmem:[%s7 + $0x68] sm:$0xf]
      %v10495 = vld [vmem:[%s7 + $0x6c] sm:$0xf]
      %v10496 = vld [vmem:[%s7 + $0x70] sm:$0xf]
      %v10497 = vld [vmem:[%s7 + $0x74] sm:$0xf]
      %v10498 = vld [vmem:[%s7 + $0x78] sm:$0xf]
      %v10499 = vld [vmem:[%s7 + $0x7c] sm:$0xf]
      %v10500 = vld [vmem:[%s8] sm:$0x1]
      %v10502 = vlaneseq
      %v10503 = vshrl.u32 %v10502, 7
      %v10504 = vsub.s32 0, %v10503
      %v10505 = vrot.slane %v10500, %v10504
      %v10539 = vunpack.c.l.b16 %v10468
      %v10540 = vunpack.c.l.b16 %v10469
      %v10541 = vunpack.c.l.b16 %v10470
      %v10542 = vunpack.c.l.b16 %v10471
      %v10543 = vunpack.c.l.b16 %v10472
      %v10544 = vunpack.c.l.b16 %v10473
      %v10545 = vunpack.c.l.b16 %v10474
      %v10546 = vunpack.c.l.b16 %v10475
      %v10547 = vunpack.c.l.b16 %v10476
      %v10548 = vunpack.c.l.b16 %v10477
      %v10549 = vunpack.c.l.b16 %v10478
      %v10550 = vunpack.c.l.b16 %v10479
      %v10551 = vunpack.c.l.b16 %v10480
      %v10552 = vunpack.c.l.b16 %v10481
      %v10553 = vunpack.c.l.b16 %v10482
      %v10554 = vunpack.c.l.b16 %v10483
      %v10555 = vunpack.c.l.b16 %v10484
      %v10556 = vunpack.c.l.b16 %v10485
      %v10557 = vunpack.c.l.b16 %v10486
      %v10558 = vunpack.c.l.b16 %v10487
      %v10559 = vunpack.c.l.b16 %v10488
      %v10560 = vunpack.c.l.b16 %v10489
      %v10561 = vunpack.c.l.b16 %v10490
      %v10562 = vunpack.c.l.b16 %v10491
      %v10563 = vunpack.c.l.b16 %v10492
      %v10564 = vunpack.c.l.b16 %v10493
      %v10565 = vunpack.c.l.b16 %v10494
      %v10566 = vunpack.c.l.b16 %v10495
      %v10567 = vunpack.c.l.b16 %v10496
      %v10568 = vunpack.c.l.b16 %v10497
      %v10569 = vunpack.c.l.b16 %v10498
      %v10570 = vunpack.c.l.b16 %v10499
      %v10571 = vpack.c.b16 %v10540, %v10539
      %v10572 = vpack.c.b16 %v10542, %v10541
      %v10573 = vpack.c.b16 %v10544, %v10543
      %v10574 = vpack.c.b16 %v10546, %v10545
      %v10575 = vpack.c.b16 %v10548, %v10547
      %v10576 = vpack.c.b16 %v10550, %v10549
      %v10577 = vpack.c.b16 %v10552, %v10551
      %v10578 = vpack.c.b16 %v10554, %v10553
      %v10579 = vpack.c.b16 %v10556, %v10555
      %v10580 = vpack.c.b16 %v10558, %v10557
      %v10581 = vpack.c.b16 %v10560, %v10559
      %v10582 = vpack.c.b16 %v10562, %v10561
      %v10583 = vpack.c.b16 %v10564, %v10563
      %v10584 = vpack.c.b16 %v10566, %v10565
      %v10585 = vpack.c.b16 %v10568, %v10567
      %v10586 = vpack.c.b16 %v10570, %v10569
      %10603 = vmatprep.subr.bf16.mxu0 0
      %10604 = vmatpush1.bf16.msra.mxu0 %v10578
      %10605 = vmatprep.subr.bf16.mxu0 0
      %10606 = vmatpush1.bf16.msra.mxu0 %v10577
      %10607 = vmatprep.subr.bf16.mxu0 0
      %10608 = vmatpush1.bf16.msra.mxu0 %v10576
      %10609 = vmatprep.subr.bf16.mxu0 0
      %10610 = vmatpush1.bf16.msra.mxu0 %v10575
      %10611 = vmatprep.subr.bf16.mxu0 0
      %10612 = vmatpush1.bf16.msra.mxu0 %v10574
      %10613 = vmatprep.subr.bf16.mxu0 0
      %10614 = vmatpush1.bf16.msra.mxu0 %v10573
      %10615 = vmatprep.subr.bf16.mxu0 0
      %10616 = vmatpush1.bf16.msra.mxu0 %v10572
      %10617 = vmatprep.subr.bf16.mxu0 0
      %10618 = vmatpush1.bf16.msra.mxu0 %v10571
      %10619 = vmatprep.subr.bf16.mxu0 0
      %10620 = vmatpush2.bf16.msra.mxu0 %v10586
      %10621 = vmatprep.subr.bf16.mxu0 0
      %10622 = vmatpush2.bf16.msra.mxu0 %v10585
      %10623 = vmatprep.subr.bf16.mxu0 0
      %10624 = vmatpush2.bf16.msra.mxu0 %v10584
      %10625 = vmatprep.subr.bf16.mxu0 0
      %10626 = vmatpush2.bf16.msra.mxu0 %v10583
      %10627 = vmatprep.subr.bf16.mxu0 0
      %10628 = vmatpush2.bf16.msra.mxu0 %v10582
      %10629 = vmatprep.subr.bf16.mxu0 0
      %10630 = vmatpush2.bf16.msra.mxu0 %v10581
      %10631 = vmatprep.subr.bf16.mxu0 0
      %10632 = vmatpush2.bf16.msra.mxu0 %v10580
      %10633 = vmatprep.subr.bf16.mxu0 0
      %10634 = vmatpush2.bf16.msra.mxu0 %v10579
      %10635 = vmatprep.mubr.bf16.mxu0 %v10467
      %10636 = vmatmul.mubr.bf16.gmra.mxu0 %v10466
      %v10637 = vpop.f32.mrf.mxu0
      %v10638 = vadd.f32 %v10505, %v10637
      %v10639 = vpop.f32.mrf.mxu0
      %v10640 = vpop.f32.mrf.mxu0
      %v10641 = vpop.f32.mrf.mxu0
      %10642 = vdwg.mxu0
      %vm10643 = vcmask 48128
      %10644 = vst.msk [vmem:[%s330] sm:$0xff] %vm10643, %v10638
      %p10645 = scmp.lt.s32.totalorder %s20, 1
      %s10646 = scalar_select %p10645, %s20, 1
      %s10647 = smul.addr %s10646, 8
      %s10648 = scalar_lea.vmem %s9, %s10647
      // Predicated region
      $region57: #{cnn_forward.1} parent=55 // pred_check
        %p10649 = pneg %p232
      $region58: #{cnn_forward.1} parent=55 // pred_check_branch
        %10651 = sbr.rel (%p10649) target = $region60
      $region59: #{cnn_forward.1} parent=55 // pred_region
        _
      $region60: #{cnn_forward.1} parent=55 // pred_fallthru
        _
    $region56: #{cnn_forward.1} parent=5 // pred_fallthru
      _
    %p10652 = scmp.le.s32.totalorder 2, %s15
    // Predicated region
    $region61: #{cnn_forward.1} parent=5 // pred_check
      %p10653 = pneg %p10652
    $region62: #{cnn_forward.1} parent=5 // pred_check_branch
      %10655 = sbr.rel (%p10653) target = $region64
    $region63: #{cnn_forward.1} parent=5 // pred_region
      %s10656 = ssub.s32 %s15, 2
      // Predicated region
      $region65: #{cnn_forward.1} parent=63 // pred_check
        %p10657 = pneg %p238
      $region66: #{cnn_forward.1} parent=63 // pred_check_branch
        %10659 = sbr.rel (%p10657) target = $region68
      $region67: #{cnn_forward.1} parent=63 // pred_region
        %p10660 = scmp.lt.s32.totalorder %s21, 1
        %s10661 = scalar_select %p10660, %s21, 1
        %s10662 = smul.addr %s10661, 8
        %s10663 = scalar_lea.vmem %s9, %s10662
      $region68: #{cnn_forward.1} parent=63 // pred_fallthru
        _
    $region64: #{cnn_forward.1} parent=5 // pred_fallthru
      _
  $region6: #{cnn_forward.1} parent=0 // loop_footer
    %s19 = sadd.s32 1, %s15
  $region7: #{cnn_forward.1} parent=0 // loop_footer_branch
    %14 = sbr.rel target = $region3
  $region8: #{cnn_forward.1} parent=0 // loop_exit
    _

</llo_original>
